<compile_context>
chip_gen: v7x
topology: tpu7x:2x2x1
jax: 0.10.0
libtpu: 0.0.40
codegen_flags: <defaults>
</compile_context>

<pallas_src>
import jax
import jax.numpy as jnp
from jax.experimental import pallas as pl
from jax.experimental.pallas import tpu as pltpu


# ----------------------------------------------------------------------------
# Small helpers
# ----------------------------------------------------------------------------

def _round_up(x, m):
    return (x + m - 1) // m * m


def _pad_last(a, target):
    c = a.shape[-1]
    if c == target:
        return a
    return jnp.pad(a, [(0, 0)] * (a.ndim - 1) + [(0, target - c)])


def _pick_tm(m):
    """M-tile: multiple of 16 (bf16 sublanes), <=512, and >=2 grid blocks
    whenever possible so both TensorCores get work on v7x / megacore."""
    if m >= 1024:
        return 512
    if m >= 32:
        return min(512, _round_up(pl.cdiv(m, 2), 16))
    if m >= 8:
        return 8
    return m


def fold_bn(bn, eps=1e-5):
    scale = bn["gamma"] / jnp.sqrt(bn["var"] + eps)
    shift = bn["beta"] - bn["mean"] * scale
    return scale, shift


# ----------------------------------------------------------------------------
# Kernel 1: fused 1x1-conv GEMM (+BN scale/shift, +optional residual, +ReLU)
#   - bf16 A / B / residual, fp32 accumulate, bf16 output
#   - weights fully VMEM-resident, no K loop, no accumulator scratch
# ----------------------------------------------------------------------------

def _make_gemm_kernel(relu, has_residual):
    if has_residual:
        def kernel(a_ref, b_ref, s_ref, t_ref, r_ref, o_ref):
            acc = jnp.dot(a_ref[...], b_ref[...],
                          preferred_element_type=jnp.float32)
            y = acc * s_ref[...] + t_ref[...] + r_ref[...].astype(jnp.float32)
            if relu:
                y = jnp.maximum(y, 0.0)
            o_ref[...] = y.astype(o_ref.dtype)
    else:
        def kernel(a_ref, b_ref, s_ref, t_ref, o_ref):
            acc = jnp.dot(a_ref[...], b_ref[...],
                          preferred_element_type=jnp.float32)
            y = acc * s_ref[...] + t_ref[...]
            if relu:
                y = jnp.maximum(y, 0.0)
            o_ref[...] = y.astype(o_ref.dtype)
    return kernel


def conv1x1_bn(x2d, w_p, scale_p, shift_p, *, relu, residual=None):
    """x2d: (M, K) bf16 (K = channel-padded Cin); w_p: (K, Np) bf16;
    scale/shift: (1, Np) f32; residual: (M, Np) bf16 or None.
    Returns (M, Np) bf16.  No K grid axis (weights resident), ragged last
    M-tile handled by Pallas masking (no M padding in the wrapper)."""
    M, K = x2d.shape
    Np = w_p.shape[1]
    tm = _pick_tm(M)
    grid = (pl.cdiv(M, tm),)

    in_specs = [pl.BlockSpec((tm, K), lambda i: (i, 0)),
                pl.BlockSpec((K, Np), lambda i: (0, 0)),
                pl.BlockSpec((1, Np), lambda i: (0, 0)),
                pl.BlockSpec((1, Np), lambda i: (0, 0))]
    args = [x2d, w_p, scale_p, shift_p]
    if residual is not None:
        in_specs.append(pl.BlockSpec((tm, Np), lambda i: (i, 0)))
        args.append(residual)

    kern = _make_gemm_kernel(relu, residual is not None)

    # NOTE: all tiles fit comfortably under the default scoped VMEM limit at
    # these shapes; raise vmem_limit_bytes via CompilerParams when growing
    # tm / resident weights for larger workloads (budget ~48 MiB on v7x).
    return pl.pallas_call(
        kern,
        out_shape=jax.ShapeDtypeStruct((M, Np), jnp.bfloat16),
        grid_spec=pltpu.PrefetchScalarGridSpec(
            num_scalar_prefetch=0,
            grid=grid,
            in_specs=in_specs,
            out_specs=pl.BlockSpec((tm, Np), lambda i: (i, 0))),
        compiler_params=pltpu.CompilerParams(
            dimension_semantics=("parallel",)),
    )(*args)


# ----------------------------------------------------------------------------
# Kernel 2: fused 3x3 conv (pad=1, stride 1/2) + BN + ReLU, no HBM im2col.
#   Each grid step owns one image: the padded image is DMA'd once, the 9 tap
#   weights are resident, and the taps are accumulated as in-kernel matmuls.
# ----------------------------------------------------------------------------

def conv3x3_bn_relu(x_nhwc_p, w_p, scale_p, shift_p, *, stride):
    """x_nhwc_p: (N, H, W, Cp) bf16 channel-padded; w_p: (9, Cp, Coutp) bf16;
    scale/shift: (1, Coutp) f32.  Returns (N, Ho, Wo, Coutp) bf16."""
    N, H, W, Cp = x_nhwc_p.shape
    Coutp = w_p.shape[-1]
    Ho = (H + 2 - 3) // stride + 1
    Wo = (W + 2 - 3) // stride + 1

    # Spatial zero-pad (padding=1).  Channel padding already present; padded
    # channels stay exactly zero through the whole block.
    xp = jnp.pad(x_nhwc_p, ((0, 0), (1, 1), (1, 1), (0, 0)))

    if stride == 1:
        phases = [xp]
    else:
        assert stride == 2 and W % 2 == 0, "stride-2 conv3x3 assumes even W"
        # Column-parity split so every tap is a contiguous, aligned window.
        # TODO(synk): fold this split into the producing kernel's output layout.
        phases = [xp[:, :, 0::2, :], xp[:, :, 1::2, :]]
    n_ph = len(phases)
    Hp = H + 2
    phase_widths = [p.shape[2] for p in phases]

    def kernel(*refs):
        ph = refs[:n_ph]
        w_ref, s_ref, t_ref, o_ref = refs[n_ph:]
        for h in range(Ho):                      # static unroll over output rows
            acc = jnp.zeros((Wo, Coutp), jnp.float32)
            for di in range(3):
                hin = h * stride + di
                rows = [ph[p][0, hin, :, :] for p in range(n_ph)]  # (Lp, Cp) bf16
                for dj in range(3):
                    if stride == 1:
                        p_idx, off = 0, dj
                    else:
                        p_idx, off = dj % 2, dj // 2
                    prod = jnp.dot(rows[p_idx], w_ref[di * 3 + dj],
                                   preferred_element_type=jnp.float32)
                    acc = acc + prod[off:off + Wo, :]
            y = acc * s_ref[...] + t_ref[...]
            y = jnp.maximum(y, 0.0)
            o_ref[0, h, :, :] = y.astype(o_ref.dtype)

    in_specs = ([pl.BlockSpec((1, Hp, lp, Cp), lambda n: (n, 0, 0, 0))
                 for lp in phase_widths]
                + [pl.BlockSpec((9, Cp, Coutp), lambda n: (0, 0, 0)),
                   pl.BlockSpec((1, Coutp), lambda n: (0, 0)),
                   pl.BlockSpec((1, Coutp), lambda n: (0, 0))])

    return pl.pallas_call(
        kernel,
        out_shape=jax.ShapeDtypeStruct((N, Ho, Wo, Coutp), jnp.bfloat16),
        grid_spec=pltpu.PrefetchScalarGridSpec(
            num_scalar_prefetch=0,
            grid=(N,),
            in_specs=in_specs,
            out_specs=pl.BlockSpec((1, Ho, Wo, Coutp),
                                   lambda n: (n, 0, 0, 0))),
        compiler_params=pltpu.CompilerParams(
            dimension_semantics=("parallel",)),
    )(*phases, w_p, scale_p, shift_p)


# ----------------------------------------------------------------------------
# Parameter preparation (channel-pad to 128 multiples, bf16 weights)
# ----------------------------------------------------------------------------

def _prep_w_1x1(w_hwio):
    cin, cout = w_hwio.shape[2], w_hwio.shape[3]
    kp, npad = _round_up(cin, 128), _round_up(cout, 128)
    w2 = jnp.pad(w_hwio.reshape(cin, cout), ((0, kp - cin), (0, npad - cout)))
    return w2.astype(jnp.bfloat16)


def _prep_w_3x3(w_hwio):
    cin, cout = w_hwio.shape[2], w_hwio.shape[3]
    kp, npad = _round_up(cin, 128), _round_up(cout, 128)
    w2 = jnp.pad(w_hwio.reshape(9, cin, cout),
                 ((0, 0), (0, kp - cin), (0, npad - cout)))
    return w2.astype(jnp.bfloat16)


def _prep_bn(bn, npad):
    scale, shift = fold_bn(bn)
    c = scale.shape[0]
    scale = jnp.pad(scale, (0, npad - c)).reshape(1, npad).astype(jnp.float32)
    shift = jnp.pad(shift, (0, npad - c)).reshape(1, npad).astype(jnp.float32)
    return scale, shift


# ----------------------------------------------------------------------------
# Parameter construction (deterministic, matches PyTorch init distributions)
# ----------------------------------------------------------------------------

class ParamGen:
    def __init__(self, key):
        self.key = key
        self.i = 0

    def _next(self):
        self.i += 1
        return jax.random.fold_in(self.key, self.i)

    def conv(self, kh, kw, cin, cout):
        # kaiming_normal_, mode='fan_out', nonlinearity='relu' (HWIO layout)
        fan_out = cout * kh * kw
        std = (2.0 / fan_out) ** 0.5
        return std * jax.random.normal(self._next(), (kh, kw, cin, cout),
                                       jnp.float32)

    def bn(self, c):
        return {"gamma": jnp.ones((c,), jnp.float32),
                "beta": jnp.zeros((c,), jnp.float32),
                "mean": jnp.zeros((c,), jnp.float32),
                "var": jnp.ones((c,), jnp.float32)}


def make_bottleneck(pg, ch1, ch2, stride=1, downsample=False):
    p = {"stride": stride,
         "w1": pg.conv(1, 1, ch1, ch2), "bn1": pg.bn(ch2),
         "w2": pg.conv(3, 3, ch2, ch2), "bn2": pg.bn(ch2),
         "w3": pg.conv(1, 1, ch2, ch2 * 4), "bn3": pg.bn(ch2 * 4),
         "downsample": None}
    if downsample:
        p["downsample"] = {"w": pg.conv(1, 1, ch1, ch2 * 4),
                           "bn": pg.bn(ch2 * 4)}
    return p


# ----------------------------------------------------------------------------
# Bottleneck forward (NCHW in / NCHW out, like PyTorch)
# ----------------------------------------------------------------------------

def bottleneck_fwd(x_nchw, p):
    stride = p["stride"]
    ch1, ch2 = p["w1"].shape[2], p["w1"].shape[3]
    ch4 = p["w3"].shape[3]
    c1p, c2p, c4p = (_round_up(ch1, 128), _round_up(ch2, 128),
                     _round_up(ch4, 128))

    N, _, H, W = x_nchw.shape
    # Block entry: NCHW f32 -> NHWC bf16, channel-padded once, kept through
    # the whole block (no per-layer pads / casts / transposes).
    x = jnp.transpose(x_nchw, (0, 2, 3, 1)).astype(jnp.bfloat16)
    x = _pad_last(x, c1p)                                  # (N, H, W, c1p)

    # conv1 (1x1) + bn1 + relu  [fused GEMM epilogue, resident weights]
    w1 = _prep_w_1x1(p["w1"])
    s1, t1 = _prep_bn(p["bn1"], c2p)
    y1 = conv1x1_bn(x.reshape(N * H * W, c1p), w1, s1, t1, relu=True)
    y1 = y1.reshape(N, H, W, c2p)

    # conv2 (3x3, stride, pad=1) + bn2 + relu  [taps folded in-kernel]
    w2 = _prep_w_3x3(p["w2"])
    s2, t2 = _prep_bn(p["bn2"], c2p)
    y2 = conv3x3_bn_relu(y1, w2, s2, t2, stride=stride)    # (N, Ho, Wo, c2p)
    _, Ho, Wo, _ = y2.shape

    # residual path (bf16, channel-padded)
    if p["downsample"] is not None:
        wd = _prep_w_1x1(p["downsample"]["w"])
        sd, td = _prep_bn(p["downsample"]["bn"], c4p)
        xs = x[:, ::stride, ::stride, :] if stride > 1 else x
        # TODO(synk): fold the stride-2 subsample into the GEMM A-side index_map.
        res = conv1x1_bn(xs.reshape(N * Ho * Wo, c1p), wd, sd, td, relu=False)
    else:
        res = x.reshape(N * Ho * Wo, c1p)                  # ch1 == ch4 here

    # conv3 (1x1) + bn3 + residual add + relu, all in one fused GEMM epilogue
    w3 = _prep_w_1x1(p["w3"])
    s3, t3 = _prep_bn(p["bn3"], c4p)
    y3 = conv1x1_bn(y2.reshape(N * Ho * Wo, c2p), w3, s3, t3,
                    relu=True, residual=res)               # (M, c4p) bf16

    out = y3.reshape(N, Ho, Wo, c4p)[:, :, :, :ch4].astype(jnp.float32)
    return jnp.transpose(out, (0, 3, 1, 2))                # NHWC -> NCHW


# ----------------------------------------------------------------------------
# Pure-JAX reference (fp32) for validation
# ----------------------------------------------------------------------------

def _conv_ref(x_nhwc, w_hwio, stride, padding):
    return jax.lax.conv_general_dilated(
        x_nhwc, w_hwio, window_strides=(stride, stride),
        padding=((padding, padding), (padding, padding)),
        dimension_numbers=("NHWC", "HWIO", "NHWC"))


def bottleneck_ref(x_nchw, p):
    x = jnp.transpose(x_nchw, (0, 2, 3, 1))

    def bn(v, b, relu):
        s, t = fold_bn(b)
        y = v * s + t
        return jnp.maximum(y, 0.0) if relu else y

    out = bn(_conv_ref(x, p["w1"], 1, 0), p["bn1"], True)
    out = bn(_conv_ref(out, p["w2"], p["stride"], 1), p["bn2"], True)
    out = bn(_conv_ref(out, p["w3"], 1, 0), p["bn3"], False)
    if p["downsample"] is not None:
        res = bn(_conv_ref(x, p["downsample"]["w"], p["stride"], 0),
                 p["downsample"]["bn"], False)
    else:
        res = x
    out = jnp.maximum(out + res, 0.0)
    return jnp.transpose(out, (0, 3, 1, 2))


# ----------------------------------------------------------------------------

if __name__ == "__main__":
    key = jax.random.PRNGKey(0)
    pg = ParamGen(key)

    # Case 1: downsampling Bottleneck (ch1=16, ch2=8, stride=2, downsample).
    p_ds = make_bottleneck(pg, 16, 8, stride=2, downsample=True)
    x1 = jax.random.normal(jax.random.fold_in(key, 1001),
                           (2, 16, 16, 16), jnp.float32)
    fwd_ds = jax.jit(lambda x: bottleneck_fwd(x, p_ds))
    y1 = jax.block_until_ready(fwd_ds(x1))
    assert y1.shape == (2, 32, 8, 8), y1.shape

    # Case 2: identity-residual Bottleneck (ch1=32=ch2*4, stride=1).
    p_id = make_bottleneck(pg, 32, 8, stride=1, downsample=False)
    x2 = jax.random.normal(jax.random.fold_in(key, 1002),
                           (2, 32, 16, 16), jnp.float32)
    fwd_id = jax.jit(lambda x: bottleneck_fwd(x, p_id))
    y2 = jax.block_until_ready(fwd_id(x2))
    assert y2.shape == (2, 32, 16, 16), y2.shape

    assert bool(jnp.all(jnp.isfinite(y1))) and bool(jnp.all(jnp.isfinite(y2)))

    # Validate against the fp32 pure-JAX reference (bf16 MXU operands and
    # bf16 inter-layer activations -> loose tolerance).
    for y, x, p in ((y1, x1, p_ds), (y2, x2, p_id)):
        ref = bottleneck_ref(x, p)
        rel = float(jnp.max(jnp.abs(y - ref)) / (jnp.max(jnp.abs(ref)) + 1e-6))
        assert rel < 5e-2, f"relative max error too large: {rel}"

    print("KERNEL_OK")
</pallas_src>

<mosaic_0001>
module attributes {stable_mosaic.version = 11 : i64} {
  func.func @kernel(%arg0: i32, %arg1: memref<256x128xbf16, #tpu.memory_space<vmem>>, %arg2: memref<128x128xbf16, #tpu.memory_space<vmem>>, %arg3: memref<1x128xf32, #tpu.memory_space<vmem>>, %arg4: memref<1x128xf32, #tpu.memory_space<vmem>>, %arg5: memref<256x128xbf16, #tpu.memory_space<vmem>>) attributes {dimension_semantics = [#tpu.dimension_semantics<parallel>], iteration_bounds = array<i64: 2>, scalar_prefetch = 0 : i64, scratch_operands = 0 : i64, tpu.core_type = #tpu.core_type<tc>, window_params = [{transform_indices = @transform_0, window_bounds = array<i64: 256, 128>}, {pipeline_mode = #tpu.pipeline_mode<synchronous>, transform_indices = @transform_1, window_bounds = array<i64: 128, 128>}, {pipeline_mode = #tpu.pipeline_mode<synchronous>, transform_indices = @transform_2, window_bounds = array<i64: 1, 128>}, {pipeline_mode = #tpu.pipeline_mode<synchronous>, transform_indices = @transform_3, window_bounds = array<i64: 1, 128>}, {transform_indices = @transform_4, window_bounds = array<i64: 256, 128>}]} {
    %c0 = arith.constant 0 : index
    %c0_0 = arith.constant 0 : index
    %0 = vector.load %arg1[%c0, %c0_0] : memref<256x128xbf16, #tpu.memory_space<vmem>>, vector<256x128xbf16>
    %c0_1 = arith.constant 0 : index
    %c0_2 = arith.constant 0 : index
    %1 = vector.load %arg2[%c0_1, %c0_2] : memref<128x128xbf16, #tpu.memory_space<vmem>>, vector<128x128xbf16>
    %cst = arith.constant dense<0.000000e+00> : vector<256x128xf32>
    %2 = tpu.matmul %0, %1, %cst {dimension_numbers = #tpu.dot_dimension_numbers<[1], [0], [0], [1], [0, 0, 1, 1], [], []>} : vector<256x128xbf16>, vector<128x128xbf16>, vector<256x128xf32> -> vector<256x128xf32>
    %c0_3 = arith.constant 0 : index
    %c0_4 = arith.constant 0 : index
    %3 = vector.load %arg3[%c0_3, %c0_4] : memref<1x128xf32, #tpu.memory_space<vmem>>, vector<1x128xf32>
    %4 = vector.broadcast %3 : vector<1x128xf32> to vector<256x128xf32>
    %5 = arith.mulf %2, %4 : vector<256x128xf32>
    %c0_5 = arith.constant 0 : index
    %c0_6 = arith.constant 0 : index
    %6 = vector.load %arg4[%c0_5, %c0_6] : memref<1x128xf32, #tpu.memory_space<vmem>>, vector<1x128xf32>
    %7 = vector.broadcast %6 : vector<1x128xf32> to vector<256x128xf32>
    %8 = arith.addf %5, %7 : vector<256x128xf32>
    %cst_7 = arith.constant 0.000000e+00 : f32
    %9 = vector.broadcast %cst_7 : f32 to vector<256x128xf32>
    %10 = arith.maximumf %8, %9 : vector<256x128xf32>
    %11 = arith.truncf %10 : vector<256x128xf32> to vector<256x128xbf16>
    %c0_8 = arith.constant 0 : index
    %c0_9 = arith.constant 0 : index
    %12 = vector.load %arg5[%c0_8, %c0_9] : memref<256x128xbf16, #tpu.memory_space<vmem>>, vector<256x128xbf16>
    tpu.vector_store %arg5[%c0_8, %c0_9], %11 {strides = array<i32>} : memref<256x128xbf16, #tpu.memory_space<vmem>>, vector<256x128xbf16>,
    return
  }
  func.func @transform_0(%arg0: i32) -> (i32, i32) {
    %c0_i32 = arith.constant 0 : i32
    %c0_i32_0 = arith.constant 0 : i32
    return %arg0, %c0_i32 : i32, i32
  }
  func.func @transform_1(%arg0: i32) -> (i32, i32) {
    %c0_i32 = arith.constant 0 : i32
    %c0_i32_0 = arith.constant 0 : i32
    %c0_i32_1 = arith.constant 0 : i32
    return %c0_i32, %c0_i32_0 : i32, i32
  }
  func.func @transform_2(%arg0: i32) -> (i32, i32) {
    %c0_i32 = arith.constant 0 : i32
    %c0_i32_0 = arith.constant 0 : i32
    %c0_i32_1 = arith.constant 0 : i32
    return %c0_i32, %c0_i32_0 : i32, i32
  }
  func.func @transform_3(%arg0: i32) -> (i32, i32) {
    %c0_i32 = arith.constant 0 : i32
    %c0_i32_0 = arith.constant 0 : i32
    %c0_i32_1 = arith.constant 0 : i32
    return %c0_i32, %c0_i32_0 : i32, i32
  }
  func.func @transform_4(%arg0: i32) -> (i32, i32) {
    %c0_i32 = arith.constant 0 : i32
    %c0_i32_0 = arith.constant 0 : i32
    return %arg0, %c0_i32 : i32, i32
  }
}

module attributes {stable_mosaic.version = 11 : i64} {
  func.func @kernel(%arg0: i32, %arg1: memref<1x18x9x128xbf16, #tpu.memory_space<vmem>>, %arg2: memref<1x18x9x128xbf16, #tpu.memory_space<vmem>>, %arg3: memref<9x128x128xbf16, #tpu.memory_space<vmem>>, %arg4: memref<1x128xf32, #tpu.memory_space<vmem>>, %arg5: memref<1x128xf32, #tpu.memory_space<vmem>>, %arg6: memref<1x8x8x128xbf16, #tpu.memory_space<vmem>>) attributes {dimension_semantics = [#tpu.dimension_semantics<parallel>], iteration_bounds = array<i64: 2>, scalar_prefetch = 0 : i64, scratch_operands = 0 : i64, tpu.core_type = #tpu.core_type<tc>, window_params = [{transform_indices = @transform_0, window_bounds = array<i64: 1, 18, 9, 128>}, {transform_indices = @transform_1, window_bounds = array<i64: 1, 18, 9, 128>}, {pipeline_mode = #tpu.pipeline_mode<synchronous>, transform_indices = @transform_2, window_bounds = array<i64: 9, 128, 128>}, {pipeline_mode = #tpu.pipeline_mode<synchronous>, transform_indices = @transform_3, window_bounds = array<i64: 1, 128>}, {pipeline_mode = #tpu.pipeline_mode<synchronous>, transform_indices = @transform_4, window_bounds = array<i64: 1, 128>}, {transform_indices = @transform_5, window_bounds = array<i64: 1, 8, 8, 128>}]} {
    %cst = arith.constant 0.000000e+00 : f32
    %0 = vector.broadcast %cst : f32 to vector<8x128xf32>
    %c0 = arith.constant 0 : index
    %c0_0 = arith.constant 0 : index
    %c0_1 = arith.constant 0 : index
    %c0_2 = arith.constant 0 : index
    %1 = vector.load %arg1[%c0, %c0_0, %c0_1, %c0_2] : memref<1x18x9x128xbf16, #tpu.memory_space<vmem>>, vector<1x1x9x128xbf16>
    %2 = vector.shape_cast %1 : vector<1x1x9x128xbf16> to vector<9x128xbf16>
    %c0_3 = arith.constant 0 : index
    %c0_4 = arith.constant 0 : index
    %c0_5 = arith.constant 0 : index
    %c0_6 = arith.constant 0 : index
    %3 = vector.load %arg2[%c0_3, %c0_4, %c0_5, %c0_6] : memref<1x18x9x128xbf16, #tpu.memory_space<vmem>>, vector<1x1x9x128xbf16>
    %4 = vector.shape_cast %3 : vector<1x1x9x128xbf16> to vector<9x128xbf16>
    %c0_7 = arith.constant 0 : index
    %c0_8 = arith.constant 0 : index
    %c0_9 = arith.constant 0 : index
    %5 = vector.load %arg3[%c0_7, %c0_8, %c0_9] : memref<9x128x128xbf16, #tpu.memory_space<vmem>>, vector<1x128x128xbf16>
    %6 = vector.shape_cast %5 : vector<1x128x128xbf16> to vector<128x128xbf16>
    %cst_10 = arith.constant dense<0.000000e+00> : vector<9x128xf32>
    %7 = tpu.matmul %2, %6, %cst_10 {dimension_numbers = #tpu.dot_dimension_numbers<[1], [0], [0], [1], [0, 0, 1, 1], [], []>} : vector<9x128xbf16>, vector<128x128xbf16>, vector<9x128xf32> -> vector<9x128xf32>
    %8 = vector.extract_strided_slice %7 {offsets = [0, 0], sizes = [8, 128], strides = [1, 1]} : vector<9x128xf32> to vector<8x128xf32>
    %9 = arith.addf %0, %8 : vector<8x128xf32>
    %c1 = arith.constant 1 : index
    %c0_11 = arith.constant 0 : index
    %c0_12 = arith.constant 0 : index
    %10 = vector.load %arg3[%c1, %c0_11, %c0_12] : memref<9x128x128xbf16, #tpu.memory_space<vmem>>, vector<1x128x128xbf16>
    %11 = vector.shape_cast %10 : vector<1x128x128xbf16> to vector<128x128xbf16>
    %cst_13 = arith.constant dense<0.000000e+00> : vector<9x128xf32>
    %12 = tpu.matmul %4, %11, %cst_13 {dimension_numbers = #tpu.dot_dimension_numbers<[1], [0], [0], [1], [0, 0, 1, 1], [], []>} : vector<9x128xbf16>, vector<128x128xbf16>, vector<9x128xf32> -> vector<9x128xf32>
    %13 = vector.extract_strided_slice %12 {offsets = [0, 0], sizes = [8, 128], strides = [1, 1]} : vector<9x128xf32> to vector<8x128xf32>
    %14 = arith.addf %9, %13 : vector<8x128xf32>
    %c2 = arith.constant 2 : index
    %c0_14 = arith.constant 0 : index
    %c0_15 = arith.constant 0 : index
    %15 = vector.load %arg3[%c2, %c0_14, %c0_15] : memref<9x128x128xbf16, #tpu.memory_space<vmem>>, vector<1x128x128xbf16>
    %16 = vector.shape_cast %15 : vector<1x128x128xbf16> to vector<128x128xbf16>
    %cst_16 = arith.constant dense<0.000000e+00> : vector<9x128xf32>
    %17 = tpu.matmul %2, %16, %cst_16 {dimension_numbers = #tpu.dot_dimension_numbers<[1], [0], [0], [1], [0, 0, 1, 1], [], []>} : vector<9x128xbf16>, vector<128x128xbf16>, vector<9x128xf32> -> vector<9x128xf32>
    %18 = vector.extract_strided_slice %17 {offsets = [1, 0], sizes = [8, 128], strides = [1, 1]} : vector<9x128xf32> to vector<8x128xf32>
    %19 = arith.addf %14, %18 : vector<8x128xf32>
    %c0_17 = arith.constant 0 : index
    %c1_18 = arith.constant 1 : index
    %c0_19 = arith.constant 0 : index
    %c0_20 = arith.constant 0 : index
    %20 = vector.load %arg1[%c0_17, %c1_18, %c0_19, %c0_20] : memref<1x18x9x128xbf16, #tpu.memory_space<vmem>>, vector<1x1x9x128xbf16>
    %21 = vector.shape_cast %20 : vector<1x1x9x128xbf16> to vector<9x128xbf16>
    %c0_21 = arith.constant 0 : index
    %c1_22 = arith.constant 1 : index
    %c0_23 = arith.constant 0 : index
    %c0_24 = arith.constant 0 : index
    %22 = vector.load %arg2[%c0_21, %c1_22, %c0_23, %c0_24] : memref<1x18x9x128xbf16, #tpu.memory_space<vmem>>, vector<1x1x9x128xbf16>
    %23 = vector.shape_cast %22 : vector<1x1x9x128xbf16> to vector<9x128xbf16>
    %c3 = arith.constant 3 : index
    %c0_25 = arith.constant 0 : index
    %c0_26 = arith.constant 0 : index
    %24 = vector.load %arg3[%c3, %c0_25, %c0_26] : memref<9x128x128xbf16, #tpu.memory_space<vmem>>, vector<1x128x128xbf16>
    %25 = vector.shape_cast %24 : vector<1x128x128xbf16> to vector<128x128xbf16>
    %cst_27 = arith.constant dense<0.000000e+00> : vector<9x128xf32>
    %26 = tpu.matmul %21, %25, %cst_27 {dimension_numbers = #tpu.dot_dimension_numbers<[1], [0], [0], [1], [0, 0, 1, 1], [], []>} : vector<9x128xbf16>, vector<128x128xbf16>, vector<9x128xf32> -> vector<9x128xf32>
    %27 = vector.extract_strided_slice %26 {offsets = [0, 0], sizes = [8, 128], strides = [1, 1]} : vector<9x128xf32> to vector<8x128xf32>
    %28 = arith.addf %19, %27 : vector<8x128xf32>
    %c4 = arith.constant 4 : index
    %c0_28 = arith.constant 0 : index
    %c0_29 = arith.constant 0 : index
    %29 = vector.load %arg3[%c4, %c0_28, %c0_29] : memref<9x128x128xbf16, #tpu.memory_space<vmem>>, vector<1x128x128xbf16>
    %30 = vector.shape_cast %29 : vector<1x128x128xbf16> to vector<128x128xbf16>
    %cst_30 = arith.constant dense<0.000000e+00> : vector<9x128xf32>
    %31 = tpu.matmul %23, %30, %cst_30 {dimension_numbers = #tpu.dot_dimension_numbers<[1], [0], [0], [1], [0, 0, 1, 1], [], []>} : vector<9x128xbf16>, vector<128x128xbf16>, vector<9x128xf32> -> vector<9x128xf32>
    %32 = vector.extract_strided_slice %31 {offsets = [0, 0], sizes = [8, 128], strides = [1, 1]} : vector<9x128xf32> to vector<8x128xf32>
    %33 = arith.addf %28, %32 : vector<8x128xf32>
    %c5 = arith.constant 5 : index
    %c0_31 = arith.constant 0 : index
    %c0_32 = arith.constant 0 : index
    %34 = vector.load %arg3[%c5, %c0_31, %c0_32] : memref<9x128x128xbf16, #tpu.memory_space<vmem>>, vector<1x128x128xbf16>
    %35 = vector.shape_cast %34 : vector<1x128x128xbf16> to vector<128x128xbf16>
    %cst_33 = arith.constant dense<0.000000e+00> : vector<9x128xf32>
    %36 = tpu.matmul %21, %35, %cst_33 {dimension_numbers = #tpu.dot_dimension_numbers<[1], [0], [0], [1], [0, 0, 1, 1], [], []>} : vector<9x128xbf16>, vector<128x128xbf16>, vector<9x128xf32> -> vector<9x128xf32>
    %37 = vector.extract_strided_slice %36 {offsets = [1, 0], sizes = [8, 128], strides = [1, 1]} : vector<9x128xf32> to vector<8x128xf32>
    %38 = arith.addf %33, %37 : vector<8x128xf32>
    %c0_34 = arith.constant 0 : index
    %c2_35 = arith.constant 2 : index
    %c0_36 = arith.constant 0 : index
    %c0_37 = arith.constant 0 : index
    %39 = vector.load %arg1[%c0_34, %c2_35, %c0_36, %c0_37] : memref<1x18x9x128xbf16, #tpu.memory_space<vmem>>, vector<1x1x9x128xbf16>
    %40 = vector.shape_cast %39 : vector<1x1x9x128xbf16> to vector<9x128xbf16>
    %c0_38 = arith.constant 0 : index
    %c2_39 = arith.constant 2 : index
    %c0_40 = arith.constant 0 : index
    %c0_41 = arith.constant 0 : index
    %41 = vector.load %arg2[%c0_38, %c2_39, %c0_40, %c0_41] : memref<1x18x9x128xbf16, #tpu.memory_space<vmem>>, vector<1x1x9x128xbf16>
    %42 = vector.shape_cast %41 : vector<1x1x9x128xbf16> to vector<9x128xbf16>
    %c6 = arith.constant 6 : index
    %c0_42 = arith.constant 0 : index
    %c0_43 = arith.constant 0 : index
    %43 = vector.load %arg3[%c6, %c0_42, %c0_43] : memref<9x128x128xbf16, #tpu.memory_space<vmem>>, vector<1x128x128xbf16>
    %44 = vector.shape_cast %43 : vector<1x128x128xbf16> to vector<128x128xbf16>
    %cst_44 = arith.constant dense<0.000000e+00> : vector<9x128xf32>
    %45 = tpu.matmul %40, %44, %cst_44 {dimension_numbers = #tpu.dot_dimension_numbers<[1], [0], [0], [1], [0, 0, 1, 1], [], []>} : vector<9x128xbf16>, vector<128x128xbf16>, vector<9x128xf32> -> vector<9x128xf32>
    %46 = vector.extract_strided_slice %45 {offsets = [0, 0], sizes = [8, 128], strides = [1, 1]} : vector<9x128xf32> to vector<8x128xf32>
    %47 = arith.addf %38, %46 : vector<8x128xf32>
    %c7 = arith.constant 7 : index
    %c0_45 = arith.constant 0 : index
    %c0_46 = arith.constant 0 : index
    %48 = vector.load %arg3[%c7, %c0_45, %c0_46] : memref<9x128x128xbf16, #tpu.memory_space<vmem>>, vector<1x128x128xbf16>
    %49 = vector.shape_cast %48 : vector<1x128x128xbf16> to vector<128x128xbf16>
    %cst_47 = arith.constant dense<0.000000e+00> : vector<9x128xf32>
    %50 = tpu.matmul %42, %49, %cst_47 {dimension_numbers = #tpu.dot_dimension_numbers<[1], [0], [0], [1], [0, 0, 1, 1], [], []>} : vector<9x128xbf16>, vector<128x128xbf16>, vector<9x128xf32> -> vector<9x128xf32>
    %51 = vector.extract_strided_slice %50 {offsets = [0, 0], sizes = [8, 128], strides = [1, 1]} : vector<9x128xf32> to vector<8x128xf32>
    %52 = arith.addf %47, %51 : vector<8x128xf32>
    %c8 = arith.constant 8 : index
    %c0_48 = arith.constant 0 : index
    %c0_49 = arith.constant 0 : index
    %53 = vector.load %arg3[%c8, %c0_48, %c0_49] : memref<9x128x128xbf16, #tpu.memory_space<vmem>>, vector<1x128x128xbf16>
    %54 = vector.shape_cast %53 : vector<1x128x128xbf16> to vector<128x128xbf16>
    %cst_50 = arith.constant dense<0.000000e+00> : vector<9x128xf32>
    %55 = tpu.matmul %40, %54, %cst_50 {dimension_numbers = #tpu.dot_dimension_numbers<[1], [0], [0], [1], [0, 0, 1, 1], [], []>} : vector<9x128xbf16>, vector<128x128xbf16>, vector<9x128xf32> -> vector<9x128xf32>
    %56 = vector.extract_strided_slice %55 {offsets = [1, 0], sizes = [8, 128], strides = [1, 1]} : vector<9x128xf32> to vector<8x128xf32>
    %57 = arith.addf %52, %56 : vector<8x128xf32>
    %c0_51 = arith.constant 0 : index
    %c0_52 = arith.constant 0 : index
    %58 = vector.load %arg4[%c0_51, %c0_52] : memref<1x128xf32, #tpu.memory_space<vmem>>, vector<1x128xf32>
    %59 = vector.broadcast %58 : vector<1x128xf32> to vector<8x128xf32>
    %60 = arith.mulf %57, %59 : vector<8x128xf32>
    %c0_53 = arith.constant 0 : index
    %c0_54 = arith.constant 0 : index
    %61 = vector.load %arg5[%c0_53, %c0_54] : memref<1x128xf32, #tpu.memory_space<vmem>>, vector<1x128xf32>
    %62 = vector.broadcast %61 : vector<1x128xf32> to vector<8x128xf32>
    %63 = arith.addf %60, %62 : vector<8x128xf32>
    %cst_55 = arith.constant 0.000000e+00 : f32
    %64 = vector.broadcast %cst_55 : f32 to vector<8x128xf32>
    %65 = arith.maximumf %63, %64 : vector<8x128xf32>
    %66 = arith.truncf %65 : vector<8x128xf32> to vector<8x128xbf16>
    %c0_56 = arith.constant 0 : index
    %c0_57 = arith.constant 0 : index
    %c0_58 = arith.constant 0 : index
    %c0_59 = arith.constant 0 : index
    %67 = vector.load %arg6[%c0_56, %c0_57, %c0_58, %c0_59] : memref<1x8x8x128xbf16, #tpu.memory_space<vmem>>, vector<1x1x8x128xbf16>
    %68 = vector.shape_cast %67 : vector<1x1x8x128xbf16> to vector<8x128xbf16>
    %69 = vector.shape_cast %66 : vector<8x128xbf16> to vector<1x1x8x128xbf16>
    tpu.vector_store %arg6[%c0_56, %c0_57, %c0_58, %c0_59], %69 {strides = array<i32>} : memref<1x8x8x128xbf16, #tpu.memory_space<vmem>>, vector<1x1x8x128xbf16>,
    %cst_60 = arith.constant 0.000000e+00 : f32
    %70 = vector.broadcast %cst_60 : f32 to vector<8x128xf32>
    %c0_61 = arith.constant 0 : index
    %c2_62 = arith.constant 2 : index
    %c0_63 = arith.constant 0 : index
    %c0_64 = arith.constant 0 : index
    %71 = vector.load %arg1[%c0_61, %c2_62, %c0_63, %c0_64] : memref<1x18x9x128xbf16, #tpu.memory_space<vmem>>, vector<1x1x9x128xbf16>
    %72 = vector.shape_cast %71 : vector<1x1x9x128xbf16> to vector<9x128xbf16>
    %c0_65 = arith.constant 0 : index
    %c2_66 = arith.constant 2 : index
    %c0_67 = arith.constant 0 : index
    %c0_68 = arith.constant 0 : index
    %73 = vector.load %arg2[%c0_65, %c2_66, %c0_67, %c0_68] : memref<1x18x9x128xbf16, #tpu.memory_space<vmem>>, vector<1x1x9x128xbf16>
    %74 = vector.shape_cast %73 : vector<1x1x9x128xbf16> to vector<9x128xbf16>
    %c0_69 = arith.constant 0 : index
    %c0_70 = arith.constant 0 : index
    %c0_71 = arith.constant 0 : index
    %75 = vector.load %arg3[%c0_69, %c0_70, %c0_71] : memref<9x128x128xbf16, #tpu.memory_space<vmem>>, vector<1x128x128xbf16>
    %76 = vector.shape_cast %75 : vector<1x128x128xbf16> to vector<128x128xbf16>
    %cst_72 = arith.constant dense<0.000000e+00> : vector<9x128xf32>
    %77 = tpu.matmul %72, %76, %cst_72 {dimension_numbers = #tpu.dot_dimension_numbers<[1], [0], [0], [1], [0, 0, 1, 1], [], []>} : vector<9x128xbf16>, vector<128x128xbf16>, vector<9x128xf32> -> vector<9x128xf32>
    %78 = vector.extract_strided_slice %77 {offsets = [0, 0], sizes = [8, 128], strides = [1, 1]} : vector<9x128xf32> to vector<8x128xf32>
    %79 = arith.addf %70, %78 : vector<8x128xf32>
    %c1_73 = arith.constant 1 : index
    %c0_74 = arith.constant 0 : index
    %c0_75 = arith.constant 0 : index
    %80 = vector.load %arg3[%c1_73, %c0_74, %c0_75] : memref<9x128x128xbf16, #tpu.memory_space<vmem>>, vector<1x128x128xbf16>
    %81 = vector.shape_cast %80 : vector<1x128x128xbf16> to vector<128x128xbf16>
    %cst_76 = arith.constant dense<0.000000e+00> : vector<9x128xf32>
    %82 = tpu.matmul %74, %81, %cst_76 {dimension_numbers = #tpu.dot_dimension_numbers<[1], [0], [0], [1], [0, 0, 1, 1], [], []>} : vector<9x128xbf16>, vector<128x128xbf16>, vector<9x128xf32> -> vector<9x128xf32>
    %83 = vector.extract_strided_slice %82 {offsets = [0, 0], sizes = [8, 128], strides = [1, 1]} : vector<9x128xf32> to vector<8x128xf32>
    %84 = arith.addf %79, %83 : vector<8x128xf32>
    %c2_77 = arith.constant 2 : index
    %c0_78 = arith.constant 0 : index
    %c0_79 = arith.constant 0 : index
    %85 = vector.load %arg3[%c2_77, %c0_78, %c0_79] : memref<9x128x128xbf16, #tpu.memory_space<vmem>>, vector<1x128x128xbf16>
    %86 = vector.shape_cast %85 : vector<1x128x128xbf16> to vector<128x128xbf16>
    %cst_80 = arith.constant dense<0.000000e+00> : vector<9x128xf32>
    %87 = tpu.matmul %72, %86, %cst_80 {dimension_numbers = #tpu.dot_dimension_numbers<[1], [0], [0], [1], [0, 0, 1, 1], [], []>} : vector<9x128xbf16>, vector<128x128xbf16>, vector<9x128xf32> -> vector<9x128xf32>
    %88 = vector.extract_strided_slice %87 {offsets = [1, 0], sizes = [8, 128], strides = [1, 1]} : vector<9x128xf32> to vector<8x128xf32>
    %89 = arith.addf %84, %88 : vector<8x128xf32>
    %c0_81 = arith.constant 0 : index
    %c3_82 = arith.constant 3 : index
    %c0_83 = arith.constant 0 : index
    %c0_84 = arith.constant 0 : index
    %90 = vector.load %arg1[%c0_81, %c3_82, %c0_83, %c0_84] : memref<1x18x9x128xbf16, #tpu.memory_space<vmem>>, vector<1x1x9x128xbf16>
    %91 = vector.shape_cast %90 : vector<1x1x9x128xbf16> to vector<9x128xbf16>
    %c0_85 = arith.constant 0 : index
    %c3_86 = arith.constant 3 : index
    %c0_87 = arith.constant 0 : index
    %c0_88 = arith.constant 0 : index
    %92 = vector.load %arg2[%c0_85, %c3_86, %c0_87, %c0_88] : memref<1x18x9x128xbf16, #tpu.memory_space<vmem>>, vector<1x1x9x128xbf16>
    %93 = vector.shape_cast %92 : vector<1x1x9x128xbf16> to vector<9x128xbf16>
    %c3_89 = arith.constant 3 : index
    %c0_90 = arith.constant 0 : index
    %c0_91 = arith.constant 0 : index
    %94 = vector.load %arg3[%c3_89, %c0_90, %c0_91] : memref<9x128x128xbf16, #tpu.memory_space<vmem>>, vector<1x128x128xbf16>
    %95 = vector.shape_cast %94 : vector<1x128x128xbf16> to vector<128x128xbf16>
    %cst_92 = arith.constant dense<0.000000e+00> : vector<9x128xf32>
    %96 = tpu.matmul %91, %95, %cst_92 {dimension_numbers = #tpu.dot_dimension_numbers<[1], [0], [0], [1], [0, 0, 1, 1], [], []>} : vector<9x128xbf16>, vector<128x128xbf16>, vector<9x128xf32> -> vector<9x128xf32>
    %97 = vector.extract_strided_slice %96 {offsets = [0, 0], sizes = [8, 128], strides = [1, 1]} : vector<9x128xf32> to vector<8x128xf32>
    %98 = arith.addf %89, %97 : vector<8x128xf32>
    %c4_93 = arith.constant 4 : index
    %c0_94 = arith.constant 0 : index
    %c0_95 = arith.constant 0 : index
    %99 = vector.load %arg3[%c4_93, %c0_94, %c0_95] : memref<9x128x128xbf16, #tpu.memory_space<vmem>>, vector<1x128x128xbf16>
    %100 = vector.shape_cast %99 : vector<1x128x128xbf16> to vector<128x128xbf16>
    %cst_96 = arith.constant dense<0.000000e+00> : vector<9x128xf32>
    %101 = tpu.matmul %93, %100, %cst_96 {dimension_numbers = #tpu.dot_dimension_numbers<[1], [0], [0], [1], [0, 0, 1, 1], [], []>} : vector<9x128xbf16>, vector<128x128xbf16>, vector<9x128xf32> -> vector<9x128xf32>
    %102 = vector.extract_strided_slice %101 {offsets = [0, 0], sizes = [8, 128], strides = [1, 1]} : vector<9x128xf32> to vector<8x128xf32>
    %103 = arith.addf %98, %102 : vector<8x128xf32>
    %c5_97 = arith.constant 5 : index
    %c0_98 = arith.constant 0 : index
    %c0_99 = arith.constant 0 : index
    %104 = vector.load %arg3[%c5_97, %c0_98, %c0_99] : memref<9x128x128xbf16, #tpu.memory_space<vmem>>, vector<1x128x128xbf16>
    %105 = vector.shape_cast %104 : vector<1x128x128xbf16> to vector<128x128xbf16>
    %cst_100 = arith.constant dense<0.000000e+00> : vector<9x128xf32>
    %106 = tpu.matmul %91, %105, %cst_100 {dimension_numbers = #tpu.dot_dimension_numbers<[1], [0], [0], [1], [0, 0, 1, 1], [], []>} : vector<9x128xbf16>, vector<128x128xbf16>, vector<9x128xf32> -> vector<9x128xf32>
    %107 = vector.extract_strided_slice %106 {offsets = [1, 0], sizes = [8, 128], strides = [1, 1]} : vector<9x128xf32> to vector<8x128xf32>
    %108 = arith.addf %103, %107 : vector<8x128xf32>
    %c0_101 = arith.constant 0 : index
    %c4_102 = arith.constant 4 : index
    %c0_103 = arith.constant 0 : index
    %c0_104 = arith.constant 0 : index
    %109 = vector.load %arg1[%c0_101, %c4_102, %c0_103, %c0_104] : memref<1x18x9x128xbf16, #tpu.memory_space<vmem>>, vector<1x1x9x128xbf16>
    %110 = vector.shape_cast %109 : vector<1x1x9x128xbf16> to vector<9x128xbf16>
    %c0_105 = arith.constant 0 : index
    %c4_106 = arith.constant 4 : index
    %c0_107 = arith.constant 0 : index
    %c0_108 = arith.constant 0 : index
    %111 = vector.load %arg2[%c0_105, %c4_106, %c0_107, %c0_108] : memref<1x18x9x128xbf16, #tpu.memory_space<vmem>>, vector<1x1x9x128xbf16>
    %112 = vector.shape_cast %111 : vector<1x1x9x128xbf16> to vector<9x128xbf16>
    %c6_109 = arith.constant 6 : index
    %c0_110 = arith.constant 0 : index
    %c0_111 = arith.constant 0 : index
    %113 = vector.load %arg3[%c6_109, %c0_110, %c0_111] : memref<9x128x128xbf16, #tpu.memory_space<vmem>>, vector<1x128x128xbf16>
    %114 = vector.shape_cast %113 : vector<1x128x128xbf16> to vector<128x128xbf16>
    %cst_112 = arith.constant dense<0.000000e+00> : vector<9x128xf32>
    %115 = tpu.matmul %110, %114, %cst_112 {dimension_numbers = #tpu.dot_dimension_numbers<[1], [0], [0], [1], [0, 0, 1, 1], [], []>} : vector<9x128xbf16>, vector<128x128xbf16>, vector<9x128xf32> -> vector<9x128xf32>
    %116 = vector.extract_strided_slice %115 {offsets = [0, 0], sizes = [8, 128], strides = [1, 1]} : vector<9x128xf32> to vector<8x128xf32>
    %117 = arith.addf %108, %116 : vector<8x128xf32>
    %c7_113 = arith.constant 7 : index
    %c0_114 = arith.constant 0 : index
    %c0_115 = arith.constant 0 : index
    %118 = vector.load %arg3[%c7_113, %c0_114, %c0_115] : memref<9x128x128xbf16, #tpu.memory_space<vmem>>, vector<1x128x128xbf16>
    %119 = vector.shape_cast %118 : vector<1x128x128xbf16> to vector<128x128xbf16>
    %cst_116 = arith.constant dense<0.000000e+00> : vector<9x128xf32>
    %120 = tpu.matmul %112, %119, %cst_116 {dimension_numbers = #tpu.dot_dimension_numbers<[1], [0], [0], [1], [0, 0, 1, 1], [], []>} : vector<9x128xbf16>, vector<128x128xbf16>, vector<9x128xf32> -> vector<9x128xf32>
    %121 = vector.extract_strided_slice %120 {offsets = [0, 0], sizes = [8, 128], strides = [1, 1]} : vector<9x128xf32> to vector<8x128xf32>
    %122 = arith.addf %117, %121 : vector<8x128xf32>
    %c8_117 = arith.constant 8 : index
    %c0_118 = arith.constant 0 : index
    %c0_119 = arith.constant 0 : index
    %123 = vector.load %arg3[%c8_117, %c0_118, %c0_119] : memref<9x128x128xbf16, #tpu.memory_space<vmem>>, vector<1x128x128xbf16>
    %124 = vector.shape_cast %123 : vector<1x128x128xbf16> to vector<128x128xbf16>
    %cst_120 = arith.constant dense<0.000000e+00> : vector<9x128xf32>
    %125 = tpu.matmul %110, %124, %cst_120 {dimension_numbers = #tpu.dot_dimension_numbers<[1], [0], [0], [1], [0, 0, 1, 1], [], []>} : vector<9x128xbf16>, vector<128x128xbf16>, vector<9x128xf32> -> vector<9x128xf32>
    %126 = vector.extract_strided_slice %125 {offsets = [1, 0], sizes = [8, 128], strides = [1, 1]} : vector<9x128xf32> to vector<8x128xf32>
    %127 = arith.addf %122, %126 : vector<8x128xf32>
    %c0_121 = arith.constant 0 : index
    %c0_122 = arith.constant 0 : index
    %128 = vector.load %arg4[%c0_121, %c0_122] : memref<1x128xf32, #tpu.memory_space<vmem>>, vector<1x128xf32>
    %129 = vector.broadcast %128 : vector<1x128xf32> to vector<8x128xf32>
    %130 = arith.mulf %127, %129 : vector<8x128xf32>
    %c0_123 = arith.constant 0 : index
    %c0_124 = arith.constant 0 : index
    %131 = vector.load %arg5[%c0_123, %c0_124] : memref<1x128xf32, #tpu.memory_space<vmem>>, vector<1x128xf32>
    %132 = vector.broadcast %131 : vector<1x128xf32> to vector<8x128xf32>
    %133 = arith.addf %130, %132 : vector<8x128xf32>
    %cst_125 = arith.constant 0.000000e+00 : f32
    %134 = vector.broadcast %cst_125 : f32 to vector<8x128xf32>
    %135 = arith.maximumf %133, %134 : vector<8x128xf32>
    %136 = arith.truncf %135 : vector<8x128xf32> to vector<8x128xbf16>
    %c0_126 = arith.constant 0 : index
    %c1_127 = arith.constant 1 : index
    %c0_128 = arith.constant 0 : index
    %c0_129 = arith.constant 0 : index
    %137 = vector.load %arg6[%c0_126, %c1_127, %c0_128, %c0_129] : memref<1x8x8x128xbf16, #tpu.memory_space<vmem>>, vector<1x1x8x128xbf16>
    %138 = vector.shape_cast %137 : vector<1x1x8x128xbf16> to vector<8x128xbf16>
    %139 = vector.shape_cast %136 : vector<8x128xbf16> to vector<1x1x8x128xbf16>
    tpu.vector_store %arg6[%c0_126, %c1_127, %c0_128, %c0_129], %139 {strides = array<i32>} : memref<1x8x8x128xbf16, #tpu.memory_space<vmem>>, vector<1x1x8x128xbf16>,
    %cst_130 = arith.constant 0.000000e+00 : f32
    %140 = vector.broadcast %cst_130 : f32 to vector<8x128xf32>
    %c0_131 = arith.constant 0 : index
    %c4_132 = arith.constant 4 : index
    %c0_133 = arith.constant 0 : index
    %c0_134 = arith.constant 0 : index
    %141 = vector.load %arg1[%c0_131, %c4_132, %c0_133, %c0_134] : memref<1x18x9x128xbf16, #tpu.memory_space<vmem>>, vector<1x1x9x128xbf16>
    %142 = vector.shape_cast %141 : vector<1x1x9x128xbf16> to vector<9x128xbf16>
    %c0_135 = arith.constant 0 : index
    %c4_136 = arith.constant 4 : index
    %c0_137 = arith.constant 0 : index
    %c0_138 = arith.constant 0 : index
    %143 = vector.load %arg2[%c0_135, %c4_136, %c0_137, %c0_138] : memref<1x18x9x128xbf16, #tpu.memory_space<vmem>>, vector<1x1x9x128xbf16>
    %144 = vector.shape_cast %143 : vector<1x1x9x128xbf16> to vector<9x128xbf16>
    %c0_139 = arith.constant 0 : index
    %c0_140 = arith.constant 0 : index
    %c0_141 = arith.constant 0 : index
    %145 = vector.load %arg3[%c0_139, %c0_140, %c0_141] : memref<9x128x128xbf16, #tpu.memory_space<vmem>>, vector<1x128x128xbf16>
    %146 = vector.shape_cast %145 : vector<1x128x128xbf16> to vector<128x128xbf16>
    %cst_142 = arith.constant dense<0.000000e+00> : vector<9x128xf32>
    %147 = tpu.matmul %142, %146, %cst_142 {dimension_numbers = #tpu.dot_dimension_numbers<[1], [0], [0], [1], [0, 0, 1, 1], [], []>} : vector<9x128xbf16>, vector<128x128xbf16>, vector<9x128xf32> -> vector<9x128xf32>
    %148 = vector.extract_strided_slice %147 {offsets = [0, 0], sizes = [8, 128], strides = [1, 1]} : vector<9x128xf32> to vector<8x128xf32>
    %149 = arith.addf %140, %148 : vector<8x128xf32>
    %c1_143 = arith.constant 1 : index
    %c0_144 = arith.constant 0 : index
    %c0_145 = arith.constant 0 : index
    %150 = vector.load %arg3[%c1_143, %c0_144, %c0_145] : memref<9x128x128xbf16, #tpu.memory_space<vmem>>, vector<1x128x128xbf16>
    %151 = vector.shape_cast %150 : vector<1x128x128xbf16> to vector<128x128xbf16>
    %cst_146 = arith.constant dense<0.000000e+00> : vector<9x128xf32>
    %152 = tpu.matmul %144, %151, %cst_146 {dimension_numbers = #tpu.dot_dimension_numbers<[1], [0], [0], [1], [0, 0, 1, 1], [], []>} : vector<9x128xbf16>, vector<128x128xbf16>, vector<9x128xf32> -> vector<9x128xf32>
    %153 = vector.extract_strided_slice %152 {offsets = [0, 0], sizes = [8, 128], strides = [1, 1]} : vector<9x128xf32> to vector<8x128xf32>
    %154 = arith.addf %149, %153 : vector<8x128xf32>
    %c2_147 = arith.constant 2 : index
    %c0_148 = arith.constant 0 : index
    %c0_149 = arith.constant 0 : index
    %155 = vector.load %arg3[%c2_147, %c0_148, %c0_149] : memref<9x128x128xbf16, #tpu.memory_space<vmem>>, vector<1x128x128xbf16>
    %156 = vector.shape_cast %155 : vector<1x128x128xbf16> to vector<128x128xbf16>
    %cst_150 = arith.constant dense<0.000000e+00> : vector<9x128xf32>
    %157 = tpu.matmul %142, %156, %cst_150 {dimension_numbers = #tpu.dot_dimension_numbers<[1], [0], [0], [1], [0, 0, 1, 1], [], []>} : vector<9x128xbf16>, vector<128x128xbf16>, vector<9x128xf32> -> vector<9x128xf32>
    %158 = vector.extract_strided_slice %157 {offsets = [1, 0], sizes = [8, 128], strides = [1, 1]} : vector<9x128xf32> to vector<8x128xf32>
    %159 = arith.addf %154, %158 : vector<8x128xf32>
    %c0_151 = arith.constant 0 : index
    %c5_152 = arith.constant 5 : index
    %c0_153 = arith.constant 0 : index
    %c0_154 = arith.constant 0 : index
    %160 = vector.load %arg1[%c0_151, %c5_152, %c0_153, %c0_154] : memref<1x18x9x128xbf16, #tpu.memory_space<vmem>>, vector<1x1x9x128xbf16>
    %161 = vector.shape_cast %160 : vector<1x1x9x128xbf16> to vector<9x128xbf16>
    %c0_155 = arith.constant 0 : index
    %c5_156 = arith.constant 5 : index
    %c0_157 = arith.constant 0 : index
    %c0_158 = arith.constant 0 : index
    %162 = vector.load %arg2[%c0_155, %c5_156, %c0_157, %c0_158] : memref<1x18x9x128xbf16, #tpu.memory_space<vmem>>, vector<1x1x9x128xbf16>
    %163 = vector.shape_cast %162 : vector<1x1x9x128xbf16> to vector<9x128xbf16>
    %c3_159 = arith.constant 3 : index
    %c0_160 = arith.constant 0 : index
    %c0_161 = arith.constant 0 : index
    %164 = vector.load %arg3[%c3_159, %c0_160, %c0_161] : memref<9x128x128xbf16, #tpu.memory_space<vmem>>, vector<1x128x128xbf16>
    %165 = vector.shape_cast %164 : vector<1x128x128xbf16> to vector<128x128xbf16>
    %cst_162 = arith.constant dense<0.000000e+00> : vector<9x128xf32>
    %166 = tpu.matmul %161, %165, %cst_162 {dimension_numbers = #tpu.dot_dimension_numbers<[1], [0], [0], [1], [0, 0, 1, 1], [], []>} : vector<9x128xbf16>, vector<128x128xbf16>, vector<9x128xf32> -> vector<9x128xf32>
    %167 = vector.extract_strided_slice %166 {offsets = [0, 0], sizes = [8, 128], strides = [1, 1]} : vector<9x128xf32> to vector<8x128xf32>
    %168 = arith.addf %159, %167 : vector<8x128xf32>
    %c4_163 = arith.constant 4 : index
    %c0_164 = arith.constant 0 : index
    %c0_165 = arith.constant 0 : index
    %169 = vector.load %arg3[%c4_163, %c0_164, %c0_165] : memref<9x128x128xbf16, #tpu.memory_space<vmem>>, vector<1x128x128xbf16>
    %170 = vector.shape_cast %169 : vector<1x128x128xbf16> to vector<128x128xbf16>
    %cst_166 = arith.constant dense<0.000000e+00> : vector<9x128xf32>
    %171 = tpu.matmul %163, %170, %cst_166 {dimension_numbers = #tpu.dot_dimension_numbers<[1], [0], [0], [1], [0, 0, 1, 1], [], []>} : vector<9x128xbf16>, vector<128x128xbf16>, vector<9x128xf32> -> vector<9x128xf32>
    %172 = vector.extract_strided_slice %171 {offsets = [0, 0], sizes = [8, 128], strides = [1, 1]} : vector<9x128xf32> to vector<8x128xf32>
    %173 = arith.addf %168, %172 : vector<8x128xf32>
    %c5_167 = arith.constant 5 : index
    %c0_168 = arith.constant 0 : index
    %c0_169 = arith.constant 0 : index
    %174 = vector.load %arg3[%c5_167, %c0_168, %c0_169] : memref<9x128x128xbf16, #tpu.memory_space<vmem>>, vector<1x128x128xbf16>
    %175 = vector.shape_cast %174 : vector<1x128x128xbf16> to vector<128x128xbf16>
    %cst_170 = arith.constant dense<0.000000e+00> : vector<9x128xf32>
    %176 = tpu.matmul %161, %175, %cst_170 {dimension_numbers = #tpu.dot_dimension_numbers<[1], [0], [0], [1], [0, 0, 1, 1], [], []>} : vector<9x128xbf16>, vector<128x128xbf16>, vector<9x128xf32> -> vector<9x128xf32>
    %177 = vector.extract_strided_slice %176 {offsets = [1, 0], sizes = [8, 128], strides = [1, 1]} : vector<9x128xf32> to vector<8x128xf32>
    %178 = arith.addf %173, %177 : vector<8x128xf32>
    %c0_171 = arith.constant 0 : index
    %c6_172 = arith.constant 6 : index
    %c0_173 = arith.constant 0 : index
    %c0_174 = arith.constant 0 : index
    %179 = vector.load %arg1[%c0_171, %c6_172, %c0_173, %c0_174] : memref<1x18x9x128xbf16, #tpu.memory_space<vmem>>, vector<1x1x9x128xbf16>
    %180 = vector.shape_cast %179 : vector<1x1x9x128xbf16> to vector<9x128xbf16>
    %c0_175 = arith.constant 0 : index
    %c6_176 = arith.constant 6 : index
    %c0_177 = arith.constant 0 : index
    %c0_178 = arith.constant 0 : index
    %181 = vector.load %arg2[%c0_175, %c6_176, %c0_177, %c0_178] : memref<1x18x9x128xbf16, #tpu.memory_space<vmem>>, vector<1x1x9x128xbf16>
    %182 = vector.shape_cast %181 : vector<1x1x9x128xbf16> to vector<9x128xbf16>
    %c6_179 = arith.constant 6 : index
    %c0_180 = arith.constant 0 : index
    %c0_181 = arith.constant 0 : index
    %183 = vector.load %arg3[%c6_179, %c0_180, %c0_181] : memref<9x128x128xbf16, #tpu.memory_space<vmem>>, vector<1x128x128xbf16>
    %184 = vector.shape_cast %183 : vector<1x128x128xbf16> to vector<128x128xbf16>
    %cst_182 = arith.constant dense<0.000000e+00> : vector<9x128xf32>
    %185 = tpu.matmul %180, %184, %cst_182 {dimension_numbers = #tpu.dot_dimension_numbers<[1], [0], [0], [1], [0, 0, 1, 1], [], []>} : vector<9x128xbf16>, vector<128x128xbf16>, vector<9x128xf32> -> vector<9x128xf32>
    %186 = vector.extract_strided_slice %185 {offsets = [0, 0], sizes = [8, 128], strides = [1, 1]} : vector<9x128xf32> to vector<8x128xf32>
    %187 = arith.addf %178, %186 : vector<8x128xf32>
    %c7_183 = arith.constant 7 : index
    %c0_184 = arith.constant 0 : index
    %c0_185 = arith.constant 0 : index
    %188 = vector.load %arg3[%c7_183, %c0_184, %c0_185] : memref<9x128x128xbf16, #tpu.memory_space<vmem>>, vector<1x128x128xbf16>
    %189 = vector.shape_cast %188 : vector<1x128x128xbf16> to vector<128x128xbf16>
    %cst_186 = arith.constant dense<0.000000e+00> : vector<9x128xf32>
    %190 = tpu.matmul %182, %189, %cst_186 {dimension_numbers = #tpu.dot_dimension_numbers<[1], [0], [0], [1], [0, 0, 1, 1], [], []>} : vector<9x128xbf16>, vector<128x128xbf16>, vector<9x128xf32> -> vector<9x128xf32>
    %191 = vector.extract_strided_slice %190 {offsets = [0, 0], sizes = [8, 128], strides = [1, 1]} : vector<9x128xf32> to vector<8x128xf32>
    %192 = arith.addf %187, %191 : vector<8x128xf32>
    %c8_187 = arith.constant 8 : index
    %c0_188 = arith.constant 0 : index
    %c0_189 = arith.constant 0 : index
    %193 = vector.load %arg3[%c8_187, %c0_188, %c0_189] : memref<9x128x128xbf16, #tpu.memory_space<vmem>>, vector<1x128x128xbf16>
    %194 = vector.shape_cast %193 : vector<1x128x128xbf16> to vector<128x128xbf16>
    %cst_190 = arith.constant dense<0.000000e+00> : vector<9x128xf32>
    %195 = tpu.matmul %180, %194, %cst_190 {dimension_numbers = #tpu.dot_dimension_numbers<[1], [0], [0], [1], [0, 0, 1, 1], [], []>} : vector<9x128xbf16>, vector<128x128xbf16>, vector<9x128xf32> -> vector<9x128xf32>
    %196 = vector.extract_strided_slice %195 {offsets = [1, 0], sizes = [8, 128], strides = [1, 1]} : vector<9x128xf32> to vector<8x128xf32>
    %197 = arith.addf %192, %196 : vector<8x128xf32>
    %c0_191 = arith.constant 0 : index
    %c0_192 = arith.constant 0 : index
    %198 = vector.load %arg4[%c0_191, %c0_192] : memref<1x128xf32, #tpu.memory_space<vmem>>, vector<1x128xf32>
    %199 = vector.broadcast %198 : vector<1x128xf32> to vector<8x128xf32>
    %200 = arith.mulf %197, %199 : vector<8x128xf32>
    %c0_193 = arith.constant 0 : index
    %c0_194 = arith.constant 0 : index
    %201 = vector.load %arg5[%c0_193, %c0_194] : memref<1x128xf32, #tpu.memory_space<vmem>>, vector<1x128xf32>
    %202 = vector.broadcast %201 : vector<1x128xf32> to vector<8x128xf32>
    %203 = arith.addf %200, %202 : vector<8x128xf32>
    %cst_195 = arith.constant 0.000000e+00 : f32
    %204 = vector.broadcast %cst_195 : f32 to vector<8x128xf32>
    %205 = arith.maximumf %203, %204 : vector<8x128xf32>
    %206 = arith.truncf %205 : vector<8x128xf32> to vector<8x128xbf16>
    %c0_196 = arith.constant 0 : index
    %c2_197 = arith.constant 2 : index
    %c0_198 = arith.constant 0 : index
    %c0_199 = arith.constant 0 : index
    %207 = vector.load %arg6[%c0_196, %c2_197, %c0_198, %c0_199] : memref<1x8x8x128xbf16, #tpu.memory_space<vmem>>, vector<1x1x8x128xbf16>
    %208 = vector.shape_cast %207 : vector<1x1x8x128xbf16> to vector<8x128xbf16>
    %209 = vector.shape_cast %206 : vector<8x128xbf16> to vector<1x1x8x128xbf16>
    tpu.vector_store %arg6[%c0_196, %c2_197, %c0_198, %c0_199], %209 {strides = array<i32>} : memref<1x8x8x128xbf16, #tpu.memory_space<vmem>>, vector<1x1x8x128xbf16>,
    %cst_200 = arith.constant 0.000000e+00 : f32
    %210 = vector.broadcast %cst_200 : f32 to vector<8x128xf32>
    %c0_201 = arith.constant 0 : index
    %c6_202 = arith.constant 6 : index
    %c0_203 = arith.constant 0 : index
    %c0_204 = arith.constant 0 : index
    %211 = vector.load %arg1[%c0_201, %c6_202, %c0_203, %c0_204] : memref<1x18x9x128xbf16, #tpu.memory_space<vmem>>, vector<1x1x9x128xbf16>
    %212 = vector.shape_cast %211 : vector<1x1x9x128xbf16> to vector<9x128xbf16>
    %c0_205 = arith.constant 0 : index
    %c6_206 = arith.constant 6 : index
    %c0_207 = arith.constant 0 : index
    %c0_208 = arith.constant 0 : index
    %213 = vector.load %arg2[%c0_205, %c6_206, %c0_207, %c0_208] : memref<1x18x9x128xbf16, #tpu.memory_space<vmem>>, vector<1x1x9x128xbf16>
    %214 = vector.shape_cast %213 : vector<1x1x9x128xbf16> to vector<9x128xbf16>
    %c0_209 = arith.constant 0 : index
    %c0_210 = arith.constant 0 : index
    %c0_211 = arith.constant 0 : index
    %215 = vector.load %arg3[%c0_209, %c0_210, %c0_211] : memref<9x128x128xbf16, #tpu.memory_space<vmem>>, vector<1x128x128xbf16>
    %216 = vector.shape_cast %215 : vector<1x128x128xbf16> to vector<128x128xbf16>
    %cst_212 = arith.constant dense<0.000000e+00> : vector<9x128xf32>
    %217 = tpu.matmul %212, %216, %cst_212 {dimension_numbers = #tpu.dot_dimension_numbers<[1], [0], [0], [1], [0, 0, 1, 1], [], []>} : vector<9x128xbf16>, vector<128x128xbf16>, vector<9x128xf32> -> vector<9x128xf32>
    %218 = vector.extract_strided_slice %217 {offsets = [0, 0], sizes = [8, 128], strides = [1, 1]} : vector<9x128xf32> to vector<8x128xf32>
    %219 = arith.addf %210, %218 : vector<8x128xf32>
    %c1_213 = arith.constant 1 : index
    %c0_214 = arith.constant 0 : index
    %c0_215 = arith.constant 0 : index
    %220 = vector.load %arg3[%c1_213, %c0_214, %c0_215] : memref<9x128x128xbf16, #tpu.memory_space<vmem>>, vector<1x128x128xbf16>
    %221 = vector.shape_cast %220 : vector<1x128x128xbf16> to vector<128x128xbf16>
    %cst_216 = arith.constant dense<0.000000e+00> : vector<9x128xf32>
    %222 = tpu.matmul %214, %221, %cst_216 {dimension_numbers = #tpu.dot_dimension_numbers<[1], [0], [0], [1], [0, 0, 1, 1], [], []>} : vector<9x128xbf16>, vector<128x128xbf16>, vector<9x128xf32> -> vector<9x128xf32>
    %223 = vector.extract_strided_slice %222 {offsets = [0, 0], sizes = [8, 128], strides = [1, 1]} : vector<9x128xf32> to vector<8x128xf32>
    %224 = arith.addf %219, %223 : vector<8x128xf32>
    %c2_217 = arith.constant 2 : index
    %c0_218 = arith.constant 0 : index
    %c0_219 = arith.constant 0 : index
    %225 = vector.load %arg3[%c2_217, %c0_218, %c0_219] : memref<9x128x128xbf16, #tpu.memory_space<vmem>>, vector<1x128x128xbf16>
    %226 = vector.shape_cast %225 : vector<1x128x128xbf16> to vector<128x128xbf16>
    %cst_220 = arith.constant dense<0.000000e+00> : vector<9x128xf32>
    %227 = tpu.matmul %212, %226, %cst_220 {dimension_numbers = #tpu.dot_dimension_numbers<[1], [0], [0], [1], [0, 0, 1, 1], [], []>} : vector<9x128xbf16>, vector<128x128xbf16>, vector<9x128xf32> -> vector<9x128xf32>
    %228 = vector.extract_strided_slice %227 {offsets = [1, 0], sizes = [8, 128], strides = [1, 1]} : vector<9x128xf32> to vector<8x128xf32>
    %229 = arith.addf %224, %228 : vector<8x128xf32>
    %c0_221 = arith.constant 0 : index
    %c7_222 = arith.constant 7 : index
    %c0_223 = arith.constant 0 : index
    %c0_224 = arith.constant 0 : index
    %230 = vector.load %arg1[%c0_221, %c7_222, %c0_223, %c0_224] : memref<1x18x9x128xbf16, #tpu.memory_space<vmem>>, vector<1x1x9x128xbf16>
    %231 = vector.shape_cast %230 : vector<1x1x9x128xbf16> to vector<9x128xbf16>
    %c0_225 = arith.constant 0 : index
    %c7_226 = arith.constant 7 : index
    %c0_227 = arith.constant 0 : index
    %c0_228 = arith.constant 0 : index
    %232 = vector.load %arg2[%c0_225, %c7_226, %c0_227, %c0_228] : memref<1x18x9x128xbf16, #tpu.memory_space<vmem>>, vector<1x1x9x128xbf16>
    %233 = vector.shape_cast %232 : vector<1x1x9x128xbf16> to vector<9x128xbf16>
    %c3_229 = arith.constant 3 : index
    %c0_230 = arith.constant 0 : index
    %c0_231 = arith.constant 0 : index
    %234 = vector.load %arg3[%c3_229, %c0_230, %c0_231] : memref<9x128x128xbf16, #tpu.memory_space<vmem>>, vector<1x128x128xbf16>
    %235 = vector.shape_cast %234 : vector<1x128x128xbf16> to vector<128x128xbf16>
    %cst_232 = arith.constant dense<0.000000e+00> : vector<9x128xf32>
    %236 = tpu.matmul %231, %235, %cst_232 {dimension_numbers = #tpu.dot_dimension_numbers<[1], [0], [0], [1], [0, 0, 1, 1], [], []>} : vector<9x128xbf16>, vector<128x128xbf16>, vector<9x128xf32> -> vector<9x128xf32>
    %237 = vector.extract_strided_slice %236 {offsets = [0, 0], sizes = [8, 128], strides = [1, 1]} : vector<9x128xf32> to vector<8x128xf32>
    %238 = arith.addf %229, %237 : vector<8x128xf32>
    %c4_233 = arith.constant 4 : index
    %c0_234 = arith.constant 0 : index
    %c0_235 = arith.constant 0 : index
    %239 = vector.load %arg3[%c4_233, %c0_234, %c0_235] : memref<9x128x128xbf16, #tpu.memory_space<vmem>>, vector<1x128x128xbf16>
    %240 = vector.shape_cast %239 : vector<1x128x128xbf16> to vector<128x128xbf16>
    %cst_236 = arith.constant dense<0.000000e+00> : vector<9x128xf32>
    %241 = tpu.matmul %233, %240, %cst_236 {dimension_numbers = #tpu.dot_dimension_numbers<[1], [0], [0], [1], [0, 0, 1, 1], [], []>} : vector<9x128xbf16>, vector<128x128xbf16>, vector<9x128xf32> -> vector<9x128xf32>
    %242 = vector.extract_strided_slice %241 {offsets = [0, 0], sizes = [8, 128], strides = [1, 1]} : vector<9x128xf32> to vector<8x128xf32>
    %243 = arith.addf %238, %242 : vector<8x128xf32>
    %c5_237 = arith.constant 5 : index
    %c0_238 = arith.constant 0 : index
    %c0_239 = arith.constant 0 : index
    %244 = vector.load %arg3[%c5_237, %c0_238, %c0_239] : memref<9x128x128xbf16, #tpu.memory_space<vmem>>, vector<1x128x128xbf16>
    %245 = vector.shape_cast %244 : vector<1x128x128xbf16> to vector<128x128xbf16>
    %cst_240 = arith.constant dense<0.000000e+00> : vector<9x128xf32>
    %246 = tpu.matmul %231, %245, %cst_240 {dimension_numbers = #tpu.dot_dimension_numbers<[1], [0], [0], [1], [0, 0, 1, 1], [], []>} : vector<9x128xbf16>, vector<128x128xbf16>, vector<9x128xf32> -> vector<9x128xf32>
    %247 = vector.extract_strided_slice %246 {offsets = [1, 0], sizes = [8, 128], strides = [1, 1]} : vector<9x128xf32> to vector<8x128xf32>
    %248 = arith.addf %243, %247 : vector<8x128xf32>
    %c0_241 = arith.constant 0 : index
    %c8_242 = arith.constant 8 : index
    %c0_243 = arith.constant 0 : index
    %c0_244 = arith.constant 0 : index
    %249 = vector.load %arg1[%c0_241, %c8_242, %c0_243, %c0_244] : memref<1x18x9x128xbf16, #tpu.memory_space<vmem>>, vector<1x1x9x128xbf16>
    %250 = vector.shape_cast %249 : vector<1x1x9x128xbf16> to vector<9x128xbf16>
    %c0_245 = arith.constant 0 : index
    %c8_246 = arith.constant 8 : index
    %c0_247 = arith.constant 0 : index
    %c0_248 = arith.constant 0 : index
    %251 = vector.load %arg2[%c0_245, %c8_246, %c0_247, %c0_248] : memref<1x18x9x128xbf16, #tpu.memory_space<vmem>>, vector<1x1x9x128xbf16>
    %252 = vector.shape_cast %251 : vector<1x1x9x128xbf16> to vector<9x128xbf16>
    %c6_249 = arith.constant 6 : index
    %c0_250 = arith.constant 0 : index
    %c0_251 = arith.constant 0 : index
    %253 = vector.load %arg3[%c6_249, %c0_250, %c0_251] : memref<9x128x128xbf16, #tpu.memory_space<vmem>>, vector<1x128x128xbf16>
    %254 = vector.shape_cast %253 : vector<1x128x128xbf16> to vector<128x128xbf16>
    %cst_252 = arith.constant dense<0.000000e+00> : vector<9x128xf32>
    %255 = tpu.matmul %250, %254, %cst_252 {dimension_numbers = #tpu.dot_dimension_numbers<[1], [0], [0], [1], [0, 0, 1, 1], [], []>} : vector<9x128xbf16>, vector<128x128xbf16>, vector<9x128xf32> -> vector<9x128xf32>
    %256 = vector.extract_strided_slice %255 {offsets = [0, 0], sizes = [8, 128], strides = [1, 1]} : vector<9x128xf32> to vector<8x128xf32>
    %257 = arith.addf %248, %256 : vector<8x128xf32>
    %c7_253 = arith.constant 7 : index
    %c0_254 = arith.constant 0 : index
    %c0_255 = arith.constant 0 : index
    %258 = vector.load %arg3[%c7_253, %c0_254, %c0_255] : memref<9x128x128xbf16, #tpu.memory_space<vmem>>, vector<1x128x128xbf16>
    %259 = vector.shape_cast %258 : vector<1x128x128xbf16> to vector<128x128xbf16>
    %cst_256 = arith.constant dense<0.000000e+00> : vector<9x128xf32>
    %260 = tpu.matmul %252, %259, %cst_256 {dimension_numbers = #tpu.dot_dimension_numbers<[1], [0], [0], [1], [0, 0, 1, 1], [], []>} : vector<9x128xbf16>, vector<128x128xbf16>, vector<9x128xf32> -> vector<9x128xf32>
    %261 = vector.extract_strided_slice %260 {offsets = [0, 0], sizes = [8, 128], strides = [1, 1]} : vector<9x128xf32> to vector<8x128xf32>
    %262 = arith.addf %257, %261 : vector<8x128xf32>
    %c8_257 = arith.constant 8 : index
    %c0_258 = arith.constant 0 : index
    %c0_259 = arith.constant 0 : index
    %263 = vector.load %arg3[%c8_257, %c0_258, %c0_259] : memref<9x128x128xbf16, #tpu.memory_space<vmem>>, vector<1x128x128xbf16>
    %264 = vector.shape_cast %263 : vector<1x128x128xbf16> to vector<128x128xbf16>
    %cst_260 = arith.constant dense<0.000000e+00> : vector<9x128xf32>
    %265 = tpu.matmul %250, %264, %cst_260 {dimension_numbers = #tpu.dot_dimension_numbers<[1], [0], [0], [1], [0, 0, 1, 1], [], []>} : vector<9x128xbf16>, vector<128x128xbf16>, vector<9x128xf32> -> vector<9x128xf32>
    %266 = vector.extract_strided_slice %265 {offsets = [1, 0], sizes = [8, 128], strides = [1, 1]} : vector<9x128xf32> to vector<8x128xf32>
    %267 = arith.addf %262, %266 : vector<8x128xf32>
    %c0_261 = arith.constant 0 : index
    %c0_262 = arith.constant 0 : index
    %268 = vector.load %arg4[%c0_261, %c0_262] : memref<1x128xf32, #tpu.memory_space<vmem>>, vector<1x128xf32>
    %269 = vector.broadcast %268 : vector<1x128xf32> to vector<8x128xf32>
    %270 = arith.mulf %267, %269 : vector<8x128xf32>
    %c0_263 = arith.constant 0 : index
    %c0_264 = arith.constant 0 : index
    %271 = vector.load %arg5[%c0_263, %c0_264] : memref<1x128xf32, #tpu.memory_space<vmem>>, vector<1x128xf32>
    %272 = vector.broadcast %271 : vector<1x128xf32> to vector<8x128xf32>
    %273 = arith.addf %270, %272 : vector<8x128xf32>
    %cst_265 = arith.constant 0.000000e+00 : f32
    %274 = vector.broadcast %cst_265 : f32 to vector<8x128xf32>
    %275 = arith.maximumf %273, %274 : vector<8x128xf32>
    %276 = arith.truncf %275 : vector<8x128xf32> to vector<8x128xbf16>
    %c0_266 = arith.constant 0 : index
    %c3_267 = arith.constant 3 : index
    %c0_268 = arith.constant 0 : index
    %c0_269 = arith.constant 0 : index
    %277 = vector.load %arg6[%c0_266, %c3_267, %c0_268, %c0_269] : memref<1x8x8x128xbf16, #tpu.memory_space<vmem>>, vector<1x1x8x128xbf16>
    %278 = vector.shape_cast %277 : vector<1x1x8x128xbf16> to vector<8x128xbf16>
    %279 = vector.shape_cast %276 : vector<8x128xbf16> to vector<1x1x8x128xbf16>
    tpu.vector_store %arg6[%c0_266, %c3_267, %c0_268, %c0_269], %279 {strides = array<i32>} : memref<1x8x8x128xbf16, #tpu.memory_space<vmem>>, vector<1x1x8x128xbf16>,
    %cst_270 = arith.constant 0.000000e+00 : f32
    %280 = vector.broadcast %cst_270 : f32 to vector<8x128xf32>
    %c0_271 = arith.constant 0 : index
    %c8_272 = arith.constant 8 : index
    %c0_273 = arith.constant 0 : index
    %c0_274 = arith.constant 0 : index
    %281 = vector.load %arg1[%c0_271, %c8_272, %c0_273, %c0_274] : memref<1x18x9x128xbf16, #tpu.memory_space<vmem>>, vector<1x1x9x128xbf16>
    %282 = vector.shape_cast %281 : vector<1x1x9x128xbf16> to vector<9x128xbf16>
    %c0_275 = arith.constant 0 : index
    %c8_276 = arith.constant 8 : index
    %c0_277 = arith.constant 0 : index
    %c0_278 = arith.constant 0 : index
    %283 = vector.load %arg2[%c0_275, %c8_276, %c0_277, %c0_278] : memref<1x18x9x128xbf16, #tpu.memory_space<vmem>>, vector<1x1x9x128xbf16>
    %284 = vector.shape_cast %283 : vector<1x1x9x128xbf16> to vector<9x128xbf16>
    %c0_279 = arith.constant 0 : index
    %c0_280 = arith.constant 0 : index
    %c0_281 = arith.constant 0 : index
    %285 = vector.load %arg3[%c0_279, %c0_280, %c0_281] : memref<9x128x128xbf16, #tpu.memory_space<vmem>>, vector<1x128x128xbf16>
    %286 = vector.shape_cast %285 : vector<1x128x128xbf16> to vector<128x128xbf16>
    %cst_282 = arith.constant dense<0.000000e+00> : vector<9x128xf32>
    %287 = tpu.matmul %282, %286, %cst_282 {dimension_numbers = #tpu.dot_dimension_numbers<[1], [0], [0], [1], [0, 0, 1, 1], [], []>} : vector<9x128xbf16>, vector<128x128xbf16>, vector<9x128xf32> -> vector<9x128xf32>
    %288 = vector.extract_strided_slice %287 {offsets = [0, 0], sizes = [8, 128], strides = [1, 1]} : vector<9x128xf32> to vector<8x128xf32>
    %289 = arith.addf %280, %288 : vector<8x128xf32>
    %c1_283 = arith.constant 1 : index
    %c0_284 = arith.constant 0 : index
    %c0_285 = arith.constant 0 : index
    %290 = vector.load %arg3[%c1_283, %c0_284, %c0_285] : memref<9x128x128xbf16, #tpu.memory_space<vmem>>, vector<1x128x128xbf16>
    %291 = vector.shape_cast %290 : vector<1x128x128xbf16> to vector<128x128xbf16>
    %cst_286 = arith.constant dense<0.000000e+00> : vector<9x128xf32>
    %292 = tpu.matmul %284, %291, %cst_286 {dimension_numbers = #tpu.dot_dimension_numbers<[1], [0], [0], [1], [0, 0, 1, 1], [], []>} : vector<9x128xbf16>, vector<128x128xbf16>, vector<9x128xf32> -> vector<9x128xf32>
    %293 = vector.extract_strided_slice %292 {offsets = [0, 0], sizes = [8, 128], strides = [1, 1]} : vector<9x128xf32> to vector<8x128xf32>
    %294 = arith.addf %289, %293 : vector<8x128xf32>
    %c2_287 = arith.constant 2 : index
    %c0_288 = arith.constant 0 : index
    %c0_289 = arith.constant 0 : index
    %295 = vector.load %arg3[%c2_287, %c0_288, %c0_289] : memref<9x128x128xbf16, #tpu.memory_space<vmem>>, vector<1x128x128xbf16>
    %296 = vector.shape_cast %295 : vector<1x128x128xbf16> to vector<128x128xbf16>
    %cst_290 = arith.constant dense<0.000000e+00> : vector<9x128xf32>
    %297 = tpu.matmul %282, %296, %cst_290 {dimension_numbers = #tpu.dot_dimension_numbers<[1], [0], [0], [1], [0, 0, 1, 1], [], []>} : vector<9x128xbf16>, vector<128x128xbf16>, vector<9x128xf32> -> vector<9x128xf32>
    %298 = vector.extract_strided_slice %297 {offsets = [1, 0], sizes = [8, 128], strides = [1, 1]} : vector<9x128xf32> to vector<8x128xf32>
    %299 = arith.addf %294, %298 : vector<8x128xf32>
    %c0_291 = arith.constant 0 : index
    %c9 = arith.constant 9 : index
    %c0_292 = arith.constant 0 : index
    %c0_293 = arith.constant 0 : index
    %300 = vector.load %arg1[%c0_291, %c9, %c0_292, %c0_293] : memref<1x18x9x128xbf16, #tpu.memory_space<vmem>>, vector<1x1x9x128xbf16>
    %301 = vector.shape_cast %300 : vector<1x1x9x128xbf16> to vector<9x128xbf16>
    %c0_294 = arith.constant 0 : index
    %c9_295 = arith.constant 9 : index
    %c0_296 = arith.constant 0 : index
    %c0_297 = arith.constant 0 : index
    %302 = vector.load %arg2[%c0_294, %c9_295, %c0_296, %c0_297] : memref<1x18x9x128xbf16, #tpu.memory_space<vmem>>, vector<1x1x9x128xbf16>
    %303 = vector.shape_cast %302 : vector<1x1x9x128xbf16> to vector<9x128xbf16>
    %c3_298 = arith.constant 3 : index
    %c0_299 = arith.constant 0 : index
    %c0_300 = arith.constant 0 : index
    %304 = vector.load %arg3[%c3_298, %c0_299, %c0_300] : memref<9x128x128xbf16, #tpu.memory_space<vmem>>, vector<1x128x128xbf16>
    %305 = vector.shape_cast %304 : vector<1x128x128xbf16> to vector<128x128xbf16>
    %cst_301 = arith.constant dense<0.000000e+00> : vector<9x128xf32>
    %306 = tpu.matmul %301, %305, %cst_301 {dimension_numbers = #tpu.dot_dimension_numbers<[1], [0], [0], [1], [0, 0, 1, 1], [], []>} : vector<9x128xbf16>, vector<128x128xbf16>, vector<9x128xf32> -> vector<9x128xf32>
    %307 = vector.extract_strided_slice %306 {offsets = [0, 0], sizes = [8, 128], strides = [1, 1]} : vector<9x128xf32> to vector<8x128xf32>
    %308 = arith.addf %299, %307 : vector<8x128xf32>
    %c4_302 = arith.constant 4 : index
    %c0_303 = arith.constant 0 : index
    %c0_304 = arith.constant 0 : index
    %309 = vector.load %arg3[%c4_302, %c0_303, %c0_304] : memref<9x128x128xbf16, #tpu.memory_space<vmem>>, vector<1x128x128xbf16>
    %310 = vector.shape_cast %309 : vector<1x128x128xbf16> to vector<128x128xbf16>
    %cst_305 = arith.constant dense<0.000000e+00> : vector<9x128xf32>
    %311 = tpu.matmul %303, %310, %cst_305 {dimension_numbers = #tpu.dot_dimension_numbers<[1], [0], [0], [1], [0, 0, 1, 1], [], []>} : vector<9x128xbf16>, vector<128x128xbf16>, vector<9x128xf32> -> vector<9x128xf32>
    %312 = vector.extract_strided_slice %311 {offsets = [0, 0], sizes = [8, 128], strides = [1, 1]} : vector<9x128xf32> to vector<8x128xf32>
    %313 = arith.addf %308, %312 : vector<8x128xf32>
    %c5_306 = arith.constant 5 : index
    %c0_307 = arith.constant 0 : index
    %c0_308 = arith.constant 0 : index
    %314 = vector.load %arg3[%c5_306, %c0_307, %c0_308] : memref<9x128x128xbf16, #tpu.memory_space<vmem>>, vector<1x128x128xbf16>
    %315 = vector.shape_cast %314 : vector<1x128x128xbf16> to vector<128x128xbf16>
    %cst_309 = arith.constant dense<0.000000e+00> : vector<9x128xf32>
    %316 = tpu.matmul %301, %315, %cst_309 {dimension_numbers = #tpu.dot_dimension_numbers<[1], [0], [0], [1], [0, 0, 1, 1], [], []>} : vector<9x128xbf16>, vector<128x128xbf16>, vector<9x128xf32> -> vector<9x128xf32>
    %317 = vector.extract_strided_slice %316 {offsets = [1, 0], sizes = [8, 128], strides = [1, 1]} : vector<9x128xf32> to vector<8x128xf32>
    %318 = arith.addf %313, %317 : vector<8x128xf32>
    %c0_310 = arith.constant 0 : index
    %c10 = arith.constant 10 : index
    %c0_311 = arith.constant 0 : index
    %c0_312 = arith.constant 0 : index
    %319 = vector.load %arg1[%c0_310, %c10, %c0_311, %c0_312] : memref<1x18x9x128xbf16, #tpu.memory_space<vmem>>, vector<1x1x9x128xbf16>
    %320 = vector.shape_cast %319 : vector<1x1x9x128xbf16> to vector<9x128xbf16>
    %c0_313 = arith.constant 0 : index
    %c10_314 = arith.constant 10 : index
    %c0_315 = arith.constant 0 : index
    %c0_316 = arith.constant 0 : index
    %321 = vector.load %arg2[%c0_313, %c10_314, %c0_315, %c0_316] : memref<1x18x9x128xbf16, #tpu.memory_space<vmem>>, vector<1x1x9x128xbf16>
    %322 = vector.shape_cast %321 : vector<1x1x9x128xbf16> to vector<9x128xbf16>
    %c6_317 = arith.constant 6 : index
    %c0_318 = arith.constant 0 : index
    %c0_319 = arith.constant 0 : index
    %323 = vector.load %arg3[%c6_317, %c0_318, %c0_319] : memref<9x128x128xbf16, #tpu.memory_space<vmem>>, vector<1x128x128xbf16>
    %324 = vector.shape_cast %323 : vector<1x128x128xbf16> to vector<128x128xbf16>
    %cst_320 = arith.constant dense<0.000000e+00> : vector<9x128xf32>
    %325 = tpu.matmul %320, %324, %cst_320 {dimension_numbers = #tpu.dot_dimension_numbers<[1], [0], [0], [1], [0, 0, 1, 1], [], []>} : vector<9x128xbf16>, vector<128x128xbf16>, vector<9x128xf32> -> vector<9x128xf32>
    %326 = vector.extract_strided_slice %325 {offsets = [0, 0], sizes = [8, 128], strides = [1, 1]} : vector<9x128xf32> to vector<8x128xf32>
    %327 = arith.addf %318, %326 : vector<8x128xf32>
    %c7_321 = arith.constant 7 : index
    %c0_322 = arith.constant 0 : index
    %c0_323 = arith.constant 0 : index
    %328 = vector.load %arg3[%c7_321, %c0_322, %c0_323] : memref<9x128x128xbf16, #tpu.memory_space<vmem>>, vector<1x128x128xbf16>
    %329 = vector.shape_cast %328 : vector<1x128x128xbf16> to vector<128x128xbf16>
    %cst_324 = arith.constant dense<0.000000e+00> : vector<9x128xf32>
    %330 = tpu.matmul %322, %329, %cst_324 {dimension_numbers = #tpu.dot_dimension_numbers<[1], [0], [0], [1], [0, 0, 1, 1], [], []>} : vector<9x128xbf16>, vector<128x128xbf16>, vector<9x128xf32> -> vector<9x128xf32>
    %331 = vector.extract_strided_slice %330 {offsets = [0, 0], sizes = [8, 128], strides = [1, 1]} : vector<9x128xf32> to vector<8x128xf32>
    %332 = arith.addf %327, %331 : vector<8x128xf32>
    %c8_325 = arith.constant 8 : index
    %c0_326 = arith.constant 0 : index
    %c0_327 = arith.constant 0 : index
    %333 = vector.load %arg3[%c8_325, %c0_326, %c0_327] : memref<9x128x128xbf16, #tpu.memory_space<vmem>>, vector<1x128x128xbf16>
    %334 = vector.shape_cast %333 : vector<1x128x128xbf16> to vector<128x128xbf16>
    %cst_328 = arith.constant dense<0.000000e+00> : vector<9x128xf32>
    %335 = tpu.matmul %320, %334, %cst_328 {dimension_numbers = #tpu.dot_dimension_numbers<[1], [0], [0], [1], [0, 0, 1, 1], [], []>} : vector<9x128xbf16>, vector<128x128xbf16>, vector<9x128xf32> -> vector<9x128xf32>
    %336 = vector.extract_strided_slice %335 {offsets = [1, 0], sizes = [8, 128], strides = [1, 1]} : vector<9x128xf32> to vector<8x128xf32>
    %337 = arith.addf %332, %336 : vector<8x128xf32>
    %c0_329 = arith.constant 0 : index
    %c0_330 = arith.constant 0 : index
    %338 = vector.load %arg4[%c0_329, %c0_330] : memref<1x128xf32, #tpu.memory_space<vmem>>, vector<1x128xf32>
    %339 = vector.broadcast %338 : vector<1x128xf32> to vector<8x128xf32>
    %340 = arith.mulf %337, %339 : vector<8x128xf32>
    %c0_331 = arith.constant 0 : index
    %c0_332 = arith.constant 0 : index
    %341 = vector.load %arg5[%c0_331, %c0_332] : memref<1x128xf32, #tpu.memory_space<vmem>>, vector<1x128xf32>
    %342 = vector.broadcast %341 : vector<1x128xf32> to vector<8x128xf32>
    %343 = arith.addf %340, %342 : vector<8x128xf32>
    %cst_333 = arith.constant 0.000000e+00 : f32
    %344 = vector.broadcast %cst_333 : f32 to vector<8x128xf32>
    %345 = arith.maximumf %343, %344 : vector<8x128xf32>
    %346 = arith.truncf %345 : vector<8x128xf32> to vector<8x128xbf16>
    %c0_334 = arith.constant 0 : index
    %c4_335 = arith.constant 4 : index
    %c0_336 = arith.constant 0 : index
    %c0_337 = arith.constant 0 : index
    %347 = vector.load %arg6[%c0_334, %c4_335, %c0_336, %c0_337] : memref<1x8x8x128xbf16, #tpu.memory_space<vmem>>, vector<1x1x8x128xbf16>
    %348 = vector.shape_cast %347 : vector<1x1x8x128xbf16> to vector<8x128xbf16>
    %349 = vector.shape_cast %346 : vector<8x128xbf16> to vector<1x1x8x128xbf16>
    tpu.vector_store %arg6[%c0_334, %c4_335, %c0_336, %c0_337], %349 {strides = array<i32>} : memref<1x8x8x128xbf16, #tpu.memory_space<vmem>>, vector<1x1x8x128xbf16>,
    %cst_338 = arith.constant 0.000000e+00 : f32
    %350 = vector.broadcast %cst_338 : f32 to vector<8x128xf32>
    %c0_339 = arith.constant 0 : index
    %c10_340 = arith.constant 10 : index
    %c0_341 = arith.constant 0 : index
    %c0_342 = arith.constant 0 : index
    %351 = vector.load %arg1[%c0_339, %c10_340, %c0_341, %c0_342] : memref<1x18x9x128xbf16, #tpu.memory_space<vmem>>, vector<1x1x9x128xbf16>
    %352 = vector.shape_cast %351 : vector<1x1x9x128xbf16> to vector<9x128xbf16>
    %c0_343 = arith.constant 0 : index
    %c10_344 = arith.constant 10 : index
    %c0_345 = arith.constant 0 : index
    %c0_346 = arith.constant 0 : index
    %353 = vector.load %arg2[%c0_343, %c10_344, %c0_345, %c0_346] : memref<1x18x9x128xbf16, #tpu.memory_space<vmem>>, vector<1x1x9x128xbf16>
    %354 = vector.shape_cast %353 : vector<1x1x9x128xbf16> to vector<9x128xbf16>
    %c0_347 = arith.constant 0 : index
    %c0_348 = arith.constant 0 : index
    %c0_349 = arith.constant 0 : index
    %355 = vector.load %arg3[%c0_347, %c0_348, %c0_349] : memref<9x128x128xbf16, #tpu.memory_space<vmem>>, vector<1x128x128xbf16>
    %356 = vector.shape_cast %355 : vector<1x128x128xbf16> to vector<128x128xbf16>
    %cst_350 = arith.constant dense<0.000000e+00> : vector<9x128xf32>
    %357 = tpu.matmul %352, %356, %cst_350 {dimension_numbers = #tpu.dot_dimension_numbers<[1], [0], [0], [1], [0, 0, 1, 1], [], []>} : vector<9x128xbf16>, vector<128x128xbf16>, vector<9x128xf32> -> vector<9x128xf32>
    %358 = vector.extract_strided_slice %357 {offsets = [0, 0], sizes = [8, 128], strides = [1, 1]} : vector<9x128xf32> to vector<8x128xf32>
    %359 = arith.addf %350, %358 : vector<8x128xf32>
    %c1_351 = arith.constant 1 : index
    %c0_352 = arith.constant 0 : index
    %c0_353 = arith.constant 0 : index
    %360 = vector.load %arg3[%c1_351, %c0_352, %c0_353] : memref<9x128x128xbf16, #tpu.memory_space<vmem>>, vector<1x128x128xbf16>
    %361 = vector.shape_cast %360 : vector<1x128x128xbf16> to vector<128x128xbf16>
    %cst_354 = arith.constant dense<0.000000e+00> : vector<9x128xf32>
    %362 = tpu.matmul %354, %361, %cst_354 {dimension_numbers = #tpu.dot_dimension_numbers<[1], [0], [0], [1], [0, 0, 1, 1], [], []>} : vector<9x128xbf16>, vector<128x128xbf16>, vector<9x128xf32> -> vector<9x128xf32>
    %363 = vector.extract_strided_slice %362 {offsets = [0, 0], sizes = [8, 128], strides = [1, 1]} : vector<9x128xf32> to vector<8x128xf32>
    %364 = arith.addf %359, %363 : vector<8x128xf32>
    %c2_355 = arith.constant 2 : index
    %c0_356 = arith.constant 0 : index
    %c0_357 = arith.constant 0 : index
    %365 = vector.load %arg3[%c2_355, %c0_356, %c0_357] : memref<9x128x128xbf16, #tpu.memory_space<vmem>>, vector<1x128x128xbf16>
    %366 = vector.shape_cast %365 : vector<1x128x128xbf16> to vector<128x128xbf16>
    %cst_358 = arith.constant dense<0.000000e+00> : vector<9x128xf32>
    %367 = tpu.matmul %352, %366, %cst_358 {dimension_numbers = #tpu.dot_dimension_numbers<[1], [0], [0], [1], [0, 0, 1, 1], [], []>} : vector<9x128xbf16>, vector<128x128xbf16>, vector<9x128xf32> -> vector<9x128xf32>
    %368 = vector.extract_strided_slice %367 {offsets = [1, 0], sizes = [8, 128], strides = [1, 1]} : vector<9x128xf32> to vector<8x128xf32>
    %369 = arith.addf %364, %368 : vector<8x128xf32>
    %c0_359 = arith.constant 0 : index
    %c11 = arith.constant 11 : index
    %c0_360 = arith.constant 0 : index
    %c0_361 = arith.constant 0 : index
    %370 = vector.load %arg1[%c0_359, %c11, %c0_360, %c0_361] : memref<1x18x9x128xbf16, #tpu.memory_space<vmem>>, vector<1x1x9x128xbf16>
    %371 = vector.shape_cast %370 : vector<1x1x9x128xbf16> to vector<9x128xbf16>
    %c0_362 = arith.constant 0 : index
    %c11_363 = arith.constant 11 : index
    %c0_364 = arith.constant 0 : index
    %c0_365 = arith.constant 0 : index
    %372 = vector.load %arg2[%c0_362, %c11_363, %c0_364, %c0_365] : memref<1x18x9x128xbf16, #tpu.memory_space<vmem>>, vector<1x1x9x128xbf16>
    %373 = vector.shape_cast %372 : vector<1x1x9x128xbf16> to vector<9x128xbf16>
    %c3_366 = arith.constant 3 : index
    %c0_367 = arith.constant 0 : index
    %c0_368 = arith.constant 0 : index
    %374 = vector.load %arg3[%c3_366, %c0_367, %c0_368] : memref<9x128x128xbf16, #tpu.memory_space<vmem>>, vector<1x128x128xbf16>
    %375 = vector.shape_cast %374 : vector<1x128x128xbf16> to vector<128x128xbf16>
    %cst_369 = arith.constant dense<0.000000e+00> : vector<9x128xf32>
    %376 = tpu.matmul %371, %375, %cst_369 {dimension_numbers = #tpu.dot_dimension_numbers<[1], [0], [0], [1], [0, 0, 1, 1], [], []>} : vector<9x128xbf16>, vector<128x128xbf16>, vector<9x128xf32> -> vector<9x128xf32>
    %377 = vector.extract_strided_slice %376 {offsets = [0, 0], sizes = [8, 128], strides = [1, 1]} : vector<9x128xf32> to vector<8x128xf32>
    %378 = arith.addf %369, %377 : vector<8x128xf32>
    %c4_370 = arith.constant 4 : index
    %c0_371 = arith.constant 0 : index
    %c0_372 = arith.constant 0 : index
    %379 = vector.load %arg3[%c4_370, %c0_371, %c0_372] : memref<9x128x128xbf16, #tpu.memory_space<vmem>>, vector<1x128x128xbf16>
    %380 = vector.shape_cast %379 : vector<1x128x128xbf16> to vector<128x128xbf16>
    %cst_373 = arith.constant dense<0.000000e+00> : vector<9x128xf32>
    %381 = tpu.matmul %373, %380, %cst_373 {dimension_numbers = #tpu.dot_dimension_numbers<[1], [0], [0], [1], [0, 0, 1, 1], [], []>} : vector<9x128xbf16>, vector<128x128xbf16>, vector<9x128xf32> -> vector<9x128xf32>
    %382 = vector.extract_strided_slice %381 {offsets = [0, 0], sizes = [8, 128], strides = [1, 1]} : vector<9x128xf32> to vector<8x128xf32>
    %383 = arith.addf %378, %382 : vector<8x128xf32>
    %c5_374 = arith.constant 5 : index
    %c0_375 = arith.constant 0 : index
    %c0_376 = arith.constant 0 : index
    %384 = vector.load %arg3[%c5_374, %c0_375, %c0_376] : memref<9x128x128xbf16, #tpu.memory_space<vmem>>, vector<1x128x128xbf16>
    %385 = vector.shape_cast %384 : vector<1x128x128xbf16> to vector<128x128xbf16>
    %cst_377 = arith.constant dense<0.000000e+00> : vector<9x128xf32>
    %386 = tpu.matmul %371, %385, %cst_377 {dimension_numbers = #tpu.dot_dimension_numbers<[1], [0], [0], [1], [0, 0, 1, 1], [], []>} : vector<9x128xbf16>, vector<128x128xbf16>, vector<9x128xf32> -> vector<9x128xf32>
    %387 = vector.extract_strided_slice %386 {offsets = [1, 0], sizes = [8, 128], strides = [1, 1]} : vector<9x128xf32> to vector<8x128xf32>
    %388 = arith.addf %383, %387 : vector<8x128xf32>
    %c0_378 = arith.constant 0 : index
    %c12 = arith.constant 12 : index
    %c0_379 = arith.constant 0 : index
    %c0_380 = arith.constant 0 : index
    %389 = vector.load %arg1[%c0_378, %c12, %c0_379, %c0_380] : memref<1x18x9x128xbf16, #tpu.memory_space<vmem>>, vector<1x1x9x128xbf16>
    %390 = vector.shape_cast %389 : vector<1x1x9x128xbf16> to vector<9x128xbf16>
    %c0_381 = arith.constant 0 : index
    %c12_382 = arith.constant 12 : index
    %c0_383 = arith.constant 0 : index
    %c0_384 = arith.constant 0 : index
    %391 = vector.load %arg2[%c0_381, %c12_382, %c0_383, %c0_384] : memref<1x18x9x128xbf16, #tpu.memory_space<vmem>>, vector<1x1x9x128xbf16>
    %392 = vector.shape_cast %391 : vector<1x1x9x128xbf16> to vector<9x128xbf16>
    %c6_385 = arith.constant 6 : index
    %c0_386 = arith.constant 0 : index
    %c0_387 = arith.constant 0 : index
    %393 = vector.load %arg3[%c6_385, %c0_386, %c0_387] : memref<9x128x128xbf16, #tpu.memory_space<vmem>>, vector<1x128x128xbf16>
    %394 = vector.shape_cast %393 : vector<1x128x128xbf16> to vector<128x128xbf16>
    %cst_388 = arith.constant dense<0.000000e+00> : vector<9x128xf32>
    %395 = tpu.matmul %390, %394, %cst_388 {dimension_numbers = #tpu.dot_dimension_numbers<[1], [0], [0], [1], [0, 0, 1, 1], [], []>} : vector<9x128xbf16>, vector<128x128xbf16>, vector<9x128xf32> -> vector<9x128xf32>
    %396 = vector.extract_strided_slice %395 {offsets = [0, 0], sizes = [8, 128], strides = [1, 1]} : vector<9x128xf32> to vector<8x128xf32>
    %397 = arith.addf %388, %396 : vector<8x128xf32>
    %c7_389 = arith.constant 7 : index
    %c0_390 = arith.constant 0 : index
    %c0_391 = arith.constant 0 : index
    %398 = vector.load %arg3[%c7_389, %c0_390, %c0_391] : memref<9x128x128xbf16, #tpu.memory_space<vmem>>, vector<1x128x128xbf16>
    %399 = vector.shape_cast %398 : vector<1x128x128xbf16> to vector<128x128xbf16>
    %cst_392 = arith.constant dense<0.000000e+00> : vector<9x128xf32>
    %400 = tpu.matmul %392, %399, %cst_392 {dimension_numbers = #tpu.dot_dimension_numbers<[1], [0], [0], [1], [0, 0, 1, 1], [], []>} : vector<9x128xbf16>, vector<128x128xbf16>, vector<9x128xf32> -> vector<9x128xf32>
    %401 = vector.extract_strided_slice %400 {offsets = [0, 0], sizes = [8, 128], strides = [1, 1]} : vector<9x128xf32> to vector<8x128xf32>
    %402 = arith.addf %397, %401 : vector<8x128xf32>
    %c8_393 = arith.constant 8 : index
    %c0_394 = arith.constant 0 : index
    %c0_395 = arith.constant 0 : index
    %403 = vector.load %arg3[%c8_393, %c0_394, %c0_395] : memref<9x128x128xbf16, #tpu.memory_space<vmem>>, vector<1x128x128xbf16>
    %404 = vector.shape_cast %403 : vector<1x128x128xbf16> to vector<128x128xbf16>
    %cst_396 = arith.constant dense<0.000000e+00> : vector<9x128xf32>
    %405 = tpu.matmul %390, %404, %cst_396 {dimension_numbers = #tpu.dot_dimension_numbers<[1], [0], [0], [1], [0, 0, 1, 1], [], []>} : vector<9x128xbf16>, vector<128x128xbf16>, vector<9x128xf32> -> vector<9x128xf32>
    %406 = vector.extract_strided_slice %405 {offsets = [1, 0], sizes = [8, 128], strides = [1, 1]} : vector<9x128xf32> to vector<8x128xf32>
    %407 = arith.addf %402, %406 : vector<8x128xf32>
    %c0_397 = arith.constant 0 : index
    %c0_398 = arith.constant 0 : index
    %408 = vector.load %arg4[%c0_397, %c0_398] : memref<1x128xf32, #tpu.memory_space<vmem>>, vector<1x128xf32>
    %409 = vector.broadcast %408 : vector<1x128xf32> to vector<8x128xf32>
    %410 = arith.mulf %407, %409 : vector<8x128xf32>
    %c0_399 = arith.constant 0 : index
    %c0_400 = arith.constant 0 : index
    %411 = vector.load %arg5[%c0_399, %c0_400] : memref<1x128xf32, #tpu.memory_space<vmem>>, vector<1x128xf32>
    %412 = vector.broadcast %411 : vector<1x128xf32> to vector<8x128xf32>
    %413 = arith.addf %410, %412 : vector<8x128xf32>
    %cst_401 = arith.constant 0.000000e+00 : f32
    %414 = vector.broadcast %cst_401 : f32 to vector<8x128xf32>
    %415 = arith.maximumf %413, %414 : vector<8x128xf32>
    %416 = arith.truncf %415 : vector<8x128xf32> to vector<8x128xbf16>
    %c0_402 = arith.constant 0 : index
    %c5_403 = arith.constant 5 : index
    %c0_404 = arith.constant 0 : index
    %c0_405 = arith.constant 0 : index
    %417 = vector.load %arg6[%c0_402, %c5_403, %c0_404, %c0_405] : memref<1x8x8x128xbf16, #tpu.memory_space<vmem>>, vector<1x1x8x128xbf16>
    %418 = vector.shape_cast %417 : vector<1x1x8x128xbf16> to vector<8x128xbf16>
    %419 = vector.shape_cast %416 : vector<8x128xbf16> to vector<1x1x8x128xbf16>
    tpu.vector_store %arg6[%c0_402, %c5_403, %c0_404, %c0_405], %419 {strides = array<i32>} : memref<1x8x8x128xbf16, #tpu.memory_space<vmem>>, vector<1x1x8x128xbf16>,
    %cst_406 = arith.constant 0.000000e+00 : f32
    %420 = vector.broadcast %cst_406 : f32 to vector<8x128xf32>
    %c0_407 = arith.constant 0 : index
    %c12_408 = arith.constant 12 : index
    %c0_409 = arith.constant 0 : index
    %c0_410 = arith.constant 0 : index
    %421 = vector.load %arg1[%c0_407, %c12_408, %c0_409, %c0_410] : memref<1x18x9x128xbf16, #tpu.memory_space<vmem>>, vector<1x1x9x128xbf16>
    %422 = vector.shape_cast %421 : vector<1x1x9x128xbf16> to vector<9x128xbf16>
    %c0_411 = arith.constant 0 : index
    %c12_412 = arith.constant 12 : index
    %c0_413 = arith.constant 0 : index
    %c0_414 = arith.constant 0 : index
    %423 = vector.load %arg2[%c0_411, %c12_412, %c0_413, %c0_414] : memref<1x18x9x128xbf16, #tpu.memory_space<vmem>>, vector<1x1x9x128xbf16>
    %424 = vector.shape_cast %423 : vector<1x1x9x128xbf16> to vector<9x128xbf16>
    %c0_415 = arith.constant 0 : index
    %c0_416 = arith.constant 0 : index
    %c0_417 = arith.constant 0 : index
    %425 = vector.load %arg3[%c0_415, %c0_416, %c0_417] : memref<9x128x128xbf16, #tpu.memory_space<vmem>>, vector<1x128x128xbf16>
    %426 = vector.shape_cast %425 : vector<1x128x128xbf16> to vector<128x128xbf16>
    %cst_418 = arith.constant dense<0.000000e+00> : vector<9x128xf32>
    %427 = tpu.matmul %422, %426, %cst_418 {dimension_numbers = #tpu.dot_dimension_numbers<[1], [0], [0], [1], [0, 0, 1, 1], [], []>} : vector<9x128xbf16>, vector<128x128xbf16>, vector<9x128xf32> -> vector<9x128xf32>
    %428 = vector.extract_strided_slice %427 {offsets = [0, 0], sizes = [8, 128], strides = [1, 1]} : vector<9x128xf32> to vector<8x128xf32>
    %429 = arith.addf %420, %428 : vector<8x128xf32>
    %c1_419 = arith.constant 1 : index
    %c0_420 = arith.constant 0 : index
    %c0_421 = arith.constant 0 : index
    %430 = vector.load %arg3[%c1_419, %c0_420, %c0_421] : memref<9x128x128xbf16, #tpu.memory_space<vmem>>, vector<1x128x128xbf16>
    %431 = vector.shape_cast %430 : vector<1x128x128xbf16> to vector<128x128xbf16>
    %cst_422 = arith.constant dense<0.000000e+00> : vector<9x128xf32>
    %432 = tpu.matmul %424, %431, %cst_422 {dimension_numbers = #tpu.dot_dimension_numbers<[1], [0], [0], [1], [0, 0, 1, 1], [], []>} : vector<9x128xbf16>, vector<128x128xbf16>, vector<9x128xf32> -> vector<9x128xf32>
    %433 = vector.extract_strided_slice %432 {offsets = [0, 0], sizes = [8, 128], strides = [1, 1]} : vector<9x128xf32> to vector<8x128xf32>
    %434 = arith.addf %429, %433 : vector<8x128xf32>
    %c2_423 = arith.constant 2 : index
    %c0_424 = arith.constant 0 : index
    %c0_425 = arith.constant 0 : index
    %435 = vector.load %arg3[%c2_423, %c0_424, %c0_425] : memref<9x128x128xbf16, #tpu.memory_space<vmem>>, vector<1x128x128xbf16>
    %436 = vector.shape_cast %435 : vector<1x128x128xbf16> to vector<128x128xbf16>
    %cst_426 = arith.constant dense<0.000000e+00> : vector<9x128xf32>
    %437 = tpu.matmul %422, %436, %cst_426 {dimension_numbers = #tpu.dot_dimension_numbers<[1], [0], [0], [1], [0, 0, 1, 1], [], []>} : vector<9x128xbf16>, vector<128x128xbf16>, vector<9x128xf32> -> vector<9x128xf32>
    %438 = vector.extract_strided_slice %437 {offsets = [1, 0], sizes = [8, 128], strides = [1, 1]} : vector<9x128xf32> to vector<8x128xf32>
    %439 = arith.addf %434, %438 : vector<8x128xf32>
    %c0_427 = arith.constant 0 : index
    %c13 = arith.constant 13 : index
    %c0_428 = arith.constant 0 : index
    %c0_429 = arith.constant 0 : index
    %440 = vector.load %arg1[%c0_427, %c13, %c0_428, %c0_429] : memref<1x18x9x128xbf16, #tpu.memory_space<vmem>>, vector<1x1x9x128xbf16>
    %441 = vector.shape_cast %440 : vector<1x1x9x128xbf16> to vector<9x128xbf16>
    %c0_430 = arith.constant 0 : index
    %c13_431 = arith.constant 13 : index
    %c0_432 = arith.constant 0 : index
    %c0_433 = arith.constant 0 : index
    %442 = vector.load %arg2[%c0_430, %c13_431, %c0_432, %c0_433] : memref<1x18x9x128xbf16, #tpu.memory_space<vmem>>, vector<1x1x9x128xbf16>
    %443 = vector.shape_cast %442 : vector<1x1x9x128xbf16> to vector<9x128xbf16>
    %c3_434 = arith.constant 3 : index
    %c0_435 = arith.constant 0 : index
    %c0_436 = arith.constant 0 : index
    %444 = vector.load %arg3[%c3_434, %c0_435, %c0_436] : memref<9x128x128xbf16, #tpu.memory_space<vmem>>, vector<1x128x128xbf16>
    %445 = vector.shape_cast %444 : vector<1x128x128xbf16> to vector<128x128xbf16>
    %cst_437 = arith.constant dense<0.000000e+00> : vector<9x128xf32>
    %446 = tpu.matmul %441, %445, %cst_437 {dimension_numbers = #tpu.dot_dimension_numbers<[1], [0], [0], [1], [0, 0, 1, 1], [], []>} : vector<9x128xbf16>, vector<128x128xbf16>, vector<9x128xf32> -> vector<9x128xf32>
    %447 = vector.extract_strided_slice %446 {offsets = [0, 0], sizes = [8, 128], strides = [1, 1]} : vector<9x128xf32> to vector<8x128xf32>
    %448 = arith.addf %439, %447 : vector<8x128xf32>
    %c4_438 = arith.constant 4 : index
    %c0_439 = arith.constant 0 : index
    %c0_440 = arith.constant 0 : index
    %449 = vector.load %arg3[%c4_438, %c0_439, %c0_440] : memref<9x128x128xbf16, #tpu.memory_space<vmem>>, vector<1x128x128xbf16>
    %450 = vector.shape_cast %449 : vector<1x128x128xbf16> to vector<128x128xbf16>
    %cst_441 = arith.constant dense<0.000000e+00> : vector<9x128xf32>
    %451 = tpu.matmul %443, %450, %cst_441 {dimension_numbers = #tpu.dot_dimension_numbers<[1], [0], [0], [1], [0, 0, 1, 1], [], []>} : vector<9x128xbf16>, vector<128x128xbf16>, vector<9x128xf32> -> vector<9x128xf32>
    %452 = vector.extract_strided_slice %451 {offsets = [0, 0], sizes = [8, 128], strides = [1, 1]} : vector<9x128xf32> to vector<8x128xf32>
    %453 = arith.addf %448, %452 : vector<8x128xf32>
    %c5_442 = arith.constant 5 : index
    %c0_443 = arith.constant 0 : index
    %c0_444 = arith.constant 0 : index
    %454 = vector.load %arg3[%c5_442, %c0_443, %c0_444] : memref<9x128x128xbf16, #tpu.memory_space<vmem>>, vector<1x128x128xbf16>
    %455 = vector.shape_cast %454 : vector<1x128x128xbf16> to vector<128x128xbf16>
    %cst_445 = arith.constant dense<0.000000e+00> : vector<9x128xf32>
    %456 = tpu.matmul %441, %455, %cst_445 {dimension_numbers = #tpu.dot_dimension_numbers<[1], [0], [0], [1], [0, 0, 1, 1], [], []>} : vector<9x128xbf16>, vector<128x128xbf16>, vector<9x128xf32> -> vector<9x128xf32>
    %457 = vector.extract_strided_slice %456 {offsets = [1, 0], sizes = [8, 128], strides = [1, 1]} : vector<9x128xf32> to vector<8x128xf32>
    %458 = arith.addf %453, %457 : vector<8x128xf32>
    %c0_446 = arith.constant 0 : index
    %c14 = arith.constant 14 : index
    %c0_447 = arith.constant 0 : index
    %c0_448 = arith.constant 0 : index
    %459 = vector.load %arg1[%c0_446, %c14, %c0_447, %c0_448] : memref<1x18x9x128xbf16, #tpu.memory_space<vmem>>, vector<1x1x9x128xbf16>
    %460 = vector.shape_cast %459 : vector<1x1x9x128xbf16> to vector<9x128xbf16>
    %c0_449 = arith.constant 0 : index
    %c14_450 = arith.constant 14 : index
    %c0_451 = arith.constant 0 : index
    %c0_452 = arith.constant 0 : index
    %461 = vector.load %arg2[%c0_449, %c14_450, %c0_451, %c0_452] : memref<1x18x9x128xbf16, #tpu.memory_space<vmem>>, vector<1x1x9x128xbf16>
    %462 = vector.shape_cast %461 : vector<1x1x9x128xbf16> to vector<9x128xbf16>
    %c6_453 = arith.constant 6 : index
    %c0_454 = arith.constant 0 : index
    %c0_455 = arith.constant 0 : index
    %463 = vector.load %arg3[%c6_453, %c0_454, %c0_455] : memref<9x128x128xbf16, #tpu.memory_space<vmem>>, vector<1x128x128xbf16>
    %464 = vector.shape_cast %463 : vector<1x128x128xbf16> to vector<128x128xbf16>
    %cst_456 = arith.constant dense<0.000000e+00> : vector<9x128xf32>
    %465 = tpu.matmul %460, %464, %cst_456 {dimension_numbers = #tpu.dot_dimension_numbers<[1], [0], [0], [1], [0, 0, 1, 1], [], []>} : vector<9x128xbf16>, vector<128x128xbf16>, vector<9x128xf32> -> vector<9x128xf32>
    %466 = vector.extract_strided_slice %465 {offsets = [0, 0], sizes = [8, 128], strides = [1, 1]} : vector<9x128xf32> to vector<8x128xf32>
    %467 = arith.addf %458, %466 : vector<8x128xf32>
    %c7_457 = arith.constant 7 : index
    %c0_458 = arith.constant 0 : index
    %c0_459 = arith.constant 0 : index
    %468 = vector.load %arg3[%c7_457, %c0_458, %c0_459] : memref<9x128x128xbf16, #tpu.memory_space<vmem>>, vector<1x128x128xbf16>
    %469 = vector.shape_cast %468 : vector<1x128x128xbf16> to vector<128x128xbf16>
    %cst_460 = arith.constant dense<0.000000e+00> : vector<9x128xf32>
    %470 = tpu.matmul %462, %469, %cst_460 {dimension_numbers = #tpu.dot_dimension_numbers<[1], [0], [0], [1], [0, 0, 1, 1], [], []>} : vector<9x128xbf16>, vector<128x128xbf16>, vector<9x128xf32> -> vector<9x128xf32>
    %471 = vector.extract_strided_slice %470 {offsets = [0, 0], sizes = [8, 128], strides = [1, 1]} : vector<9x128xf32> to vector<8x128xf32>
    %472 = arith.addf %467, %471 : vector<8x128xf32>
    %c8_461 = arith.constant 8 : index
    %c0_462 = arith.constant 0 : index
    %c0_463 = arith.constant 0 : index
    %473 = vector.load %arg3[%c8_461, %c0_462, %c0_463] : memref<9x128x128xbf16, #tpu.memory_space<vmem>>, vector<1x128x128xbf16>
    %474 = vector.shape_cast %473 : vector<1x128x128xbf16> to vector<128x128xbf16>
    %cst_464 = arith.constant dense<0.000000e+00> : vector<9x128xf32>
    %475 = tpu.matmul %460, %474, %cst_464 {dimension_numbers = #tpu.dot_dimension_numbers<[1], [0], [0], [1], [0, 0, 1, 1], [], []>} : vector<9x128xbf16>, vector<128x128xbf16>, vector<9x128xf32> -> vector<9x128xf32>
    %476 = vector.extract_strided_slice %475 {offsets = [1, 0], sizes = [8, 128], strides = [1, 1]} : vector<9x128xf32> to vector<8x128xf32>
    %477 = arith.addf %472, %476 : vector<8x128xf32>
    %c0_465 = arith.constant 0 : index
    %c0_466 = arith.constant 0 : index
    %478 = vector.load %arg4[%c0_465, %c0_466] : memref<1x128xf32, #tpu.memory_space<vmem>>, vector<1x128xf32>
    %479 = vector.broadcast %478 : vector<1x128xf32> to vector<8x128xf32>
    %480 = arith.mulf %477, %479 : vector<8x128xf32>
    %c0_467 = arith.constant 0 : index
    %c0_468 = arith.constant 0 : index
    %481 = vector.load %arg5[%c0_467, %c0_468] : memref<1x128xf32, #tpu.memory_space<vmem>>, vector<1x128xf32>
    %482 = vector.broadcast %481 : vector<1x128xf32> to vector<8x128xf32>
    %483 = arith.addf %480, %482 : vector<8x128xf32>
    %cst_469 = arith.constant 0.000000e+00 : f32
    %484 = vector.broadcast %cst_469 : f32 to vector<8x128xf32>
    %485 = arith.maximumf %483, %484 : vector<8x128xf32>
    %486 = arith.truncf %485 : vector<8x128xf32> to vector<8x128xbf16>
    %c0_470 = arith.constant 0 : index
    %c6_471 = arith.constant 6 : index
    %c0_472 = arith.constant 0 : index
    %c0_473 = arith.constant 0 : index
    %487 = vector.load %arg6[%c0_470, %c6_471, %c0_472, %c0_473] : memref<1x8x8x128xbf16, #tpu.memory_space<vmem>>, vector<1x1x8x128xbf16>
    %488 = vector.shape_cast %487 : vector<1x1x8x128xbf16> to vector<8x128xbf16>
    %489 = vector.shape_cast %486 : vector<8x128xbf16> to vector<1x1x8x128xbf16>
    tpu.vector_store %arg6[%c0_470, %c6_471, %c0_472, %c0_473], %489 {strides = array<i32>} : memref<1x8x8x128xbf16, #tpu.memory_space<vmem>>, vector<1x1x8x128xbf16>,
    %cst_474 = arith.constant 0.000000e+00 : f32
    %490 = vector.broadcast %cst_474 : f32 to vector<8x128xf32>
    %c0_475 = arith.constant 0 : index
    %c14_476 = arith.constant 14 : index
    %c0_477 = arith.constant 0 : index
    %c0_478 = arith.constant 0 : index
    %491 = vector.load %arg1[%c0_475, %c14_476, %c0_477, %c0_478] : memref<1x18x9x128xbf16, #tpu.memory_space<vmem>>, vector<1x1x9x128xbf16>
    %492 = vector.shape_cast %491 : vector<1x1x9x128xbf16> to vector<9x128xbf16>
    %c0_479 = arith.constant 0 : index
    %c14_480 = arith.constant 14 : index
    %c0_481 = arith.constant 0 : index
    %c0_482 = arith.constant 0 : index
    %493 = vector.load %arg2[%c0_479, %c14_480, %c0_481, %c0_482] : memref<1x18x9x128xbf16, #tpu.memory_space<vmem>>, vector<1x1x9x128xbf16>
    %494 = vector.shape_cast %493 : vector<1x1x9x128xbf16> to vector<9x128xbf16>
    %c0_483 = arith.constant 0 : index
    %c0_484 = arith.constant 0 : index
    %c0_485 = arith.constant 0 : index
    %495 = vector.load %arg3[%c0_483, %c0_484, %c0_485] : memref<9x128x128xbf16, #tpu.memory_space<vmem>>, vector<1x128x128xbf16>
    %496 = vector.shape_cast %495 : vector<1x128x128xbf16> to vector<128x128xbf16>
    %cst_486 = arith.constant dense<0.000000e+00> : vector<9x128xf32>
    %497 = tpu.matmul %492, %496, %cst_486 {dimension_numbers = #tpu.dot_dimension_numbers<[1], [0], [0], [1], [0, 0, 1, 1], [], []>} : vector<9x128xbf16>, vector<128x128xbf16>, vector<9x128xf32> -> vector<9x128xf32>
    %498 = vector.extract_strided_slice %497 {offsets = [0, 0], sizes = [8, 128], strides = [1, 1]} : vector<9x128xf32> to vector<8x128xf32>
    %499 = arith.addf %490, %498 : vector<8x128xf32>
    %c1_487 = arith.constant 1 : index
    %c0_488 = arith.constant 0 : index
    %c0_489 = arith.constant 0 : index
    %500 = vector.load %arg3[%c1_487, %c0_488, %c0_489] : memref<9x128x128xbf16, #tpu.memory_space<vmem>>, vector<1x128x128xbf16>
    %501 = vector.shape_cast %500 : vector<1x128x128xbf16> to vector<128x128xbf16>
    %cst_490 = arith.constant dense<0.000000e+00> : vector<9x128xf32>
    %502 = tpu.matmul %494, %501, %cst_490 {dimension_numbers = #tpu.dot_dimension_numbers<[1], [0], [0], [1], [0, 0, 1, 1], [], []>} : vector<9x128xbf16>, vector<128x128xbf16>, vector<9x128xf32> -> vector<9x128xf32>
    %503 = vector.extract_strided_slice %502 {offsets = [0, 0], sizes = [8, 128], strides = [1, 1]} : vector<9x128xf32> to vector<8x128xf32>
    %504 = arith.addf %499, %503 : vector<8x128xf32>
    %c2_491 = arith.constant 2 : index
    %c0_492 = arith.constant 0 : index
    %c0_493 = arith.constant 0 : index
    %505 = vector.load %arg3[%c2_491, %c0_492, %c0_493] : memref<9x128x128xbf16, #tpu.memory_space<vmem>>, vector<1x128x128xbf16>
    %506 = vector.shape_cast %505 : vector<1x128x128xbf16> to vector<128x128xbf16>
    %cst_494 = arith.constant dense<0.000000e+00> : vector<9x128xf32>
    %507 = tpu.matmul %492, %506, %cst_494 {dimension_numbers = #tpu.dot_dimension_numbers<[1], [0], [0], [1], [0, 0, 1, 1], [], []>} : vector<9x128xbf16>, vector<128x128xbf16>, vector<9x128xf32> -> vector<9x128xf32>
    %508 = vector.extract_strided_slice %507 {offsets = [1, 0], sizes = [8, 128], strides = [1, 1]} : vector<9x128xf32> to vector<8x128xf32>
    %509 = arith.addf %504, %508 : vector<8x128xf32>
    %c0_495 = arith.constant 0 : index
    %c15 = arith.constant 15 : index
    %c0_496 = arith.constant 0 : index
    %c0_497 = arith.constant 0 : index
    %510 = vector.load %arg1[%c0_495, %c15, %c0_496, %c0_497] : memref<1x18x9x128xbf16, #tpu.memory_space<vmem>>, vector<1x1x9x128xbf16>
    %511 = vector.shape_cast %510 : vector<1x1x9x128xbf16> to vector<9x128xbf16>
    %c0_498 = arith.constant 0 : index
    %c15_499 = arith.constant 15 : index
    %c0_500 = arith.constant 0 : index
    %c0_501 = arith.constant 0 : index
    %512 = vector.load %arg2[%c0_498, %c15_499, %c0_500, %c0_501] : memref<1x18x9x128xbf16, #tpu.memory_space<vmem>>, vector<1x1x9x128xbf16>
    %513 = vector.shape_cast %512 : vector<1x1x9x128xbf16> to vector<9x128xbf16>
    %c3_502 = arith.constant 3 : index
    %c0_503 = arith.constant 0 : index
    %c0_504 = arith.constant 0 : index
    %514 = vector.load %arg3[%c3_502, %c0_503, %c0_504] : memref<9x128x128xbf16, #tpu.memory_space<vmem>>, vector<1x128x128xbf16>
    %515 = vector.shape_cast %514 : vector<1x128x128xbf16> to vector<128x128xbf16>
    %cst_505 = arith.constant dense<0.000000e+00> : vector<9x128xf32>
    %516 = tpu.matmul %511, %515, %cst_505 {dimension_numbers = #tpu.dot_dimension_numbers<[1], [0], [0], [1], [0, 0, 1, 1], [], []>} : vector<9x128xbf16>, vector<128x128xbf16>, vector<9x128xf32> -> vector<9x128xf32>
    %517 = vector.extract_strided_slice %516 {offsets = [0, 0], sizes = [8, 128], strides = [1, 1]} : vector<9x128xf32> to vector<8x128xf32>
    %518 = arith.addf %509, %517 : vector<8x128xf32>
    %c4_506 = arith.constant 4 : index
    %c0_507 = arith.constant 0 : index
    %c0_508 = arith.constant 0 : index
    %519 = vector.load %arg3[%c4_506, %c0_507, %c0_508] : memref<9x128x128xbf16, #tpu.memory_space<vmem>>, vector<1x128x128xbf16>
    %520 = vector.shape_cast %519 : vector<1x128x128xbf16> to vector<128x128xbf16>
    %cst_509 = arith.constant dense<0.000000e+00> : vector<9x128xf32>
    %521 = tpu.matmul %513, %520, %cst_509 {dimension_numbers = #tpu.dot_dimension_numbers<[1], [0], [0], [1], [0, 0, 1, 1], [], []>} : vector<9x128xbf16>, vector<128x128xbf16>, vector<9x128xf32> -> vector<9x128xf32>
    %522 = vector.extract_strided_slice %521 {offsets = [0, 0], sizes = [8, 128], strides = [1, 1]} : vector<9x128xf32> to vector<8x128xf32>
    %523 = arith.addf %518, %522 : vector<8x128xf32>
    %c5_510 = arith.constant 5 : index
    %c0_511 = arith.constant 0 : index
    %c0_512 = arith.constant 0 : index
    %524 = vector.load %arg3[%c5_510, %c0_511, %c0_512] : memref<9x128x128xbf16, #tpu.memory_space<vmem>>, vector<1x128x128xbf16>
    %525 = vector.shape_cast %524 : vector<1x128x128xbf16> to vector<128x128xbf16>
    %cst_513 = arith.constant dense<0.000000e+00> : vector<9x128xf32>
    %526 = tpu.matmul %511, %525, %cst_513 {dimension_numbers = #tpu.dot_dimension_numbers<[1], [0], [0], [1], [0, 0, 1, 1], [], []>} : vector<9x128xbf16>, vector<128x128xbf16>, vector<9x128xf32> -> vector<9x128xf32>
    %527 = vector.extract_strided_slice %526 {offsets = [1, 0], sizes = [8, 128], strides = [1, 1]} : vector<9x128xf32> to vector<8x128xf32>
    %528 = arith.addf %523, %527 : vector<8x128xf32>
    %c0_514 = arith.constant 0 : index
    %c16 = arith.constant 16 : index
    %c0_515 = arith.constant 0 : index
    %c0_516 = arith.constant 0 : index
    %529 = vector.load %arg1[%c0_514, %c16, %c0_515, %c0_516] : memref<1x18x9x128xbf16, #tpu.memory_space<vmem>>, vector<1x1x9x128xbf16>
    %530 = vector.shape_cast %529 : vector<1x1x9x128xbf16> to vector<9x128xbf16>
    %c0_517 = arith.constant 0 : index
    %c16_518 = arith.constant 16 : index
    %c0_519 = arith.constant 0 : index
    %c0_520 = arith.constant 0 : index
    %531 = vector.load %arg2[%c0_517, %c16_518, %c0_519, %c0_520] : memref<1x18x9x128xbf16, #tpu.memory_space<vmem>>, vector<1x1x9x128xbf16>
    %532 = vector.shape_cast %531 : vector<1x1x9x128xbf16> to vector<9x128xbf16>
    %c6_521 = arith.constant 6 : index
    %c0_522 = arith.constant 0 : index
    %c0_523 = arith.constant 0 : index
    %533 = vector.load %arg3[%c6_521, %c0_522, %c0_523] : memref<9x128x128xbf16, #tpu.memory_space<vmem>>, vector<1x128x128xbf16>
    %534 = vector.shape_cast %533 : vector<1x128x128xbf16> to vector<128x128xbf16>
    %cst_524 = arith.constant dense<0.000000e+00> : vector<9x128xf32>
    %535 = tpu.matmul %530, %534, %cst_524 {dimension_numbers = #tpu.dot_dimension_numbers<[1], [0], [0], [1], [0, 0, 1, 1], [], []>} : vector<9x128xbf16>, vector<128x128xbf16>, vector<9x128xf32> -> vector<9x128xf32>
    %536 = vector.extract_strided_slice %535 {offsets = [0, 0], sizes = [8, 128], strides = [1, 1]} : vector<9x128xf32> to vector<8x128xf32>
    %537 = arith.addf %528, %536 : vector<8x128xf32>
    %c7_525 = arith.constant 7 : index
    %c0_526 = arith.constant 0 : index
    %c0_527 = arith.constant 0 : index
    %538 = vector.load %arg3[%c7_525, %c0_526, %c0_527] : memref<9x128x128xbf16, #tpu.memory_space<vmem>>, vector<1x128x128xbf16>
    %539 = vector.shape_cast %538 : vector<1x128x128xbf16> to vector<128x128xbf16>
    %cst_528 = arith.constant dense<0.000000e+00> : vector<9x128xf32>
    %540 = tpu.matmul %532, %539, %cst_528 {dimension_numbers = #tpu.dot_dimension_numbers<[1], [0], [0], [1], [0, 0, 1, 1], [], []>} : vector<9x128xbf16>, vector<128x128xbf16>, vector<9x128xf32> -> vector<9x128xf32>
    %541 = vector.extract_strided_slice %540 {offsets = [0, 0], sizes = [8, 128], strides = [1, 1]} : vector<9x128xf32> to vector<8x128xf32>
    %542 = arith.addf %537, %541 : vector<8x128xf32>
    %c8_529 = arith.constant 8 : index
    %c0_530 = arith.constant 0 : index
    %c0_531 = arith.constant 0 : index
    %543 = vector.load %arg3[%c8_529, %c0_530, %c0_531] : memref<9x128x128xbf16, #tpu.memory_space<vmem>>, vector<1x128x128xbf16>
    %544 = vector.shape_cast %543 : vector<1x128x128xbf16> to vector<128x128xbf16>
    %cst_532 = arith.constant dense<0.000000e+00> : vector<9x128xf32>
    %545 = tpu.matmul %530, %544, %cst_532 {dimension_numbers = #tpu.dot_dimension_numbers<[1], [0], [0], [1], [0, 0, 1, 1], [], []>} : vector<9x128xbf16>, vector<128x128xbf16>, vector<9x128xf32> -> vector<9x128xf32>
    %546 = vector.extract_strided_slice %545 {offsets = [1, 0], sizes = [8, 128], strides = [1, 1]} : vector<9x128xf32> to vector<8x128xf32>
    %547 = arith.addf %542, %546 : vector<8x128xf32>
    %c0_533 = arith.constant 0 : index
    %c0_534 = arith.constant 0 : index
    %548 = vector.load %arg4[%c0_533, %c0_534] : memref<1x128xf32, #tpu.memory_space<vmem>>, vector<1x128xf32>
    %549 = vector.broadcast %548 : vector<1x128xf32> to vector<8x128xf32>
    %550 = arith.mulf %547, %549 : vector<8x128xf32>
    %c0_535 = arith.constant 0 : index
    %c0_536 = arith.constant 0 : index
    %551 = vector.load %arg5[%c0_535, %c0_536] : memref<1x128xf32, #tpu.memory_space<vmem>>, vector<1x128xf32>
    %552 = vector.broadcast %551 : vector<1x128xf32> to vector<8x128xf32>
    %553 = arith.addf %550, %552 : vector<8x128xf32>
    %cst_537 = arith.constant 0.000000e+00 : f32
    %554 = vector.broadcast %cst_537 : f32 to vector<8x128xf32>
    %555 = arith.maximumf %553, %554 : vector<8x128xf32>
    %556 = arith.truncf %555 : vector<8x128xf32> to vector<8x128xbf16>
    %c0_538 = arith.constant 0 : index
    %c7_539 = arith.constant 7 : index
    %c0_540 = arith.constant 0 : index
    %c0_541 = arith.constant 0 : index
    %557 = vector.load %arg6[%c0_538, %c7_539, %c0_540, %c0_541] : memref<1x8x8x128xbf16, #tpu.memory_space<vmem>>, vector<1x1x8x128xbf16>
    %558 = vector.shape_cast %557 : vector<1x1x8x128xbf16> to vector<8x128xbf16>
    %559 = vector.shape_cast %556 : vector<8x128xbf16> to vector<1x1x8x128xbf16>
    tpu.vector_store %arg6[%c0_538, %c7_539, %c0_540, %c0_541], %559 {strides = array<i32>} : memref<1x8x8x128xbf16, #tpu.memory_space<vmem>>, vector<1x1x8x128xbf16>,
    return
  }
  func.func @transform_0(%arg0: i32) -> (i32, i32, i32, i32) {
    %c0_i32 = arith.constant 0 : i32
    %c0_i32_0 = arith.constant 0 : i32
    %c0_i32_1 = arith.constant 0 : i32
    %c0_i32_2 = arith.constant 0 : i32
    return %arg0, %c0_i32, %c0_i32_0, %c0_i32_1 : i32, i32, i32, i32
  }
  func.func @transform_1(%arg0: i32) -> (i32, i32, i32, i32) {
    %c0_i32 = arith.constant 0 : i32
    %c0_i32_0 = arith.constant 0 : i32
    %c0_i32_1 = arith.constant 0 : i32
    %c0_i32_2 = arith.constant 0 : i32
    return %arg0, %c0_i32, %c0_i32_0, %c0_i32_1 : i32, i32, i32, i32
  }
  func.func @transform_2(%arg0: i32) -> (i32, i32, i32) {
    %c0_i32 = arith.constant 0 : i32
    %c0_i32_0 = arith.constant 0 : i32
    %c0_i32_1 = arith.constant 0 : i32
    %c0_i32_2 = arith.constant 0 : i32
    return %c0_i32, %c0_i32_0, %c0_i32_1 : i32, i32, i32
  }
  func.func @transform_3(%arg0: i32) -> (i32, i32) {
    %c0_i32 = arith.constant 0 : i32
    %c0_i32_0 = arith.constant 0 : i32
    %c0_i32_1 = arith.constant 0 : i32
    return %c0_i32, %c0_i32_0 : i32, i32
  }
  func.func @transform_4(%arg0: i32) -> (i32, i32) {
    %c0_i32 = arith.constant 0 : i32
    %c0_i32_0 = arith.constant 0 : i32
    %c0_i32_1 = arith.constant 0 : i32
    return %c0_i32, %c0_i32_0 : i32, i32
  }
  func.func @transform_5(%arg0: i32) -> (i32, i32, i32, i32) {
    %c0_i32 = arith.constant 0 : i32
    %c0_i32_0 = arith.constant 0 : i32
    %c0_i32_1 = arith.constant 0 : i32
    %c0_i32_2 = arith.constant 0 : i32
    return %arg0, %c0_i32, %c0_i32_0, %c0_i32_1 : i32, i32, i32, i32
  }
}

module attributes {stable_mosaic.version = 11 : i64} {
  func.func @kernel(%arg0: i32, %arg1: memref<64x128xbf16, #tpu.memory_space<vmem>>, %arg2: memref<128x128xbf16, #tpu.memory_space<vmem>>, %arg3: memref<1x128xf32, #tpu.memory_space<vmem>>, %arg4: memref<1x128xf32, #tpu.memory_space<vmem>>, %arg5: memref<64x128xbf16, #tpu.memory_space<vmem>>) attributes {dimension_semantics = [#tpu.dimension_semantics<parallel>], iteration_bounds = array<i64: 2>, scalar_prefetch = 0 : i64, scratch_operands = 0 : i64, tpu.core_type = #tpu.core_type<tc>, window_params = [{transform_indices = @transform_0, window_bounds = array<i64: 64, 128>}, {pipeline_mode = #tpu.pipeline_mode<synchronous>, transform_indices = @transform_1, window_bounds = array<i64: 128, 128>}, {pipeline_mode = #tpu.pipeline_mode<synchronous>, transform_indices = @transform_2, window_bounds = array<i64: 1, 128>}, {pipeline_mode = #tpu.pipeline_mode<synchronous>, transform_indices = @transform_3, window_bounds = array<i64: 1, 128>}, {transform_indices = @transform_4, window_bounds = array<i64: 64, 128>}]} {
    %c0 = arith.constant 0 : index
    %c0_0 = arith.constant 0 : index
    %0 = vector.load %arg1[%c0, %c0_0] : memref<64x128xbf16, #tpu.memory_space<vmem>>, vector<64x128xbf16>
    %c0_1 = arith.constant 0 : index
    %c0_2 = arith.constant 0 : index
    %1 = vector.load %arg2[%c0_1, %c0_2] : memref<128x128xbf16, #tpu.memory_space<vmem>>, vector<128x128xbf16>
    %cst = arith.constant dense<0.000000e+00> : vector<64x128xf32>
    %2 = tpu.matmul %0, %1, %cst {dimension_numbers = #tpu.dot_dimension_numbers<[1], [0], [0], [1], [0, 0, 1, 1], [], []>} : vector<64x128xbf16>, vector<128x128xbf16>, vector<64x128xf32> -> vector<64x128xf32>
    %c0_3 = arith.constant 0 : index
    %c0_4 = arith.constant 0 : index
    %3 = vector.load %arg3[%c0_3, %c0_4] : memref<1x128xf32, #tpu.memory_space<vmem>>, vector<1x128xf32>
    %4 = vector.broadcast %3 : vector<1x128xf32> to vector<64x128xf32>
    %5 = arith.mulf %2, %4 : vector<64x128xf32>
    %c0_5 = arith.constant 0 : index
    %c0_6 = arith.constant 0 : index
    %6 = vector.load %arg4[%c0_5, %c0_6] : memref<1x128xf32, #tpu.memory_space<vmem>>, vector<1x128xf32>
    %7 = vector.broadcast %6 : vector<1x128xf32> to vector<64x128xf32>
    %8 = arith.addf %5, %7 : vector<64x128xf32>
    %9 = arith.truncf %8 : vector<64x128xf32> to vector<64x128xbf16>
    %c0_7 = arith.constant 0 : index
    %c0_8 = arith.constant 0 : index
    %10 = vector.load %arg5[%c0_7, %c0_8] : memref<64x128xbf16, #tpu.memory_space<vmem>>, vector<64x128xbf16>
    tpu.vector_store %arg5[%c0_7, %c0_8], %9 {strides = array<i32>} : memref<64x128xbf16, #tpu.memory_space<vmem>>, vector<64x128xbf16>,
    return
  }
  func.func @transform_0(%arg0: i32) -> (i32, i32) {
    %c0_i32 = arith.constant 0 : i32
    %c0_i32_0 = arith.constant 0 : i32
    return %arg0, %c0_i32 : i32, i32
  }
  func.func @transform_1(%arg0: i32) -> (i32, i32) {
    %c0_i32 = arith.constant 0 : i32
    %c0_i32_0 = arith.constant 0 : i32
    %c0_i32_1 = arith.constant 0 : i32
    return %c0_i32, %c0_i32_0 : i32, i32
  }
  func.func @transform_2(%arg0: i32) -> (i32, i32) {
    %c0_i32 = arith.constant 0 : i32
    %c0_i32_0 = arith.constant 0 : i32
    %c0_i32_1 = arith.constant 0 : i32
    return %c0_i32, %c0_i32_0 : i32, i32
  }
  func.func @transform_3(%arg0: i32) -> (i32, i32) {
    %c0_i32 = arith.constant 0 : i32
    %c0_i32_0 = arith.constant 0 : i32
    %c0_i32_1 = arith.constant 0 : i32
    return %c0_i32, %c0_i32_0 : i32, i32
  }
  func.func @transform_4(%arg0: i32) -> (i32, i32) {
    %c0_i32 = arith.constant 0 : i32
    %c0_i32_0 = arith.constant 0 : i32
    return %arg0, %c0_i32 : i32, i32
  }
}

module attributes {stable_mosaic.version = 11 : i64} {
  func.func @kernel(%arg0: i32, %arg1: memref<64x128xbf16, #tpu.memory_space<vmem>>, %arg2: memref<128x128xbf16, #tpu.memory_space<vmem>>, %arg3: memref<1x128xf32, #tpu.memory_space<vmem>>, %arg4: memref<1x128xf32, #tpu.memory_space<vmem>>, %arg5: memref<64x128xbf16, #tpu.memory_space<vmem>>, %arg6: memref<64x128xbf16, #tpu.memory_space<vmem>>) attributes {dimension_semantics = [#tpu.dimension_semantics<parallel>], iteration_bounds = array<i64: 2>, scalar_prefetch = 0 : i64, scratch_operands = 0 : i64, tpu.core_type = #tpu.core_type<tc>, window_params = [{transform_indices = @transform_0, window_bounds = array<i64: 64, 128>}, {pipeline_mode = #tpu.pipeline_mode<synchronous>, transform_indices = @transform_1, window_bounds = array<i64: 128, 128>}, {pipeline_mode = #tpu.pipeline_mode<synchronous>, transform_indices = @transform_2, window_bounds = array<i64: 1, 128>}, {pipeline_mode = #tpu.pipeline_mode<synchronous>, transform_indices = @transform_3, window_bounds = array<i64: 1, 128>}, {transform_indices = @transform_4, window_bounds = array<i64: 64, 128>}, {transform_indices = @transform_5, window_bounds = array<i64: 64, 128>}]} {
    %c0 = arith.constant 0 : index
    %c0_0 = arith.constant 0 : index
    %0 = vector.load %arg1[%c0, %c0_0] : memref<64x128xbf16, #tpu.memory_space<vmem>>, vector<64x128xbf16>
    %c0_1 = arith.constant 0 : index
    %c0_2 = arith.constant 0 : index
    %1 = vector.load %arg2[%c0_1, %c0_2] : memref<128x128xbf16, #tpu.memory_space<vmem>>, vector<128x128xbf16>
    %cst = arith.constant dense<0.000000e+00> : vector<64x128xf32>
    %2 = tpu.matmul %0, %1, %cst {dimension_numbers = #tpu.dot_dimension_numbers<[1], [0], [0], [1], [0, 0, 1, 1], [], []>} : vector<64x128xbf16>, vector<128x128xbf16>, vector<64x128xf32> -> vector<64x128xf32>
    %c0_3 = arith.constant 0 : index
    %c0_4 = arith.constant 0 : index
    %3 = vector.load %arg3[%c0_3, %c0_4] : memref<1x128xf32, #tpu.memory_space<vmem>>, vector<1x128xf32>
    %4 = vector.broadcast %3 : vector<1x128xf32> to vector<64x128xf32>
    %5 = arith.mulf %2, %4 : vector<64x128xf32>
    %c0_5 = arith.constant 0 : index
    %c0_6 = arith.constant 0 : index
    %6 = vector.load %arg4[%c0_5, %c0_6] : memref<1x128xf32, #tpu.memory_space<vmem>>, vector<1x128xf32>
    %7 = vector.broadcast %6 : vector<1x128xf32> to vector<64x128xf32>
    %8 = arith.addf %5, %7 : vector<64x128xf32>
    %c0_7 = arith.constant 0 : index
    %c0_8 = arith.constant 0 : index
    %9 = vector.load %arg5[%c0_7, %c0_8] : memref<64x128xbf16, #tpu.memory_space<vmem>>, vector<64x128xbf16>
    %10 = arith.extf %9 : vector<64x128xbf16> to vector<64x128xf32>
    %11 = arith.addf %8, %10 : vector<64x128xf32>
    %cst_9 = arith.constant 0.000000e+00 : f32
    %12 = vector.broadcast %cst_9 : f32 to vector<64x128xf32>
    %13 = arith.maximumf %11, %12 : vector<64x128xf32>
    %14 = arith.truncf %13 : vector<64x128xf32> to vector<64x128xbf16>
    %c0_10 = arith.constant 0 : index
    %c0_11 = arith.constant 0 : index
    %15 = vector.load %arg6[%c0_10, %c0_11] : memref<64x128xbf16, #tpu.memory_space<vmem>>, vector<64x128xbf16>
    tpu.vector_store %arg6[%c0_10, %c0_11], %14 {strides = array<i32>} : memref<64x128xbf16, #tpu.memory_space<vmem>>, vector<64x128xbf16>,
    return
  }
  func.func @transform_0(%arg0: i32) -> (i32, i32) {
    %c0_i32 = arith.constant 0 : i32
    %c0_i32_0 = arith.constant 0 : i32
    return %arg0, %c0_i32 : i32, i32
  }
  func.func @transform_1(%arg0: i32) -> (i32, i32) {
    %c0_i32 = arith.constant 0 : i32
    %c0_i32_0 = arith.constant 0 : i32
    %c0_i32_1 = arith.constant 0 : i32
    return %c0_i32, %c0_i32_0 : i32, i32
  }
  func.func @transform_2(%arg0: i32) -> (i32, i32) {
    %c0_i32 = arith.constant 0 : i32
    %c0_i32_0 = arith.constant 0 : i32
    %c0_i32_1 = arith.constant 0 : i32
    return %c0_i32, %c0_i32_0 : i32, i32
  }
  func.func @transform_3(%arg0: i32) -> (i32, i32) {
    %c0_i32 = arith.constant 0 : i32
    %c0_i32_0 = arith.constant 0 : i32
    %c0_i32_1 = arith.constant 0 : i32
    return %c0_i32, %c0_i32_0 : i32, i32
  }
  func.func @transform_4(%arg0: i32) -> (i32, i32) {
    %c0_i32 = arith.constant 0 : i32
    %c0_i32_0 = arith.constant 0 : i32
    return %arg0, %c0_i32 : i32, i32
  }
  func.func @transform_5(%arg0: i32) -> (i32, i32) {
    %c0_i32 = arith.constant 0 : i32
    %c0_i32_0 = arith.constant 0 : i32
    return %arg0, %c0_i32 : i32, i32
  }
}

</mosaic_0001>

<llo_original>
// kernel: _lambda_.4
$region0: #{_lambda_.4}
  #allocation0 [shape = 'u32[]', space=smem, size = 0x4, offset = 0x4, fixed_abs, tag = 'smem constant byte address 0x4 - core index']
  #allocation1 [shape = 'u32[144,128]{1,0:T(1,128)}', space=vmem, size = 0x12000, scoped, tag = 'internal scratch']
  %s0 = inlined_call_operand.vmem [shape: bf16[512,128], index: 0, kind: input, shape index: {}]
  %s1 = inlined_call_operand.vmem [shape: bf16[128,128], index: 1, kind: input, shape index: {}]
  %s2 = inlined_call_operand.vmem [shape: f32[1,128], index: 2, kind: input, shape index: {}]
  %s3 = inlined_call_operand.vmem [shape: f32[1,128], index: 3, kind: input, shape index: {}]
  %s4 = inlined_call_operand.vmem [shape: bf16[512,128], index: 4, kind: output, shape index: {}]
  %s5 = sld [smem:[#allocation0]]
  $region49: #{_lambda_.4} parent=0
    _
  %s7 = ssub.s32 1, %s5
  %s8 = scalar_select 0, %s7, %s5
  loop: start=0, step=1, limit=4
  $region2: #{_lambda_.4} parent=0 // loop_pre_header
    _
  $region3: #{_lambda_.4} parent=0 // loop_header
    %s10 = sphi 0, %s14
    %p11 = scmp.ge.s32.totalorder %s10, 4
    %s20 = sphi 0, %s22
    %s23 = sphi 0, %s20
    %s24 = sphi 0, %s23
    %s40 = sphi 0, %s24
    %s44 = sphi 0, %s44
    %s46 = sphi 0, %s44
    %s47 = sphi 0, %s46
    %s61 = sphi 0, %s47
    %s65 = sphi 0, %s65
    %s67 = sphi 0, %s65
    %s68 = sphi 0, %s67
    %s82 = sphi 0, %s68
    %s86 = sphi 0, %s86
    %s88 = sphi 0, %s86
    %s89 = sphi 0, %s88
    %s103 = sphi 0, %s89
    %s109 = sphi 0, %s111
    %s112 = sphi 0, %s109
    %s113 = sphi 0, %s112
    %s129 = sphi 0, %s113
  $region4: #{_lambda_.4} parent=0 // loop_header_branch
    %13 = sbr.rel (%p11) target = $region8
  $region5: #{_lambda_.4} parent=0 // loop_body
    %s15 = ssub.s32 %s10, 1
    %s16 = ssub.s32 %s10, 2
    %s17 = sadd.s32 %s10, 1
    %s18 = ssub.s32 %s10, %s17
    %p19 = scmp.eq.s32.totalorder %s18, 0
    %s21 = sadd.s32 %s20, 1
    %s22 = scalar_select %p19, %s20, %s21
    %p25 = pneg %p19
    %p26 = scmp.eq.s32.totalorder %s10, 1
    %p27 = por %p25, %p26
    %p28 = scmp.ne.s32.totalorder %s20, %s23
    %p29 = scmp.eq.s32.totalorder %s10, 0
    %p30 = por %p28, %p29
    %p31 = scmp.ne.s32.totalorder %s20, %s23
    %p32 = scmp.eq.s32.totalorder %s15, 1
    %p33 = por %p31, %p32
    %p34 = scmp.ne.s32.totalorder %s23, %s24
    %p35 = scmp.eq.s32.totalorder %s15, 0
    %p36 = por %p34, %p35
    %p37 = scmp.ne.s32.totalorder %s23, %s24
    %p38 = scmp.eq.s32.totalorder %s16, 1
    %p39 = por %p37, %p38
    %p41 = scmp.ne.s32.totalorder %s24, %s40
    %p42 = scmp.eq.s32.totalorder %s16, 0
    %p43 = por %p41, %p42
    %s45 = sadd.s32 %s44, 1
    %p48 = scmp.eq.s32.totalorder %s10, 1
    %p49 = scmp.ne.s32.totalorder %s44, %s46
    %p50 = scmp.eq.s32.totalorder %s10, 0
    %p51 = por %p49, %p50
    %p52 = scmp.ne.s32.totalorder %s44, %s46
    %p53 = scmp.eq.s32.totalorder %s15, 1
    %p54 = por %p52, %p53
    %p55 = scmp.ne.s32.totalorder %s46, %s47
    %p56 = scmp.eq.s32.totalorder %s15, 0
    %p57 = por %p55, %p56
    %p58 = scmp.ne.s32.totalorder %s46, %s47
    %p59 = scmp.eq.s32.totalorder %s16, 1
    %p60 = por %p58, %p59
    %p62 = scmp.ne.s32.totalorder %s47, %s61
    %p63 = scmp.eq.s32.totalorder %s16, 0
    %p64 = por %p62, %p63
    %s66 = sadd.s32 %s65, 1
    %p69 = scmp.eq.s32.totalorder %s10, 1
    %p70 = scmp.ne.s32.totalorder %s65, %s67
    %p71 = scmp.eq.s32.totalorder %s10, 0
    %p72 = por %p70, %p71
    %p73 = scmp.ne.s32.totalorder %s65, %s67
    %p74 = scmp.eq.s32.totalorder %s15, 1
    %p75 = por %p73, %p74
    %p76 = scmp.ne.s32.totalorder %s67, %s68
    %p77 = scmp.eq.s32.totalorder %s15, 0
    %p78 = por %p76, %p77
    %p79 = scmp.ne.s32.totalorder %s67, %s68
    %p80 = scmp.eq.s32.totalorder %s16, 1
    %p81 = por %p79, %p80
    %p83 = scmp.ne.s32.totalorder %s68, %s82
    %p84 = scmp.eq.s32.totalorder %s16, 0
    %p85 = por %p83, %p84
    %s87 = sadd.s32 %s86, 1
    %p90 = scmp.eq.s32.totalorder %s10, 1
    %p91 = scmp.ne.s32.totalorder %s86, %s88
    %p92 = scmp.eq.s32.totalorder %s10, 0
    %p93 = por %p91, %p92
    %p94 = scmp.ne.s32.totalorder %s86, %s88
    %p95 = scmp.eq.s32.totalorder %s15, 1
    %p96 = por %p94, %p95
    %p97 = scmp.ne.s32.totalorder %s88, %s89
    %p98 = scmp.eq.s32.totalorder %s15, 0
    %p99 = por %p97, %p98
    %p100 = scmp.ne.s32.totalorder %s88, %s89
    %p101 = scmp.eq.s32.totalorder %s16, 1
    %p102 = por %p100, %p101
    %p104 = scmp.ne.s32.totalorder %s89, %s103
    %p105 = scmp.eq.s32.totalorder %s16, 0
    %p106 = por %p104, %p105
    %s107 = ssub.s32 %s10, %s17
    %p108 = scmp.eq.s32.totalorder %s107, 0
    %s110 = sadd.s32 %s109, 1
    %s111 = scalar_select %p108, %s109, %s110
    %p114 = pneg %p108
    %p115 = scmp.eq.s32.totalorder %s10, 1
    %p116 = por %p114, %p115
    %p117 = scmp.ne.s32.totalorder %s109, %s112
    %p118 = scmp.eq.s32.totalorder %s10, 0
    %p119 = por %p117, %p118
    %p120 = scmp.ne.s32.totalorder %s109, %s112
    %p121 = scmp.eq.s32.totalorder %s15, 1
    %p122 = por %p120, %p121
    %p123 = scmp.ne.s32.totalorder %s112, %s113
    %p124 = scmp.eq.s32.totalorder %s15, 0
    %p125 = por %p123, %p124
    %p126 = scmp.ne.s32.totalorder %s112, %s113
    %p127 = scmp.eq.s32.totalorder %s16, 1
    %p128 = por %p126, %p127
    %p130 = scmp.ne.s32.totalorder %s113, %s129
    %p131 = scmp.eq.s32.totalorder %s16, 0
    %p132 = por %p130, %p131
    %p133 = scmp.le.s32.totalorder 1, %s10
    %p134 = scmp.lt.s32.totalorder %s10, 3
    %p135 = pnand %p133, %p134
    %p136 = pneg %p135
    // Predicated region
    $region9: #{_lambda_.4} parent=5 // pred_check
      _
    $region10: #{_lambda_.4} parent=5 // pred_check_branch
      %138 = sbr.rel (%p135) target = $region12
    $region11: #{_lambda_.4} parent=5 // pred_region
      %s139 = ssub.s32 %s10, 1
      // Predicated region
      $region13: #{_lambda_.4} parent=11 // pred_check
        %p140 = pneg %p57
      $region14: #{_lambda_.4} parent=11 // pred_check_branch
        %142 = sbr.rel (%p140) target = $region16
      $region15: #{_lambda_.4} parent=11 // pred_region
        _
      $region16: #{_lambda_.4} parent=11 // pred_fallthru
        _
      // Predicated region
      $region17: #{_lambda_.4} parent=11 // pred_check
        %p143 = pneg %p78
      $region18: #{_lambda_.4} parent=11 // pred_check_branch
        %145 = sbr.rel (%p143) target = $region20
      $region19: #{_lambda_.4} parent=11 // pred_region
        _
      $region20: #{_lambda_.4} parent=11 // pred_fallthru
        _
      // Predicated region
      $region21: #{_lambda_.4} parent=11 // pred_check
        %p146 = pneg %p99
      $region22: #{_lambda_.4} parent=11 // pred_check_branch
        %148 = sbr.rel (%p146) target = $region24
      $region23: #{_lambda_.4} parent=11 // pred_region
        _
      $region24: #{_lambda_.4} parent=11 // pred_fallthru
        _
    $region12: #{_lambda_.4} parent=5 // pred_fallthru
      _
    %p149 = scmp.lt.s32.totalorder %s10, 2
    // Predicated region
    $region25: #{_lambda_.4} parent=5 // pred_check
      %p150 = pneg %p149
    $region26: #{_lambda_.4} parent=5 // pred_check_branch
      %152 = sbr.rel (%p150) target = $region28
    $region27: #{_lambda_.4} parent=5 // pred_region
      // Predicated region
      $region29: #{_lambda_.4} parent=27 // pred_check
        %p153 = pneg %p30
      $region30: #{_lambda_.4} parent=27 // pred_check_branch
        %155 = sbr.rel (%p153) target = $region32
      $region31: #{_lambda_.4} parent=27 // pred_region
        %s156 = smul.u32 32, %s10
        %p157 = scmp.lt.s32.totalorder %s156, 63
        %s158 = scalar_select %p157, %s156, 63
        %s159 = smul.addr %s158, 4
        %s160 = scalar_lea.vmem %s0, %s159
        %s161 = smul.u32 32, %s10
      $region32: #{_lambda_.4} parent=27 // pred_fallthru
        _
    $region28: #{_lambda_.4} parent=5 // pred_fallthru
      _
    %p162 = scmp.le.s32.totalorder 1, %s10
    %p163 = scmp.lt.s32.totalorder %s10, 3
    %p164 = pnand %p162, %p163
    %p165 = pneg %p164
    // Predicated region
    $region33: #{_lambda_.4} parent=5 // pred_check
      _
    $region34: #{_lambda_.4} parent=5 // pred_check_branch
      %167 = sbr.rel (%p164) target = $region36
    $region35: #{_lambda_.4} parent=5 // pred_region
      %s168 = ssub.s32 %s10, 1
      %s169 = smul.u32 32, %s15
      %p170 = scmp.lt.s32.totalorder %s169, 63
      %s171 = scalar_select %p170, %s169, 63
      %s172 = smul.addr %s171, 4
      %s173 = scalar_lea.vmem %s0, %s172
      %p174 = pneg %p36
      %p175 = pneg %p33
      %p176 = pneg %p57
      %p177 = pneg %p54
      %p178 = pneg %p78
      %p179 = pneg %p75
      %p180 = pneg %p99
      %p181 = pneg %p96
      %p182 = pneg %p125
      %p183 = pneg %p122
      %s184 = smul.u32 32, %s15
      %p185 = scmp.lt.s32.totalorder %s184, 63
      %s186 = scalar_select %p185, %s184, 63
      %s187 = smul.addr %s186, 4
      %s188 = scalar_lea.vmem %s4, %s187
      %s189 = smul.u32 32, %s15
      %p190 = scmp.lt.s32.totalorder %s189, 63
      %s191 = scalar_select %p190, %s189, 63
      %s192 = smul.addr %s191, 4
      %s193 = scalar_lea.vmem %s0, %s192
      %s194 = smul.u32 32, %s15
      %s195 = smul.u32 32, %s15
      %p196 = scmp.lt.s32.totalorder %s195, 63
      %s197 = scalar_select %p196, %s195, 63
      %s198 = smul.addr %s197, 4
      %s199 = scalar_lea.vmem %s4, %s198
      %s200 = smul.u32 32, %s15
      %v202 = vld [vmem:[%s193] sm:$0xf]
      %v203 = vld [vmem:[%s193 + $0x4] sm:$0xf]
      %v204 = vld [vmem:[%s193 + $0x8] sm:$0xf]
      %v205 = vld [vmem:[%s193 + $0xc] sm:$0xf]
      %v206 = vld [vmem:[%s193 + $0x10] sm:$0xf]
      %v207 = vld [vmem:[%s193 + $0x14] sm:$0xf]
      %v208 = vld [vmem:[%s193 + $0x18] sm:$0xf]
      %v209 = vld [vmem:[%s193 + $0x1c] sm:$0xf]
      %v210 = vld [vmem:[%s193 + $0x20] sm:$0xf]
      %v211 = vld [vmem:[%s193 + $0x24] sm:$0xf]
      %v212 = vld [vmem:[%s193 + $0x28] sm:$0xf]
      %v213 = vld [vmem:[%s193 + $0x2c] sm:$0xf]
      %v214 = vld [vmem:[%s193 + $0x30] sm:$0xf]
      %v215 = vld [vmem:[%s193 + $0x34] sm:$0xf]
      %v216 = vld [vmem:[%s193 + $0x38] sm:$0xf]
      %v217 = vld [vmem:[%s193 + $0x3c] sm:$0xf]
      %v218 = vld [vmem:[%s193 + $0x40] sm:$0xf]
      %v219 = vld [vmem:[%s193 + $0x44] sm:$0xf]
      %v220 = vld [vmem:[%s193 + $0x48] sm:$0xf]
      %v221 = vld [vmem:[%s193 + $0x4c] sm:$0xf]
      %v222 = vld [vmem:[%s193 + $0x50] sm:$0xf]
      %v223 = vld [vmem:[%s193 + $0x54] sm:$0xf]
      %v224 = vld [vmem:[%s193 + $0x58] sm:$0xf]
      %v225 = vld [vmem:[%s193 + $0x5c] sm:$0xf]
      %v226 = vld [vmem:[%s193 + $0x60] sm:$0xf]
      %v227 = vld [vmem:[%s193 + $0x64] sm:$0xf]
      %v228 = vld [vmem:[%s193 + $0x68] sm:$0xf]
      %v229 = vld [vmem:[%s193 + $0x6c] sm:$0xf]
      %v230 = vld [vmem:[%s193 + $0x70] sm:$0xf]
      %v231 = vld [vmem:[%s193 + $0x74] sm:$0xf]
      %v232 = vld [vmem:[%s193 + $0x78] sm:$0xf]
      %v233 = vld [vmem:[%s193 + $0x7c] sm:$0xf]
      %v234 = vld [vmem:[%s1] sm:$0xf]
      %v235 = vld [vmem:[%s1 + $0x4] sm:$0xf]
      %v236 = vld [vmem:[%s1 + $0x8] sm:$0xf]
      %v237 = vld [vmem:[%s1 + $0xc] sm:$0xf]
      %v238 = vld [vmem:[%s1 + $0x10] sm:$0xf]
      %v239 = vld [vmem:[%s1 + $0x14] sm:$0xf]
      %v240 = vld [vmem:[%s1 + $0x18] sm:$0xf]
      %v241 = vld [vmem:[%s1 + $0x1c] sm:$0xf]
      %v242 = vld [vmem:[%s1 + $0x20] sm:$0xf]
      %v243 = vld [vmem:[%s1 + $0x24] sm:$0xf]
      %v244 = vld [vmem:[%s1 + $0x28] sm:$0xf]
      %v245 = vld [vmem:[%s1 + $0x2c] sm:$0xf]
      %v246 = vld [vmem:[%s1 + $0x30] sm:$0xf]
      %v247 = vld [vmem:[%s1 + $0x34] sm:$0xf]
      %v248 = vld [vmem:[%s1 + $0x38] sm:$0xf]
      %v249 = vld [vmem:[%s1 + $0x3c] sm:$0xf]
      %v282 = vunpack.c.l.b16 %v202
      %v283 = vunpack.c.l.b16 %v203
      %v284 = vunpack.c.l.b16 %v204
      %v285 = vunpack.c.l.b16 %v205
      %v286 = vunpack.c.l.b16 %v206
      %v287 = vunpack.c.l.b16 %v207
      %v288 = vunpack.c.l.b16 %v208
      %v289 = vunpack.c.l.b16 %v209
      %v290 = vunpack.c.l.b16 %v210
      %v291 = vunpack.c.l.b16 %v211
      %v292 = vunpack.c.l.b16 %v212
      %v293 = vunpack.c.l.b16 %v213
      %v294 = vunpack.c.l.b16 %v214
      %v295 = vunpack.c.l.b16 %v215
      %v296 = vunpack.c.l.b16 %v216
      %v297 = vunpack.c.l.b16 %v217
      %v298 = vunpack.c.l.b16 %v218
      %v299 = vunpack.c.l.b16 %v219
      %v300 = vunpack.c.l.b16 %v220
      %v301 = vunpack.c.l.b16 %v221
      %v302 = vunpack.c.l.b16 %v222
      %v303 = vunpack.c.l.b16 %v223
      %v304 = vunpack.c.l.b16 %v224
      %v305 = vunpack.c.l.b16 %v225
      %v306 = vunpack.c.l.b16 %v226
      %v307 = vunpack.c.l.b16 %v227
      %v308 = vunpack.c.l.b16 %v228
      %v309 = vunpack.c.l.b16 %v229
      %v310 = vunpack.c.l.b16 %v230
      %v311 = vunpack.c.l.b16 %v231
      %v312 = vunpack.c.l.b16 %v232
      %v313 = vunpack.c.l.b16 %v233
      %v314 = vpack.c.b16 %v283, %v282
      %v315 = vpack.c.b16 %v285, %v284
      %v316 = vpack.c.b16 %v287, %v286
      %v317 = vpack.c.b16 %v289, %v288
      %v318 = vpack.c.b16 %v291, %v290
      %v319 = vpack.c.b16 %v293, %v292
      %v320 = vpack.c.b16 %v295, %v294
      %v321 = vpack.c.b16 %v297, %v296
      %v322 = vpack.c.b16 %v299, %v298
      %v323 = vpack.c.b16 %v301, %v300
      %v324 = vpack.c.b16 %v303, %v302
      %v325 = vpack.c.b16 %v305, %v304
      %v326 = vpack.c.b16 %v307, %v306
      %v327 = vpack.c.b16 %v309, %v308
      %v328 = vpack.c.b16 %v311, %v310
      %v329 = vpack.c.b16 %v313, %v312
      %v362 = vunpack.c.l.b16 %v234
      %v363 = vunpack.c.l.b16 %v235
      %v364 = vunpack.c.l.b16 %v236
      %v365 = vunpack.c.l.b16 %v237
      %v366 = vunpack.c.l.b16 %v238
      %v367 = vunpack.c.l.b16 %v239
      %v368 = vunpack.c.l.b16 %v240
      %v369 = vunpack.c.l.b16 %v241
      %v370 = vunpack.c.l.b16 %v242
      %v371 = vunpack.c.l.b16 %v243
      %v372 = vunpack.c.l.b16 %v244
      %v373 = vunpack.c.l.b16 %v245
      %v374 = vunpack.c.l.b16 %v246
      %v375 = vunpack.c.l.b16 %v247
      %v376 = vunpack.c.l.b16 %v248
      %v377 = vunpack.c.l.b16 %v249
      %v378 = vpack.c.b16 %v363, %v362
      %v379 = vpack.c.b16 %v365, %v364
      %v380 = vpack.c.b16 %v367, %v366
      %v381 = vpack.c.b16 %v369, %v368
      %v382 = vpack.c.b16 %v371, %v370
      %v383 = vpack.c.b16 %v373, %v372
      %v384 = vpack.c.b16 %v375, %v374
      %v385 = vpack.c.b16 %v377, %v376
      %394 = vmatprep.subr.bf16.mxu0 0
      %395 = vmatpush1.bf16.msra.mxu0 %v378
      %396 = vmatprep.subr.bf16.mxu0 0
      %397 = vmatpush1.bf16.msra.mxu0 %v379
      %398 = vmatprep.subr.bf16.mxu0 0
      %399 = vmatpush1.bf16.msra.mxu0 %v380
      %400 = vmatprep.subr.bf16.mxu0 0
      %401 = vmatpush1.bf16.msra.mxu0 %v381
      %402 = vmatprep.subr.bf16.mxu0 0
      %403 = vmatpush1.bf16.msra.mxu0 %v382
      %404 = vmatprep.subr.bf16.mxu0 0
      %405 = vmatpush1.bf16.msra.mxu0 %v383
      %406 = vmatprep.subr.bf16.mxu0 0
      %407 = vmatpush1.bf16.msra.mxu0 %v384
      %408 = vmatprep.subr.bf16.mxu0 0
      %409 = vmatpush1.bf16.msra.mxu0 %v385
      %410 = vmatprep.subr.bf16.mxu0 0
      %411 = vmatpush1.bf16.msra.mxu0 0
      %412 = vmatprep.subr.bf16.mxu0 0
      %413 = vmatpush1.bf16.msra.mxu0 0
      %414 = vmatprep.subr.bf16.mxu0 0
      %415 = vmatpush1.bf16.msra.mxu0 0
      %416 = vmatprep.subr.bf16.mxu0 0
      %417 = vmatpush1.bf16.msra.mxu0 0
      %418 = vmatprep.subr.bf16.mxu0 0
      %419 = vmatpush1.bf16.msra.mxu0 0
      %420 = vmatprep.subr.bf16.mxu0 0
      %421 = vmatpush1.bf16.msra.mxu0 0
      %422 = vmatprep.subr.bf16.mxu0 0
      %423 = vmatpush1.bf16.msra.mxu0 0
      %424 = vmatprep.subr.bf16.mxu0 0
      %425 = vmatpush1.bf16.msra.mxu0 0
      %426 = vmatprep.mubr.bf16.mxu0 0
      %427 = vmatmul.mubr.bf16.gmra.mrb[0].mxu0 %v314
      %v428 = vpop.f32.mrb[0].mxu0
      %v429 = vadd.f32 0.0, %v428
      %v430 = vpop.f32.mrb[0].mxu0
      %v431 = vpop.f32.mrb[0].mxu0
      %v432 = vadd.f32 0.0, %v431
      %v433 = vpop.f32.mrb[0].mxu0
      %434 = vmatprep.mubr.bf16.mxu0 0
      %435 = vmatmul.mubr.bf16.gmra.mrb[0].mxu0 %v315
      %v436 = vpop.f32.mrb[0].mxu0
      %v437 = vadd.f32 0.0, %v436
      %v438 = vpop.f32.mrb[0].mxu0
      %v439 = vpop.f32.mrb[0].mxu0
      %v440 = vadd.f32 0.0, %v439
      %v441 = vpop.f32.mrb[0].mxu0
      %442 = vmatprep.mubr.bf16.mxu0 0
      %443 = vmatmul.mubr.bf16.gmra.mrb[0].mxu0 %v316
      %v444 = vpop.f32.mrb[0].mxu0
      %v445 = vadd.f32 0.0, %v444
      %v446 = vpop.f32.mrb[0].mxu0
      %v447 = vpop.f32.mrb[0].mxu0
      %v448 = vadd.f32 0.0, %v447
      %v449 = vpop.f32.mrb[0].mxu0
      %450 = vmatprep.mubr.bf16.mxu0 0
      %451 = vmatmul.mubr.bf16.gmra.mrb[0].mxu0 %v317
      %v452 = vpop.f32.mrb[0].mxu0
      %v453 = vadd.f32 0.0, %v452
      %v454 = vpop.f32.mrb[0].mxu0
      %v455 = vpop.f32.mrb[0].mxu0
      %v456 = vadd.f32 0.0, %v455
      %v457 = vpop.f32.mrb[0].mxu0
      %458 = vmatprep.mubr.bf16.mxu0 0
      %459 = vmatmul.mubr.bf16.gmra.mrb[0].mxu0 %v318
      %v460 = vpop.f32.mrb[0].mxu0
      %v461 = vadd.f32 0.0, %v460
      %v462 = vpop.f32.mrb[0].mxu0
      %v463 = vpop.f32.mrb[0].mxu0
      %v464 = vadd.f32 0.0, %v463
      %v465 = vpop.f32.mrb[0].mxu0
      %466 = vmatprep.mubr.bf16.mxu0 0
      %467 = vmatmul.mubr.bf16.gmra.mrb[0].mxu0 %v319
      %v468 = vpop.f32.mrb[0].mxu0
      %v469 = vadd.f32 0.0, %v468
      %v470 = vpop.f32.mrb[0].mxu0
      %v471 = vpop.f32.mrb[0].mxu0
      %v472 = vadd.f32 0.0, %v471
      %v473 = vpop.f32.mrb[0].mxu0
      %474 = vmatprep.mubr.bf16.mxu0 0
      %475 = vmatmul.mubr.bf16.gmra.mrb[0].mxu0 %v320
      %v476 = vpop.f32.mrb[0].mxu0
      %v477 = vadd.f32 0.0, %v476
      %v478 = vpop.f32.mrb[0].mxu0
      %v479 = vpop.f32.mrb[0].mxu0
      %v480 = vadd.f32 0.0, %v479
      %v481 = vpop.f32.mrb[0].mxu0
      %482 = vmatprep.mubr.bf16.mxu0 0
      %483 = vmatmul.mubr.bf16.gmra.mrb[0].mxu0 %v321
      %v484 = vpop.f32.mrb[0].mxu0
      %v485 = vadd.f32 0.0, %v484
      %v486 = vpop.f32.mrb[0].mxu0
      %v487 = vpop.f32.mrb[0].mxu0
      %v488 = vadd.f32 0.0, %v487
      %v489 = vpop.f32.mrb[0].mxu0
      %490 = vmatprep.mubr.bf16.mxu0 0
      %491 = vmatmul.mubr.bf16.gmra.mrb[0].mxu0 %v322
      %v492 = vpop.f32.mrb[0].mxu0
      %v493 = vadd.f32 0.0, %v492
      %v494 = vpop.f32.mrb[0].mxu0
      %v495 = vpop.f32.mrb[0].mxu0
      %v496 = vadd.f32 0.0, %v495
      %v497 = vpop.f32.mrb[0].mxu0
      %498 = vmatprep.mubr.bf16.mxu0 0
      %499 = vmatmul.mubr.bf16.gmra.mrb[0].mxu0 %v323
      %v500 = vpop.f32.mrb[0].mxu0
      %v501 = vadd.f32 0.0, %v500
      %v502 = vpop.f32.mrb[0].mxu0
      %v503 = vpop.f32.mrb[0].mxu0
      %v504 = vadd.f32 0.0, %v503
      %v505 = vpop.f32.mrb[0].mxu0
      %506 = vmatprep.mubr.bf16.mxu0 0
      %507 = vmatmul.mubr.bf16.gmra.mrb[0].mxu0 %v324
      %v508 = vpop.f32.mrb[0].mxu0
      %v509 = vadd.f32 0.0, %v508
      %v510 = vpop.f32.mrb[0].mxu0
      %v511 = vpop.f32.mrb[0].mxu0
      %v512 = vadd.f32 0.0, %v511
      %v513 = vpop.f32.mrb[0].mxu0
      %514 = vmatprep.mubr.bf16.mxu0 0
      %515 = vmatmul.mubr.bf16.gmra.mrb[0].mxu0 %v325
      %v516 = vpop.f32.mrb[0].mxu0
      %v517 = vadd.f32 0.0, %v516
      %v518 = vpop.f32.mrb[0].mxu0
      %v519 = vpop.f32.mrb[0].mxu0
      %v520 = vadd.f32 0.0, %v519
      %v521 = vpop.f32.mrb[0].mxu0
      %522 = vmatprep.mubr.bf16.mxu0 0
      %523 = vmatmul.mubr.bf16.gmra.mrb[0].mxu0 %v326
      %v524 = vpop.f32.mrb[0].mxu0
      %v525 = vadd.f32 0.0, %v524
      %v526 = vpop.f32.mrb[0].mxu0
      %v527 = vpop.f32.mrb[0].mxu0
      %v528 = vadd.f32 0.0, %v527
      %v529 = vpop.f32.mrb[0].mxu0
      %530 = vmatprep.mubr.bf16.mxu0 0
      %531 = vmatmul.mubr.bf16.gmra.mrb[0].mxu0 %v327
      %v532 = vpop.f32.mrb[0].mxu0
      %v533 = vadd.f32 0.0, %v532
      %v534 = vpop.f32.mrb[0].mxu0
      %v535 = vpop.f32.mrb[0].mxu0
      %v536 = vadd.f32 0.0, %v535
      %v537 = vpop.f32.mrb[0].mxu0
      %538 = vmatprep.mubr.bf16.mxu0 0
      %539 = vmatmul.mubr.bf16.gmra.mrb[0].mxu0 %v328
      %v540 = vpop.f32.mrb[0].mxu0
      %v541 = vadd.f32 0.0, %v540
      %v542 = vpop.f32.mrb[0].mxu0
      %v543 = vpop.f32.mrb[0].mxu0
      %v544 = vadd.f32 0.0, %v543
      %v545 = vpop.f32.mrb[0].mxu0
      %546 = vmatprep.mubr.bf16.mxu0 0
      %547 = vmatmul.mubr.bf16.gmra.mrb[0].mxu0 %v329
      %v548 = vpop.f32.mrb[0].mxu0
      %v549 = vadd.f32 0.0, %v548
      %v550 = vpop.f32.mrb[0].mxu0
      %v551 = vpop.f32.mrb[0].mxu0
      %v552 = vadd.f32 0.0, %v551
      %v553 = vpop.f32.mrb[0].mxu0
      %554 = vdwg.mxu0
      %v555 = vld [vmem:[%s2] sm:$0x1]
      %v557 = vlaneseq
      %v558 = vshrl.u32 %v557, 7
      %v559 = vsub.s32 0, %v558
      %v560 = vrot.slane %v555, %v559
      %v562 = vmul.f32 %v429, %v560
      %v563 = vmul.f32 %v432, %v560
      %v564 = vmul.f32 %v437, %v560
      %v565 = vmul.f32 %v440, %v560
      %v566 = vmul.f32 %v445, %v560
      %v567 = vmul.f32 %v448, %v560
      %v568 = vmul.f32 %v453, %v560
      %v569 = vmul.f32 %v456, %v560
      %v570 = vmul.f32 %v461, %v560
      %v571 = vmul.f32 %v464, %v560
      %v572 = vmul.f32 %v469, %v560
      %v573 = vmul.f32 %v472, %v560
      %v574 = vmul.f32 %v477, %v560
      %v575 = vmul.f32 %v480, %v560
      %v576 = vmul.f32 %v485, %v560
      %v577 = vmul.f32 %v488, %v560
      %v578 = vmul.f32 %v493, %v560
      %v579 = vmul.f32 %v496, %v560
      %v580 = vmul.f32 %v501, %v560
      %v581 = vmul.f32 %v504, %v560
      %v582 = vmul.f32 %v509, %v560
      %v583 = vmul.f32 %v512, %v560
      %v584 = vmul.f32 %v517, %v560
      %v585 = vmul.f32 %v520, %v560
      %v586 = vmul.f32 %v525, %v560
      %v587 = vmul.f32 %v528, %v560
      %v588 = vmul.f32 %v533, %v560
      %v589 = vmul.f32 %v536, %v560
      %v590 = vmul.f32 %v541, %v560
      %v591 = vmul.f32 %v544, %v560
      %v592 = vmul.f32 %v549, %v560
      %v593 = vmul.f32 %v552, %v560
      %v594 = vld [vmem:[%s3] sm:$0x1]
      %v596 = vlaneseq
      %v597 = vshrl.u32 %v596, 7
      %v598 = vsub.s32 0, %v597
      %v599 = vrot.slane %v594, %v598
      %v601 = vadd.f32 %v562, %v599
      %v602 = vadd.f32 %v563, %v599
      %v603 = vadd.f32 %v564, %v599
      %v604 = vadd.f32 %v565, %v599
      %v605 = vadd.f32 %v566, %v599
      %v606 = vadd.f32 %v567, %v599
      %v607 = vadd.f32 %v568, %v599
      %v608 = vadd.f32 %v569, %v599
      %v609 = vadd.f32 %v570, %v599
      %v610 = vadd.f32 %v571, %v599
      %v611 = vadd.f32 %v572, %v599
      %v612 = vadd.f32 %v573, %v599
      %v613 = vadd.f32 %v574, %v599
      %v614 = vadd.f32 %v575, %v599
      %v615 = vadd.f32 %v576, %v599
      %v616 = vadd.f32 %v577, %v599
      %v617 = vadd.f32 %v578, %v599
      %v618 = vadd.f32 %v579, %v599
      %v619 = vadd.f32 %v580, %v599
      %v620 = vadd.f32 %v581, %v599
      %v621 = vadd.f32 %v582, %v599
      %v622 = vadd.f32 %v583, %v599
      %v623 = vadd.f32 %v584, %v599
      %v624 = vadd.f32 %v585, %v599
      %v625 = vadd.f32 %v586, %v599
      %v626 = vadd.f32 %v587, %v599
      %v627 = vadd.f32 %v588, %v599
      %v628 = vadd.f32 %v589, %v599
      %v629 = vadd.f32 %v590, %v599
      %v630 = vadd.f32 %v591, %v599
      %v631 = vadd.f32 %v592, %v599
      %v632 = vadd.f32 %v593, %v599
      %v633 = vmax.f32 %v601, 0.0
      %v634 = vmax.f32 %v602, 0.0
      %v635 = vmax.f32 %v603, 0.0
      %v636 = vmax.f32 %v604, 0.0
      %v637 = vmax.f32 %v605, 0.0
      %v638 = vmax.f32 %v606, 0.0
      %v639 = vmax.f32 %v607, 0.0
      %v640 = vmax.f32 %v608, 0.0
      %v641 = vmax.f32 %v609, 0.0
      %v642 = vmax.f32 %v610, 0.0
      %v643 = vmax.f32 %v611, 0.0
      %v644 = vmax.f32 %v612, 0.0
      %v645 = vmax.f32 %v613, 0.0
      %v646 = vmax.f32 %v614, 0.0
      %v647 = vmax.f32 %v615, 0.0
      %v648 = vmax.f32 %v616, 0.0
      %v649 = vmax.f32 %v617, 0.0
      %v650 = vmax.f32 %v618, 0.0
      %v651 = vmax.f32 %v619, 0.0
      %v652 = vmax.f32 %v620, 0.0
      %v653 = vmax.f32 %v621, 0.0
      %v654 = vmax.f32 %v622, 0.0
      %v655 = vmax.f32 %v623, 0.0
      %v656 = vmax.f32 %v624, 0.0
      %v657 = vmax.f32 %v625, 0.0
      %v658 = vmax.f32 %v626, 0.0
      %v659 = vmax.f32 %v627, 0.0
      %v660 = vmax.f32 %v628, 0.0
      %v661 = vmax.f32 %v629, 0.0
      %v662 = vmax.f32 %v630, 0.0
      %v663 = vmax.f32 %v631, 0.0
      %v664 = vmax.f32 %v632, 0.0
      %v665 = vpack.c.bf16 %v634, %v633
      %v666 = vpack.c.bf16 %v636, %v635
      %v667 = vpack.c.bf16 %v638, %v637
      %v668 = vpack.c.bf16 %v640, %v639
      %v669 = vpack.c.bf16 %v642, %v641
      %v670 = vpack.c.bf16 %v644, %v643
      %v671 = vpack.c.bf16 %v646, %v645
      %v672 = vpack.c.bf16 %v648, %v647
      %v673 = vpack.c.bf16 %v650, %v649
      %v674 = vpack.c.bf16 %v652, %v651
      %v675 = vpack.c.bf16 %v654, %v653
      %v676 = vpack.c.bf16 %v656, %v655
      %v677 = vpack.c.bf16 %v658, %v657
      %v678 = vpack.c.bf16 %v660, %v659
      %v679 = vpack.c.bf16 %v662, %v661
      %v680 = vpack.c.bf16 %v664, %v663
      %v697 = vunpack.c.l.b16 %v665
      %v698 = vunpack.c.h.b16 %v665
      %v699 = vunpack.c.l.b16 %v666
      %v700 = vunpack.c.h.b16 %v666
      %v701 = vunpack.c.l.b16 %v667
      %v702 = vunpack.c.h.b16 %v667
      %v703 = vunpack.c.l.b16 %v668
      %v704 = vunpack.c.h.b16 %v668
      %v705 = vunpack.c.l.b16 %v669
      %v706 = vunpack.c.h.b16 %v669
      %v707 = vunpack.c.l.b16 %v670
      %v708 = vunpack.c.h.b16 %v670
      %v709 = vunpack.c.l.b16 %v671
      %v710 = vunpack.c.h.b16 %v671
      %v711 = vunpack.c.l.b16 %v672
      %v712 = vunpack.c.h.b16 %v672
      %v713 = vunpack.c.l.b16 %v673
      %v714 = vunpack.c.h.b16 %v673
      %v715 = vunpack.c.l.b16 %v674
      %v716 = vunpack.c.h.b16 %v674
      %v717 = vunpack.c.l.b16 %v675
      %v718 = vunpack.c.h.b16 %v675
      %v719 = vunpack.c.l.b16 %v676
      %v720 = vunpack.c.h.b16 %v676
      %v721 = vunpack.c.l.b16 %v677
      %v722 = vunpack.c.h.b16 %v677
      %v723 = vunpack.c.l.b16 %v678
      %v724 = vunpack.c.h.b16 %v678
      %v725 = vunpack.c.l.b16 %v679
      %v726 = vunpack.c.h.b16 %v679
      %v727 = vunpack.c.l.b16 %v680
      %v728 = vunpack.c.h.b16 %v680
      %v729 = vpack.c.b16 %v697, %v697
      %v730 = vpack.c.b16 %v698, %v698
      %v731 = vpack.c.b16 %v699, %v699
      %v732 = vpack.c.b16 %v700, %v700
      %v733 = vpack.c.b16 %v701, %v701
      %v734 = vpack.c.b16 %v702, %v702
      %v735 = vpack.c.b16 %v703, %v703
      %v736 = vpack.c.b16 %v704, %v704
      %v737 = vpack.c.b16 %v705, %v705
      %v738 = vpack.c.b16 %v706, %v706
      %v739 = vpack.c.b16 %v707, %v707
      %v740 = vpack.c.b16 %v708, %v708
      %v741 = vpack.c.b16 %v709, %v709
      %v742 = vpack.c.b16 %v710, %v710
      %v743 = vpack.c.b16 %v711, %v711
      %v744 = vpack.c.b16 %v712, %v712
      %v745 = vpack.c.b16 %v713, %v713
      %v746 = vpack.c.b16 %v714, %v714
      %v747 = vpack.c.b16 %v715, %v715
      %v748 = vpack.c.b16 %v716, %v716
      %v749 = vpack.c.b16 %v717, %v717
      %v750 = vpack.c.b16 %v718, %v718
      %v751 = vpack.c.b16 %v719, %v719
      %v752 = vpack.c.b16 %v720, %v720
      %v753 = vpack.c.b16 %v721, %v721
      %v754 = vpack.c.b16 %v722, %v722
      %v755 = vpack.c.b16 %v723, %v723
      %v756 = vpack.c.b16 %v724, %v724
      %v757 = vpack.c.b16 %v725, %v725
      %v758 = vpack.c.b16 %v726, %v726
      %v759 = vpack.c.b16 %v727, %v727
      %v760 = vpack.c.b16 %v728, %v728
      %793 = vst [vmem:[%s199] sm:$0xf] %v729
      %794 = vst [vmem:[%s199 + $0x4] sm:$0xf] %v730
      %795 = vst [vmem:[%s199 + $0x8] sm:$0xf] %v731
      %796 = vst [vmem:[%s199 + $0xc] sm:$0xf] %v732
      %797 = vst [vmem:[%s199 + $0x10] sm:$0xf] %v733
      %798 = vst [vmem:[%s199 + $0x14] sm:$0xf] %v734
      %799 = vst [vmem:[%s199 + $0x18] sm:$0xf] %v735
      %800 = vst [vmem:[%s199 + $0x1c] sm:$0xf] %v736
      %801 = vst [vmem:[%s199 + $0x20] sm:$0xf] %v737
      %802 = vst [vmem:[%s199 + $0x24] sm:$0xf] %v738
      %803 = vst [vmem:[%s199 + $0x28] sm:$0xf] %v739
      %804 = vst [vmem:[%s199 + $0x2c] sm:$0xf] %v740
      %805 = vst [vmem:[%s199 + $0x30] sm:$0xf] %v741
      %806 = vst [vmem:[%s199 + $0x34] sm:$0xf] %v742
      %807 = vst [vmem:[%s199 + $0x38] sm:$0xf] %v743
      %808 = vst [vmem:[%s199 + $0x3c] sm:$0xf] %v744
      %809 = vst [vmem:[%s199 + $0x40] sm:$0xf] %v745
      %810 = vst [vmem:[%s199 + $0x44] sm:$0xf] %v746
      %811 = vst [vmem:[%s199 + $0x48] sm:$0xf] %v747
      %812 = vst [vmem:[%s199 + $0x4c] sm:$0xf] %v748
      %813 = vst [vmem:[%s199 + $0x50] sm:$0xf] %v749
      %814 = vst [vmem:[%s199 + $0x54] sm:$0xf] %v750
      %815 = vst [vmem:[%s199 + $0x58] sm:$0xf] %v751
      %816 = vst [vmem:[%s199 + $0x5c] sm:$0xf] %v752
      %817 = vst [vmem:[%s199 + $0x60] sm:$0xf] %v753
      %818 = vst [vmem:[%s199 + $0x64] sm:$0xf] %v754
      %819 = vst [vmem:[%s199 + $0x68] sm:$0xf] %v755
      %820 = vst [vmem:[%s199 + $0x6c] sm:$0xf] %v756
      %821 = vst [vmem:[%s199 + $0x70] sm:$0xf] %v757
      %822 = vst [vmem:[%s199 + $0x74] sm:$0xf] %v758
      %823 = vst [vmem:[%s199 + $0x78] sm:$0xf] %v759
      %824 = vst [vmem:[%s199 + $0x7c] sm:$0xf] %v760
      %s825 = smul.u32 32, %s15
      %p826 = scmp.lt.s32.totalorder %s825, 63
      %s827 = scalar_select %p826, %s825, 63
      %s828 = smul.addr %s827, 4
      %s829 = scalar_lea.vmem %s4, %s828
      // Predicated region
      $region37: #{_lambda_.4} parent=35 // pred_check
        %p830 = pneg %p122
      $region38: #{_lambda_.4} parent=35 // pred_check_branch
        %832 = sbr.rel (%p830) target = $region40
      $region39: #{_lambda_.4} parent=35 // pred_region
        %s833 = smul.u32 32, %s15
      $region40: #{_lambda_.4} parent=35 // pred_fallthru
        _
    $region36: #{_lambda_.4} parent=5 // pred_fallthru
      _
    %p834 = scmp.le.s32.totalorder 2, %s10
    // Predicated region
    $region41: #{_lambda_.4} parent=5 // pred_check
      %p835 = pneg %p834
    $region42: #{_lambda_.4} parent=5 // pred_check_branch
      %837 = sbr.rel (%p835) target = $region44
    $region43: #{_lambda_.4} parent=5 // pred_region
      %s838 = ssub.s32 %s10, 2
      // Predicated region
      $region45: #{_lambda_.4} parent=43 // pred_check
        %p839 = pneg %p128
      $region46: #{_lambda_.4} parent=43 // pred_check_branch
        %841 = sbr.rel (%p839) target = $region48
      $region47: #{_lambda_.4} parent=43 // pred_region
        %s842 = smul.u32 32, %s16
        %p843 = scmp.lt.s32.totalorder %s842, 63
        %s844 = scalar_select %p843, %s842, 63
        %s845 = smul.addr %s844, 4
        %s846 = scalar_lea.vmem %s4, %s845
      $region48: #{_lambda_.4} parent=43 // pred_fallthru
        _
    $region44: #{_lambda_.4} parent=5 // pred_fallthru
      _
  $region6: #{_lambda_.4} parent=0 // loop_footer
    %s14 = sadd.s32 1, %s10
  $region7: #{_lambda_.4} parent=0 // loop_footer_branch
    %9 = sbr.rel target = $region3
  $region8: #{_lambda_.4} parent=0 // loop_exit
    _

// kernel: _lambda_.6
$region0: #{_lambda_.6}
  #allocation0 [shape = 'u32[]', space=smem, size = 0x4, offset = 0x4, fixed_abs, tag = 'smem constant byte address 0x4 - core index']
  #allocation1 [shape = 'u32[144,128]{1,0:T(1,128)}', space=vmem, size = 0x12000, scoped, tag = 'internal scratch']
  %s0 = inlined_call_operand.vmem [shape: bf16[128,128], index: 0, kind: input, shape index: {}]
  %s1 = inlined_call_operand.vmem [shape: bf16[128,128], index: 1, kind: input, shape index: {}]
  %s2 = inlined_call_operand.vmem [shape: f32[1,128], index: 2, kind: input, shape index: {}]
  %s3 = inlined_call_operand.vmem [shape: f32[1,128], index: 3, kind: input, shape index: {}]
  %s4 = inlined_call_operand.vmem [shape: bf16[128,128], index: 4, kind: output, shape index: {}]
  %s5 = sld [smem:[#allocation0]]
  $region49: #{_lambda_.6} parent=0
    _
  %s7 = ssub.s32 1, %s5
  %s8 = scalar_select 0, %s7, %s5
  loop: start=0, step=1, limit=4
  $region2: #{_lambda_.6} parent=0 // loop_pre_header
    _
  $region3: #{_lambda_.6} parent=0 // loop_header
    %s10 = sphi 0, %s14
    %p11 = scmp.ge.s32.totalorder %s10, 4
    %s20 = sphi 0, %s22
    %s23 = sphi 0, %s20
    %s24 = sphi 0, %s23
    %s40 = sphi 0, %s24
    %s44 = sphi 0, %s44
    %s46 = sphi 0, %s44
    %s47 = sphi 0, %s46
    %s61 = sphi 0, %s47
    %s65 = sphi 0, %s65
    %s67 = sphi 0, %s65
    %s68 = sphi 0, %s67
    %s82 = sphi 0, %s68
    %s86 = sphi 0, %s86
    %s88 = sphi 0, %s86
    %s89 = sphi 0, %s88
    %s103 = sphi 0, %s89
    %s109 = sphi 0, %s111
    %s112 = sphi 0, %s109
    %s113 = sphi 0, %s112
    %s129 = sphi 0, %s113
  $region4: #{_lambda_.6} parent=0 // loop_header_branch
    %13 = sbr.rel (%p11) target = $region8
  $region5: #{_lambda_.6} parent=0 // loop_body
    %s15 = ssub.s32 %s10, 1
    %s16 = ssub.s32 %s10, 2
    %s17 = sadd.s32 %s10, 1
    %s18 = ssub.s32 %s10, %s17
    %p19 = scmp.eq.s32.totalorder %s18, 0
    %s21 = sadd.s32 %s20, 1
    %s22 = scalar_select %p19, %s20, %s21
    %p25 = pneg %p19
    %p26 = scmp.eq.s32.totalorder %s10, 1
    %p27 = por %p25, %p26
    %p28 = scmp.ne.s32.totalorder %s20, %s23
    %p29 = scmp.eq.s32.totalorder %s10, 0
    %p30 = por %p28, %p29
    %p31 = scmp.ne.s32.totalorder %s20, %s23
    %p32 = scmp.eq.s32.totalorder %s15, 1
    %p33 = por %p31, %p32
    %p34 = scmp.ne.s32.totalorder %s23, %s24
    %p35 = scmp.eq.s32.totalorder %s15, 0
    %p36 = por %p34, %p35
    %p37 = scmp.ne.s32.totalorder %s23, %s24
    %p38 = scmp.eq.s32.totalorder %s16, 1
    %p39 = por %p37, %p38
    %p41 = scmp.ne.s32.totalorder %s24, %s40
    %p42 = scmp.eq.s32.totalorder %s16, 0
    %p43 = por %p41, %p42
    %s45 = sadd.s32 %s44, 1
    %p48 = scmp.eq.s32.totalorder %s10, 1
    %p49 = scmp.ne.s32.totalorder %s44, %s46
    %p50 = scmp.eq.s32.totalorder %s10, 0
    %p51 = por %p49, %p50
    %p52 = scmp.ne.s32.totalorder %s44, %s46
    %p53 = scmp.eq.s32.totalorder %s15, 1
    %p54 = por %p52, %p53
    %p55 = scmp.ne.s32.totalorder %s46, %s47
    %p56 = scmp.eq.s32.totalorder %s15, 0
    %p57 = por %p55, %p56
    %p58 = scmp.ne.s32.totalorder %s46, %s47
    %p59 = scmp.eq.s32.totalorder %s16, 1
    %p60 = por %p58, %p59
    %p62 = scmp.ne.s32.totalorder %s47, %s61
    %p63 = scmp.eq.s32.totalorder %s16, 0
    %p64 = por %p62, %p63
    %s66 = sadd.s32 %s65, 1
    %p69 = scmp.eq.s32.totalorder %s10, 1
    %p70 = scmp.ne.s32.totalorder %s65, %s67
    %p71 = scmp.eq.s32.totalorder %s10, 0
    %p72 = por %p70, %p71
    %p73 = scmp.ne.s32.totalorder %s65, %s67
    %p74 = scmp.eq.s32.totalorder %s15, 1
    %p75 = por %p73, %p74
    %p76 = scmp.ne.s32.totalorder %s67, %s68
    %p77 = scmp.eq.s32.totalorder %s15, 0
    %p78 = por %p76, %p77
    %p79 = scmp.ne.s32.totalorder %s67, %s68
    %p80 = scmp.eq.s32.totalorder %s16, 1
    %p81 = por %p79, %p80
    %p83 = scmp.ne.s32.totalorder %s68, %s82
    %p84 = scmp.eq.s32.totalorder %s16, 0
    %p85 = por %p83, %p84
    %s87 = sadd.s32 %s86, 1
    %p90 = scmp.eq.s32.totalorder %s10, 1
    %p91 = scmp.ne.s32.totalorder %s86, %s88
    %p92 = scmp.eq.s32.totalorder %s10, 0
    %p93 = por %p91, %p92
    %p94 = scmp.ne.s32.totalorder %s86, %s88
    %p95 = scmp.eq.s32.totalorder %s15, 1
    %p96 = por %p94, %p95
    %p97 = scmp.ne.s32.totalorder %s88, %s89
    %p98 = scmp.eq.s32.totalorder %s15, 0
    %p99 = por %p97, %p98
    %p100 = scmp.ne.s32.totalorder %s88, %s89
    %p101 = scmp.eq.s32.totalorder %s16, 1
    %p102 = por %p100, %p101
    %p104 = scmp.ne.s32.totalorder %s89, %s103
    %p105 = scmp.eq.s32.totalorder %s16, 0
    %p106 = por %p104, %p105
    %s107 = ssub.s32 %s10, %s17
    %p108 = scmp.eq.s32.totalorder %s107, 0
    %s110 = sadd.s32 %s109, 1
    %s111 = scalar_select %p108, %s109, %s110
    %p114 = pneg %p108
    %p115 = scmp.eq.s32.totalorder %s10, 1
    %p116 = por %p114, %p115
    %p117 = scmp.ne.s32.totalorder %s109, %s112
    %p118 = scmp.eq.s32.totalorder %s10, 0
    %p119 = por %p117, %p118
    %p120 = scmp.ne.s32.totalorder %s109, %s112
    %p121 = scmp.eq.s32.totalorder %s15, 1
    %p122 = por %p120, %p121
    %p123 = scmp.ne.s32.totalorder %s112, %s113
    %p124 = scmp.eq.s32.totalorder %s15, 0
    %p125 = por %p123, %p124
    %p126 = scmp.ne.s32.totalorder %s112, %s113
    %p127 = scmp.eq.s32.totalorder %s16, 1
    %p128 = por %p126, %p127
    %p130 = scmp.ne.s32.totalorder %s113, %s129
    %p131 = scmp.eq.s32.totalorder %s16, 0
    %p132 = por %p130, %p131
    %p133 = scmp.le.s32.totalorder 1, %s10
    %p134 = scmp.lt.s32.totalorder %s10, 3
    %p135 = pnand %p133, %p134
    %p136 = pneg %p135
    // Predicated region
    $region9: #{_lambda_.6} parent=5 // pred_check
      _
    $region10: #{_lambda_.6} parent=5 // pred_check_branch
      %138 = sbr.rel (%p135) target = $region12
    $region11: #{_lambda_.6} parent=5 // pred_region
      %s139 = ssub.s32 %s10, 1
      // Predicated region
      $region13: #{_lambda_.6} parent=11 // pred_check
        %p140 = pneg %p57
      $region14: #{_lambda_.6} parent=11 // pred_check_branch
        %142 = sbr.rel (%p140) target = $region16
      $region15: #{_lambda_.6} parent=11 // pred_region
        _
      $region16: #{_lambda_.6} parent=11 // pred_fallthru
        _
      // Predicated region
      $region17: #{_lambda_.6} parent=11 // pred_check
        %p143 = pneg %p78
      $region18: #{_lambda_.6} parent=11 // pred_check_branch
        %145 = sbr.rel (%p143) target = $region20
      $region19: #{_lambda_.6} parent=11 // pred_region
        _
      $region20: #{_lambda_.6} parent=11 // pred_fallthru
        _
      // Predicated region
      $region21: #{_lambda_.6} parent=11 // pred_check
        %p146 = pneg %p99
      $region22: #{_lambda_.6} parent=11 // pred_check_branch
        %148 = sbr.rel (%p146) target = $region24
      $region23: #{_lambda_.6} parent=11 // pred_region
        _
      $region24: #{_lambda_.6} parent=11 // pred_fallthru
        _
    $region12: #{_lambda_.6} parent=5 // pred_fallthru
      _
    %p149 = scmp.lt.s32.totalorder %s10, 2
    // Predicated region
    $region25: #{_lambda_.6} parent=5 // pred_check
      %p150 = pneg %p149
    $region26: #{_lambda_.6} parent=5 // pred_check_branch
      %152 = sbr.rel (%p150) target = $region28
    $region27: #{_lambda_.6} parent=5 // pred_region
      // Predicated region
      $region29: #{_lambda_.6} parent=27 // pred_check
        %p153 = pneg %p30
      $region30: #{_lambda_.6} parent=27 // pred_check_branch
        %155 = sbr.rel (%p153) target = $region32
      $region31: #{_lambda_.6} parent=27 // pred_region
        %s156 = smul.u32 8, %s10
        %p157 = scmp.lt.s32.totalorder %s156, 15
        %s158 = scalar_select %p157, %s156, 15
        %s159 = smul.addr %s158, 4
        %s160 = scalar_lea.vmem %s0, %s159
        %s161 = smul.u32 8, %s10
      $region32: #{_lambda_.6} parent=27 // pred_fallthru
        _
    $region28: #{_lambda_.6} parent=5 // pred_fallthru
      _
    %p162 = scmp.le.s32.totalorder 1, %s10
    %p163 = scmp.lt.s32.totalorder %s10, 3
    %p164 = pnand %p162, %p163
    %p165 = pneg %p164
    // Predicated region
    $region33: #{_lambda_.6} parent=5 // pred_check
      _
    $region34: #{_lambda_.6} parent=5 // pred_check_branch
      %167 = sbr.rel (%p164) target = $region36
    $region35: #{_lambda_.6} parent=5 // pred_region
      %s168 = ssub.s32 %s10, 1
      %s169 = smul.u32 8, %s15
      %p170 = scmp.lt.s32.totalorder %s169, 15
      %s171 = scalar_select %p170, %s169, 15
      %s172 = smul.addr %s171, 4
      %s173 = scalar_lea.vmem %s0, %s172
      %p174 = pneg %p36
      %p175 = pneg %p33
      %p176 = pneg %p57
      %p177 = pneg %p54
      %p178 = pneg %p78
      %p179 = pneg %p75
      %p180 = pneg %p99
      %p181 = pneg %p96
      %p182 = pneg %p125
      %p183 = pneg %p122
      %s184 = smul.u32 8, %s15
      %p185 = scmp.lt.s32.totalorder %s184, 15
      %s186 = scalar_select %p185, %s184, 15
      %s187 = smul.addr %s186, 4
      %s188 = scalar_lea.vmem %s4, %s187
      %s189 = smul.u32 8, %s15
      %p190 = scmp.lt.s32.totalorder %s189, 15
      %s191 = scalar_select %p190, %s189, 15
      %s192 = smul.addr %s191, 4
      %s193 = scalar_lea.vmem %s0, %s192
      %s194 = smul.u32 8, %s15
      %s195 = smul.u32 8, %s15
      %p196 = scmp.lt.s32.totalorder %s195, 15
      %s197 = scalar_select %p196, %s195, 15
      %s198 = smul.addr %s197, 4
      %s199 = scalar_lea.vmem %s4, %s198
      %s200 = smul.u32 8, %s15
      %v202 = vld [vmem:[%s193] sm:$0xf]
      %v203 = vld [vmem:[%s193 + $0x4] sm:$0xf]
      %v204 = vld [vmem:[%s193 + $0x8] sm:$0xf]
      %v205 = vld [vmem:[%s193 + $0xc] sm:$0xf]
      %v206 = vld [vmem:[%s193 + $0x10] sm:$0xf]
      %v207 = vld [vmem:[%s193 + $0x14] sm:$0xf]
      %v208 = vld [vmem:[%s193 + $0x18] sm:$0xf]
      %v209 = vld [vmem:[%s193 + $0x1c] sm:$0xf]
      %v210 = vld [vmem:[%s1] sm:$0xf]
      %v211 = vld [vmem:[%s1 + $0x4] sm:$0xf]
      %v212 = vld [vmem:[%s1 + $0x8] sm:$0xf]
      %v213 = vld [vmem:[%s1 + $0xc] sm:$0xf]
      %v214 = vld [vmem:[%s1 + $0x10] sm:$0xf]
      %v215 = vld [vmem:[%s1 + $0x14] sm:$0xf]
      %v216 = vld [vmem:[%s1 + $0x18] sm:$0xf]
      %v217 = vld [vmem:[%s1 + $0x1c] sm:$0xf]
      %v218 = vld [vmem:[%s1 + $0x20] sm:$0xf]
      %v219 = vld [vmem:[%s1 + $0x24] sm:$0xf]
      %v220 = vld [vmem:[%s1 + $0x28] sm:$0xf]
      %v221 = vld [vmem:[%s1 + $0x2c] sm:$0xf]
      %v222 = vld [vmem:[%s1 + $0x30] sm:$0xf]
      %v223 = vld [vmem:[%s1 + $0x34] sm:$0xf]
      %v224 = vld [vmem:[%s1 + $0x38] sm:$0xf]
      %v225 = vld [vmem:[%s1 + $0x3c] sm:$0xf]
      %v234 = vunpack.c.l.b16 %v202
      %v235 = vunpack.c.l.b16 %v203
      %v236 = vunpack.c.l.b16 %v204
      %v237 = vunpack.c.l.b16 %v205
      %v238 = vunpack.c.l.b16 %v206
      %v239 = vunpack.c.l.b16 %v207
      %v240 = vunpack.c.l.b16 %v208
      %v241 = vunpack.c.l.b16 %v209
      %v242 = vpack.c.b16 %v235, %v234
      %v243 = vpack.c.b16 %v237, %v236
      %v244 = vpack.c.b16 %v239, %v238
      %v245 = vpack.c.b16 %v241, %v240
      %v266 = vunpack.c.l.b16 %v210
      %v267 = vunpack.c.l.b16 %v211
      %v268 = vunpack.c.l.b16 %v212
      %v269 = vunpack.c.l.b16 %v213
      %v270 = vunpack.c.l.b16 %v214
      %v271 = vunpack.c.l.b16 %v215
      %v272 = vunpack.c.l.b16 %v216
      %v273 = vunpack.c.l.b16 %v217
      %v274 = vunpack.c.l.b16 %v218
      %v275 = vunpack.c.l.b16 %v219
      %v276 = vunpack.c.l.b16 %v220
      %v277 = vunpack.c.l.b16 %v221
      %v278 = vunpack.c.l.b16 %v222
      %v279 = vunpack.c.l.b16 %v223
      %v280 = vunpack.c.l.b16 %v224
      %v281 = vunpack.c.l.b16 %v225
      %v282 = vpack.c.b16 %v267, %v266
      %v283 = vpack.c.b16 %v269, %v268
      %v284 = vpack.c.b16 %v271, %v270
      %v285 = vpack.c.b16 %v273, %v272
      %v286 = vpack.c.b16 %v275, %v274
      %v287 = vpack.c.b16 %v277, %v276
      %v288 = vpack.c.b16 %v279, %v278
      %v289 = vpack.c.b16 %v281, %v280
      %298 = vmatprep.subr.bf16.mxu0 0
      %299 = vmatpush1.bf16.msra.mxu0 %v282
      %300 = vmatprep.subr.bf16.mxu0 0
      %301 = vmatpush1.bf16.msra.mxu0 %v283
      %302 = vmatprep.subr.bf16.mxu0 0
      %303 = vmatpush1.bf16.msra.mxu0 %v284
      %304 = vmatprep.subr.bf16.mxu0 0
      %305 = vmatpush1.bf16.msra.mxu0 %v285
      %306 = vmatprep.subr.bf16.mxu0 0
      %307 = vmatpush1.bf16.msra.mxu0 %v286
      %308 = vmatprep.subr.bf16.mxu0 0
      %309 = vmatpush1.bf16.msra.mxu0 %v287
      %310 = vmatprep.subr.bf16.mxu0 0
      %311 = vmatpush1.bf16.msra.mxu0 %v288
      %312 = vmatprep.subr.bf16.mxu0 0
      %313 = vmatpush1.bf16.msra.mxu0 %v289
      %314 = vmatprep.subr.bf16.mxu0 0
      %315 = vmatpush1.bf16.msra.mxu0 0
      %316 = vmatprep.subr.bf16.mxu0 0
      %317 = vmatpush1.bf16.msra.mxu0 0
      %318 = vmatprep.subr.bf16.mxu0 0
      %319 = vmatpush1.bf16.msra.mxu0 0
      %320 = vmatprep.subr.bf16.mxu0 0
      %321 = vmatpush1.bf16.msra.mxu0 0
      %322 = vmatprep.subr.bf16.mxu0 0
      %323 = vmatpush1.bf16.msra.mxu0 0
      %324 = vmatprep.subr.bf16.mxu0 0
      %325 = vmatpush1.bf16.msra.mxu0 0
      %326 = vmatprep.subr.bf16.mxu0 0
      %327 = vmatpush1.bf16.msra.mxu0 0
      %328 = vmatprep.subr.bf16.mxu0 0
      %329 = vmatpush1.bf16.msra.mxu0 0
      %330 = vmatprep.mubr.bf16.mxu0 0
      %331 = vmatmul.mubr.bf16.gmra.mrb[0].mxu0 %v242
      %v332 = vpop.f32.mrb[0].mxu0
      %v333 = vadd.f32 0.0, %v332
      %v334 = vpop.f32.mrb[0].mxu0
      %v335 = vpop.f32.mrb[0].mxu0
      %v336 = vadd.f32 0.0, %v335
      %v337 = vpop.f32.mrb[0].mxu0
      %338 = vmatprep.mubr.bf16.mxu0 0
      %339 = vmatmul.mubr.bf16.gmra.mrb[0].mxu0 %v243
      %v340 = vpop.f32.mrb[0].mxu0
      %v341 = vadd.f32 0.0, %v340
      %v342 = vpop.f32.mrb[0].mxu0
      %v343 = vpop.f32.mrb[0].mxu0
      %v344 = vadd.f32 0.0, %v343
      %v345 = vpop.f32.mrb[0].mxu0
      %346 = vmatprep.mubr.bf16.mxu0 0
      %347 = vmatmul.mubr.bf16.gmra.mrb[0].mxu0 %v244
      %v348 = vpop.f32.mrb[0].mxu0
      %v349 = vadd.f32 0.0, %v348
      %v350 = vpop.f32.mrb[0].mxu0
      %v351 = vpop.f32.mrb[0].mxu0
      %v352 = vadd.f32 0.0, %v351
      %v353 = vpop.f32.mrb[0].mxu0
      %354 = vmatprep.mubr.bf16.mxu0 0
      %355 = vmatmul.mubr.bf16.gmra.mrb[0].mxu0 %v245
      %v356 = vpop.f32.mrb[0].mxu0
      %v357 = vadd.f32 0.0, %v356
      %v358 = vpop.f32.mrb[0].mxu0
      %v359 = vpop.f32.mrb[0].mxu0
      %v360 = vadd.f32 0.0, %v359
      %v361 = vpop.f32.mrb[0].mxu0
      %362 = vdwg.mxu0
      %v363 = vld [vmem:[%s2] sm:$0x1]
      %v365 = vlaneseq
      %v366 = vshrl.u32 %v365, 7
      %v367 = vsub.s32 0, %v366
      %v368 = vrot.slane %v363, %v367
      %v370 = vmul.f32 %v333, %v368
      %v371 = vmul.f32 %v336, %v368
      %v372 = vmul.f32 %v341, %v368
      %v373 = vmul.f32 %v344, %v368
      %v374 = vmul.f32 %v349, %v368
      %v375 = vmul.f32 %v352, %v368
      %v376 = vmul.f32 %v357, %v368
      %v377 = vmul.f32 %v360, %v368
      %v378 = vld [vmem:[%s3] sm:$0x1]
      %v380 = vlaneseq
      %v381 = vshrl.u32 %v380, 7
      %v382 = vsub.s32 0, %v381
      %v383 = vrot.slane %v378, %v382
      %v385 = vadd.f32 %v370, %v383
      %v386 = vadd.f32 %v371, %v383
      %v387 = vadd.f32 %v372, %v383
      %v388 = vadd.f32 %v373, %v383
      %v389 = vadd.f32 %v374, %v383
      %v390 = vadd.f32 %v375, %v383
      %v391 = vadd.f32 %v376, %v383
      %v392 = vadd.f32 %v377, %v383
      %v393 = vpack.c.bf16 %v386, %v385
      %v394 = vpack.c.bf16 %v388, %v387
      %v395 = vpack.c.bf16 %v390, %v389
      %v396 = vpack.c.bf16 %v392, %v391
      %v401 = vunpack.c.l.b16 %v393
      %v402 = vunpack.c.h.b16 %v393
      %v403 = vunpack.c.l.b16 %v394
      %v404 = vunpack.c.h.b16 %v394
      %v405 = vunpack.c.l.b16 %v395
      %v406 = vunpack.c.h.b16 %v395
      %v407 = vunpack.c.l.b16 %v396
      %v408 = vunpack.c.h.b16 %v396
      %v409 = vpack.c.b16 %v401, %v401
      %v410 = vpack.c.b16 %v402, %v402
      %v411 = vpack.c.b16 %v403, %v403
      %v412 = vpack.c.b16 %v404, %v404
      %v413 = vpack.c.b16 %v405, %v405
      %v414 = vpack.c.b16 %v406, %v406
      %v415 = vpack.c.b16 %v407, %v407
      %v416 = vpack.c.b16 %v408, %v408
      %425 = vst [vmem:[%s199] sm:$0xf] %v409
      %426 = vst [vmem:[%s199 + $0x4] sm:$0xf] %v410
      %427 = vst [vmem:[%s199 + $0x8] sm:$0xf] %v411
      %428 = vst [vmem:[%s199 + $0xc] sm:$0xf] %v412
      %429 = vst [vmem:[%s199 + $0x10] sm:$0xf] %v413
      %430 = vst [vmem:[%s199 + $0x14] sm:$0xf] %v414
      %431 = vst [vmem:[%s199 + $0x18] sm:$0xf] %v415
      %432 = vst [vmem:[%s199 + $0x1c] sm:$0xf] %v416
      %s433 = smul.u32 8, %s15
      %p434 = scmp.lt.s32.totalorder %s433, 15
      %s435 = scalar_select %p434, %s433, 15
      %s436 = smul.addr %s435, 4
      %s437 = scalar_lea.vmem %s4, %s436
      // Predicated region
      $region37: #{_lambda_.6} parent=35 // pred_check
        %p438 = pneg %p122
      $region38: #{_lambda_.6} parent=35 // pred_check_branch
        %440 = sbr.rel (%p438) target = $region40
      $region39: #{_lambda_.6} parent=35 // pred_region
        %s441 = smul.u32 8, %s15
      $region40: #{_lambda_.6} parent=35 // pred_fallthru
        _
    $region36: #{_lambda_.6} parent=5 // pred_fallthru
      _
    %p442 = scmp.le.s32.totalorder 2, %s10
    // Predicated region
    $region41: #{_lambda_.6} parent=5 // pred_check
      %p443 = pneg %p442
    $region42: #{_lambda_.6} parent=5 // pred_check_branch
      %445 = sbr.rel (%p443) target = $region44
    $region43: #{_lambda_.6} parent=5 // pred_region
      %s446 = ssub.s32 %s10, 2
      // Predicated region
      $region45: #{_lambda_.6} parent=43 // pred_check
        %p447 = pneg %p128
      $region46: #{_lambda_.6} parent=43 // pred_check_branch
        %449 = sbr.rel (%p447) target = $region48
      $region47: #{_lambda_.6} parent=43 // pred_region
        %s450 = smul.u32 8, %s16
        %p451 = scmp.lt.s32.totalorder %s450, 15
        %s452 = scalar_select %p451, %s450, 15
        %s453 = smul.addr %s452, 4
        %s454 = scalar_lea.vmem %s4, %s453
      $region48: #{_lambda_.6} parent=43 // pred_fallthru
        _
    $region44: #{_lambda_.6} parent=5 // pred_fallthru
      _
  $region6: #{_lambda_.6} parent=0 // loop_footer
    %s14 = sadd.s32 1, %s10
  $region7: #{_lambda_.6} parent=0 // loop_footer_branch
    %9 = sbr.rel target = $region3
  $region8: #{_lambda_.6} parent=0 // loop_exit
    _

// kernel: _lambda_.7
$region0: #{_lambda_.7}
  #allocation0 [shape = 'u32[]', space=smem, size = 0x4, offset = 0x4, fixed_abs, tag = 'smem constant byte address 0x4 - core index']
  #allocation1 [shape = 'u32[144,128]{1,0:T(1,128)}', space=vmem, size = 0x12000, scoped, tag = 'internal scratch']
  %s0 = inlined_call_operand.vmem [shape: bf16[128,128], index: 0, kind: input, shape index: {}]
  %s1 = inlined_call_operand.vmem [shape: bf16[128,128], index: 1, kind: input, shape index: {}]
  %s2 = inlined_call_operand.vmem [shape: f32[1,128], index: 2, kind: input, shape index: {}]
  %s3 = inlined_call_operand.vmem [shape: f32[1,128], index: 3, kind: input, shape index: {}]
  %s4 = inlined_call_operand.vmem [shape: bf16[128,128], index: 4, kind: input, shape index: {}]
  %s5 = inlined_call_operand.vmem [shape: bf16[128,128], index: 5, kind: output, shape index: {}]
  %s6 = sld [smem:[#allocation0]]
  $region53: #{_lambda_.7} parent=0
    _
  %s8 = ssub.s32 1, %s6
  %s9 = scalar_select 0, %s8, %s6
  loop: start=0, step=1, limit=4
  $region2: #{_lambda_.7} parent=0 // loop_pre_header
    _
  $region3: #{_lambda_.7} parent=0 // loop_header
    %s11 = sphi 0, %s15
    %p12 = scmp.ge.s32.totalorder %s11, 4
    %s21 = sphi 0, %s23
    %s24 = sphi 0, %s21
    %s25 = sphi 0, %s24
    %s41 = sphi 0, %s25
    %s45 = sphi 0, %s45
    %s47 = sphi 0, %s45
    %s48 = sphi 0, %s47
    %s62 = sphi 0, %s48
    %s66 = sphi 0, %s66
    %s68 = sphi 0, %s66
    %s69 = sphi 0, %s68
    %s83 = sphi 0, %s69
    %s87 = sphi 0, %s87
    %s89 = sphi 0, %s87
    %s90 = sphi 0, %s89
    %s104 = sphi 0, %s90
    %s110 = sphi 0, %s112
    %s113 = sphi 0, %s110
    %s114 = sphi 0, %s113
    %s130 = sphi 0, %s114
    %s136 = sphi 0, %s138
    %s139 = sphi 0, %s136
    %s140 = sphi 0, %s139
    %s156 = sphi 0, %s140
  $region4: #{_lambda_.7} parent=0 // loop_header_branch
    %14 = sbr.rel (%p12) target = $region8
  $region5: #{_lambda_.7} parent=0 // loop_body
    %s16 = ssub.s32 %s11, 1
    %s17 = ssub.s32 %s11, 2
    %s18 = sadd.s32 %s11, 1
    %s19 = ssub.s32 %s11, %s18
    %p20 = scmp.eq.s32.totalorder %s19, 0
    %s22 = sadd.s32 %s21, 1
    %s23 = scalar_select %p20, %s21, %s22
    %p26 = pneg %p20
    %p27 = scmp.eq.s32.totalorder %s11, 1
    %p28 = por %p26, %p27
    %p29 = scmp.ne.s32.totalorder %s21, %s24
    %p30 = scmp.eq.s32.totalorder %s11, 0
    %p31 = por %p29, %p30
    %p32 = scmp.ne.s32.totalorder %s21, %s24
    %p33 = scmp.eq.s32.totalorder %s16, 1
    %p34 = por %p32, %p33
    %p35 = scmp.ne.s32.totalorder %s24, %s25
    %p36 = scmp.eq.s32.totalorder %s16, 0
    %p37 = por %p35, %p36
    %p38 = scmp.ne.s32.totalorder %s24, %s25
    %p39 = scmp.eq.s32.totalorder %s17, 1
    %p40 = por %p38, %p39
    %p42 = scmp.ne.s32.totalorder %s25, %s41
    %p43 = scmp.eq.s32.totalorder %s17, 0
    %p44 = por %p42, %p43
    %s46 = sadd.s32 %s45, 1
    %p49 = scmp.eq.s32.totalorder %s11, 1
    %p50 = scmp.ne.s32.totalorder %s45, %s47
    %p51 = scmp.eq.s32.totalorder %s11, 0
    %p52 = por %p50, %p51
    %p53 = scmp.ne.s32.totalorder %s45, %s47
    %p54 = scmp.eq.s32.totalorder %s16, 1
    %p55 = por %p53, %p54
    %p56 = scmp.ne.s32.totalorder %s47, %s48
    %p57 = scmp.eq.s32.totalorder %s16, 0
    %p58 = por %p56, %p57
    %p59 = scmp.ne.s32.totalorder %s47, %s48
    %p60 = scmp.eq.s32.totalorder %s17, 1
    %p61 = por %p59, %p60
    %p63 = scmp.ne.s32.totalorder %s48, %s62
    %p64 = scmp.eq.s32.totalorder %s17, 0
    %p65 = por %p63, %p64
    %s67 = sadd.s32 %s66, 1
    %p70 = scmp.eq.s32.totalorder %s11, 1
    %p71 = scmp.ne.s32.totalorder %s66, %s68
    %p72 = scmp.eq.s32.totalorder %s11, 0
    %p73 = por %p71, %p72
    %p74 = scmp.ne.s32.totalorder %s66, %s68
    %p75 = scmp.eq.s32.totalorder %s16, 1
    %p76 = por %p74, %p75
    %p77 = scmp.ne.s32.totalorder %s68, %s69
    %p78 = scmp.eq.s32.totalorder %s16, 0
    %p79 = por %p77, %p78
    %p80 = scmp.ne.s32.totalorder %s68, %s69
    %p81 = scmp.eq.s32.totalorder %s17, 1
    %p82 = por %p80, %p81
    %p84 = scmp.ne.s32.totalorder %s69, %s83
    %p85 = scmp.eq.s32.totalorder %s17, 0
    %p86 = por %p84, %p85
    %s88 = sadd.s32 %s87, 1
    %p91 = scmp.eq.s32.totalorder %s11, 1
    %p92 = scmp.ne.s32.totalorder %s87, %s89
    %p93 = scmp.eq.s32.totalorder %s11, 0
    %p94 = por %p92, %p93
    %p95 = scmp.ne.s32.totalorder %s87, %s89
    %p96 = scmp.eq.s32.totalorder %s16, 1
    %p97 = por %p95, %p96
    %p98 = scmp.ne.s32.totalorder %s89, %s90
    %p99 = scmp.eq.s32.totalorder %s16, 0
    %p100 = por %p98, %p99
    %p101 = scmp.ne.s32.totalorder %s89, %s90
    %p102 = scmp.eq.s32.totalorder %s17, 1
    %p103 = por %p101, %p102
    %p105 = scmp.ne.s32.totalorder %s90, %s104
    %p106 = scmp.eq.s32.totalorder %s17, 0
    %p107 = por %p105, %p106
    %s108 = ssub.s32 %s11, %s18
    %p109 = scmp.eq.s32.totalorder %s108, 0
    %s111 = sadd.s32 %s110, 1
    %s112 = scalar_select %p109, %s110, %s111
    %p115 = pneg %p109
    %p116 = scmp.eq.s32.totalorder %s11, 1
    %p117 = por %p115, %p116
    %p118 = scmp.ne.s32.totalorder %s110, %s113
    %p119 = scmp.eq.s32.totalorder %s11, 0
    %p120 = por %p118, %p119
    %p121 = scmp.ne.s32.totalorder %s110, %s113
    %p122 = scmp.eq.s32.totalorder %s16, 1
    %p123 = por %p121, %p122
    %p124 = scmp.ne.s32.totalorder %s113, %s114
    %p125 = scmp.eq.s32.totalorder %s16, 0
    %p126 = por %p124, %p125
    %p127 = scmp.ne.s32.totalorder %s113, %s114
    %p128 = scmp.eq.s32.totalorder %s17, 1
    %p129 = por %p127, %p128
    %p131 = scmp.ne.s32.totalorder %s114, %s130
    %p132 = scmp.eq.s32.totalorder %s17, 0
    %p133 = por %p131, %p132
    %s134 = ssub.s32 %s11, %s18
    %p135 = scmp.eq.s32.totalorder %s134, 0
    %s137 = sadd.s32 %s136, 1
    %s138 = scalar_select %p135, %s136, %s137
    %p141 = pneg %p135
    %p142 = scmp.eq.s32.totalorder %s11, 1
    %p143 = por %p141, %p142
    %p144 = scmp.ne.s32.totalorder %s136, %s139
    %p145 = scmp.eq.s32.totalorder %s11, 0
    %p146 = por %p144, %p145
    %p147 = scmp.ne.s32.totalorder %s136, %s139
    %p148 = scmp.eq.s32.totalorder %s16, 1
    %p149 = por %p147, %p148
    %p150 = scmp.ne.s32.totalorder %s139, %s140
    %p151 = scmp.eq.s32.totalorder %s16, 0
    %p152 = por %p150, %p151
    %p153 = scmp.ne.s32.totalorder %s139, %s140
    %p154 = scmp.eq.s32.totalorder %s17, 1
    %p155 = por %p153, %p154
    %p157 = scmp.ne.s32.totalorder %s140, %s156
    %p158 = scmp.eq.s32.totalorder %s17, 0
    %p159 = por %p157, %p158
    %p160 = scmp.le.s32.totalorder 1, %s11
    %p161 = scmp.lt.s32.totalorder %s11, 3
    %p162 = pnand %p160, %p161
    %p163 = pneg %p162
    // Predicated region
    $region9: #{_lambda_.7} parent=5 // pred_check
      _
    $region10: #{_lambda_.7} parent=5 // pred_check_branch
      %165 = sbr.rel (%p162) target = $region12
    $region11: #{_lambda_.7} parent=5 // pred_region
      %s166 = ssub.s32 %s11, 1
      // Predicated region
      $region13: #{_lambda_.7} parent=11 // pred_check
        %p167 = pneg %p58
      $region14: #{_lambda_.7} parent=11 // pred_check_branch
        %169 = sbr.rel (%p167) target = $region16
      $region15: #{_lambda_.7} parent=11 // pred_region
        _
      $region16: #{_lambda_.7} parent=11 // pred_fallthru
        _
      // Predicated region
      $region17: #{_lambda_.7} parent=11 // pred_check
        %p170 = pneg %p79
      $region18: #{_lambda_.7} parent=11 // pred_check_branch
        %172 = sbr.rel (%p170) target = $region20
      $region19: #{_lambda_.7} parent=11 // pred_region
        _
      $region20: #{_lambda_.7} parent=11 // pred_fallthru
        _
      // Predicated region
      $region21: #{_lambda_.7} parent=11 // pred_check
        %p173 = pneg %p100
      $region22: #{_lambda_.7} parent=11 // pred_check_branch
        %175 = sbr.rel (%p173) target = $region24
      $region23: #{_lambda_.7} parent=11 // pred_region
        _
      $region24: #{_lambda_.7} parent=11 // pred_fallthru
        _
    $region12: #{_lambda_.7} parent=5 // pred_fallthru
      _
    %p176 = scmp.lt.s32.totalorder %s11, 2
    // Predicated region
    $region25: #{_lambda_.7} parent=5 // pred_check
      %p177 = pneg %p176
    $region26: #{_lambda_.7} parent=5 // pred_check_branch
      %179 = sbr.rel (%p177) target = $region28
    $region27: #{_lambda_.7} parent=5 // pred_region
      // Predicated region
      $region29: #{_lambda_.7} parent=27 // pred_check
        %p180 = pneg %p31
      $region30: #{_lambda_.7} parent=27 // pred_check_branch
        %182 = sbr.rel (%p180) target = $region32
      $region31: #{_lambda_.7} parent=27 // pred_region
        %s183 = smul.u32 8, %s11
        %p184 = scmp.lt.s32.totalorder %s183, 15
        %s185 = scalar_select %p184, %s183, 15
        %s186 = smul.addr %s185, 4
        %s187 = scalar_lea.vmem %s0, %s186
        %s188 = smul.u32 8, %s11
      $region32: #{_lambda_.7} parent=27 // pred_fallthru
        _
      // Predicated region
      $region33: #{_lambda_.7} parent=27 // pred_check
        %p189 = pneg %p120
      $region34: #{_lambda_.7} parent=27 // pred_check_branch
        %191 = sbr.rel (%p189) target = $region36
      $region35: #{_lambda_.7} parent=27 // pred_region
        %s192 = smul.u32 8, %s11
        %p193 = scmp.lt.s32.totalorder %s192, 15
        %s194 = scalar_select %p193, %s192, 15
        %s195 = smul.addr %s194, 4
        %s196 = scalar_lea.vmem %s4, %s195
        %s197 = smul.u32 8, %s11
      $region36: #{_lambda_.7} parent=27 // pred_fallthru
        _
    $region28: #{_lambda_.7} parent=5 // pred_fallthru
      _
    %p198 = scmp.le.s32.totalorder 1, %s11
    %p199 = scmp.lt.s32.totalorder %s11, 3
    %p200 = pnand %p198, %p199
    %p201 = pneg %p200
    // Predicated region
    $region37: #{_lambda_.7} parent=5 // pred_check
      _
    $region38: #{_lambda_.7} parent=5 // pred_check_branch
      %203 = sbr.rel (%p200) target = $region40
    $region39: #{_lambda_.7} parent=5 // pred_region
      %s204 = ssub.s32 %s11, 1
      %s205 = smul.u32 8, %s16
      %p206 = scmp.lt.s32.totalorder %s205, 15
      %s207 = scalar_select %p206, %s205, 15
      %s208 = smul.addr %s207, 4
      %s209 = scalar_lea.vmem %s0, %s208
      %p210 = pneg %p37
      %p211 = pneg %p34
      %p212 = pneg %p58
      %p213 = pneg %p55
      %p214 = pneg %p79
      %p215 = pneg %p76
      %p216 = pneg %p100
      %p217 = pneg %p97
      %s218 = smul.u32 8, %s16
      %p219 = scmp.lt.s32.totalorder %s218, 15
      %s220 = scalar_select %p219, %s218, 15
      %s221 = smul.addr %s220, 4
      %s222 = scalar_lea.vmem %s4, %s221
      %p223 = pneg %p126
      %p224 = pneg %p123
      %p225 = pneg %p152
      %p226 = pneg %p149
      %s227 = smul.u32 8, %s16
      %p228 = scmp.lt.s32.totalorder %s227, 15
      %s229 = scalar_select %p228, %s227, 15
      %s230 = smul.addr %s229, 4
      %s231 = scalar_lea.vmem %s5, %s230
      %s232 = smul.u32 8, %s16
      %p233 = scmp.lt.s32.totalorder %s232, 15
      %s234 = scalar_select %p233, %s232, 15
      %s235 = smul.addr %s234, 4
      %s236 = scalar_lea.vmem %s0, %s235
      %s237 = smul.u32 8, %s16
      %s238 = smul.u32 8, %s16
      %p239 = scmp.lt.s32.totalorder %s238, 15
      %s240 = scalar_select %p239, %s238, 15
      %s241 = smul.addr %s240, 4
      %s242 = scalar_lea.vmem %s4, %s241
      %s243 = smul.u32 8, %s16
      %s244 = smul.u32 8, %s16
      %p245 = scmp.lt.s32.totalorder %s244, 15
      %s246 = scalar_select %p245, %s244, 15
      %s247 = smul.addr %s246, 4
      %s248 = scalar_lea.vmem %s5, %s247
      %s249 = smul.u32 8, %s16
      %v251 = vld [vmem:[%s236] sm:$0xf]
      %v252 = vld [vmem:[%s236 + $0x4] sm:$0xf]
      %v253 = vld [vmem:[%s236 + $0x8] sm:$0xf]
      %v254 = vld [vmem:[%s236 + $0xc] sm:$0xf]
      %v255 = vld [vmem:[%s236 + $0x10] sm:$0xf]
      %v256 = vld [vmem:[%s236 + $0x14] sm:$0xf]
      %v257 = vld [vmem:[%s236 + $0x18] sm:$0xf]
      %v258 = vld [vmem:[%s236 + $0x1c] sm:$0xf]
      %v259 = vld [vmem:[%s1] sm:$0xf]
      %v260 = vld [vmem:[%s1 + $0x4] sm:$0xf]
      %v261 = vld [vmem:[%s1 + $0x8] sm:$0xf]
      %v262 = vld [vmem:[%s1 + $0xc] sm:$0xf]
      %v263 = vld [vmem:[%s1 + $0x10] sm:$0xf]
      %v264 = vld [vmem:[%s1 + $0x14] sm:$0xf]
      %v265 = vld [vmem:[%s1 + $0x18] sm:$0xf]
      %v266 = vld [vmem:[%s1 + $0x1c] sm:$0xf]
      %v267 = vld [vmem:[%s1 + $0x20] sm:$0xf]
      %v268 = vld [vmem:[%s1 + $0x24] sm:$0xf]
      %v269 = vld [vmem:[%s1 + $0x28] sm:$0xf]
      %v270 = vld [vmem:[%s1 + $0x2c] sm:$0xf]
      %v271 = vld [vmem:[%s1 + $0x30] sm:$0xf]
      %v272 = vld [vmem:[%s1 + $0x34] sm:$0xf]
      %v273 = vld [vmem:[%s1 + $0x38] sm:$0xf]
      %v274 = vld [vmem:[%s1 + $0x3c] sm:$0xf]
      %v283 = vunpack.c.l.b16 %v251
      %v284 = vunpack.c.l.b16 %v252
      %v285 = vunpack.c.l.b16 %v253
      %v286 = vunpack.c.l.b16 %v254
      %v287 = vunpack.c.l.b16 %v255
      %v288 = vunpack.c.l.b16 %v256
      %v289 = vunpack.c.l.b16 %v257
      %v290 = vunpack.c.l.b16 %v258
      %v291 = vpack.c.b16 %v284, %v283
      %v292 = vpack.c.b16 %v286, %v285
      %v293 = vpack.c.b16 %v288, %v287
      %v294 = vpack.c.b16 %v290, %v289
      %v315 = vunpack.c.l.b16 %v259
      %v316 = vunpack.c.l.b16 %v260
      %v317 = vunpack.c.l.b16 %v261
      %v318 = vunpack.c.l.b16 %v262
      %v319 = vunpack.c.l.b16 %v263
      %v320 = vunpack.c.l.b16 %v264
      %v321 = vunpack.c.l.b16 %v265
      %v322 = vunpack.c.l.b16 %v266
      %v323 = vunpack.c.l.b16 %v267
      %v324 = vunpack.c.l.b16 %v268
      %v325 = vunpack.c.l.b16 %v269
      %v326 = vunpack.c.l.b16 %v270
      %v327 = vunpack.c.l.b16 %v271
      %v328 = vunpack.c.l.b16 %v272
      %v329 = vunpack.c.l.b16 %v273
      %v330 = vunpack.c.l.b16 %v274
      %v331 = vpack.c.b16 %v316, %v315
      %v332 = vpack.c.b16 %v318, %v317
      %v333 = vpack.c.b16 %v320, %v319
      %v334 = vpack.c.b16 %v322, %v321
      %v335 = vpack.c.b16 %v324, %v323
      %v336 = vpack.c.b16 %v326, %v325
      %v337 = vpack.c.b16 %v328, %v327
      %v338 = vpack.c.b16 %v330, %v329
      %347 = vmatprep.subr.bf16.mxu0 0
      %348 = vmatpush1.bf16.msra.mxu0 %v331
      %349 = vmatprep.subr.bf16.mxu0 0
      %350 = vmatpush1.bf16.msra.mxu0 %v332
      %351 = vmatprep.subr.bf16.mxu0 0
      %352 = vmatpush1.bf16.msra.mxu0 %v333
      %353 = vmatprep.subr.bf16.mxu0 0
      %354 = vmatpush1.bf16.msra.mxu0 %v334
      %355 = vmatprep.subr.bf16.mxu0 0
      %356 = vmatpush1.bf16.msra.mxu0 %v335
      %357 = vmatprep.subr.bf16.mxu0 0
      %358 = vmatpush1.bf16.msra.mxu0 %v336
      %359 = vmatprep.subr.bf16.mxu0 0
      %360 = vmatpush1.bf16.msra.mxu0 %v337
      %361 = vmatprep.subr.bf16.mxu0 0
      %362 = vmatpush1.bf16.msra.mxu0 %v338
      %363 = vmatprep.subr.bf16.mxu0 0
      %364 = vmatpush1.bf16.msra.mxu0 0
      %365 = vmatprep.subr.bf16.mxu0 0
      %366 = vmatpush1.bf16.msra.mxu0 0
      %367 = vmatprep.subr.bf16.mxu0 0
      %368 = vmatpush1.bf16.msra.mxu0 0
      %369 = vmatprep.subr.bf16.mxu0 0
      %370 = vmatpush1.bf16.msra.mxu0 0
      %371 = vmatprep.subr.bf16.mxu0 0
      %372 = vmatpush1.bf16.msra.mxu0 0
      %373 = vmatprep.subr.bf16.mxu0 0
      %374 = vmatpush1.bf16.msra.mxu0 0
      %375 = vmatprep.subr.bf16.mxu0 0
      %376 = vmatpush1.bf16.msra.mxu0 0
      %377 = vmatprep.subr.bf16.mxu0 0
      %378 = vmatpush1.bf16.msra.mxu0 0
      %379 = vmatprep.mubr.bf16.mxu0 0
      %380 = vmatmul.mubr.bf16.gmra.mrb[0].mxu0 %v291
      %v381 = vpop.f32.mrb[0].mxu0
      %v382 = vadd.f32 0.0, %v381
      %v383 = vpop.f32.mrb[0].mxu0
      %v384 = vpop.f32.mrb[0].mxu0
      %v385 = vadd.f32 0.0, %v384
      %v386 = vpop.f32.mrb[0].mxu0
      %387 = vmatprep.mubr.bf16.mxu0 0
      %388 = vmatmul.mubr.bf16.gmra.mrb[0].mxu0 %v292
      %v389 = vpop.f32.mrb[0].mxu0
      %v390 = vadd.f32 0.0, %v389
      %v391 = vpop.f32.mrb[0].mxu0
      %v392 = vpop.f32.mrb[0].mxu0
      %v393 = vadd.f32 0.0, %v392
      %v394 = vpop.f32.mrb[0].mxu0
      %395 = vmatprep.mubr.bf16.mxu0 0
      %396 = vmatmul.mubr.bf16.gmra.mrb[0].mxu0 %v293
      %v397 = vpop.f32.mrb[0].mxu0
      %v398 = vadd.f32 0.0, %v397
      %v399 = vpop.f32.mrb[0].mxu0
      %v400 = vpop.f32.mrb[0].mxu0
      %v401 = vadd.f32 0.0, %v400
      %v402 = vpop.f32.mrb[0].mxu0
      %403 = vmatprep.mubr.bf16.mxu0 0
      %404 = vmatmul.mubr.bf16.gmra.mrb[0].mxu0 %v294
      %v405 = vpop.f32.mrb[0].mxu0
      %v406 = vadd.f32 0.0, %v405
      %v407 = vpop.f32.mrb[0].mxu0
      %v408 = vpop.f32.mrb[0].mxu0
      %v409 = vadd.f32 0.0, %v408
      %v410 = vpop.f32.mrb[0].mxu0
      %411 = vdwg.mxu0
      %v412 = vld [vmem:[%s2] sm:$0x1]
      %v414 = vlaneseq
      %v415 = vshrl.u32 %v414, 7
      %v416 = vsub.s32 0, %v415
      %v417 = vrot.slane %v412, %v416
      %v419 = vmul.f32 %v382, %v417
      %v420 = vmul.f32 %v385, %v417
      %v421 = vmul.f32 %v390, %v417
      %v422 = vmul.f32 %v393, %v417
      %v423 = vmul.f32 %v398, %v417
      %v424 = vmul.f32 %v401, %v417
      %v425 = vmul.f32 %v406, %v417
      %v426 = vmul.f32 %v409, %v417
      %v427 = vld [vmem:[%s3] sm:$0x1]
      %v429 = vlaneseq
      %v430 = vshrl.u32 %v429, 7
      %v431 = vsub.s32 0, %v430
      %v432 = vrot.slane %v427, %v431
      %v434 = vadd.f32 %v419, %v432
      %v435 = vadd.f32 %v420, %v432
      %v436 = vadd.f32 %v421, %v432
      %v437 = vadd.f32 %v422, %v432
      %v438 = vadd.f32 %v423, %v432
      %v439 = vadd.f32 %v424, %v432
      %v440 = vadd.f32 %v425, %v432
      %v441 = vadd.f32 %v426, %v432
      %v442 = vld [vmem:[%s242] sm:$0xf]
      %v443 = vld [vmem:[%s242 + $0x4] sm:$0xf]
      %v444 = vld [vmem:[%s242 + $0x8] sm:$0xf]
      %v445 = vld [vmem:[%s242 + $0xc] sm:$0xf]
      %v446 = vld [vmem:[%s242 + $0x10] sm:$0xf]
      %v447 = vld [vmem:[%s242 + $0x14] sm:$0xf]
      %v448 = vld [vmem:[%s242 + $0x18] sm:$0xf]
      %v449 = vld [vmem:[%s242 + $0x1c] sm:$0xf]
      %v450 = vunpack.c.l.bf16 %v442
      %v451 = vunpack.c.l.bf16 %v443
      %v452 = vunpack.c.l.bf16 %v444
      %v453 = vunpack.c.l.bf16 %v445
      %v454 = vunpack.c.l.bf16 %v446
      %v455 = vunpack.c.l.bf16 %v447
      %v456 = vunpack.c.l.bf16 %v448
      %v457 = vunpack.c.l.bf16 %v449
      %v458 = vadd.f32 %v434, %v450
      %v459 = vadd.f32 %v435, %v451
      %v460 = vadd.f32 %v436, %v452
      %v461 = vadd.f32 %v437, %v453
      %v462 = vadd.f32 %v438, %v454
      %v463 = vadd.f32 %v439, %v455
      %v464 = vadd.f32 %v440, %v456
      %v465 = vadd.f32 %v441, %v457
      %v466 = vmax.f32 %v458, 0.0
      %v467 = vmax.f32 %v459, 0.0
      %v468 = vmax.f32 %v460, 0.0
      %v469 = vmax.f32 %v461, 0.0
      %v470 = vmax.f32 %v462, 0.0
      %v471 = vmax.f32 %v463, 0.0
      %v472 = vmax.f32 %v464, 0.0
      %v473 = vmax.f32 %v465, 0.0
      %v474 = vpack.c.bf16 %v467, %v466
      %v475 = vpack.c.bf16 %v469, %v468
      %v476 = vpack.c.bf16 %v471, %v470
      %v477 = vpack.c.bf16 %v473, %v472
      %v482 = vunpack.c.l.b16 %v474
      %v483 = vunpack.c.h.b16 %v474
      %v484 = vunpack.c.l.b16 %v475
      %v485 = vunpack.c.h.b16 %v475
      %v486 = vunpack.c.l.b16 %v476
      %v487 = vunpack.c.h.b16 %v476
      %v488 = vunpack.c.l.b16 %v477
      %v489 = vunpack.c.h.b16 %v477
      %v490 = vpack.c.b16 %v482, %v482
      %v491 = vpack.c.b16 %v483, %v483
      %v492 = vpack.c.b16 %v484, %v484
      %v493 = vpack.c.b16 %v485, %v485
      %v494 = vpack.c.b16 %v486, %v486
      %v495 = vpack.c.b16 %v487, %v487
      %v496 = vpack.c.b16 %v488, %v488
      %v497 = vpack.c.b16 %v489, %v489
      %506 = vst [vmem:[%s248] sm:$0xf] %v490
      %507 = vst [vmem:[%s248 + $0x4] sm:$0xf] %v491
      %508 = vst [vmem:[%s248 + $0x8] sm:$0xf] %v492
      %509 = vst [vmem:[%s248 + $0xc] sm:$0xf] %v493
      %510 = vst [vmem:[%s248 + $0x10] sm:$0xf] %v494
      %511 = vst [vmem:[%s248 + $0x14] sm:$0xf] %v495
      %512 = vst [vmem:[%s248 + $0x18] sm:$0xf] %v496
      %513 = vst [vmem:[%s248 + $0x1c] sm:$0xf] %v497
      %s514 = smul.u32 8, %s16
      %p515 = scmp.lt.s32.totalorder %s514, 15
      %s516 = scalar_select %p515, %s514, 15
      %s517 = smul.addr %s516, 4
      %s518 = scalar_lea.vmem %s5, %s517
      // Predicated region
      $region41: #{_lambda_.7} parent=39 // pred_check
        %p519 = pneg %p149
      $region42: #{_lambda_.7} parent=39 // pred_check_branch
        %521 = sbr.rel (%p519) target = $region44
      $region43: #{_lambda_.7} parent=39 // pred_region
        %s522 = smul.u32 8, %s16
      $region44: #{_lambda_.7} parent=39 // pred_fallthru
        _
    $region40: #{_lambda_.7} parent=5 // pred_fallthru
      _
    %p523 = scmp.le.s32.totalorder 2, %s11
    // Predicated region
    $region45: #{_lambda_.7} parent=5 // pred_check
      %p524 = pneg %p523
    $region46: #{_lambda_.7} parent=5 // pred_check_branch
      %526 = sbr.rel (%p524) target = $region48
    $region47: #{_lambda_.7} parent=5 // pred_region
      %s527 = ssub.s32 %s11, 2
      // Predicated region
      $region49: #{_lambda_.7} parent=47 // pred_check
        %p528 = pneg %p155
      $region50: #{_lambda_.7} parent=47 // pred_check_branch
        %530 = sbr.rel (%p528) target = $region52
      $region51: #{_lambda_.7} parent=47 // pred_region
        %s531 = smul.u32 8, %s17
        %p532 = scmp.lt.s32.totalorder %s531, 15
        %s533 = scalar_select %p532, %s531, 15
        %s534 = smul.addr %s533, 4
        %s535 = scalar_lea.vmem %s5, %s534
      $region52: #{_lambda_.7} parent=47 // pred_fallthru
        _
    $region48: #{_lambda_.7} parent=5 // pred_fallthru
      _
  $region6: #{_lambda_.7} parent=0 // loop_footer
    %s15 = sadd.s32 1, %s11
  $region7: #{_lambda_.7} parent=0 // loop_footer_branch
    %10 = sbr.rel target = $region3
  $region8: #{_lambda_.7} parent=0 // loop_exit
    _

// kernel: _lambda_.5
$region0: #{_lambda_.5}
  #allocation0 [shape = 'u32[]', space=smem, size = 0x4, offset = 0x4, fixed_abs, tag = 'smem constant byte address 0x4 - core index']
  #allocation1 [shape = 'u32[144,128]{1,0:T(1,128)}', space=vmem, size = 0x12000, scoped, tag = 'internal scratch']
  %s0 = inlined_call_operand.vmem [shape: bf16[2,18,9,128], index: 0, kind: input, shape index: {}]
  %s1 = inlined_call_operand.vmem [shape: bf16[2,18,9,128], index: 1, kind: input, shape index: {}]
  %s2 = inlined_call_operand.vmem [shape: bf16[9,128,128], index: 2, kind: input, shape index: {}]
  %s3 = inlined_call_operand.vmem [shape: f32[1,128], index: 3, kind: input, shape index: {}]
  %s4 = inlined_call_operand.vmem [shape: f32[1,128], index: 4, kind: input, shape index: {}]
  %s5 = inlined_call_operand.vmem [shape: bf16[2,8,8,128], index: 5, kind: output, shape index: {}]
  %s6 = sld [smem:[#allocation0]]
  $region53: #{_lambda_.5} parent=0
    _
  %s8 = ssub.s32 1, %s6
  %s9 = scalar_select 0, %s8, %s6
  loop: start=0, step=1, limit=4
  $region2: #{_lambda_.5} parent=0 // loop_pre_header
    _
  $region3: #{_lambda_.5} parent=0 // loop_header
    %s11 = sphi 0, %s15
    %p12 = scmp.ge.s32.totalorder %s11, 4
    %s21 = sphi 0, %s23
    %s24 = sphi 0, %s21
    %s25 = sphi 0, %s24
    %s41 = sphi 0, %s25
    %s47 = sphi 0, %s49
    %s50 = sphi 0, %s47
    %s51 = sphi 0, %s50
    %s67 = sphi 0, %s51
    %s71 = sphi 0, %s71
    %s73 = sphi 0, %s71
    %s74 = sphi 0, %s73
    %s88 = sphi 0, %s74
    %s92 = sphi 0, %s92
    %s94 = sphi 0, %s92
    %s95 = sphi 0, %s94
    %s109 = sphi 0, %s95
    %s113 = sphi 0, %s113
    %s115 = sphi 0, %s113
    %s116 = sphi 0, %s115
    %s130 = sphi 0, %s116
    %s136 = sphi 0, %s138
    %s139 = sphi 0, %s136
    %s140 = sphi 0, %s139
    %s156 = sphi 0, %s140
  $region4: #{_lambda_.5} parent=0 // loop_header_branch
    %14 = sbr.rel (%p12) target = $region8
  $region5: #{_lambda_.5} parent=0 // loop_body
    %s16 = ssub.s32 %s11, 1
    %s17 = ssub.s32 %s11, 2
    %s18 = sadd.s32 %s11, 1
    %s19 = ssub.s32 %s11, %s18
    %p20 = scmp.eq.s32.totalorder %s19, 0
    %s22 = sadd.s32 %s21, 1
    %s23 = scalar_select %p20, %s21, %s22
    %p26 = pneg %p20
    %p27 = scmp.eq.s32.totalorder %s11, 1
    %p28 = por %p26, %p27
    %p29 = scmp.ne.s32.totalorder %s21, %s24
    %p30 = scmp.eq.s32.totalorder %s11, 0
    %p31 = por %p29, %p30
    %p32 = scmp.ne.s32.totalorder %s21, %s24
    %p33 = scmp.eq.s32.totalorder %s16, 1
    %p34 = por %p32, %p33
    %p35 = scmp.ne.s32.totalorder %s24, %s25
    %p36 = scmp.eq.s32.totalorder %s16, 0
    %p37 = por %p35, %p36
    %p38 = scmp.ne.s32.totalorder %s24, %s25
    %p39 = scmp.eq.s32.totalorder %s17, 1
    %p40 = por %p38, %p39
    %p42 = scmp.ne.s32.totalorder %s25, %s41
    %p43 = scmp.eq.s32.totalorder %s17, 0
    %p44 = por %p42, %p43
    %s45 = ssub.s32 %s11, %s18
    %p46 = scmp.eq.s32.totalorder %s45, 0
    %s48 = sadd.s32 %s47, 1
    %s49 = scalar_select %p46, %s47, %s48
    %p52 = pneg %p46
    %p53 = scmp.eq.s32.totalorder %s11, 1
    %p54 = por %p52, %p53
    %p55 = scmp.ne.s32.totalorder %s47, %s50
    %p56 = scmp.eq.s32.totalorder %s11, 0
    %p57 = por %p55, %p56
    %p58 = scmp.ne.s32.totalorder %s47, %s50
    %p59 = scmp.eq.s32.totalorder %s16, 1
    %p60 = por %p58, %p59
    %p61 = scmp.ne.s32.totalorder %s50, %s51
    %p62 = scmp.eq.s32.totalorder %s16, 0
    %p63 = por %p61, %p62
    %p64 = scmp.ne.s32.totalorder %s50, %s51
    %p65 = scmp.eq.s32.totalorder %s17, 1
    %p66 = por %p64, %p65
    %p68 = scmp.ne.s32.totalorder %s51, %s67
    %p69 = scmp.eq.s32.totalorder %s17, 0
    %p70 = por %p68, %p69
    %s72 = sadd.s32 %s71, 1
    %p75 = scmp.eq.s32.totalorder %s11, 1
    %p76 = scmp.ne.s32.totalorder %s71, %s73
    %p77 = scmp.eq.s32.totalorder %s11, 0
    %p78 = por %p76, %p77
    %p79 = scmp.ne.s32.totalorder %s71, %s73
    %p80 = scmp.eq.s32.totalorder %s16, 1
    %p81 = por %p79, %p80
    %p82 = scmp.ne.s32.totalorder %s73, %s74
    %p83 = scmp.eq.s32.totalorder %s16, 0
    %p84 = por %p82, %p83
    %p85 = scmp.ne.s32.totalorder %s73, %s74
    %p86 = scmp.eq.s32.totalorder %s17, 1
    %p87 = por %p85, %p86
    %p89 = scmp.ne.s32.totalorder %s74, %s88
    %p90 = scmp.eq.s32.totalorder %s17, 0
    %p91 = por %p89, %p90
    %s93 = sadd.s32 %s92, 1
    %p96 = scmp.eq.s32.totalorder %s11, 1
    %p97 = scmp.ne.s32.totalorder %s92, %s94
    %p98 = scmp.eq.s32.totalorder %s11, 0
    %p99 = por %p97, %p98
    %p100 = scmp.ne.s32.totalorder %s92, %s94
    %p101 = scmp.eq.s32.totalorder %s16, 1
    %p102 = por %p100, %p101
    %p103 = scmp.ne.s32.totalorder %s94, %s95
    %p104 = scmp.eq.s32.totalorder %s16, 0
    %p105 = por %p103, %p104
    %p106 = scmp.ne.s32.totalorder %s94, %s95
    %p107 = scmp.eq.s32.totalorder %s17, 1
    %p108 = por %p106, %p107
    %p110 = scmp.ne.s32.totalorder %s95, %s109
    %p111 = scmp.eq.s32.totalorder %s17, 0
    %p112 = por %p110, %p111
    %s114 = sadd.s32 %s113, 1
    %p117 = scmp.eq.s32.totalorder %s11, 1
    %p118 = scmp.ne.s32.totalorder %s113, %s115
    %p119 = scmp.eq.s32.totalorder %s11, 0
    %p120 = por %p118, %p119
    %p121 = scmp.ne.s32.totalorder %s113, %s115
    %p122 = scmp.eq.s32.totalorder %s16, 1
    %p123 = por %p121, %p122
    %p124 = scmp.ne.s32.totalorder %s115, %s116
    %p125 = scmp.eq.s32.totalorder %s16, 0
    %p126 = por %p124, %p125
    %p127 = scmp.ne.s32.totalorder %s115, %s116
    %p128 = scmp.eq.s32.totalorder %s17, 1
    %p129 = por %p127, %p128
    %p131 = scmp.ne.s32.totalorder %s116, %s130
    %p132 = scmp.eq.s32.totalorder %s17, 0
    %p133 = por %p131, %p132
    %s134 = ssub.s32 %s11, %s18
    %p135 = scmp.eq.s32.totalorder %s134, 0
    %s137 = sadd.s32 %s136, 1
    %s138 = scalar_select %p135, %s136, %s137
    %p141 = pneg %p135
    %p142 = scmp.eq.s32.totalorder %s11, 1
    %p143 = por %p141, %p142
    %p144 = scmp.ne.s32.totalorder %s136, %s139
    %p145 = scmp.eq.s32.totalorder %s11, 0
    %p146 = por %p144, %p145
    %p147 = scmp.ne.s32.totalorder %s136, %s139
    %p148 = scmp.eq.s32.totalorder %s16, 1
    %p149 = por %p147, %p148
    %p150 = scmp.ne.s32.totalorder %s139, %s140
    %p151 = scmp.eq.s32.totalorder %s16, 0
    %p152 = por %p150, %p151
    %p153 = scmp.ne.s32.totalorder %s139, %s140
    %p154 = scmp.eq.s32.totalorder %s17, 1
    %p155 = por %p153, %p154
    %p157 = scmp.ne.s32.totalorder %s140, %s156
    %p158 = scmp.eq.s32.totalorder %s17, 0
    %p159 = por %p157, %p158
    %p160 = scmp.le.s32.totalorder 1, %s11
    %p161 = scmp.lt.s32.totalorder %s11, 3
    %p162 = pnand %p160, %p161
    %p163 = pneg %p162
    // Predicated region
    $region9: #{_lambda_.5} parent=5 // pred_check
      _
    $region10: #{_lambda_.5} parent=5 // pred_check_branch
      %165 = sbr.rel (%p162) target = $region12
    $region11: #{_lambda_.5} parent=5 // pred_region
      %s166 = ssub.s32 %s11, 1
      // Predicated region
      $region13: #{_lambda_.5} parent=11 // pred_check
        %p167 = pneg %p84
      $region14: #{_lambda_.5} parent=11 // pred_check_branch
        %169 = sbr.rel (%p167) target = $region16
      $region15: #{_lambda_.5} parent=11 // pred_region
        _
      $region16: #{_lambda_.5} parent=11 // pred_fallthru
        _
      // Predicated region
      $region17: #{_lambda_.5} parent=11 // pred_check
        %p170 = pneg %p105
      $region18: #{_lambda_.5} parent=11 // pred_check_branch
        %172 = sbr.rel (%p170) target = $region20
      $region19: #{_lambda_.5} parent=11 // pred_region
        _
      $region20: #{_lambda_.5} parent=11 // pred_fallthru
        _
      // Predicated region
      $region21: #{_lambda_.5} parent=11 // pred_check
        %p173 = pneg %p126
      $region22: #{_lambda_.5} parent=11 // pred_check_branch
        %175 = sbr.rel (%p173) target = $region24
      $region23: #{_lambda_.5} parent=11 // pred_region
        _
      $region24: #{_lambda_.5} parent=11 // pred_fallthru
        _
    $region12: #{_lambda_.5} parent=5 // pred_fallthru
      _
    %p176 = scmp.lt.s32.totalorder %s11, 2
    // Predicated region
    $region25: #{_lambda_.5} parent=5 // pred_check
      %p177 = pneg %p176
    $region26: #{_lambda_.5} parent=5 // pred_check_branch
      %179 = sbr.rel (%p177) target = $region28
    $region27: #{_lambda_.5} parent=5 // pred_region
      // Predicated region
      $region29: #{_lambda_.5} parent=27 // pred_check
        %p180 = pneg %p31
      $region30: #{_lambda_.5} parent=27 // pred_check_branch
        %182 = sbr.rel (%p180) target = $region32
      $region31: #{_lambda_.5} parent=27 // pred_region
        %p183 = scmp.lt.s32.totalorder %s11, 1
        %s184 = scalar_select %p183, %s11, 1
        %s185 = smul.addr %s184, 36
        %s186 = smul.addr %s185, 4
        %s187 = scalar_lea.vmem %s0, %s186
      $region32: #{_lambda_.5} parent=27 // pred_fallthru
        _
      // Predicated region
      $region33: #{_lambda_.5} parent=27 // pred_check
        %p188 = pneg %p57
      $region34: #{_lambda_.5} parent=27 // pred_check_branch
        %190 = sbr.rel (%p188) target = $region36
      $region35: #{_lambda_.5} parent=27 // pred_region
        %p191 = scmp.lt.s32.totalorder %s11, 1
        %s192 = scalar_select %p191, %s11, 1
        %s193 = smul.addr %s192, 36
        %s194 = smul.addr %s193, 4
        %s195 = scalar_lea.vmem %s1, %s194
      $region36: #{_lambda_.5} parent=27 // pred_fallthru
        _
    $region28: #{_lambda_.5} parent=5 // pred_fallthru
      _
    %p196 = scmp.le.s32.totalorder 1, %s11
    %p197 = scmp.lt.s32.totalorder %s11, 3
    %p198 = pnand %p196, %p197
    %p199 = pneg %p198
    // Predicated region
    $region37: #{_lambda_.5} parent=5 // pred_check
      _
    $region38: #{_lambda_.5} parent=5 // pred_check_branch
      %201 = sbr.rel (%p198) target = $region40
    $region39: #{_lambda_.5} parent=5 // pred_region
      %s202 = ssub.s32 %s11, 1
      %p203 = scmp.lt.s32.totalorder %s16, 1
      %s204 = scalar_select %p203, %s16, 1
      %s205 = smul.addr %s204, 36
      %s206 = smul.addr %s205, 4
      %s207 = scalar_lea.vmem %s0, %s206
      %p208 = pneg %p37
      %p209 = pneg %p34
      %p210 = scmp.lt.s32.totalorder %s16, 1
      %s211 = scalar_select %p210, %s16, 1
      %s212 = smul.addr %s211, 36
      %s213 = smul.addr %s212, 4
      %s214 = scalar_lea.vmem %s1, %s213
      %p215 = pneg %p63
      %p216 = pneg %p60
      %p217 = pneg %p84
      %p218 = pneg %p81
      %p219 = pneg %p105
      %p220 = pneg %p102
      %p221 = pneg %p126
      %p222 = pneg %p123
      %p223 = pneg %p152
      %p224 = pneg %p149
      %p225 = scmp.lt.s32.totalorder %s16, 1
      %s226 = scalar_select %p225, %s16, 1
      %s227 = smul.addr %s226, 8
      %s228 = smul.addr %s227, 4
      %s229 = scalar_lea.vmem %s5, %s228
      %p230 = scmp.lt.s32.totalorder %s16, 1
      %s231 = scalar_select %p230, %s16, 1
      %s232 = smul.addr %s231, 36
      %s233 = smul.addr %s232, 4
      %s234 = scalar_lea.vmem %s0, %s233
      %p235 = scmp.lt.s32.totalorder %s16, 1
      %s236 = scalar_select %p235, %s16, 1
      %s237 = smul.addr %s236, 36
      %s238 = smul.addr %s237, 4
      %s239 = scalar_lea.vmem %s1, %s238
      %p240 = scmp.lt.s32.totalorder %s16, 1
      %s241 = scalar_select %p240, %s16, 1
      %s242 = smul.addr %s241, 8
      %s243 = smul.addr %s242, 4
      %s244 = scalar_lea.vmem %s5, %s243
      %v246 = vld [vmem:[%s234] sm:$0xf]
      %v247 = vld [vmem:[%s234 + $0x4] sm:$0x1]
      %v248 = vld [vmem:[%s239] sm:$0xf]
      %v249 = vld [vmem:[%s239 + $0x4] sm:$0x1]
      %v250 = vld [vmem:[%s2] sm:$0xf]
      %v251 = vld [vmem:[%s2 + $0x4] sm:$0xf]
      %v252 = vld [vmem:[%s2 + $0x8] sm:$0xf]
      %v253 = vld [vmem:[%s2 + $0xc] sm:$0xf]
      %v254 = vld [vmem:[%s2 + $0x10] sm:$0xf]
      %v255 = vld [vmem:[%s2 + $0x14] sm:$0xf]
      %v256 = vld [vmem:[%s2 + $0x18] sm:$0xf]
      %v257 = vld [vmem:[%s2 + $0x1c] sm:$0xf]
      %v258 = vld [vmem:[%s2 + $0x20] sm:$0xf]
      %v259 = vld [vmem:[%s2 + $0x24] sm:$0xf]
      %v260 = vld [vmem:[%s2 + $0x28] sm:$0xf]
      %v261 = vld [vmem:[%s2 + $0x2c] sm:$0xf]
      %v262 = vld [vmem:[%s2 + $0x30] sm:$0xf]
      %v263 = vld [vmem:[%s2 + $0x34] sm:$0xf]
      %v264 = vld [vmem:[%s2 + $0x38] sm:$0xf]
      %v265 = vld [vmem:[%s2 + $0x3c] sm:$0xf]
      %v268 = vunpack.c.l.b16 %v246
      %v269 = vunpack.c.l.b16 %v247
      %v270 = vpack.c.b16 %v269, %v268
      %v288 = vunpack.c.l.b16 %v250
      %v289 = vunpack.c.l.b16 %v251
      %v290 = vunpack.c.l.b16 %v252
      %v291 = vunpack.c.l.b16 %v253
      %v292 = vunpack.c.l.b16 %v254
      %v293 = vunpack.c.l.b16 %v255
      %v294 = vunpack.c.l.b16 %v256
      %v295 = vunpack.c.l.b16 %v257
      %v296 = vunpack.c.l.b16 %v258
      %v297 = vunpack.c.l.b16 %v259
      %v298 = vunpack.c.l.b16 %v260
      %v299 = vunpack.c.l.b16 %v261
      %v300 = vunpack.c.l.b16 %v262
      %v301 = vunpack.c.l.b16 %v263
      %v302 = vunpack.c.l.b16 %v264
      %v303 = vunpack.c.l.b16 %v265
      %v304 = vpack.c.b16 %v289, %v288
      %v305 = vpack.c.b16 %v291, %v290
      %v306 = vpack.c.b16 %v293, %v292
      %v307 = vpack.c.b16 %v295, %v294
      %v308 = vpack.c.b16 %v297, %v296
      %v309 = vpack.c.b16 %v299, %v298
      %v310 = vpack.c.b16 %v301, %v300
      %v311 = vpack.c.b16 %v303, %v302
      %320 = vmatprep.subr.bf16.mxu0 0
      %321 = vmatpush1.bf16.msra.mxu0 %v304
      %322 = vmatprep.subr.bf16.mxu0 0
      %323 = vmatpush1.bf16.msra.mxu0 %v305
      %324 = vmatprep.subr.bf16.mxu0 0
      %325 = vmatpush1.bf16.msra.mxu0 %v306
      %326 = vmatprep.subr.bf16.mxu0 0
      %327 = vmatpush1.bf16.msra.mxu0 %v307
      %328 = vmatprep.subr.bf16.mxu0 0
      %329 = vmatpush1.bf16.msra.mxu0 %v308
      %330 = vmatprep.subr.bf16.mxu0 0
      %331 = vmatpush1.bf16.msra.mxu0 %v309
      %332 = vmatprep.subr.bf16.mxu0 0
      %333 = vmatpush1.bf16.msra.mxu0 %v310
      %334 = vmatprep.subr.bf16.mxu0 0
      %335 = vmatpush1.bf16.msra.mxu0 %v311
      %336 = vmatprep.subr.bf16.mxu0 0
      %337 = vmatpush1.bf16.msra.mxu0 0
      %338 = vmatprep.subr.bf16.mxu0 0
      %339 = vmatpush1.bf16.msra.mxu0 0
      %340 = vmatprep.subr.bf16.mxu0 0
      %341 = vmatpush1.bf16.msra.mxu0 0
      %342 = vmatprep.subr.bf16.mxu0 0
      %343 = vmatpush1.bf16.msra.mxu0 0
      %344 = vmatprep.subr.bf16.mxu0 0
      %345 = vmatpush1.bf16.msra.mxu0 0
      %346 = vmatprep.subr.bf16.mxu0 0
      %347 = vmatpush1.bf16.msra.mxu0 0
      %348 = vmatprep.subr.bf16.mxu0 0
      %349 = vmatpush1.bf16.msra.mxu0 0
      %350 = vmatprep.subr.bf16.mxu0 0
      %351 = vmatpush1.bf16.msra.mxu0 0
      %352 = vmatprep.mubr.bf16.mxu0 0
      %353 = vmatmul.mubr.bf16.gmra.mrb[0].mxu0 %v270
      %v354 = vpop.f32.mrb[0].mxu0
      %v355 = vadd.f32 0.0, %v354
      %v356 = vpop.f32.mrb[0].mxu0
      %v357 = vpop.f32.mrb[0].mxu0
      %v358 = vpop.f32.mrb[0].mxu0
      %359 = vdwg.mxu0
      %v360 = vadd.f32 %v355, 0.0
      %s361 = scalar_lea.vmem %s2, 64
      %v362 = vld [vmem:[%s361] sm:$0xf]
      %v363 = vld [vmem:[%s361 + $0x4] sm:$0xf]
      %v364 = vld [vmem:[%s361 + $0x8] sm:$0xf]
      %v365 = vld [vmem:[%s361 + $0xc] sm:$0xf]
      %v366 = vld [vmem:[%s361 + $0x10] sm:$0xf]
      %v367 = vld [vmem:[%s361 + $0x14] sm:$0xf]
      %v368 = vld [vmem:[%s361 + $0x18] sm:$0xf]
      %v369 = vld [vmem:[%s361 + $0x1c] sm:$0xf]
      %v370 = vld [vmem:[%s361 + $0x20] sm:$0xf]
      %v371 = vld [vmem:[%s361 + $0x24] sm:$0xf]
      %v372 = vld [vmem:[%s361 + $0x28] sm:$0xf]
      %v373 = vld [vmem:[%s361 + $0x2c] sm:$0xf]
      %v374 = vld [vmem:[%s361 + $0x30] sm:$0xf]
      %v375 = vld [vmem:[%s361 + $0x34] sm:$0xf]
      %v376 = vld [vmem:[%s361 + $0x38] sm:$0xf]
      %v377 = vld [vmem:[%s361 + $0x3c] sm:$0xf]
      %v380 = vunpack.c.l.b16 %v248
      %v381 = vunpack.c.l.b16 %v249
      %v382 = vpack.c.b16 %v381, %v380
      %v400 = vunpack.c.l.b16 %v362
      %v401 = vunpack.c.l.b16 %v363
      %v402 = vunpack.c.l.b16 %v364
      %v403 = vunpack.c.l.b16 %v365
      %v404 = vunpack.c.l.b16 %v366
      %v405 = vunpack.c.l.b16 %v367
      %v406 = vunpack.c.l.b16 %v368
      %v407 = vunpack.c.l.b16 %v369
      %v408 = vunpack.c.l.b16 %v370
      %v409 = vunpack.c.l.b16 %v371
      %v410 = vunpack.c.l.b16 %v372
      %v411 = vunpack.c.l.b16 %v373
      %v412 = vunpack.c.l.b16 %v374
      %v413 = vunpack.c.l.b16 %v375
      %v414 = vunpack.c.l.b16 %v376
      %v415 = vunpack.c.l.b16 %v377
      %v416 = vpack.c.b16 %v401, %v400
      %v417 = vpack.c.b16 %v403, %v402
      %v418 = vpack.c.b16 %v405, %v404
      %v419 = vpack.c.b16 %v407, %v406
      %v420 = vpack.c.b16 %v409, %v408
      %v421 = vpack.c.b16 %v411, %v410
      %v422 = vpack.c.b16 %v413, %v412
      %v423 = vpack.c.b16 %v415, %v414
      %432 = vmatprep.subr.bf16.mxu0 0
      %433 = vmatpush1.bf16.msra.mxu0 %v416
      %434 = vmatprep.subr.bf16.mxu0 0
      %435 = vmatpush1.bf16.msra.mxu0 %v417
      %436 = vmatprep.subr.bf16.mxu0 0
      %437 = vmatpush1.bf16.msra.mxu0 %v418
      %438 = vmatprep.subr.bf16.mxu0 0
      %439 = vmatpush1.bf16.msra.mxu0 %v419
      %440 = vmatprep.subr.bf16.mxu0 0
      %441 = vmatpush1.bf16.msra.mxu0 %v420
      %442 = vmatprep.subr.bf16.mxu0 0
      %443 = vmatpush1.bf16.msra.mxu0 %v421
      %444 = vmatprep.subr.bf16.mxu0 0
      %445 = vmatpush1.bf16.msra.mxu0 %v422
      %446 = vmatprep.subr.bf16.mxu0 0
      %447 = vmatpush1.bf16.msra.mxu0 %v423
      %448 = vmatprep.subr.bf16.mxu0 0
      %449 = vmatpush1.bf16.msra.mxu0 0
      %450 = vmatprep.subr.bf16.mxu0 0
      %451 = vmatpush1.bf16.msra.mxu0 0
      %452 = vmatprep.subr.bf16.mxu0 0
      %453 = vmatpush1.bf16.msra.mxu0 0
      %454 = vmatprep.subr.bf16.mxu0 0
      %455 = vmatpush1.bf16.msra.mxu0 0
      %456 = vmatprep.subr.bf16.mxu0 0
      %457 = vmatpush1.bf16.msra.mxu0 0
      %458 = vmatprep.subr.bf16.mxu0 0
      %459 = vmatpush1.bf16.msra.mxu0 0
      %460 = vmatprep.subr.bf16.mxu0 0
      %461 = vmatpush1.bf16.msra.mxu0 0
      %462 = vmatprep.subr.bf16.mxu0 0
      %463 = vmatpush1.bf16.msra.mxu0 0
      %464 = vmatprep.mubr.bf16.mxu0 0
      %465 = vmatmul.mubr.bf16.gmra.mrb[0].mxu0 %v382
      %v466 = vpop.f32.mrb[0].mxu0
      %v467 = vadd.f32 0.0, %v466
      %v468 = vpop.f32.mrb[0].mxu0
      %v469 = vpop.f32.mrb[0].mxu0
      %v470 = vpop.f32.mrb[0].mxu0
      %471 = vdwg.mxu0
      %v472 = vadd.f32 %v360, %v467
      %s473 = scalar_lea.vmem %s2, 128
      %v474 = vld [vmem:[%s473] sm:$0xf]
      %v475 = vld [vmem:[%s473 + $0x4] sm:$0xf]
      %v476 = vld [vmem:[%s473 + $0x8] sm:$0xf]
      %v477 = vld [vmem:[%s473 + $0xc] sm:$0xf]
      %v478 = vld [vmem:[%s473 + $0x10] sm:$0xf]
      %v479 = vld [vmem:[%s473 + $0x14] sm:$0xf]
      %v480 = vld [vmem:[%s473 + $0x18] sm:$0xf]
      %v481 = vld [vmem:[%s473 + $0x1c] sm:$0xf]
      %v482 = vld [vmem:[%s473 + $0x20] sm:$0xf]
      %v483 = vld [vmem:[%s473 + $0x24] sm:$0xf]
      %v484 = vld [vmem:[%s473 + $0x28] sm:$0xf]
      %v485 = vld [vmem:[%s473 + $0x2c] sm:$0xf]
      %v486 = vld [vmem:[%s473 + $0x30] sm:$0xf]
      %v487 = vld [vmem:[%s473 + $0x34] sm:$0xf]
      %v488 = vld [vmem:[%s473 + $0x38] sm:$0xf]
      %v489 = vld [vmem:[%s473 + $0x3c] sm:$0xf]
      %v506 = vunpack.c.l.b16 %v474
      %v507 = vunpack.c.l.b16 %v475
      %v508 = vunpack.c.l.b16 %v476
      %v509 = vunpack.c.l.b16 %v477
      %v510 = vunpack.c.l.b16 %v478
      %v511 = vunpack.c.l.b16 %v479
      %v512 = vunpack.c.l.b16 %v480
      %v513 = vunpack.c.l.b16 %v481
      %v514 = vunpack.c.l.b16 %v482
      %v515 = vunpack.c.l.b16 %v483
      %v516 = vunpack.c.l.b16 %v484
      %v517 = vunpack.c.l.b16 %v485
      %v518 = vunpack.c.l.b16 %v486
      %v519 = vunpack.c.l.b16 %v487
      %v520 = vunpack.c.l.b16 %v488
      %v521 = vunpack.c.l.b16 %v489
      %v522 = vpack.c.b16 %v507, %v506
      %v523 = vpack.c.b16 %v509, %v508
      %v524 = vpack.c.b16 %v511, %v510
      %v525 = vpack.c.b16 %v513, %v512
      %v526 = vpack.c.b16 %v515, %v514
      %v527 = vpack.c.b16 %v517, %v516
      %v528 = vpack.c.b16 %v519, %v518
      %v529 = vpack.c.b16 %v521, %v520
      %538 = vmatprep.subr.bf16.mxu0 0
      %539 = vmatpush1.bf16.msra.mxu0 %v522
      %540 = vmatprep.subr.bf16.mxu0 0
      %541 = vmatpush1.bf16.msra.mxu0 %v523
      %542 = vmatprep.subr.bf16.mxu0 0
      %543 = vmatpush1.bf16.msra.mxu0 %v524
      %544 = vmatprep.subr.bf16.mxu0 0
      %545 = vmatpush1.bf16.msra.mxu0 %v525
      %546 = vmatprep.subr.bf16.mxu0 0
      %547 = vmatpush1.bf16.msra.mxu0 %v526
      %548 = vmatprep.subr.bf16.mxu0 0
      %549 = vmatpush1.bf16.msra.mxu0 %v527
      %550 = vmatprep.subr.bf16.mxu0 0
      %551 = vmatpush1.bf16.msra.mxu0 %v528
      %552 = vmatprep.subr.bf16.mxu0 0
      %553 = vmatpush1.bf16.msra.mxu0 %v529
      %554 = vmatprep.subr.bf16.mxu0 0
      %555 = vmatpush1.bf16.msra.mxu0 0
      %556 = vmatprep.subr.bf16.mxu0 0
      %557 = vmatpush1.bf16.msra.mxu0 0
      %558 = vmatprep.subr.bf16.mxu0 0
      %559 = vmatpush1.bf16.msra.mxu0 0
      %560 = vmatprep.subr.bf16.mxu0 0
      %561 = vmatpush1.bf16.msra.mxu0 0
      %562 = vmatprep.subr.bf16.mxu0 0
      %563 = vmatpush1.bf16.msra.mxu0 0
      %564 = vmatprep.subr.bf16.mxu0 0
      %565 = vmatpush1.bf16.msra.mxu0 0
      %566 = vmatprep.subr.bf16.mxu0 0
      %567 = vmatpush1.bf16.msra.mxu0 0
      %568 = vmatprep.subr.bf16.mxu0 0
      %569 = vmatpush1.bf16.msra.mxu0 0
      %570 = vmatprep.mubr.bf16.mxu0 0
      %571 = vmatmul.mubr.bf16.gmra.mrb[0].mxu0 %v270
      %v572 = vpop.f32.mrb[0].mxu0
      %v573 = vadd.f32 0.0, %v572
      %v574 = vpop.f32.mrb[0].mxu0
      %v575 = vpop.f32.mrb[0].mxu0
      %v576 = vadd.f32 0.0, %v575
      %v577 = vpop.f32.mrb[0].mxu0
      %578 = vdwg.mxu0
      %vm581 = vcmask 1046528
      %v582 = vrot.slane %v573, 1
      %v583 = vrot.slane %v576, 1
      %v584 = vsel %vm581, %v582, %v583
      %v586 = vadd.f32 %v472, %v584
      %s587 = scalar_lea.vmem %s234, 8
      %v588 = vld [vmem:[%s587] sm:$0xf]
      %v589 = vld [vmem:[%s587 + $0x4] sm:$0x1]
      %s590 = scalar_lea.vmem %s239, 8
      %v591 = vld [vmem:[%s590] sm:$0xf]
      %v592 = vld [vmem:[%s590 + $0x4] sm:$0x1]
      %s593 = scalar_lea.vmem %s2, 192
      %v594 = vld [vmem:[%s593] sm:$0xf]
      %v595 = vld [vmem:[%s593 + $0x4] sm:$0xf]
      %v596 = vld [vmem:[%s593 + $0x8] sm:$0xf]
      %v597 = vld [vmem:[%s593 + $0xc] sm:$0xf]
      %v598 = vld [vmem:[%s593 + $0x10] sm:$0xf]
      %v599 = vld [vmem:[%s593 + $0x14] sm:$0xf]
      %v600 = vld [vmem:[%s593 + $0x18] sm:$0xf]
      %v601 = vld [vmem:[%s593 + $0x1c] sm:$0xf]
      %v602 = vld [vmem:[%s593 + $0x20] sm:$0xf]
      %v603 = vld [vmem:[%s593 + $0x24] sm:$0xf]
      %v604 = vld [vmem:[%s593 + $0x28] sm:$0xf]
      %v605 = vld [vmem:[%s593 + $0x2c] sm:$0xf]
      %v606 = vld [vmem:[%s593 + $0x30] sm:$0xf]
      %v607 = vld [vmem:[%s593 + $0x34] sm:$0xf]
      %v608 = vld [vmem:[%s593 + $0x38] sm:$0xf]
      %v609 = vld [vmem:[%s593 + $0x3c] sm:$0xf]
      %v612 = vunpack.c.l.b16 %v588
      %v613 = vunpack.c.l.b16 %v589
      %v614 = vpack.c.b16 %v613, %v612
      %v632 = vunpack.c.l.b16 %v594
      %v633 = vunpack.c.l.b16 %v595
      %v634 = vunpack.c.l.b16 %v596
      %v635 = vunpack.c.l.b16 %v597
      %v636 = vunpack.c.l.b16 %v598
      %v637 = vunpack.c.l.b16 %v599
      %v638 = vunpack.c.l.b16 %v600
      %v639 = vunpack.c.l.b16 %v601
      %v640 = vunpack.c.l.b16 %v602
      %v641 = vunpack.c.l.b16 %v603
      %v642 = vunpack.c.l.b16 %v604
      %v643 = vunpack.c.l.b16 %v605
      %v644 = vunpack.c.l.b16 %v606
      %v645 = vunpack.c.l.b16 %v607
      %v646 = vunpack.c.l.b16 %v608
      %v647 = vunpack.c.l.b16 %v609
      %v648 = vpack.c.b16 %v633, %v632
      %v649 = vpack.c.b16 %v635, %v634
      %v650 = vpack.c.b16 %v637, %v636
      %v651 = vpack.c.b16 %v639, %v638
      %v652 = vpack.c.b16 %v641, %v640
      %v653 = vpack.c.b16 %v643, %v642
      %v654 = vpack.c.b16 %v645, %v644
      %v655 = vpack.c.b16 %v647, %v646
      %664 = vmatprep.subr.bf16.mxu0 0
      %665 = vmatpush1.bf16.msra.mxu0 %v648
      %666 = vmatprep.subr.bf16.mxu0 0
      %667 = vmatpush1.bf16.msra.mxu0 %v649
      %668 = vmatprep.subr.bf16.mxu0 0
      %669 = vmatpush1.bf16.msra.mxu0 %v650
      %670 = vmatprep.subr.bf16.mxu0 0
      %671 = vmatpush1.bf16.msra.mxu0 %v651
      %672 = vmatprep.subr.bf16.mxu0 0
      %673 = vmatpush1.bf16.msra.mxu0 %v652
      %674 = vmatprep.subr.bf16.mxu0 0
      %675 = vmatpush1.bf16.msra.mxu0 %v653
      %676 = vmatprep.subr.bf16.mxu0 0
      %677 = vmatpush1.bf16.msra.mxu0 %v654
      %678 = vmatprep.subr.bf16.mxu0 0
      %679 = vmatpush1.bf16.msra.mxu0 %v655
      %680 = vmatprep.subr.bf16.mxu0 0
      %681 = vmatpush1.bf16.msra.mxu0 0
      %682 = vmatprep.subr.bf16.mxu0 0
      %683 = vmatpush1.bf16.msra.mxu0 0
      %684 = vmatprep.subr.bf16.mxu0 0
      %685 = vmatpush1.bf16.msra.mxu0 0
      %686 = vmatprep.subr.bf16.mxu0 0
      %687 = vmatpush1.bf16.msra.mxu0 0
      %688 = vmatprep.subr.bf16.mxu0 0
      %689 = vmatpush1.bf16.msra.mxu0 0
      %690 = vmatprep.subr.bf16.mxu0 0
      %691 = vmatpush1.bf16.msra.mxu0 0
      %692 = vmatprep.subr.bf16.mxu0 0
      %693 = vmatpush1.bf16.msra.mxu0 0
      %694 = vmatprep.subr.bf16.mxu0 0
      %695 = vmatpush1.bf16.msra.mxu0 0
      %696 = vmatprep.mubr.bf16.mxu0 0
      %697 = vmatmul.mubr.bf16.gmra.mrb[0].mxu0 %v614
      %v698 = vpop.f32.mrb[0].mxu0
      %v699 = vadd.f32 0.0, %v698
      %v700 = vpop.f32.mrb[0].mxu0
      %v701 = vpop.f32.mrb[0].mxu0
      %v702 = vpop.f32.mrb[0].mxu0
      %703 = vdwg.mxu0
      %v704 = vadd.f32 %v586, %v699
      %s705 = scalar_lea.vmem %s2, 256
      %v706 = vld [vmem:[%s705] sm:$0xf]
      %v707 = vld [vmem:[%s705 + $0x4] sm:$0xf]
      %v708 = vld [vmem:[%s705 + $0x8] sm:$0xf]
      %v709 = vld [vmem:[%s705 + $0xc] sm:$0xf]
      %v710 = vld [vmem:[%s705 + $0x10] sm:$0xf]
      %v711 = vld [vmem:[%s705 + $0x14] sm:$0xf]
      %v712 = vld [vmem:[%s705 + $0x18] sm:$0xf]
      %v713 = vld [vmem:[%s705 + $0x1c] sm:$0xf]
      %v714 = vld [vmem:[%s705 + $0x20] sm:$0xf]
      %v715 = vld [vmem:[%s705 + $0x24] sm:$0xf]
      %v716 = vld [vmem:[%s705 + $0x28] sm:$0xf]
      %v717 = vld [vmem:[%s705 + $0x2c] sm:$0xf]
      %v718 = vld [vmem:[%s705 + $0x30] sm:$0xf]
      %v719 = vld [vmem:[%s705 + $0x34] sm:$0xf]
      %v720 = vld [vmem:[%s705 + $0x38] sm:$0xf]
      %v721 = vld [vmem:[%s705 + $0x3c] sm:$0xf]
      %v724 = vunpack.c.l.b16 %v591
      %v725 = vunpack.c.l.b16 %v592
      %v726 = vpack.c.b16 %v725, %v724
      %v744 = vunpack.c.l.b16 %v706
      %v745 = vunpack.c.l.b16 %v707
      %v746 = vunpack.c.l.b16 %v708
      %v747 = vunpack.c.l.b16 %v709
      %v748 = vunpack.c.l.b16 %v710
      %v749 = vunpack.c.l.b16 %v711
      %v750 = vunpack.c.l.b16 %v712
      %v751 = vunpack.c.l.b16 %v713
      %v752 = vunpack.c.l.b16 %v714
      %v753 = vunpack.c.l.b16 %v715
      %v754 = vunpack.c.l.b16 %v716
      %v755 = vunpack.c.l.b16 %v717
      %v756 = vunpack.c.l.b16 %v718
      %v757 = vunpack.c.l.b16 %v719
      %v758 = vunpack.c.l.b16 %v720
      %v759 = vunpack.c.l.b16 %v721
      %v760 = vpack.c.b16 %v745, %v744
      %v761 = vpack.c.b16 %v747, %v746
      %v762 = vpack.c.b16 %v749, %v748
      %v763 = vpack.c.b16 %v751, %v750
      %v764 = vpack.c.b16 %v753, %v752
      %v765 = vpack.c.b16 %v755, %v754
      %v766 = vpack.c.b16 %v757, %v756
      %v767 = vpack.c.b16 %v759, %v758
      %776 = vmatprep.subr.bf16.mxu0 0
      %777 = vmatpush1.bf16.msra.mxu0 %v760
      %778 = vmatprep.subr.bf16.mxu0 0
      %779 = vmatpush1.bf16.msra.mxu0 %v761
      %780 = vmatprep.subr.bf16.mxu0 0
      %781 = vmatpush1.bf16.msra.mxu0 %v762
      %782 = vmatprep.subr.bf16.mxu0 0
      %783 = vmatpush1.bf16.msra.mxu0 %v763
      %784 = vmatprep.subr.bf16.mxu0 0
      %785 = vmatpush1.bf16.msra.mxu0 %v764
      %786 = vmatprep.subr.bf16.mxu0 0
      %787 = vmatpush1.bf16.msra.mxu0 %v765
      %788 = vmatprep.subr.bf16.mxu0 0
      %789 = vmatpush1.bf16.msra.mxu0 %v766
      %790 = vmatprep.subr.bf16.mxu0 0
      %791 = vmatpush1.bf16.msra.mxu0 %v767
      %792 = vmatprep.subr.bf16.mxu0 0
      %793 = vmatpush1.bf16.msra.mxu0 0
      %794 = vmatprep.subr.bf16.mxu0 0
      %795 = vmatpush1.bf16.msra.mxu0 0
      %796 = vmatprep.subr.bf16.mxu0 0
      %797 = vmatpush1.bf16.msra.mxu0 0
      %798 = vmatprep.subr.bf16.mxu0 0
      %799 = vmatpush1.bf16.msra.mxu0 0
      %800 = vmatprep.subr.bf16.mxu0 0
      %801 = vmatpush1.bf16.msra.mxu0 0
      %802 = vmatprep.subr.bf16.mxu0 0
      %803 = vmatpush1.bf16.msra.mxu0 0
      %804 = vmatprep.subr.bf16.mxu0 0
      %805 = vmatpush1.bf16.msra.mxu0 0
      %806 = vmatprep.subr.bf16.mxu0 0
      %807 = vmatpush1.bf16.msra.mxu0 0
      %808 = vmatprep.mubr.bf16.mxu0 0
      %809 = vmatmul.mubr.bf16.gmra.mrb[0].mxu0 %v726
      %v810 = vpop.f32.mrb[0].mxu0
      %v811 = vadd.f32 0.0, %v810
      %v812 = vpop.f32.mrb[0].mxu0
      %v813 = vpop.f32.mrb[0].mxu0
      %v814 = vpop.f32.mrb[0].mxu0
      %815 = vdwg.mxu0
      %v816 = vadd.f32 %v704, %v811
      %s817 = scalar_lea.vmem %s2, 320
      %v818 = vld [vmem:[%s817] sm:$0xf]
      %v819 = vld [vmem:[%s817 + $0x4] sm:$0xf]
      %v820 = vld [vmem:[%s817 + $0x8] sm:$0xf]
      %v821 = vld [vmem:[%s817 + $0xc] sm:$0xf]
      %v822 = vld [vmem:[%s817 + $0x10] sm:$0xf]
      %v823 = vld [vmem:[%s817 + $0x14] sm:$0xf]
      %v824 = vld [vmem:[%s817 + $0x18] sm:$0xf]
      %v825 = vld [vmem:[%s817 + $0x1c] sm:$0xf]
      %v826 = vld [vmem:[%s817 + $0x20] sm:$0xf]
      %v827 = vld [vmem:[%s817 + $0x24] sm:$0xf]
      %v828 = vld [vmem:[%s817 + $0x28] sm:$0xf]
      %v829 = vld [vmem:[%s817 + $0x2c] sm:$0xf]
      %v830 = vld [vmem:[%s817 + $0x30] sm:$0xf]
      %v831 = vld [vmem:[%s817 + $0x34] sm:$0xf]
      %v832 = vld [vmem:[%s817 + $0x38] sm:$0xf]
      %v833 = vld [vmem:[%s817 + $0x3c] sm:$0xf]
      %v850 = vunpack.c.l.b16 %v818
      %v851 = vunpack.c.l.b16 %v819
      %v852 = vunpack.c.l.b16 %v820
      %v853 = vunpack.c.l.b16 %v821
      %v854 = vunpack.c.l.b16 %v822
      %v855 = vunpack.c.l.b16 %v823
      %v856 = vunpack.c.l.b16 %v824
      %v857 = vunpack.c.l.b16 %v825
      %v858 = vunpack.c.l.b16 %v826
      %v859 = vunpack.c.l.b16 %v827
      %v860 = vunpack.c.l.b16 %v828
      %v861 = vunpack.c.l.b16 %v829
      %v862 = vunpack.c.l.b16 %v830
      %v863 = vunpack.c.l.b16 %v831
      %v864 = vunpack.c.l.b16 %v832
      %v865 = vunpack.c.l.b16 %v833
      %v866 = vpack.c.b16 %v851, %v850
      %v867 = vpack.c.b16 %v853, %v852
      %v868 = vpack.c.b16 %v855, %v854
      %v869 = vpack.c.b16 %v857, %v856
      %v870 = vpack.c.b16 %v859, %v858
      %v871 = vpack.c.b16 %v861, %v860
      %v872 = vpack.c.b16 %v863, %v862
      %v873 = vpack.c.b16 %v865, %v864
      %882 = vmatprep.subr.bf16.mxu0 0
      %883 = vmatpush1.bf16.msra.mxu0 %v866
      %884 = vmatprep.subr.bf16.mxu0 0
      %885 = vmatpush1.bf16.msra.mxu0 %v867
      %886 = vmatprep.subr.bf16.mxu0 0
      %887 = vmatpush1.bf16.msra.mxu0 %v868
      %888 = vmatprep.subr.bf16.mxu0 0
      %889 = vmatpush1.bf16.msra.mxu0 %v869
      %890 = vmatprep.subr.bf16.mxu0 0
      %891 = vmatpush1.bf16.msra.mxu0 %v870
      %892 = vmatprep.subr.bf16.mxu0 0
      %893 = vmatpush1.bf16.msra.mxu0 %v871
      %894 = vmatprep.subr.bf16.mxu0 0
      %895 = vmatpush1.bf16.msra.mxu0 %v872
      %896 = vmatprep.subr.bf16.mxu0 0
      %897 = vmatpush1.bf16.msra.mxu0 %v873
      %898 = vmatprep.subr.bf16.mxu0 0
      %899 = vmatpush1.bf16.msra.mxu0 0
      %900 = vmatprep.subr.bf16.mxu0 0
      %901 = vmatpush1.bf16.msra.mxu0 0
      %902 = vmatprep.subr.bf16.mxu0 0
      %903 = vmatpush1.bf16.msra.mxu0 0
      %904 = vmatprep.subr.bf16.mxu0 0
      %905 = vmatpush1.bf16.msra.mxu0 0
      %906 = vmatprep.subr.bf16.mxu0 0
      %907 = vmatpush1.bf16.msra.mxu0 0
      %908 = vmatprep.subr.bf16.mxu0 0
      %909 = vmatpush1.bf16.msra.mxu0 0
      %910 = vmatprep.subr.bf16.mxu0 0
      %911 = vmatpush1.bf16.msra.mxu0 0
      %912 = vmatprep.subr.bf16.mxu0 0
      %913 = vmatpush1.bf16.msra.mxu0 0
      %914 = vmatprep.mubr.bf16.mxu0 0
      %915 = vmatmul.mubr.bf16.gmra.mrb[0].mxu0 %v614
      %v916 = vpop.f32.mrb[0].mxu0
      %v917 = vadd.f32 0.0, %v916
      %v918 = vpop.f32.mrb[0].mxu0
      %v919 = vpop.f32.mrb[0].mxu0
      %v920 = vadd.f32 0.0, %v919
      %v921 = vpop.f32.mrb[0].mxu0
      %922 = vdwg.mxu0
      %v925 = vrot.slane %v917, 1
      %v926 = vrot.slane %v920, 1
      %v927 = vsel %vm581, %v925, %v926
      %v929 = vadd.f32 %v816, %v927
      %s930 = scalar_lea.vmem %s234, 16
      %v931 = vld [vmem:[%s930] sm:$0xf]
      %v932 = vld [vmem:[%s930 + $0x4] sm:$0x1]
      %s933 = scalar_lea.vmem %s239, 16
      %v934 = vld [vmem:[%s933] sm:$0xf]
      %v935 = vld [vmem:[%s933 + $0x4] sm:$0x1]
      %s936 = scalar_lea.vmem %s2, 384
      %v937 = vld [vmem:[%s936] sm:$0xf]
      %v938 = vld [vmem:[%s936 + $0x4] sm:$0xf]
      %v939 = vld [vmem:[%s936 + $0x8] sm:$0xf]
      %v940 = vld [vmem:[%s936 + $0xc] sm:$0xf]
      %v941 = vld [vmem:[%s936 + $0x10] sm:$0xf]
      %v942 = vld [vmem:[%s936 + $0x14] sm:$0xf]
      %v943 = vld [vmem:[%s936 + $0x18] sm:$0xf]
      %v944 = vld [vmem:[%s936 + $0x1c] sm:$0xf]
      %v945 = vld [vmem:[%s936 + $0x20] sm:$0xf]
      %v946 = vld [vmem:[%s936 + $0x24] sm:$0xf]
      %v947 = vld [vmem:[%s936 + $0x28] sm:$0xf]
      %v948 = vld [vmem:[%s936 + $0x2c] sm:$0xf]
      %v949 = vld [vmem:[%s936 + $0x30] sm:$0xf]
      %v950 = vld [vmem:[%s936 + $0x34] sm:$0xf]
      %v951 = vld [vmem:[%s936 + $0x38] sm:$0xf]
      %v952 = vld [vmem:[%s936 + $0x3c] sm:$0xf]
      %v955 = vunpack.c.l.b16 %v931
      %v956 = vunpack.c.l.b16 %v932
      %v957 = vpack.c.b16 %v956, %v955
      %v975 = vunpack.c.l.b16 %v937
      %v976 = vunpack.c.l.b16 %v938
      %v977 = vunpack.c.l.b16 %v939
      %v978 = vunpack.c.l.b16 %v940
      %v979 = vunpack.c.l.b16 %v941
      %v980 = vunpack.c.l.b16 %v942
      %v981 = vunpack.c.l.b16 %v943
      %v982 = vunpack.c.l.b16 %v944
      %v983 = vunpack.c.l.b16 %v945
      %v984 = vunpack.c.l.b16 %v946
      %v985 = vunpack.c.l.b16 %v947
      %v986 = vunpack.c.l.b16 %v948
      %v987 = vunpack.c.l.b16 %v949
      %v988 = vunpack.c.l.b16 %v950
      %v989 = vunpack.c.l.b16 %v951
      %v990 = vunpack.c.l.b16 %v952
      %v991 = vpack.c.b16 %v976, %v975
      %v992 = vpack.c.b16 %v978, %v977
      %v993 = vpack.c.b16 %v980, %v979
      %v994 = vpack.c.b16 %v982, %v981
      %v995 = vpack.c.b16 %v984, %v983
      %v996 = vpack.c.b16 %v986, %v985
      %v997 = vpack.c.b16 %v988, %v987
      %v998 = vpack.c.b16 %v990, %v989
      %1007 = vmatprep.subr.bf16.mxu0 0
      %1008 = vmatpush1.bf16.msra.mxu0 %v991
      %1009 = vmatprep.subr.bf16.mxu0 0
      %1010 = vmatpush1.bf16.msra.mxu0 %v992
      %1011 = vmatprep.subr.bf16.mxu0 0
      %1012 = vmatpush1.bf16.msra.mxu0 %v993
      %1013 = vmatprep.subr.bf16.mxu0 0
      %1014 = vmatpush1.bf16.msra.mxu0 %v994
      %1015 = vmatprep.subr.bf16.mxu0 0
      %1016 = vmatpush1.bf16.msra.mxu0 %v995
      %1017 = vmatprep.subr.bf16.mxu0 0
      %1018 = vmatpush1.bf16.msra.mxu0 %v996
      %1019 = vmatprep.subr.bf16.mxu0 0
      %1020 = vmatpush1.bf16.msra.mxu0 %v997
      %1021 = vmatprep.subr.bf16.mxu0 0
      %1022 = vmatpush1.bf16.msra.mxu0 %v998
      %1023 = vmatprep.subr.bf16.mxu0 0
      %1024 = vmatpush1.bf16.msra.mxu0 0
      %1025 = vmatprep.subr.bf16.mxu0 0
      %1026 = vmatpush1.bf16.msra.mxu0 0
      %1027 = vmatprep.subr.bf16.mxu0 0
      %1028 = vmatpush1.bf16.msra.mxu0 0
      %1029 = vmatprep.subr.bf16.mxu0 0
      %1030 = vmatpush1.bf16.msra.mxu0 0
      %1031 = vmatprep.subr.bf16.mxu0 0
      %1032 = vmatpush1.bf16.msra.mxu0 0
      %1033 = vmatprep.subr.bf16.mxu0 0
      %1034 = vmatpush1.bf16.msra.mxu0 0
      %1035 = vmatprep.subr.bf16.mxu0 0
      %1036 = vmatpush1.bf16.msra.mxu0 0
      %1037 = vmatprep.subr.bf16.mxu0 0
      %1038 = vmatpush1.bf16.msra.mxu0 0
      %1039 = vmatprep.mubr.bf16.mxu0 0
      %1040 = vmatmul.mubr.bf16.gmra.mrb[0].mxu0 %v957
      %v1041 = vpop.f32.mrb[0].mxu0
      %v1042 = vadd.f32 0.0, %v1041
      %v1043 = vpop.f32.mrb[0].mxu0
      %v1044 = vpop.f32.mrb[0].mxu0
      %v1045 = vpop.f32.mrb[0].mxu0
      %1046 = vdwg.mxu0
      %v1047 = vadd.f32 %v929, %v1042
      %s1048 = scalar_lea.vmem %s2, 448
      %v1049 = vld [vmem:[%s1048] sm:$0xf]
      %v1050 = vld [vmem:[%s1048 + $0x4] sm:$0xf]
      %v1051 = vld [vmem:[%s1048 + $0x8] sm:$0xf]
      %v1052 = vld [vmem:[%s1048 + $0xc] sm:$0xf]
      %v1053 = vld [vmem:[%s1048 + $0x10] sm:$0xf]
      %v1054 = vld [vmem:[%s1048 + $0x14] sm:$0xf]
      %v1055 = vld [vmem:[%s1048 + $0x18] sm:$0xf]
      %v1056 = vld [vmem:[%s1048 + $0x1c] sm:$0xf]
      %v1057 = vld [vmem:[%s1048 + $0x20] sm:$0xf]
      %v1058 = vld [vmem:[%s1048 + $0x24] sm:$0xf]
      %v1059 = vld [vmem:[%s1048 + $0x28] sm:$0xf]
      %v1060 = vld [vmem:[%s1048 + $0x2c] sm:$0xf]
      %v1061 = vld [vmem:[%s1048 + $0x30] sm:$0xf]
      %v1062 = vld [vmem:[%s1048 + $0x34] sm:$0xf]
      %v1063 = vld [vmem:[%s1048 + $0x38] sm:$0xf]
      %v1064 = vld [vmem:[%s1048 + $0x3c] sm:$0xf]
      %v1067 = vunpack.c.l.b16 %v934
      %v1068 = vunpack.c.l.b16 %v935
      %v1069 = vpack.c.b16 %v1068, %v1067
      %v1087 = vunpack.c.l.b16 %v1049
      %v1088 = vunpack.c.l.b16 %v1050
      %v1089 = vunpack.c.l.b16 %v1051
      %v1090 = vunpack.c.l.b16 %v1052
      %v1091 = vunpack.c.l.b16 %v1053
      %v1092 = vunpack.c.l.b16 %v1054
      %v1093 = vunpack.c.l.b16 %v1055
      %v1094 = vunpack.c.l.b16 %v1056
      %v1095 = vunpack.c.l.b16 %v1057
      %v1096 = vunpack.c.l.b16 %v1058
      %v1097 = vunpack.c.l.b16 %v1059
      %v1098 = vunpack.c.l.b16 %v1060
      %v1099 = vunpack.c.l.b16 %v1061
      %v1100 = vunpack.c.l.b16 %v1062
      %v1101 = vunpack.c.l.b16 %v1063
      %v1102 = vunpack.c.l.b16 %v1064
      %v1103 = vpack.c.b16 %v1088, %v1087
      %v1104 = vpack.c.b16 %v1090, %v1089
      %v1105 = vpack.c.b16 %v1092, %v1091
      %v1106 = vpack.c.b16 %v1094, %v1093
      %v1107 = vpack.c.b16 %v1096, %v1095
      %v1108 = vpack.c.b16 %v1098, %v1097
      %v1109 = vpack.c.b16 %v1100, %v1099
      %v1110 = vpack.c.b16 %v1102, %v1101
      %1119 = vmatprep.subr.bf16.mxu0 0
      %1120 = vmatpush1.bf16.msra.mxu0 %v1103
      %1121 = vmatprep.subr.bf16.mxu0 0
      %1122 = vmatpush1.bf16.msra.mxu0 %v1104
      %1123 = vmatprep.subr.bf16.mxu0 0
      %1124 = vmatpush1.bf16.msra.mxu0 %v1105
      %1125 = vmatprep.subr.bf16.mxu0 0
      %1126 = vmatpush1.bf16.msra.mxu0 %v1106
      %1127 = vmatprep.subr.bf16.mxu0 0
      %1128 = vmatpush1.bf16.msra.mxu0 %v1107
      %1129 = vmatprep.subr.bf16.mxu0 0
      %1130 = vmatpush1.bf16.msra.mxu0 %v1108
      %1131 = vmatprep.subr.bf16.mxu0 0
      %1132 = vmatpush1.bf16.msra.mxu0 %v1109
      %1133 = vmatprep.subr.bf16.mxu0 0
      %1134 = vmatpush1.bf16.msra.mxu0 %v1110
      %1135 = vmatprep.subr.bf16.mxu0 0
      %1136 = vmatpush1.bf16.msra.mxu0 0
      %1137 = vmatprep.subr.bf16.mxu0 0
      %1138 = vmatpush1.bf16.msra.mxu0 0
      %1139 = vmatprep.subr.bf16.mxu0 0
      %1140 = vmatpush1.bf16.msra.mxu0 0
      %1141 = vmatprep.subr.bf16.mxu0 0
      %1142 = vmatpush1.bf16.msra.mxu0 0
      %1143 = vmatprep.subr.bf16.mxu0 0
      %1144 = vmatpush1.bf16.msra.mxu0 0
      %1145 = vmatprep.subr.bf16.mxu0 0
      %1146 = vmatpush1.bf16.msra.mxu0 0
      %1147 = vmatprep.subr.bf16.mxu0 0
      %1148 = vmatpush1.bf16.msra.mxu0 0
      %1149 = vmatprep.subr.bf16.mxu0 0
      %1150 = vmatpush1.bf16.msra.mxu0 0
      %1151 = vmatprep.mubr.bf16.mxu0 0
      %1152 = vmatmul.mubr.bf16.gmra.mrb[0].mxu0 %v1069
      %v1153 = vpop.f32.mrb[0].mxu0
      %v1154 = vadd.f32 0.0, %v1153
      %v1155 = vpop.f32.mrb[0].mxu0
      %v1156 = vpop.f32.mrb[0].mxu0
      %v1157 = vpop.f32.mrb[0].mxu0
      %1158 = vdwg.mxu0
      %v1159 = vadd.f32 %v1047, %v1154
      %s1160 = scalar_lea.vmem %s2, 512
      %v1161 = vld [vmem:[%s1160] sm:$0xf]
      %v1162 = vld [vmem:[%s1160 + $0x4] sm:$0xf]
      %v1163 = vld [vmem:[%s1160 + $0x8] sm:$0xf]
      %v1164 = vld [vmem:[%s1160 + $0xc] sm:$0xf]
      %v1165 = vld [vmem:[%s1160 + $0x10] sm:$0xf]
      %v1166 = vld [vmem:[%s1160 + $0x14] sm:$0xf]
      %v1167 = vld [vmem:[%s1160 + $0x18] sm:$0xf]
      %v1168 = vld [vmem:[%s1160 + $0x1c] sm:$0xf]
      %v1169 = vld [vmem:[%s1160 + $0x20] sm:$0xf]
      %v1170 = vld [vmem:[%s1160 + $0x24] sm:$0xf]
      %v1171 = vld [vmem:[%s1160 + $0x28] sm:$0xf]
      %v1172 = vld [vmem:[%s1160 + $0x2c] sm:$0xf]
      %v1173 = vld [vmem:[%s1160 + $0x30] sm:$0xf]
      %v1174 = vld [vmem:[%s1160 + $0x34] sm:$0xf]
      %v1175 = vld [vmem:[%s1160 + $0x38] sm:$0xf]
      %v1176 = vld [vmem:[%s1160 + $0x3c] sm:$0xf]
      %v1193 = vunpack.c.l.b16 %v1161
      %v1194 = vunpack.c.l.b16 %v1162
      %v1195 = vunpack.c.l.b16 %v1163
      %v1196 = vunpack.c.l.b16 %v1164
      %v1197 = vunpack.c.l.b16 %v1165
      %v1198 = vunpack.c.l.b16 %v1166
      %v1199 = vunpack.c.l.b16 %v1167
      %v1200 = vunpack.c.l.b16 %v1168
      %v1201 = vunpack.c.l.b16 %v1169
      %v1202 = vunpack.c.l.b16 %v1170
      %v1203 = vunpack.c.l.b16 %v1171
      %v1204 = vunpack.c.l.b16 %v1172
      %v1205 = vunpack.c.l.b16 %v1173
      %v1206 = vunpack.c.l.b16 %v1174
      %v1207 = vunpack.c.l.b16 %v1175
      %v1208 = vunpack.c.l.b16 %v1176
      %v1209 = vpack.c.b16 %v1194, %v1193
      %v1210 = vpack.c.b16 %v1196, %v1195
      %v1211 = vpack.c.b16 %v1198, %v1197
      %v1212 = vpack.c.b16 %v1200, %v1199
      %v1213 = vpack.c.b16 %v1202, %v1201
      %v1214 = vpack.c.b16 %v1204, %v1203
      %v1215 = vpack.c.b16 %v1206, %v1205
      %v1216 = vpack.c.b16 %v1208, %v1207
      %1225 = vmatprep.subr.bf16.mxu0 0
      %1226 = vmatpush1.bf16.msra.mxu0 %v1209
      %1227 = vmatprep.subr.bf16.mxu0 0
      %1228 = vmatpush1.bf16.msra.mxu0 %v1210
      %1229 = vmatprep.subr.bf16.mxu0 0
      %1230 = vmatpush1.bf16.msra.mxu0 %v1211
      %1231 = vmatprep.subr.bf16.mxu0 0
      %1232 = vmatpush1.bf16.msra.mxu0 %v1212
      %1233 = vmatprep.subr.bf16.mxu0 0
      %1234 = vmatpush1.bf16.msra.mxu0 %v1213
      %1235 = vmatprep.subr.bf16.mxu0 0
      %1236 = vmatpush1.bf16.msra.mxu0 %v1214
      %1237 = vmatprep.subr.bf16.mxu0 0
      %1238 = vmatpush1.bf16.msra.mxu0 %v1215
      %1239 = vmatprep.subr.bf16.mxu0 0
      %1240 = vmatpush1.bf16.msra.mxu0 %v1216
      %1241 = vmatprep.subr.bf16.mxu0 0
      %1242 = vmatpush1.bf16.msra.mxu0 0
      %1243 = vmatprep.subr.bf16.mxu0 0
      %1244 = vmatpush1.bf16.msra.mxu0 0
      %1245 = vmatprep.subr.bf16.mxu0 0
      %1246 = vmatpush1.bf16.msra.mxu0 0
      %1247 = vmatprep.subr.bf16.mxu0 0
      %1248 = vmatpush1.bf16.msra.mxu0 0
      %1249 = vmatprep.subr.bf16.mxu0 0
      %1250 = vmatpush1.bf16.msra.mxu0 0
      %1251 = vmatprep.subr.bf16.mxu0 0
      %1252 = vmatpush1.bf16.msra.mxu0 0
      %1253 = vmatprep.subr.bf16.mxu0 0
      %1254 = vmatpush1.bf16.msra.mxu0 0
      %1255 = vmatprep.subr.bf16.mxu0 0
      %1256 = vmatpush1.bf16.msra.mxu0 0
      %1257 = vmatprep.mubr.bf16.mxu0 0
      %1258 = vmatmul.mubr.bf16.gmra.mrb[0].mxu0 %v957
      %v1259 = vpop.f32.mrb[0].mxu0
      %v1260 = vadd.f32 0.0, %v1259
      %v1261 = vpop.f32.mrb[0].mxu0
      %v1262 = vpop.f32.mrb[0].mxu0
      %v1263 = vadd.f32 0.0, %v1262
      %v1264 = vpop.f32.mrb[0].mxu0
      %1265 = vdwg.mxu0
      %v1268 = vrot.slane %v1260, 1
      %v1269 = vrot.slane %v1263, 1
      %v1270 = vsel %vm581, %v1268, %v1269
      %v1272 = vadd.f32 %v1159, %v1270
      %v1273 = vld [vmem:[%s3] sm:$0x1]
      %v1275 = vlaneseq
      %v1276 = vshrl.u32 %v1275, 7
      %v1277 = vsub.s32 0, %v1276
      %v1278 = vrot.slane %v1273, %v1277
      %v1280 = vmul.f32 %v1272, %v1278
      %v1281 = vld [vmem:[%s4] sm:$0x1]
      %v1283 = vlaneseq
      %v1284 = vshrl.u32 %v1283, 7
      %v1285 = vsub.s32 0, %v1284
      %v1286 = vrot.slane %v1281, %v1285
      %v1288 = vadd.f32 %v1280, %v1286
      %v1289 = vmax.f32 %v1288, 0.0
      %v1290 = vpack.c.bf16 %v1289, %v1289
      %1291 = vst [vmem:[%s244] sm:$0xf] %v1290
      %v1292 = vld [vmem:[%s930] sm:$0xf]
      %v1293 = vld [vmem:[%s930 + $0x4] sm:$0x1]
      %v1294 = vld [vmem:[%s933] sm:$0xf]
      %v1295 = vld [vmem:[%s933 + $0x4] sm:$0x1]
      %v1296 = vld [vmem:[%s2] sm:$0xf]
      %v1297 = vld [vmem:[%s2 + $0x4] sm:$0xf]
      %v1298 = vld [vmem:[%s2 + $0x8] sm:$0xf]
      %v1299 = vld [vmem:[%s2 + $0xc] sm:$0xf]
      %v1300 = vld [vmem:[%s2 + $0x10] sm:$0xf]
      %v1301 = vld [vmem:[%s2 + $0x14] sm:$0xf]
      %v1302 = vld [vmem:[%s2 + $0x18] sm:$0xf]
      %v1303 = vld [vmem:[%s2 + $0x1c] sm:$0xf]
      %v1304 = vld [vmem:[%s2 + $0x20] sm:$0xf]
      %v1305 = vld [vmem:[%s2 + $0x24] sm:$0xf]
      %v1306 = vld [vmem:[%s2 + $0x28] sm:$0xf]
      %v1307 = vld [vmem:[%s2 + $0x2c] sm:$0xf]
      %v1308 = vld [vmem:[%s2 + $0x30] sm:$0xf]
      %v1309 = vld [vmem:[%s2 + $0x34] sm:$0xf]
      %v1310 = vld [vmem:[%s2 + $0x38] sm:$0xf]
      %v1311 = vld [vmem:[%s2 + $0x3c] sm:$0xf]
      %v1314 = vunpack.c.l.b16 %v1292
      %v1315 = vunpack.c.l.b16 %v1293
      %v1316 = vpack.c.b16 %v1315, %v1314
      %v1334 = vunpack.c.l.b16 %v1296
      %v1335 = vunpack.c.l.b16 %v1297
      %v1336 = vunpack.c.l.b16 %v1298
      %v1337 = vunpack.c.l.b16 %v1299
      %v1338 = vunpack.c.l.b16 %v1300
      %v1339 = vunpack.c.l.b16 %v1301
      %v1340 = vunpack.c.l.b16 %v1302
      %v1341 = vunpack.c.l.b16 %v1303
      %v1342 = vunpack.c.l.b16 %v1304
      %v1343 = vunpack.c.l.b16 %v1305
      %v1344 = vunpack.c.l.b16 %v1306
      %v1345 = vunpack.c.l.b16 %v1307
      %v1346 = vunpack.c.l.b16 %v1308
      %v1347 = vunpack.c.l.b16 %v1309
      %v1348 = vunpack.c.l.b16 %v1310
      %v1349 = vunpack.c.l.b16 %v1311
      %v1350 = vpack.c.b16 %v1335, %v1334
      %v1351 = vpack.c.b16 %v1337, %v1336
      %v1352 = vpack.c.b16 %v1339, %v1338
      %v1353 = vpack.c.b16 %v1341, %v1340
      %v1354 = vpack.c.b16 %v1343, %v1342
      %v1355 = vpack.c.b16 %v1345, %v1344
      %v1356 = vpack.c.b16 %v1347, %v1346
      %v1357 = vpack.c.b16 %v1349, %v1348
      %1366 = vmatprep.subr.bf16.mxu0 0
      %1367 = vmatpush1.bf16.msra.mxu0 %v1350
      %1368 = vmatprep.subr.bf16.mxu0 0
      %1369 = vmatpush1.bf16.msra.mxu0 %v1351
      %1370 = vmatprep.subr.bf16.mxu0 0
      %1371 = vmatpush1.bf16.msra.mxu0 %v1352
      %1372 = vmatprep.subr.bf16.mxu0 0
      %1373 = vmatpush1.bf16.msra.mxu0 %v1353
      %1374 = vmatprep.subr.bf16.mxu0 0
      %1375 = vmatpush1.bf16.msra.mxu0 %v1354
      %1376 = vmatprep.subr.bf16.mxu0 0
      %1377 = vmatpush1.bf16.msra.mxu0 %v1355
      %1378 = vmatprep.subr.bf16.mxu0 0
      %1379 = vmatpush1.bf16.msra.mxu0 %v1356
      %1380 = vmatprep.subr.bf16.mxu0 0
      %1381 = vmatpush1.bf16.msra.mxu0 %v1357
      %1382 = vmatprep.subr.bf16.mxu0 0
      %1383 = vmatpush1.bf16.msra.mxu0 0
      %1384 = vmatprep.subr.bf16.mxu0 0
      %1385 = vmatpush1.bf16.msra.mxu0 0
      %1386 = vmatprep.subr.bf16.mxu0 0
      %1387 = vmatpush1.bf16.msra.mxu0 0
      %1388 = vmatprep.subr.bf16.mxu0 0
      %1389 = vmatpush1.bf16.msra.mxu0 0
      %1390 = vmatprep.subr.bf16.mxu0 0
      %1391 = vmatpush1.bf16.msra.mxu0 0
      %1392 = vmatprep.subr.bf16.mxu0 0
      %1393 = vmatpush1.bf16.msra.mxu0 0
      %1394 = vmatprep.subr.bf16.mxu0 0
      %1395 = vmatpush1.bf16.msra.mxu0 0
      %1396 = vmatprep.subr.bf16.mxu0 0
      %1397 = vmatpush1.bf16.msra.mxu0 0
      %1398 = vmatprep.mubr.bf16.mxu0 0
      %1399 = vmatmul.mubr.bf16.gmra.mrb[0].mxu0 %v1316
      %v1400 = vpop.f32.mrb[0].mxu0
      %v1401 = vadd.f32 0.0, %v1400
      %v1402 = vpop.f32.mrb[0].mxu0
      %v1403 = vpop.f32.mrb[0].mxu0
      %v1404 = vpop.f32.mrb[0].mxu0
      %1405 = vdwg.mxu0
      %v1406 = vadd.f32 %v1401, 0.0
      %v1407 = vld [vmem:[%s361] sm:$0xf]
      %v1408 = vld [vmem:[%s361 + $0x4] sm:$0xf]
      %v1409 = vld [vmem:[%s361 + $0x8] sm:$0xf]
      %v1410 = vld [vmem:[%s361 + $0xc] sm:$0xf]
      %v1411 = vld [vmem:[%s361 + $0x10] sm:$0xf]
      %v1412 = vld [vmem:[%s361 + $0x14] sm:$0xf]
      %v1413 = vld [vmem:[%s361 + $0x18] sm:$0xf]
      %v1414 = vld [vmem:[%s361 + $0x1c] sm:$0xf]
      %v1415 = vld [vmem:[%s361 + $0x20] sm:$0xf]
      %v1416 = vld [vmem:[%s361 + $0x24] sm:$0xf]
      %v1417 = vld [vmem:[%s361 + $0x28] sm:$0xf]
      %v1418 = vld [vmem:[%s361 + $0x2c] sm:$0xf]
      %v1419 = vld [vmem:[%s361 + $0x30] sm:$0xf]
      %v1420 = vld [vmem:[%s361 + $0x34] sm:$0xf]
      %v1421 = vld [vmem:[%s361 + $0x38] sm:$0xf]
      %v1422 = vld [vmem:[%s361 + $0x3c] sm:$0xf]
      %v1425 = vunpack.c.l.b16 %v1294
      %v1426 = vunpack.c.l.b16 %v1295
      %v1427 = vpack.c.b16 %v1426, %v1425
      %v1445 = vunpack.c.l.b16 %v1407
      %v1446 = vunpack.c.l.b16 %v1408
      %v1447 = vunpack.c.l.b16 %v1409
      %v1448 = vunpack.c.l.b16 %v1410
      %v1449 = vunpack.c.l.b16 %v1411
      %v1450 = vunpack.c.l.b16 %v1412
      %v1451 = vunpack.c.l.b16 %v1413
      %v1452 = vunpack.c.l.b16 %v1414
      %v1453 = vunpack.c.l.b16 %v1415
      %v1454 = vunpack.c.l.b16 %v1416
      %v1455 = vunpack.c.l.b16 %v1417
      %v1456 = vunpack.c.l.b16 %v1418
      %v1457 = vunpack.c.l.b16 %v1419
      %v1458 = vunpack.c.l.b16 %v1420
      %v1459 = vunpack.c.l.b16 %v1421
      %v1460 = vunpack.c.l.b16 %v1422
      %v1461 = vpack.c.b16 %v1446, %v1445
      %v1462 = vpack.c.b16 %v1448, %v1447
      %v1463 = vpack.c.b16 %v1450, %v1449
      %v1464 = vpack.c.b16 %v1452, %v1451
      %v1465 = vpack.c.b16 %v1454, %v1453
      %v1466 = vpack.c.b16 %v1456, %v1455
      %v1467 = vpack.c.b16 %v1458, %v1457
      %v1468 = vpack.c.b16 %v1460, %v1459
      %1477 = vmatprep.subr.bf16.mxu0 0
      %1478 = vmatpush1.bf16.msra.mxu0 %v1461
      %1479 = vmatprep.subr.bf16.mxu0 0
      %1480 = vmatpush1.bf16.msra.mxu0 %v1462
      %1481 = vmatprep.subr.bf16.mxu0 0
      %1482 = vmatpush1.bf16.msra.mxu0 %v1463
      %1483 = vmatprep.subr.bf16.mxu0 0
      %1484 = vmatpush1.bf16.msra.mxu0 %v1464
      %1485 = vmatprep.subr.bf16.mxu0 0
      %1486 = vmatpush1.bf16.msra.mxu0 %v1465
      %1487 = vmatprep.subr.bf16.mxu0 0
      %1488 = vmatpush1.bf16.msra.mxu0 %v1466
      %1489 = vmatprep.subr.bf16.mxu0 0
      %1490 = vmatpush1.bf16.msra.mxu0 %v1467
      %1491 = vmatprep.subr.bf16.mxu0 0
      %1492 = vmatpush1.bf16.msra.mxu0 %v1468
      %1493 = vmatprep.subr.bf16.mxu0 0
      %1494 = vmatpush1.bf16.msra.mxu0 0
      %1495 = vmatprep.subr.bf16.mxu0 0
      %1496 = vmatpush1.bf16.msra.mxu0 0
      %1497 = vmatprep.subr.bf16.mxu0 0
      %1498 = vmatpush1.bf16.msra.mxu0 0
      %1499 = vmatprep.subr.bf16.mxu0 0
      %1500 = vmatpush1.bf16.msra.mxu0 0
      %1501 = vmatprep.subr.bf16.mxu0 0
      %1502 = vmatpush1.bf16.msra.mxu0 0
      %1503 = vmatprep.subr.bf16.mxu0 0
      %1504 = vmatpush1.bf16.msra.mxu0 0
      %1505 = vmatprep.subr.bf16.mxu0 0
      %1506 = vmatpush1.bf16.msra.mxu0 0
      %1507 = vmatprep.subr.bf16.mxu0 0
      %1508 = vmatpush1.bf16.msra.mxu0 0
      %1509 = vmatprep.mubr.bf16.mxu0 0
      %1510 = vmatmul.mubr.bf16.gmra.mrb[0].mxu0 %v1427
      %v1511 = vpop.f32.mrb[0].mxu0
      %v1512 = vadd.f32 0.0, %v1511
      %v1513 = vpop.f32.mrb[0].mxu0
      %v1514 = vpop.f32.mrb[0].mxu0
      %v1515 = vpop.f32.mrb[0].mxu0
      %1516 = vdwg.mxu0
      %v1517 = vadd.f32 %v1406, %v1512
      %v1518 = vld [vmem:[%s473] sm:$0xf]
      %v1519 = vld [vmem:[%s473 + $0x4] sm:$0xf]
      %v1520 = vld [vmem:[%s473 + $0x8] sm:$0xf]
      %v1521 = vld [vmem:[%s473 + $0xc] sm:$0xf]
      %v1522 = vld [vmem:[%s473 + $0x10] sm:$0xf]
      %v1523 = vld [vmem:[%s473 + $0x14] sm:$0xf]
      %v1524 = vld [vmem:[%s473 + $0x18] sm:$0xf]
      %v1525 = vld [vmem:[%s473 + $0x1c] sm:$0xf]
      %v1526 = vld [vmem:[%s473 + $0x20] sm:$0xf]
      %v1527 = vld [vmem:[%s473 + $0x24] sm:$0xf]
      %v1528 = vld [vmem:[%s473 + $0x28] sm:$0xf]
      %v1529 = vld [vmem:[%s473 + $0x2c] sm:$0xf]
      %v1530 = vld [vmem:[%s473 + $0x30] sm:$0xf]
      %v1531 = vld [vmem:[%s473 + $0x34] sm:$0xf]
      %v1532 = vld [vmem:[%s473 + $0x38] sm:$0xf]
      %v1533 = vld [vmem:[%s473 + $0x3c] sm:$0xf]
      %v1550 = vunpack.c.l.b16 %v1518
      %v1551 = vunpack.c.l.b16 %v1519
      %v1552 = vunpack.c.l.b16 %v1520
      %v1553 = vunpack.c.l.b16 %v1521
      %v1554 = vunpack.c.l.b16 %v1522
      %v1555 = vunpack.c.l.b16 %v1523
      %v1556 = vunpack.c.l.b16 %v1524
      %v1557 = vunpack.c.l.b16 %v1525
      %v1558 = vunpack.c.l.b16 %v1526
      %v1559 = vunpack.c.l.b16 %v1527
      %v1560 = vunpack.c.l.b16 %v1528
      %v1561 = vunpack.c.l.b16 %v1529
      %v1562 = vunpack.c.l.b16 %v1530
      %v1563 = vunpack.c.l.b16 %v1531
      %v1564 = vunpack.c.l.b16 %v1532
      %v1565 = vunpack.c.l.b16 %v1533
      %v1566 = vpack.c.b16 %v1551, %v1550
      %v1567 = vpack.c.b16 %v1553, %v1552
      %v1568 = vpack.c.b16 %v1555, %v1554
      %v1569 = vpack.c.b16 %v1557, %v1556
      %v1570 = vpack.c.b16 %v1559, %v1558
      %v1571 = vpack.c.b16 %v1561, %v1560
      %v1572 = vpack.c.b16 %v1563, %v1562
      %v1573 = vpack.c.b16 %v1565, %v1564
      %1582 = vmatprep.subr.bf16.mxu0 0
      %1583 = vmatpush1.bf16.msra.mxu0 %v1566
      %1584 = vmatprep.subr.bf16.mxu0 0
      %1585 = vmatpush1.bf16.msra.mxu0 %v1567
      %1586 = vmatprep.subr.bf16.mxu0 0
      %1587 = vmatpush1.bf16.msra.mxu0 %v1568
      %1588 = vmatprep.subr.bf16.mxu0 0
      %1589 = vmatpush1.bf16.msra.mxu0 %v1569
      %1590 = vmatprep.subr.bf16.mxu0 0
      %1591 = vmatpush1.bf16.msra.mxu0 %v1570
      %1592 = vmatprep.subr.bf16.mxu0 0
      %1593 = vmatpush1.bf16.msra.mxu0 %v1571
      %1594 = vmatprep.subr.bf16.mxu0 0
      %1595 = vmatpush1.bf16.msra.mxu0 %v1572
      %1596 = vmatprep.subr.bf16.mxu0 0
      %1597 = vmatpush1.bf16.msra.mxu0 %v1573
      %1598 = vmatprep.subr.bf16.mxu0 0
      %1599 = vmatpush1.bf16.msra.mxu0 0
      %1600 = vmatprep.subr.bf16.mxu0 0
      %1601 = vmatpush1.bf16.msra.mxu0 0
      %1602 = vmatprep.subr.bf16.mxu0 0
      %1603 = vmatpush1.bf16.msra.mxu0 0
      %1604 = vmatprep.subr.bf16.mxu0 0
      %1605 = vmatpush1.bf16.msra.mxu0 0
      %1606 = vmatprep.subr.bf16.mxu0 0
      %1607 = vmatpush1.bf16.msra.mxu0 0
      %1608 = vmatprep.subr.bf16.mxu0 0
      %1609 = vmatpush1.bf16.msra.mxu0 0
      %1610 = vmatprep.subr.bf16.mxu0 0
      %1611 = vmatpush1.bf16.msra.mxu0 0
      %1612 = vmatprep.subr.bf16.mxu0 0
      %1613 = vmatpush1.bf16.msra.mxu0 0
      %1614 = vmatprep.mubr.bf16.mxu0 0
      %1615 = vmatmul.mubr.bf16.gmra.mrb[0].mxu0 %v1316
      %v1616 = vpop.f32.mrb[0].mxu0
      %v1617 = vadd.f32 0.0, %v1616
      %v1618 = vpop.f32.mrb[0].mxu0
      %v1619 = vpop.f32.mrb[0].mxu0
      %v1620 = vadd.f32 0.0, %v1619
      %v1621 = vpop.f32.mrb[0].mxu0
      %1622 = vdwg.mxu0
      %v1625 = vrot.slane %v1617, 1
      %v1626 = vrot.slane %v1620, 1
      %v1627 = vsel %vm581, %v1625, %v1626
      %v1629 = vadd.f32 %v1517, %v1627
      %s1630 = scalar_lea.vmem %s234, 24
      %v1631 = vld [vmem:[%s1630] sm:$0xf]
      %v1632 = vld [vmem:[%s1630 + $0x4] sm:$0x1]
      %s1633 = scalar_lea.vmem %s239, 24
      %v1634 = vld [vmem:[%s1633] sm:$0xf]
      %v1635 = vld [vmem:[%s1633 + $0x4] sm:$0x1]
      %v1636 = vld [vmem:[%s593] sm:$0xf]
      %v1637 = vld [vmem:[%s593 + $0x4] sm:$0xf]
      %v1638 = vld [vmem:[%s593 + $0x8] sm:$0xf]
      %v1639 = vld [vmem:[%s593 + $0xc] sm:$0xf]
      %v1640 = vld [vmem:[%s593 + $0x10] sm:$0xf]
      %v1641 = vld [vmem:[%s593 + $0x14] sm:$0xf]
      %v1642 = vld [vmem:[%s593 + $0x18] sm:$0xf]
      %v1643 = vld [vmem:[%s593 + $0x1c] sm:$0xf]
      %v1644 = vld [vmem:[%s593 + $0x20] sm:$0xf]
      %v1645 = vld [vmem:[%s593 + $0x24] sm:$0xf]
      %v1646 = vld [vmem:[%s593 + $0x28] sm:$0xf]
      %v1647 = vld [vmem:[%s593 + $0x2c] sm:$0xf]
      %v1648 = vld [vmem:[%s593 + $0x30] sm:$0xf]
      %v1649 = vld [vmem:[%s593 + $0x34] sm:$0xf]
      %v1650 = vld [vmem:[%s593 + $0x38] sm:$0xf]
      %v1651 = vld [vmem:[%s593 + $0x3c] sm:$0xf]
      %v1654 = vunpack.c.l.b16 %v1631
      %v1655 = vunpack.c.l.b16 %v1632
      %v1656 = vpack.c.b16 %v1655, %v1654
      %v1674 = vunpack.c.l.b16 %v1636
      %v1675 = vunpack.c.l.b16 %v1637
      %v1676 = vunpack.c.l.b16 %v1638
      %v1677 = vunpack.c.l.b16 %v1639
      %v1678 = vunpack.c.l.b16 %v1640
      %v1679 = vunpack.c.l.b16 %v1641
      %v1680 = vunpack.c.l.b16 %v1642
      %v1681 = vunpack.c.l.b16 %v1643
      %v1682 = vunpack.c.l.b16 %v1644
      %v1683 = vunpack.c.l.b16 %v1645
      %v1684 = vunpack.c.l.b16 %v1646
      %v1685 = vunpack.c.l.b16 %v1647
      %v1686 = vunpack.c.l.b16 %v1648
      %v1687 = vunpack.c.l.b16 %v1649
      %v1688 = vunpack.c.l.b16 %v1650
      %v1689 = vunpack.c.l.b16 %v1651
      %v1690 = vpack.c.b16 %v1675, %v1674
      %v1691 = vpack.c.b16 %v1677, %v1676
      %v1692 = vpack.c.b16 %v1679, %v1678
      %v1693 = vpack.c.b16 %v1681, %v1680
      %v1694 = vpack.c.b16 %v1683, %v1682
      %v1695 = vpack.c.b16 %v1685, %v1684
      %v1696 = vpack.c.b16 %v1687, %v1686
      %v1697 = vpack.c.b16 %v1689, %v1688
      %1706 = vmatprep.subr.bf16.mxu0 0
      %1707 = vmatpush1.bf16.msra.mxu0 %v1690
      %1708 = vmatprep.subr.bf16.mxu0 0
      %1709 = vmatpush1.bf16.msra.mxu0 %v1691
      %1710 = vmatprep.subr.bf16.mxu0 0
      %1711 = vmatpush1.bf16.msra.mxu0 %v1692
      %1712 = vmatprep.subr.bf16.mxu0 0
      %1713 = vmatpush1.bf16.msra.mxu0 %v1693
      %1714 = vmatprep.subr.bf16.mxu0 0
      %1715 = vmatpush1.bf16.msra.mxu0 %v1694
      %1716 = vmatprep.subr.bf16.mxu0 0
      %1717 = vmatpush1.bf16.msra.mxu0 %v1695
      %1718 = vmatprep.subr.bf16.mxu0 0
      %1719 = vmatpush1.bf16.msra.mxu0 %v1696
      %1720 = vmatprep.subr.bf16.mxu0 0
      %1721 = vmatpush1.bf16.msra.mxu0 %v1697
      %1722 = vmatprep.subr.bf16.mxu0 0
      %1723 = vmatpush1.bf16.msra.mxu0 0
      %1724 = vmatprep.subr.bf16.mxu0 0
      %1725 = vmatpush1.bf16.msra.mxu0 0
      %1726 = vmatprep.subr.bf16.mxu0 0
      %1727 = vmatpush1.bf16.msra.mxu0 0
      %1728 = vmatprep.subr.bf16.mxu0 0
      %1729 = vmatpush1.bf16.msra.mxu0 0
      %1730 = vmatprep.subr.bf16.mxu0 0
      %1731 = vmatpush1.bf16.msra.mxu0 0
      %1732 = vmatprep.subr.bf16.mxu0 0
      %1733 = vmatpush1.bf16.msra.mxu0 0
      %1734 = vmatprep.subr.bf16.mxu0 0
      %1735 = vmatpush1.bf16.msra.mxu0 0
      %1736 = vmatprep.subr.bf16.mxu0 0
      %1737 = vmatpush1.bf16.msra.mxu0 0
      %1738 = vmatprep.mubr.bf16.mxu0 0
      %1739 = vmatmul.mubr.bf16.gmra.mrb[0].mxu0 %v1656
      %v1740 = vpop.f32.mrb[0].mxu0
      %v1741 = vadd.f32 0.0, %v1740
      %v1742 = vpop.f32.mrb[0].mxu0
      %v1743 = vpop.f32.mrb[0].mxu0
      %v1744 = vpop.f32.mrb[0].mxu0
      %1745 = vdwg.mxu0
      %v1746 = vadd.f32 %v1629, %v1741
      %v1747 = vld [vmem:[%s705] sm:$0xf]
      %v1748 = vld [vmem:[%s705 + $0x4] sm:$0xf]
      %v1749 = vld [vmem:[%s705 + $0x8] sm:$0xf]
      %v1750 = vld [vmem:[%s705 + $0xc] sm:$0xf]
      %v1751 = vld [vmem:[%s705 + $0x10] sm:$0xf]
      %v1752 = vld [vmem:[%s705 + $0x14] sm:$0xf]
      %v1753 = vld [vmem:[%s705 + $0x18] sm:$0xf]
      %v1754 = vld [vmem:[%s705 + $0x1c] sm:$0xf]
      %v1755 = vld [vmem:[%s705 + $0x20] sm:$0xf]
      %v1756 = vld [vmem:[%s705 + $0x24] sm:$0xf]
      %v1757 = vld [vmem:[%s705 + $0x28] sm:$0xf]
      %v1758 = vld [vmem:[%s705 + $0x2c] sm:$0xf]
      %v1759 = vld [vmem:[%s705 + $0x30] sm:$0xf]
      %v1760 = vld [vmem:[%s705 + $0x34] sm:$0xf]
      %v1761 = vld [vmem:[%s705 + $0x38] sm:$0xf]
      %v1762 = vld [vmem:[%s705 + $0x3c] sm:$0xf]
      %v1765 = vunpack.c.l.b16 %v1634
      %v1766 = vunpack.c.l.b16 %v1635
      %v1767 = vpack.c.b16 %v1766, %v1765
      %v1785 = vunpack.c.l.b16 %v1747
      %v1786 = vunpack.c.l.b16 %v1748
      %v1787 = vunpack.c.l.b16 %v1749
      %v1788 = vunpack.c.l.b16 %v1750
      %v1789 = vunpack.c.l.b16 %v1751
      %v1790 = vunpack.c.l.b16 %v1752
      %v1791 = vunpack.c.l.b16 %v1753
      %v1792 = vunpack.c.l.b16 %v1754
      %v1793 = vunpack.c.l.b16 %v1755
      %v1794 = vunpack.c.l.b16 %v1756
      %v1795 = vunpack.c.l.b16 %v1757
      %v1796 = vunpack.c.l.b16 %v1758
      %v1797 = vunpack.c.l.b16 %v1759
      %v1798 = vunpack.c.l.b16 %v1760
      %v1799 = vunpack.c.l.b16 %v1761
      %v1800 = vunpack.c.l.b16 %v1762
      %v1801 = vpack.c.b16 %v1786, %v1785
      %v1802 = vpack.c.b16 %v1788, %v1787
      %v1803 = vpack.c.b16 %v1790, %v1789
      %v1804 = vpack.c.b16 %v1792, %v1791
      %v1805 = vpack.c.b16 %v1794, %v1793
      %v1806 = vpack.c.b16 %v1796, %v1795
      %v1807 = vpack.c.b16 %v1798, %v1797
      %v1808 = vpack.c.b16 %v1800, %v1799
      %1817 = vmatprep.subr.bf16.mxu0 0
      %1818 = vmatpush1.bf16.msra.mxu0 %v1801
      %1819 = vmatprep.subr.bf16.mxu0 0
      %1820 = vmatpush1.bf16.msra.mxu0 %v1802
      %1821 = vmatprep.subr.bf16.mxu0 0
      %1822 = vmatpush1.bf16.msra.mxu0 %v1803
      %1823 = vmatprep.subr.bf16.mxu0 0
      %1824 = vmatpush1.bf16.msra.mxu0 %v1804
      %1825 = vmatprep.subr.bf16.mxu0 0
      %1826 = vmatpush1.bf16.msra.mxu0 %v1805
      %1827 = vmatprep.subr.bf16.mxu0 0
      %1828 = vmatpush1.bf16.msra.mxu0 %v1806
      %1829 = vmatprep.subr.bf16.mxu0 0
      %1830 = vmatpush1.bf16.msra.mxu0 %v1807
      %1831 = vmatprep.subr.bf16.mxu0 0
      %1832 = vmatpush1.bf16.msra.mxu0 %v1808
      %1833 = vmatprep.subr.bf16.mxu0 0
      %1834 = vmatpush1.bf16.msra.mxu0 0
      %1835 = vmatprep.subr.bf16.mxu0 0
      %1836 = vmatpush1.bf16.msra.mxu0 0
      %1837 = vmatprep.subr.bf16.mxu0 0
      %1838 = vmatpush1.bf16.msra.mxu0 0
      %1839 = vmatprep.subr.bf16.mxu0 0
      %1840 = vmatpush1.bf16.msra.mxu0 0
      %1841 = vmatprep.subr.bf16.mxu0 0
      %1842 = vmatpush1.bf16.msra.mxu0 0
      %1843 = vmatprep.subr.bf16.mxu0 0
      %1844 = vmatpush1.bf16.msra.mxu0 0
      %1845 = vmatprep.subr.bf16.mxu0 0
      %1846 = vmatpush1.bf16.msra.mxu0 0
      %1847 = vmatprep.subr.bf16.mxu0 0
      %1848 = vmatpush1.bf16.msra.mxu0 0
      %1849 = vmatprep.mubr.bf16.mxu0 0
      %1850 = vmatmul.mubr.bf16.gmra.mrb[0].mxu0 %v1767
      %v1851 = vpop.f32.mrb[0].mxu0
      %v1852 = vadd.f32 0.0, %v1851
      %v1853 = vpop.f32.mrb[0].mxu0
      %v1854 = vpop.f32.mrb[0].mxu0
      %v1855 = vpop.f32.mrb[0].mxu0
      %1856 = vdwg.mxu0
      %v1857 = vadd.f32 %v1746, %v1852
      %v1858 = vld [vmem:[%s817] sm:$0xf]
      %v1859 = vld [vmem:[%s817 + $0x4] sm:$0xf]
      %v1860 = vld [vmem:[%s817 + $0x8] sm:$0xf]
      %v1861 = vld [vmem:[%s817 + $0xc] sm:$0xf]
      %v1862 = vld [vmem:[%s817 + $0x10] sm:$0xf]
      %v1863 = vld [vmem:[%s817 + $0x14] sm:$0xf]
      %v1864 = vld [vmem:[%s817 + $0x18] sm:$0xf]
      %v1865 = vld [vmem:[%s817 + $0x1c] sm:$0xf]
      %v1866 = vld [vmem:[%s817 + $0x20] sm:$0xf]
      %v1867 = vld [vmem:[%s817 + $0x24] sm:$0xf]
      %v1868 = vld [vmem:[%s817 + $0x28] sm:$0xf]
      %v1869 = vld [vmem:[%s817 + $0x2c] sm:$0xf]
      %v1870 = vld [vmem:[%s817 + $0x30] sm:$0xf]
      %v1871 = vld [vmem:[%s817 + $0x34] sm:$0xf]
      %v1872 = vld [vmem:[%s817 + $0x38] sm:$0xf]
      %v1873 = vld [vmem:[%s817 + $0x3c] sm:$0xf]
      %v1890 = vunpack.c.l.b16 %v1858
      %v1891 = vunpack.c.l.b16 %v1859
      %v1892 = vunpack.c.l.b16 %v1860
      %v1893 = vunpack.c.l.b16 %v1861
      %v1894 = vunpack.c.l.b16 %v1862
      %v1895 = vunpack.c.l.b16 %v1863
      %v1896 = vunpack.c.l.b16 %v1864
      %v1897 = vunpack.c.l.b16 %v1865
      %v1898 = vunpack.c.l.b16 %v1866
      %v1899 = vunpack.c.l.b16 %v1867
      %v1900 = vunpack.c.l.b16 %v1868
      %v1901 = vunpack.c.l.b16 %v1869
      %v1902 = vunpack.c.l.b16 %v1870
      %v1903 = vunpack.c.l.b16 %v1871
      %v1904 = vunpack.c.l.b16 %v1872
      %v1905 = vunpack.c.l.b16 %v1873
      %v1906 = vpack.c.b16 %v1891, %v1890
      %v1907 = vpack.c.b16 %v1893, %v1892
      %v1908 = vpack.c.b16 %v1895, %v1894
      %v1909 = vpack.c.b16 %v1897, %v1896
      %v1910 = vpack.c.b16 %v1899, %v1898
      %v1911 = vpack.c.b16 %v1901, %v1900
      %v1912 = vpack.c.b16 %v1903, %v1902
      %v1913 = vpack.c.b16 %v1905, %v1904
      %1922 = vmatprep.subr.bf16.mxu0 0
      %1923 = vmatpush1.bf16.msra.mxu0 %v1906
      %1924 = vmatprep.subr.bf16.mxu0 0
      %1925 = vmatpush1.bf16.msra.mxu0 %v1907
      %1926 = vmatprep.subr.bf16.mxu0 0
      %1927 = vmatpush1.bf16.msra.mxu0 %v1908
      %1928 = vmatprep.subr.bf16.mxu0 0
      %1929 = vmatpush1.bf16.msra.mxu0 %v1909
      %1930 = vmatprep.subr.bf16.mxu0 0
      %1931 = vmatpush1.bf16.msra.mxu0 %v1910
      %1932 = vmatprep.subr.bf16.mxu0 0
      %1933 = vmatpush1.bf16.msra.mxu0 %v1911
      %1934 = vmatprep.subr.bf16.mxu0 0
      %1935 = vmatpush1.bf16.msra.mxu0 %v1912
      %1936 = vmatprep.subr.bf16.mxu0 0
      %1937 = vmatpush1.bf16.msra.mxu0 %v1913
      %1938 = vmatprep.subr.bf16.mxu0 0
      %1939 = vmatpush1.bf16.msra.mxu0 0
      %1940 = vmatprep.subr.bf16.mxu0 0
      %1941 = vmatpush1.bf16.msra.mxu0 0
      %1942 = vmatprep.subr.bf16.mxu0 0
      %1943 = vmatpush1.bf16.msra.mxu0 0
      %1944 = vmatprep.subr.bf16.mxu0 0
      %1945 = vmatpush1.bf16.msra.mxu0 0
      %1946 = vmatprep.subr.bf16.mxu0 0
      %1947 = vmatpush1.bf16.msra.mxu0 0
      %1948 = vmatprep.subr.bf16.mxu0 0
      %1949 = vmatpush1.bf16.msra.mxu0 0
      %1950 = vmatprep.subr.bf16.mxu0 0
      %1951 = vmatpush1.bf16.msra.mxu0 0
      %1952 = vmatprep.subr.bf16.mxu0 0
      %1953 = vmatpush1.bf16.msra.mxu0 0
      %1954 = vmatprep.mubr.bf16.mxu0 0
      %1955 = vmatmul.mubr.bf16.gmra.mrb[0].mxu0 %v1656
      %v1956 = vpop.f32.mrb[0].mxu0
      %v1957 = vadd.f32 0.0, %v1956
      %v1958 = vpop.f32.mrb[0].mxu0
      %v1959 = vpop.f32.mrb[0].mxu0
      %v1960 = vadd.f32 0.0, %v1959
      %v1961 = vpop.f32.mrb[0].mxu0
      %1962 = vdwg.mxu0
      %v1965 = vrot.slane %v1957, 1
      %v1966 = vrot.slane %v1960, 1
      %v1967 = vsel %vm581, %v1965, %v1966
      %v1969 = vadd.f32 %v1857, %v1967
      %s1970 = scalar_lea.vmem %s234, 32
      %v1971 = vld [vmem:[%s1970] sm:$0xf]
      %v1972 = vld [vmem:[%s1970 + $0x4] sm:$0x1]
      %s1973 = scalar_lea.vmem %s239, 32
      %v1974 = vld [vmem:[%s1973] sm:$0xf]
      %v1975 = vld [vmem:[%s1973 + $0x4] sm:$0x1]
      %v1976 = vld [vmem:[%s936] sm:$0xf]
      %v1977 = vld [vmem:[%s936 + $0x4] sm:$0xf]
      %v1978 = vld [vmem:[%s936 + $0x8] sm:$0xf]
      %v1979 = vld [vmem:[%s936 + $0xc] sm:$0xf]
      %v1980 = vld [vmem:[%s936 + $0x10] sm:$0xf]
      %v1981 = vld [vmem:[%s936 + $0x14] sm:$0xf]
      %v1982 = vld [vmem:[%s936 + $0x18] sm:$0xf]
      %v1983 = vld [vmem:[%s936 + $0x1c] sm:$0xf]
      %v1984 = vld [vmem:[%s936 + $0x20] sm:$0xf]
      %v1985 = vld [vmem:[%s936 + $0x24] sm:$0xf]
      %v1986 = vld [vmem:[%s936 + $0x28] sm:$0xf]
      %v1987 = vld [vmem:[%s936 + $0x2c] sm:$0xf]
      %v1988 = vld [vmem:[%s936 + $0x30] sm:$0xf]
      %v1989 = vld [vmem:[%s936 + $0x34] sm:$0xf]
      %v1990 = vld [vmem:[%s936 + $0x38] sm:$0xf]
      %v1991 = vld [vmem:[%s936 + $0x3c] sm:$0xf]
      %v1994 = vunpack.c.l.b16 %v1971
      %v1995 = vunpack.c.l.b16 %v1972
      %v1996 = vpack.c.b16 %v1995, %v1994
      %v2014 = vunpack.c.l.b16 %v1976
      %v2015 = vunpack.c.l.b16 %v1977
      %v2016 = vunpack.c.l.b16 %v1978
      %v2017 = vunpack.c.l.b16 %v1979
      %v2018 = vunpack.c.l.b16 %v1980
      %v2019 = vunpack.c.l.b16 %v1981
      %v2020 = vunpack.c.l.b16 %v1982
      %v2021 = vunpack.c.l.b16 %v1983
      %v2022 = vunpack.c.l.b16 %v1984
      %v2023 = vunpack.c.l.b16 %v1985
      %v2024 = vunpack.c.l.b16 %v1986
      %v2025 = vunpack.c.l.b16 %v1987
      %v2026 = vunpack.c.l.b16 %v1988
      %v2027 = vunpack.c.l.b16 %v1989
      %v2028 = vunpack.c.l.b16 %v1990
      %v2029 = vunpack.c.l.b16 %v1991
      %v2030 = vpack.c.b16 %v2015, %v2014
      %v2031 = vpack.c.b16 %v2017, %v2016
      %v2032 = vpack.c.b16 %v2019, %v2018
      %v2033 = vpack.c.b16 %v2021, %v2020
      %v2034 = vpack.c.b16 %v2023, %v2022
      %v2035 = vpack.c.b16 %v2025, %v2024
      %v2036 = vpack.c.b16 %v2027, %v2026
      %v2037 = vpack.c.b16 %v2029, %v2028
      %2046 = vmatprep.subr.bf16.mxu0 0
      %2047 = vmatpush1.bf16.msra.mxu0 %v2030
      %2048 = vmatprep.subr.bf16.mxu0 0
      %2049 = vmatpush1.bf16.msra.mxu0 %v2031
      %2050 = vmatprep.subr.bf16.mxu0 0
      %2051 = vmatpush1.bf16.msra.mxu0 %v2032
      %2052 = vmatprep.subr.bf16.mxu0 0
      %2053 = vmatpush1.bf16.msra.mxu0 %v2033
      %2054 = vmatprep.subr.bf16.mxu0 0
      %2055 = vmatpush1.bf16.msra.mxu0 %v2034
      %2056 = vmatprep.subr.bf16.mxu0 0
      %2057 = vmatpush1.bf16.msra.mxu0 %v2035
      %2058 = vmatprep.subr.bf16.mxu0 0
      %2059 = vmatpush1.bf16.msra.mxu0 %v2036
      %2060 = vmatprep.subr.bf16.mxu0 0
      %2061 = vmatpush1.bf16.msra.mxu0 %v2037
      %2062 = vmatprep.subr.bf16.mxu0 0
      %2063 = vmatpush1.bf16.msra.mxu0 0
      %2064 = vmatprep.subr.bf16.mxu0 0
      %2065 = vmatpush1.bf16.msra.mxu0 0
      %2066 = vmatprep.subr.bf16.mxu0 0
      %2067 = vmatpush1.bf16.msra.mxu0 0
      %2068 = vmatprep.subr.bf16.mxu0 0
      %2069 = vmatpush1.bf16.msra.mxu0 0
      %2070 = vmatprep.subr.bf16.mxu0 0
      %2071 = vmatpush1.bf16.msra.mxu0 0
      %2072 = vmatprep.subr.bf16.mxu0 0
      %2073 = vmatpush1.bf16.msra.mxu0 0
      %2074 = vmatprep.subr.bf16.mxu0 0
      %2075 = vmatpush1.bf16.msra.mxu0 0
      %2076 = vmatprep.subr.bf16.mxu0 0
      %2077 = vmatpush1.bf16.msra.mxu0 0
      %2078 = vmatprep.mubr.bf16.mxu0 0
      %2079 = vmatmul.mubr.bf16.gmra.mrb[0].mxu0 %v1996
      %v2080 = vpop.f32.mrb[0].mxu0
      %v2081 = vadd.f32 0.0, %v2080
      %v2082 = vpop.f32.mrb[0].mxu0
      %v2083 = vpop.f32.mrb[0].mxu0
      %v2084 = vpop.f32.mrb[0].mxu0
      %2085 = vdwg.mxu0
      %v2086 = vadd.f32 %v1969, %v2081
      %v2087 = vld [vmem:[%s1048] sm:$0xf]
      %v2088 = vld [vmem:[%s1048 + $0x4] sm:$0xf]
      %v2089 = vld [vmem:[%s1048 + $0x8] sm:$0xf]
      %v2090 = vld [vmem:[%s1048 + $0xc] sm:$0xf]
      %v2091 = vld [vmem:[%s1048 + $0x10] sm:$0xf]
      %v2092 = vld [vmem:[%s1048 + $0x14] sm:$0xf]
      %v2093 = vld [vmem:[%s1048 + $0x18] sm:$0xf]
      %v2094 = vld [vmem:[%s1048 + $0x1c] sm:$0xf]
      %v2095 = vld [vmem:[%s1048 + $0x20] sm:$0xf]
      %v2096 = vld [vmem:[%s1048 + $0x24] sm:$0xf]
      %v2097 = vld [vmem:[%s1048 + $0x28] sm:$0xf]
      %v2098 = vld [vmem:[%s1048 + $0x2c] sm:$0xf]
      %v2099 = vld [vmem:[%s1048 + $0x30] sm:$0xf]
      %v2100 = vld [vmem:[%s1048 + $0x34] sm:$0xf]
      %v2101 = vld [vmem:[%s1048 + $0x38] sm:$0xf]
      %v2102 = vld [vmem:[%s1048 + $0x3c] sm:$0xf]
      %v2105 = vunpack.c.l.b16 %v1974
      %v2106 = vunpack.c.l.b16 %v1975
      %v2107 = vpack.c.b16 %v2106, %v2105
      %v2125 = vunpack.c.l.b16 %v2087
      %v2126 = vunpack.c.l.b16 %v2088
      %v2127 = vunpack.c.l.b16 %v2089
      %v2128 = vunpack.c.l.b16 %v2090
      %v2129 = vunpack.c.l.b16 %v2091
      %v2130 = vunpack.c.l.b16 %v2092
      %v2131 = vunpack.c.l.b16 %v2093
      %v2132 = vunpack.c.l.b16 %v2094
      %v2133 = vunpack.c.l.b16 %v2095
      %v2134 = vunpack.c.l.b16 %v2096
      %v2135 = vunpack.c.l.b16 %v2097
      %v2136 = vunpack.c.l.b16 %v2098
      %v2137 = vunpack.c.l.b16 %v2099
      %v2138 = vunpack.c.l.b16 %v2100
      %v2139 = vunpack.c.l.b16 %v2101
      %v2140 = vunpack.c.l.b16 %v2102
      %v2141 = vpack.c.b16 %v2126, %v2125
      %v2142 = vpack.c.b16 %v2128, %v2127
      %v2143 = vpack.c.b16 %v2130, %v2129
      %v2144 = vpack.c.b16 %v2132, %v2131
      %v2145 = vpack.c.b16 %v2134, %v2133
      %v2146 = vpack.c.b16 %v2136, %v2135
      %v2147 = vpack.c.b16 %v2138, %v2137
      %v2148 = vpack.c.b16 %v2140, %v2139
      %2157 = vmatprep.subr.bf16.mxu0 0
      %2158 = vmatpush1.bf16.msra.mxu0 %v2141
      %2159 = vmatprep.subr.bf16.mxu0 0
      %2160 = vmatpush1.bf16.msra.mxu0 %v2142
      %2161 = vmatprep.subr.bf16.mxu0 0
      %2162 = vmatpush1.bf16.msra.mxu0 %v2143
      %2163 = vmatprep.subr.bf16.mxu0 0
      %2164 = vmatpush1.bf16.msra.mxu0 %v2144
      %2165 = vmatprep.subr.bf16.mxu0 0
      %2166 = vmatpush1.bf16.msra.mxu0 %v2145
      %2167 = vmatprep.subr.bf16.mxu0 0
      %2168 = vmatpush1.bf16.msra.mxu0 %v2146
      %2169 = vmatprep.subr.bf16.mxu0 0
      %2170 = vmatpush1.bf16.msra.mxu0 %v2147
      %2171 = vmatprep.subr.bf16.mxu0 0
      %2172 = vmatpush1.bf16.msra.mxu0 %v2148
      %2173 = vmatprep.subr.bf16.mxu0 0
      %2174 = vmatpush1.bf16.msra.mxu0 0
      %2175 = vmatprep.subr.bf16.mxu0 0
      %2176 = vmatpush1.bf16.msra.mxu0 0
      %2177 = vmatprep.subr.bf16.mxu0 0
      %2178 = vmatpush1.bf16.msra.mxu0 0
      %2179 = vmatprep.subr.bf16.mxu0 0
      %2180 = vmatpush1.bf16.msra.mxu0 0
      %2181 = vmatprep.subr.bf16.mxu0 0
      %2182 = vmatpush1.bf16.msra.mxu0 0
      %2183 = vmatprep.subr.bf16.mxu0 0
      %2184 = vmatpush1.bf16.msra.mxu0 0
      %2185 = vmatprep.subr.bf16.mxu0 0
      %2186 = vmatpush1.bf16.msra.mxu0 0
      %2187 = vmatprep.subr.bf16.mxu0 0
      %2188 = vmatpush1.bf16.msra.mxu0 0
      %2189 = vmatprep.mubr.bf16.mxu0 0
      %2190 = vmatmul.mubr.bf16.gmra.mrb[0].mxu0 %v2107
      %v2191 = vpop.f32.mrb[0].mxu0
      %v2192 = vadd.f32 0.0, %v2191
      %v2193 = vpop.f32.mrb[0].mxu0
      %v2194 = vpop.f32.mrb[0].mxu0
      %v2195 = vpop.f32.mrb[0].mxu0
      %2196 = vdwg.mxu0
      %v2197 = vadd.f32 %v2086, %v2192
      %v2198 = vld [vmem:[%s1160] sm:$0xf]
      %v2199 = vld [vmem:[%s1160 + $0x4] sm:$0xf]
      %v2200 = vld [vmem:[%s1160 + $0x8] sm:$0xf]
      %v2201 = vld [vmem:[%s1160 + $0xc] sm:$0xf]
      %v2202 = vld [vmem:[%s1160 + $0x10] sm:$0xf]
      %v2203 = vld [vmem:[%s1160 + $0x14] sm:$0xf]
      %v2204 = vld [vmem:[%s1160 + $0x18] sm:$0xf]
      %v2205 = vld [vmem:[%s1160 + $0x1c] sm:$0xf]
      %v2206 = vld [vmem:[%s1160 + $0x20] sm:$0xf]
      %v2207 = vld [vmem:[%s1160 + $0x24] sm:$0xf]
      %v2208 = vld [vmem:[%s1160 + $0x28] sm:$0xf]
      %v2209 = vld [vmem:[%s1160 + $0x2c] sm:$0xf]
      %v2210 = vld [vmem:[%s1160 + $0x30] sm:$0xf]
      %v2211 = vld [vmem:[%s1160 + $0x34] sm:$0xf]
      %v2212 = vld [vmem:[%s1160 + $0x38] sm:$0xf]
      %v2213 = vld [vmem:[%s1160 + $0x3c] sm:$0xf]
      %v2230 = vunpack.c.l.b16 %v2198
      %v2231 = vunpack.c.l.b16 %v2199
      %v2232 = vunpack.c.l.b16 %v2200
      %v2233 = vunpack.c.l.b16 %v2201
      %v2234 = vunpack.c.l.b16 %v2202
      %v2235 = vunpack.c.l.b16 %v2203
      %v2236 = vunpack.c.l.b16 %v2204
      %v2237 = vunpack.c.l.b16 %v2205
      %v2238 = vunpack.c.l.b16 %v2206
      %v2239 = vunpack.c.l.b16 %v2207
      %v2240 = vunpack.c.l.b16 %v2208
      %v2241 = vunpack.c.l.b16 %v2209
      %v2242 = vunpack.c.l.b16 %v2210
      %v2243 = vunpack.c.l.b16 %v2211
      %v2244 = vunpack.c.l.b16 %v2212
      %v2245 = vunpack.c.l.b16 %v2213
      %v2246 = vpack.c.b16 %v2231, %v2230
      %v2247 = vpack.c.b16 %v2233, %v2232
      %v2248 = vpack.c.b16 %v2235, %v2234
      %v2249 = vpack.c.b16 %v2237, %v2236
      %v2250 = vpack.c.b16 %v2239, %v2238
      %v2251 = vpack.c.b16 %v2241, %v2240
      %v2252 = vpack.c.b16 %v2243, %v2242
      %v2253 = vpack.c.b16 %v2245, %v2244
      %2262 = vmatprep.subr.bf16.mxu0 0
      %2263 = vmatpush1.bf16.msra.mxu0 %v2246
      %2264 = vmatprep.subr.bf16.mxu0 0
      %2265 = vmatpush1.bf16.msra.mxu0 %v2247
      %2266 = vmatprep.subr.bf16.mxu0 0
      %2267 = vmatpush1.bf16.msra.mxu0 %v2248
      %2268 = vmatprep.subr.bf16.mxu0 0
      %2269 = vmatpush1.bf16.msra.mxu0 %v2249
      %2270 = vmatprep.subr.bf16.mxu0 0
      %2271 = vmatpush1.bf16.msra.mxu0 %v2250
      %2272 = vmatprep.subr.bf16.mxu0 0
      %2273 = vmatpush1.bf16.msra.mxu0 %v2251
      %2274 = vmatprep.subr.bf16.mxu0 0
      %2275 = vmatpush1.bf16.msra.mxu0 %v2252
      %2276 = vmatprep.subr.bf16.mxu0 0
      %2277 = vmatpush1.bf16.msra.mxu0 %v2253
      %2278 = vmatprep.subr.bf16.mxu0 0
      %2279 = vmatpush1.bf16.msra.mxu0 0
      %2280 = vmatprep.subr.bf16.mxu0 0
      %2281 = vmatpush1.bf16.msra.mxu0 0
      %2282 = vmatprep.subr.bf16.mxu0 0
      %2283 = vmatpush1.bf16.msra.mxu0 0
      %2284 = vmatprep.subr.bf16.mxu0 0
      %2285 = vmatpush1.bf16.msra.mxu0 0
      %2286 = vmatprep.subr.bf16.mxu0 0
      %2287 = vmatpush1.bf16.msra.mxu0 0
      %2288 = vmatprep.subr.bf16.mxu0 0
      %2289 = vmatpush1.bf16.msra.mxu0 0
      %2290 = vmatprep.subr.bf16.mxu0 0
      %2291 = vmatpush1.bf16.msra.mxu0 0
      %2292 = vmatprep.subr.bf16.mxu0 0
      %2293 = vmatpush1.bf16.msra.mxu0 0
      %2294 = vmatprep.mubr.bf16.mxu0 0
      %2295 = vmatmul.mubr.bf16.gmra.mrb[0].mxu0 %v1996
      %v2296 = vpop.f32.mrb[0].mxu0
      %v2297 = vadd.f32 0.0, %v2296
      %v2298 = vpop.f32.mrb[0].mxu0
      %v2299 = vpop.f32.mrb[0].mxu0
      %v2300 = vadd.f32 0.0, %v2299
      %v2301 = vpop.f32.mrb[0].mxu0
      %2302 = vdwg.mxu0
      %v2305 = vrot.slane %v2297, 1
      %v2306 = vrot.slane %v2300, 1
      %v2307 = vsel %vm581, %v2305, %v2306
      %v2309 = vadd.f32 %v2197, %v2307
      %v2310 = vld [vmem:[%s3] sm:$0x1]
      %v2312 = vlaneseq
      %v2313 = vshrl.u32 %v2312, 7
      %v2314 = vsub.s32 0, %v2313
      %v2315 = vrot.slane %v2310, %v2314
      %v2317 = vmul.f32 %v2309, %v2315
      %v2318 = vld [vmem:[%s4] sm:$0x1]
      %v2320 = vlaneseq
      %v2321 = vshrl.u32 %v2320, 7
      %v2322 = vsub.s32 0, %v2321
      %v2323 = vrot.slane %v2318, %v2322
      %v2325 = vadd.f32 %v2317, %v2323
      %v2326 = vmax.f32 %v2325, 0.0
      %v2327 = vpack.c.bf16 %v2326, %v2326
      %s2328 = scalar_lea.vmem %s244, 4
      %2329 = vst [vmem:[%s2328] sm:$0xf] %v2327
      %v2330 = vld [vmem:[%s1970] sm:$0xf]
      %v2331 = vld [vmem:[%s1970 + $0x4] sm:$0x1]
      %v2332 = vld [vmem:[%s1973] sm:$0xf]
      %v2333 = vld [vmem:[%s1973 + $0x4] sm:$0x1]
      %v2334 = vld [vmem:[%s2] sm:$0xf]
      %v2335 = vld [vmem:[%s2 + $0x4] sm:$0xf]
      %v2336 = vld [vmem:[%s2 + $0x8] sm:$0xf]
      %v2337 = vld [vmem:[%s2 + $0xc] sm:$0xf]
      %v2338 = vld [vmem:[%s2 + $0x10] sm:$0xf]
      %v2339 = vld [vmem:[%s2 + $0x14] sm:$0xf]
      %v2340 = vld [vmem:[%s2 + $0x18] sm:$0xf]
      %v2341 = vld [vmem:[%s2 + $0x1c] sm:$0xf]
      %v2342 = vld [vmem:[%s2 + $0x20] sm:$0xf]
      %v2343 = vld [vmem:[%s2 + $0x24] sm:$0xf]
      %v2344 = vld [vmem:[%s2 + $0x28] sm:$0xf]
      %v2345 = vld [vmem:[%s2 + $0x2c] sm:$0xf]
      %v2346 = vld [vmem:[%s2 + $0x30] sm:$0xf]
      %v2347 = vld [vmem:[%s2 + $0x34] sm:$0xf]
      %v2348 = vld [vmem:[%s2 + $0x38] sm:$0xf]
      %v2349 = vld [vmem:[%s2 + $0x3c] sm:$0xf]
      %v2352 = vunpack.c.l.b16 %v2330
      %v2353 = vunpack.c.l.b16 %v2331
      %v2354 = vpack.c.b16 %v2353, %v2352
      %v2372 = vunpack.c.l.b16 %v2334
      %v2373 = vunpack.c.l.b16 %v2335
      %v2374 = vunpack.c.l.b16 %v2336
      %v2375 = vunpack.c.l.b16 %v2337
      %v2376 = vunpack.c.l.b16 %v2338
      %v2377 = vunpack.c.l.b16 %v2339
      %v2378 = vunpack.c.l.b16 %v2340
      %v2379 = vunpack.c.l.b16 %v2341
      %v2380 = vunpack.c.l.b16 %v2342
      %v2381 = vunpack.c.l.b16 %v2343
      %v2382 = vunpack.c.l.b16 %v2344
      %v2383 = vunpack.c.l.b16 %v2345
      %v2384 = vunpack.c.l.b16 %v2346
      %v2385 = vunpack.c.l.b16 %v2347
      %v2386 = vunpack.c.l.b16 %v2348
      %v2387 = vunpack.c.l.b16 %v2349
      %v2388 = vpack.c.b16 %v2373, %v2372
      %v2389 = vpack.c.b16 %v2375, %v2374
      %v2390 = vpack.c.b16 %v2377, %v2376
      %v2391 = vpack.c.b16 %v2379, %v2378
      %v2392 = vpack.c.b16 %v2381, %v2380
      %v2393 = vpack.c.b16 %v2383, %v2382
      %v2394 = vpack.c.b16 %v2385, %v2384
      %v2395 = vpack.c.b16 %v2387, %v2386
      %2404 = vmatprep.subr.bf16.mxu0 0
      %2405 = vmatpush1.bf16.msra.mxu0 %v2388
      %2406 = vmatprep.subr.bf16.mxu0 0
      %2407 = vmatpush1.bf16.msra.mxu0 %v2389
      %2408 = vmatprep.subr.bf16.mxu0 0
      %2409 = vmatpush1.bf16.msra.mxu0 %v2390
      %2410 = vmatprep.subr.bf16.mxu0 0
      %2411 = vmatpush1.bf16.msra.mxu0 %v2391
      %2412 = vmatprep.subr.bf16.mxu0 0
      %2413 = vmatpush1.bf16.msra.mxu0 %v2392
      %2414 = vmatprep.subr.bf16.mxu0 0
      %2415 = vmatpush1.bf16.msra.mxu0 %v2393
      %2416 = vmatprep.subr.bf16.mxu0 0
      %2417 = vmatpush1.bf16.msra.mxu0 %v2394
      %2418 = vmatprep.subr.bf16.mxu0 0
      %2419 = vmatpush1.bf16.msra.mxu0 %v2395
      %2420 = vmatprep.subr.bf16.mxu0 0
      %2421 = vmatpush1.bf16.msra.mxu0 0
      %2422 = vmatprep.subr.bf16.mxu0 0
      %2423 = vmatpush1.bf16.msra.mxu0 0
      %2424 = vmatprep.subr.bf16.mxu0 0
      %2425 = vmatpush1.bf16.msra.mxu0 0
      %2426 = vmatprep.subr.bf16.mxu0 0
      %2427 = vmatpush1.bf16.msra.mxu0 0
      %2428 = vmatprep.subr.bf16.mxu0 0
      %2429 = vmatpush1.bf16.msra.mxu0 0
      %2430 = vmatprep.subr.bf16.mxu0 0
      %2431 = vmatpush1.bf16.msra.mxu0 0
      %2432 = vmatprep.subr.bf16.mxu0 0
      %2433 = vmatpush1.bf16.msra.mxu0 0
      %2434 = vmatprep.subr.bf16.mxu0 0
      %2435 = vmatpush1.bf16.msra.mxu0 0
      %2436 = vmatprep.mubr.bf16.mxu0 0
      %2437 = vmatmul.mubr.bf16.gmra.mrb[0].mxu0 %v2354
      %v2438 = vpop.f32.mrb[0].mxu0
      %v2439 = vadd.f32 0.0, %v2438
      %v2440 = vpop.f32.mrb[0].mxu0
      %v2441 = vpop.f32.mrb[0].mxu0
      %v2442 = vpop.f32.mrb[0].mxu0
      %2443 = vdwg.mxu0
      %v2444 = vadd.f32 %v2439, 0.0
      %v2445 = vld [vmem:[%s361] sm:$0xf]
      %v2446 = vld [vmem:[%s361 + $0x4] sm:$0xf]
      %v2447 = vld [vmem:[%s361 + $0x8] sm:$0xf]
      %v2448 = vld [vmem:[%s361 + $0xc] sm:$0xf]
      %v2449 = vld [vmem:[%s361 + $0x10] sm:$0xf]
      %v2450 = vld [vmem:[%s361 + $0x14] sm:$0xf]
      %v2451 = vld [vmem:[%s361 + $0x18] sm:$0xf]
      %v2452 = vld [vmem:[%s361 + $0x1c] sm:$0xf]
      %v2453 = vld [vmem:[%s361 + $0x20] sm:$0xf]
      %v2454 = vld [vmem:[%s361 + $0x24] sm:$0xf]
      %v2455 = vld [vmem:[%s361 + $0x28] sm:$0xf]
      %v2456 = vld [vmem:[%s361 + $0x2c] sm:$0xf]
      %v2457 = vld [vmem:[%s361 + $0x30] sm:$0xf]
      %v2458 = vld [vmem:[%s361 + $0x34] sm:$0xf]
      %v2459 = vld [vmem:[%s361 + $0x38] sm:$0xf]
      %v2460 = vld [vmem:[%s361 + $0x3c] sm:$0xf]
      %v2463 = vunpack.c.l.b16 %v2332
      %v2464 = vunpack.c.l.b16 %v2333
      %v2465 = vpack.c.b16 %v2464, %v2463
      %v2483 = vunpack.c.l.b16 %v2445
      %v2484 = vunpack.c.l.b16 %v2446
      %v2485 = vunpack.c.l.b16 %v2447
      %v2486 = vunpack.c.l.b16 %v2448
      %v2487 = vunpack.c.l.b16 %v2449
      %v2488 = vunpack.c.l.b16 %v2450
      %v2489 = vunpack.c.l.b16 %v2451
      %v2490 = vunpack.c.l.b16 %v2452
      %v2491 = vunpack.c.l.b16 %v2453
      %v2492 = vunpack.c.l.b16 %v2454
      %v2493 = vunpack.c.l.b16 %v2455
      %v2494 = vunpack.c.l.b16 %v2456
      %v2495 = vunpack.c.l.b16 %v2457
      %v2496 = vunpack.c.l.b16 %v2458
      %v2497 = vunpack.c.l.b16 %v2459
      %v2498 = vunpack.c.l.b16 %v2460
      %v2499 = vpack.c.b16 %v2484, %v2483
      %v2500 = vpack.c.b16 %v2486, %v2485
      %v2501 = vpack.c.b16 %v2488, %v2487
      %v2502 = vpack.c.b16 %v2490, %v2489
      %v2503 = vpack.c.b16 %v2492, %v2491
      %v2504 = vpack.c.b16 %v2494, %v2493
      %v2505 = vpack.c.b16 %v2496, %v2495
      %v2506 = vpack.c.b16 %v2498, %v2497
      %2515 = vmatprep.subr.bf16.mxu0 0
      %2516 = vmatpush1.bf16.msra.mxu0 %v2499
      %2517 = vmatprep.subr.bf16.mxu0 0
      %2518 = vmatpush1.bf16.msra.mxu0 %v2500
      %2519 = vmatprep.subr.bf16.mxu0 0
      %2520 = vmatpush1.bf16.msra.mxu0 %v2501
      %2521 = vmatprep.subr.bf16.mxu0 0
      %2522 = vmatpush1.bf16.msra.mxu0 %v2502
      %2523 = vmatprep.subr.bf16.mxu0 0
      %2524 = vmatpush1.bf16.msra.mxu0 %v2503
      %2525 = vmatprep.subr.bf16.mxu0 0
      %2526 = vmatpush1.bf16.msra.mxu0 %v2504
      %2527 = vmatprep.subr.bf16.mxu0 0
      %2528 = vmatpush1.bf16.msra.mxu0 %v2505
      %2529 = vmatprep.subr.bf16.mxu0 0
      %2530 = vmatpush1.bf16.msra.mxu0 %v2506
      %2531 = vmatprep.subr.bf16.mxu0 0
      %2532 = vmatpush1.bf16.msra.mxu0 0
      %2533 = vmatprep.subr.bf16.mxu0 0
      %2534 = vmatpush1.bf16.msra.mxu0 0
      %2535 = vmatprep.subr.bf16.mxu0 0
      %2536 = vmatpush1.bf16.msra.mxu0 0
      %2537 = vmatprep.subr.bf16.mxu0 0
      %2538 = vmatpush1.bf16.msra.mxu0 0
      %2539 = vmatprep.subr.bf16.mxu0 0
      %2540 = vmatpush1.bf16.msra.mxu0 0
      %2541 = vmatprep.subr.bf16.mxu0 0
      %2542 = vmatpush1.bf16.msra.mxu0 0
      %2543 = vmatprep.subr.bf16.mxu0 0
      %2544 = vmatpush1.bf16.msra.mxu0 0
      %2545 = vmatprep.subr.bf16.mxu0 0
      %2546 = vmatpush1.bf16.msra.mxu0 0
      %2547 = vmatprep.mubr.bf16.mxu0 0
      %2548 = vmatmul.mubr.bf16.gmra.mrb[0].mxu0 %v2465
      %v2549 = vpop.f32.mrb[0].mxu0
      %v2550 = vadd.f32 0.0, %v2549
      %v2551 = vpop.f32.mrb[0].mxu0
      %v2552 = vpop.f32.mrb[0].mxu0
      %v2553 = vpop.f32.mrb[0].mxu0
      %2554 = vdwg.mxu0
      %v2555 = vadd.f32 %v2444, %v2550
      %v2556 = vld [vmem:[%s473] sm:$0xf]
      %v2557 = vld [vmem:[%s473 + $0x4] sm:$0xf]
      %v2558 = vld [vmem:[%s473 + $0x8] sm:$0xf]
      %v2559 = vld [vmem:[%s473 + $0xc] sm:$0xf]
      %v2560 = vld [vmem:[%s473 + $0x10] sm:$0xf]
      %v2561 = vld [vmem:[%s473 + $0x14] sm:$0xf]
      %v2562 = vld [vmem:[%s473 + $0x18] sm:$0xf]
      %v2563 = vld [vmem:[%s473 + $0x1c] sm:$0xf]
      %v2564 = vld [vmem:[%s473 + $0x20] sm:$0xf]
      %v2565 = vld [vmem:[%s473 + $0x24] sm:$0xf]
      %v2566 = vld [vmem:[%s473 + $0x28] sm:$0xf]
      %v2567 = vld [vmem:[%s473 + $0x2c] sm:$0xf]
      %v2568 = vld [vmem:[%s473 + $0x30] sm:$0xf]
      %v2569 = vld [vmem:[%s473 + $0x34] sm:$0xf]
      %v2570 = vld [vmem:[%s473 + $0x38] sm:$0xf]
      %v2571 = vld [vmem:[%s473 + $0x3c] sm:$0xf]
      %v2588 = vunpack.c.l.b16 %v2556
      %v2589 = vunpack.c.l.b16 %v2557
      %v2590 = vunpack.c.l.b16 %v2558
      %v2591 = vunpack.c.l.b16 %v2559
      %v2592 = vunpack.c.l.b16 %v2560
      %v2593 = vunpack.c.l.b16 %v2561
      %v2594 = vunpack.c.l.b16 %v2562
      %v2595 = vunpack.c.l.b16 %v2563
      %v2596 = vunpack.c.l.b16 %v2564
      %v2597 = vunpack.c.l.b16 %v2565
      %v2598 = vunpack.c.l.b16 %v2566
      %v2599 = vunpack.c.l.b16 %v2567
      %v2600 = vunpack.c.l.b16 %v2568
      %v2601 = vunpack.c.l.b16 %v2569
      %v2602 = vunpack.c.l.b16 %v2570
      %v2603 = vunpack.c.l.b16 %v2571
      %v2604 = vpack.c.b16 %v2589, %v2588
      %v2605 = vpack.c.b16 %v2591, %v2590
      %v2606 = vpack.c.b16 %v2593, %v2592
      %v2607 = vpack.c.b16 %v2595, %v2594
      %v2608 = vpack.c.b16 %v2597, %v2596
      %v2609 = vpack.c.b16 %v2599, %v2598
      %v2610 = vpack.c.b16 %v2601, %v2600
      %v2611 = vpack.c.b16 %v2603, %v2602
      %2620 = vmatprep.subr.bf16.mxu0 0
      %2621 = vmatpush1.bf16.msra.mxu0 %v2604
      %2622 = vmatprep.subr.bf16.mxu0 0
      %2623 = vmatpush1.bf16.msra.mxu0 %v2605
      %2624 = vmatprep.subr.bf16.mxu0 0
      %2625 = vmatpush1.bf16.msra.mxu0 %v2606
      %2626 = vmatprep.subr.bf16.mxu0 0
      %2627 = vmatpush1.bf16.msra.mxu0 %v2607
      %2628 = vmatprep.subr.bf16.mxu0 0
      %2629 = vmatpush1.bf16.msra.mxu0 %v2608
      %2630 = vmatprep.subr.bf16.mxu0 0
      %2631 = vmatpush1.bf16.msra.mxu0 %v2609
      %2632 = vmatprep.subr.bf16.mxu0 0
      %2633 = vmatpush1.bf16.msra.mxu0 %v2610
      %2634 = vmatprep.subr.bf16.mxu0 0
      %2635 = vmatpush1.bf16.msra.mxu0 %v2611
      %2636 = vmatprep.subr.bf16.mxu0 0
      %2637 = vmatpush1.bf16.msra.mxu0 0
      %2638 = vmatprep.subr.bf16.mxu0 0
      %2639 = vmatpush1.bf16.msra.mxu0 0
      %2640 = vmatprep.subr.bf16.mxu0 0
      %2641 = vmatpush1.bf16.msra.mxu0 0
      %2642 = vmatprep.subr.bf16.mxu0 0
      %2643 = vmatpush1.bf16.msra.mxu0 0
      %2644 = vmatprep.subr.bf16.mxu0 0
      %2645 = vmatpush1.bf16.msra.mxu0 0
      %2646 = vmatprep.subr.bf16.mxu0 0
      %2647 = vmatpush1.bf16.msra.mxu0 0
      %2648 = vmatprep.subr.bf16.mxu0 0
      %2649 = vmatpush1.bf16.msra.mxu0 0
      %2650 = vmatprep.subr.bf16.mxu0 0
      %2651 = vmatpush1.bf16.msra.mxu0 0
      %2652 = vmatprep.mubr.bf16.mxu0 0
      %2653 = vmatmul.mubr.bf16.gmra.mrb[0].mxu0 %v2354
      %v2654 = vpop.f32.mrb[0].mxu0
      %v2655 = vadd.f32 0.0, %v2654
      %v2656 = vpop.f32.mrb[0].mxu0
      %v2657 = vpop.f32.mrb[0].mxu0
      %v2658 = vadd.f32 0.0, %v2657
      %v2659 = vpop.f32.mrb[0].mxu0
      %2660 = vdwg.mxu0
      %v2663 = vrot.slane %v2655, 1
      %v2664 = vrot.slane %v2658, 1
      %v2665 = vsel %vm581, %v2663, %v2664
      %v2667 = vadd.f32 %v2555, %v2665
      %s2668 = scalar_lea.vmem %s234, 40
      %v2669 = vld [vmem:[%s2668] sm:$0xf]
      %v2670 = vld [vmem:[%s2668 + $0x4] sm:$0x1]
      %s2671 = scalar_lea.vmem %s239, 40
      %v2672 = vld [vmem:[%s2671] sm:$0xf]
      %v2673 = vld [vmem:[%s2671 + $0x4] sm:$0x1]
      %v2674 = vld [vmem:[%s593] sm:$0xf]
      %v2675 = vld [vmem:[%s593 + $0x4] sm:$0xf]
      %v2676 = vld [vmem:[%s593 + $0x8] sm:$0xf]
      %v2677 = vld [vmem:[%s593 + $0xc] sm:$0xf]
      %v2678 = vld [vmem:[%s593 + $0x10] sm:$0xf]
      %v2679 = vld [vmem:[%s593 + $0x14] sm:$0xf]
      %v2680 = vld [vmem:[%s593 + $0x18] sm:$0xf]
      %v2681 = vld [vmem:[%s593 + $0x1c] sm:$0xf]
      %v2682 = vld [vmem:[%s593 + $0x20] sm:$0xf]
      %v2683 = vld [vmem:[%s593 + $0x24] sm:$0xf]
      %v2684 = vld [vmem:[%s593 + $0x28] sm:$0xf]
      %v2685 = vld [vmem:[%s593 + $0x2c] sm:$0xf]
      %v2686 = vld [vmem:[%s593 + $0x30] sm:$0xf]
      %v2687 = vld [vmem:[%s593 + $0x34] sm:$0xf]
      %v2688 = vld [vmem:[%s593 + $0x38] sm:$0xf]
      %v2689 = vld [vmem:[%s593 + $0x3c] sm:$0xf]
      %v2692 = vunpack.c.l.b16 %v2669
      %v2693 = vunpack.c.l.b16 %v2670
      %v2694 = vpack.c.b16 %v2693, %v2692
      %v2712 = vunpack.c.l.b16 %v2674
      %v2713 = vunpack.c.l.b16 %v2675
      %v2714 = vunpack.c.l.b16 %v2676
      %v2715 = vunpack.c.l.b16 %v2677
      %v2716 = vunpack.c.l.b16 %v2678
      %v2717 = vunpack.c.l.b16 %v2679
      %v2718 = vunpack.c.l.b16 %v2680
      %v2719 = vunpack.c.l.b16 %v2681
      %v2720 = vunpack.c.l.b16 %v2682
      %v2721 = vunpack.c.l.b16 %v2683
      %v2722 = vunpack.c.l.b16 %v2684
      %v2723 = vunpack.c.l.b16 %v2685
      %v2724 = vunpack.c.l.b16 %v2686
      %v2725 = vunpack.c.l.b16 %v2687
      %v2726 = vunpack.c.l.b16 %v2688
      %v2727 = vunpack.c.l.b16 %v2689
      %v2728 = vpack.c.b16 %v2713, %v2712
      %v2729 = vpack.c.b16 %v2715, %v2714
      %v2730 = vpack.c.b16 %v2717, %v2716
      %v2731 = vpack.c.b16 %v2719, %v2718
      %v2732 = vpack.c.b16 %v2721, %v2720
      %v2733 = vpack.c.b16 %v2723, %v2722
      %v2734 = vpack.c.b16 %v2725, %v2724
      %v2735 = vpack.c.b16 %v2727, %v2726
      %2744 = vmatprep.subr.bf16.mxu0 0
      %2745 = vmatpush1.bf16.msra.mxu0 %v2728
      %2746 = vmatprep.subr.bf16.mxu0 0
      %2747 = vmatpush1.bf16.msra.mxu0 %v2729
      %2748 = vmatprep.subr.bf16.mxu0 0
      %2749 = vmatpush1.bf16.msra.mxu0 %v2730
      %2750 = vmatprep.subr.bf16.mxu0 0
      %2751 = vmatpush1.bf16.msra.mxu0 %v2731
      %2752 = vmatprep.subr.bf16.mxu0 0
      %2753 = vmatpush1.bf16.msra.mxu0 %v2732
      %2754 = vmatprep.subr.bf16.mxu0 0
      %2755 = vmatpush1.bf16.msra.mxu0 %v2733
      %2756 = vmatprep.subr.bf16.mxu0 0
      %2757 = vmatpush1.bf16.msra.mxu0 %v2734
      %2758 = vmatprep.subr.bf16.mxu0 0
      %2759 = vmatpush1.bf16.msra.mxu0 %v2735
      %2760 = vmatprep.subr.bf16.mxu0 0
      %2761 = vmatpush1.bf16.msra.mxu0 0
      %2762 = vmatprep.subr.bf16.mxu0 0
      %2763 = vmatpush1.bf16.msra.mxu0 0
      %2764 = vmatprep.subr.bf16.mxu0 0
      %2765 = vmatpush1.bf16.msra.mxu0 0
      %2766 = vmatprep.subr.bf16.mxu0 0
      %2767 = vmatpush1.bf16.msra.mxu0 0
      %2768 = vmatprep.subr.bf16.mxu0 0
      %2769 = vmatpush1.bf16.msra.mxu0 0
      %2770 = vmatprep.subr.bf16.mxu0 0
      %2771 = vmatpush1.bf16.msra.mxu0 0
      %2772 = vmatprep.subr.bf16.mxu0 0
      %2773 = vmatpush1.bf16.msra.mxu0 0
      %2774 = vmatprep.subr.bf16.mxu0 0
      %2775 = vmatpush1.bf16.msra.mxu0 0
      %2776 = vmatprep.mubr.bf16.mxu0 0
      %2777 = vmatmul.mubr.bf16.gmra.mrb[0].mxu0 %v2694
      %v2778 = vpop.f32.mrb[0].mxu0
      %v2779 = vadd.f32 0.0, %v2778
      %v2780 = vpop.f32.mrb[0].mxu0
      %v2781 = vpop.f32.mrb[0].mxu0
      %v2782 = vpop.f32.mrb[0].mxu0
      %2783 = vdwg.mxu0
      %v2784 = vadd.f32 %v2667, %v2779
      %v2785 = vld [vmem:[%s705] sm:$0xf]
      %v2786 = vld [vmem:[%s705 + $0x4] sm:$0xf]
      %v2787 = vld [vmem:[%s705 + $0x8] sm:$0xf]
      %v2788 = vld [vmem:[%s705 + $0xc] sm:$0xf]
      %v2789 = vld [vmem:[%s705 + $0x10] sm:$0xf]
      %v2790 = vld [vmem:[%s705 + $0x14] sm:$0xf]
      %v2791 = vld [vmem:[%s705 + $0x18] sm:$0xf]
      %v2792 = vld [vmem:[%s705 + $0x1c] sm:$0xf]
      %v2793 = vld [vmem:[%s705 + $0x20] sm:$0xf]
      %v2794 = vld [vmem:[%s705 + $0x24] sm:$0xf]
      %v2795 = vld [vmem:[%s705 + $0x28] sm:$0xf]
      %v2796 = vld [vmem:[%s705 + $0x2c] sm:$0xf]
      %v2797 = vld [vmem:[%s705 + $0x30] sm:$0xf]
      %v2798 = vld [vmem:[%s705 + $0x34] sm:$0xf]
      %v2799 = vld [vmem:[%s705 + $0x38] sm:$0xf]
      %v2800 = vld [vmem:[%s705 + $0x3c] sm:$0xf]
      %v2803 = vunpack.c.l.b16 %v2672
      %v2804 = vunpack.c.l.b16 %v2673
      %v2805 = vpack.c.b16 %v2804, %v2803
      %v2823 = vunpack.c.l.b16 %v2785
      %v2824 = vunpack.c.l.b16 %v2786
      %v2825 = vunpack.c.l.b16 %v2787
      %v2826 = vunpack.c.l.b16 %v2788
      %v2827 = vunpack.c.l.b16 %v2789
      %v2828 = vunpack.c.l.b16 %v2790
      %v2829 = vunpack.c.l.b16 %v2791
      %v2830 = vunpack.c.l.b16 %v2792
      %v2831 = vunpack.c.l.b16 %v2793
      %v2832 = vunpack.c.l.b16 %v2794
      %v2833 = vunpack.c.l.b16 %v2795
      %v2834 = vunpack.c.l.b16 %v2796
      %v2835 = vunpack.c.l.b16 %v2797
      %v2836 = vunpack.c.l.b16 %v2798
      %v2837 = vunpack.c.l.b16 %v2799
      %v2838 = vunpack.c.l.b16 %v2800
      %v2839 = vpack.c.b16 %v2824, %v2823
      %v2840 = vpack.c.b16 %v2826, %v2825
      %v2841 = vpack.c.b16 %v2828, %v2827
      %v2842 = vpack.c.b16 %v2830, %v2829
      %v2843 = vpack.c.b16 %v2832, %v2831
      %v2844 = vpack.c.b16 %v2834, %v2833
      %v2845 = vpack.c.b16 %v2836, %v2835
      %v2846 = vpack.c.b16 %v2838, %v2837
      %2855 = vmatprep.subr.bf16.mxu0 0
      %2856 = vmatpush1.bf16.msra.mxu0 %v2839
      %2857 = vmatprep.subr.bf16.mxu0 0
      %2858 = vmatpush1.bf16.msra.mxu0 %v2840
      %2859 = vmatprep.subr.bf16.mxu0 0
      %2860 = vmatpush1.bf16.msra.mxu0 %v2841
      %2861 = vmatprep.subr.bf16.mxu0 0
      %2862 = vmatpush1.bf16.msra.mxu0 %v2842
      %2863 = vmatprep.subr.bf16.mxu0 0
      %2864 = vmatpush1.bf16.msra.mxu0 %v2843
      %2865 = vmatprep.subr.bf16.mxu0 0
      %2866 = vmatpush1.bf16.msra.mxu0 %v2844
      %2867 = vmatprep.subr.bf16.mxu0 0
      %2868 = vmatpush1.bf16.msra.mxu0 %v2845
      %2869 = vmatprep.subr.bf16.mxu0 0
      %2870 = vmatpush1.bf16.msra.mxu0 %v2846
      %2871 = vmatprep.subr.bf16.mxu0 0
      %2872 = vmatpush1.bf16.msra.mxu0 0
      %2873 = vmatprep.subr.bf16.mxu0 0
      %2874 = vmatpush1.bf16.msra.mxu0 0
      %2875 = vmatprep.subr.bf16.mxu0 0
      %2876 = vmatpush1.bf16.msra.mxu0 0
      %2877 = vmatprep.subr.bf16.mxu0 0
      %2878 = vmatpush1.bf16.msra.mxu0 0
      %2879 = vmatprep.subr.bf16.mxu0 0
      %2880 = vmatpush1.bf16.msra.mxu0 0
      %2881 = vmatprep.subr.bf16.mxu0 0
      %2882 = vmatpush1.bf16.msra.mxu0 0
      %2883 = vmatprep.subr.bf16.mxu0 0
      %2884 = vmatpush1.bf16.msra.mxu0 0
      %2885 = vmatprep.subr.bf16.mxu0 0
      %2886 = vmatpush1.bf16.msra.mxu0 0
      %2887 = vmatprep.mubr.bf16.mxu0 0
      %2888 = vmatmul.mubr.bf16.gmra.mrb[0].mxu0 %v2805
      %v2889 = vpop.f32.mrb[0].mxu0
      %v2890 = vadd.f32 0.0, %v2889
      %v2891 = vpop.f32.mrb[0].mxu0
      %v2892 = vpop.f32.mrb[0].mxu0
      %v2893 = vpop.f32.mrb[0].mxu0
      %2894 = vdwg.mxu0
      %v2895 = vadd.f32 %v2784, %v2890
      %v2896 = vld [vmem:[%s817] sm:$0xf]
      %v2897 = vld [vmem:[%s817 + $0x4] sm:$0xf]
      %v2898 = vld [vmem:[%s817 + $0x8] sm:$0xf]
      %v2899 = vld [vmem:[%s817 + $0xc] sm:$0xf]
      %v2900 = vld [vmem:[%s817 + $0x10] sm:$0xf]
      %v2901 = vld [vmem:[%s817 + $0x14] sm:$0xf]
      %v2902 = vld [vmem:[%s817 + $0x18] sm:$0xf]
      %v2903 = vld [vmem:[%s817 + $0x1c] sm:$0xf]
      %v2904 = vld [vmem:[%s817 + $0x20] sm:$0xf]
      %v2905 = vld [vmem:[%s817 + $0x24] sm:$0xf]
      %v2906 = vld [vmem:[%s817 + $0x28] sm:$0xf]
      %v2907 = vld [vmem:[%s817 + $0x2c] sm:$0xf]
      %v2908 = vld [vmem:[%s817 + $0x30] sm:$0xf]
      %v2909 = vld [vmem:[%s817 + $0x34] sm:$0xf]
      %v2910 = vld [vmem:[%s817 + $0x38] sm:$0xf]
      %v2911 = vld [vmem:[%s817 + $0x3c] sm:$0xf]
      %v2928 = vunpack.c.l.b16 %v2896
      %v2929 = vunpack.c.l.b16 %v2897
      %v2930 = vunpack.c.l.b16 %v2898
      %v2931 = vunpack.c.l.b16 %v2899
      %v2932 = vunpack.c.l.b16 %v2900
      %v2933 = vunpack.c.l.b16 %v2901
      %v2934 = vunpack.c.l.b16 %v2902
      %v2935 = vunpack.c.l.b16 %v2903
      %v2936 = vunpack.c.l.b16 %v2904
      %v2937 = vunpack.c.l.b16 %v2905
      %v2938 = vunpack.c.l.b16 %v2906
      %v2939 = vunpack.c.l.b16 %v2907
      %v2940 = vunpack.c.l.b16 %v2908
      %v2941 = vunpack.c.l.b16 %v2909
      %v2942 = vunpack.c.l.b16 %v2910
      %v2943 = vunpack.c.l.b16 %v2911
      %v2944 = vpack.c.b16 %v2929, %v2928
      %v2945 = vpack.c.b16 %v2931, %v2930
      %v2946 = vpack.c.b16 %v2933, %v2932
      %v2947 = vpack.c.b16 %v2935, %v2934
      %v2948 = vpack.c.b16 %v2937, %v2936
      %v2949 = vpack.c.b16 %v2939, %v2938
      %v2950 = vpack.c.b16 %v2941, %v2940
      %v2951 = vpack.c.b16 %v2943, %v2942
      %2960 = vmatprep.subr.bf16.mxu0 0
      %2961 = vmatpush1.bf16.msra.mxu0 %v2944
      %2962 = vmatprep.subr.bf16.mxu0 0
      %2963 = vmatpush1.bf16.msra.mxu0 %v2945
      %2964 = vmatprep.subr.bf16.mxu0 0
      %2965 = vmatpush1.bf16.msra.mxu0 %v2946
      %2966 = vmatprep.subr.bf16.mxu0 0
      %2967 = vmatpush1.bf16.msra.mxu0 %v2947
      %2968 = vmatprep.subr.bf16.mxu0 0
      %2969 = vmatpush1.bf16.msra.mxu0 %v2948
      %2970 = vmatprep.subr.bf16.mxu0 0
      %2971 = vmatpush1.bf16.msra.mxu0 %v2949
      %2972 = vmatprep.subr.bf16.mxu0 0
      %2973 = vmatpush1.bf16.msra.mxu0 %v2950
      %2974 = vmatprep.subr.bf16.mxu0 0
      %2975 = vmatpush1.bf16.msra.mxu0 %v2951
      %2976 = vmatprep.subr.bf16.mxu0 0
      %2977 = vmatpush1.bf16.msra.mxu0 0
      %2978 = vmatprep.subr.bf16.mxu0 0
      %2979 = vmatpush1.bf16.msra.mxu0 0
      %2980 = vmatprep.subr.bf16.mxu0 0
      %2981 = vmatpush1.bf16.msra.mxu0 0
      %2982 = vmatprep.subr.bf16.mxu0 0
      %2983 = vmatpush1.bf16.msra.mxu0 0
      %2984 = vmatprep.subr.bf16.mxu0 0
      %2985 = vmatpush1.bf16.msra.mxu0 0
      %2986 = vmatprep.subr.bf16.mxu0 0
      %2987 = vmatpush1.bf16.msra.mxu0 0
      %2988 = vmatprep.subr.bf16.mxu0 0
      %2989 = vmatpush1.bf16.msra.mxu0 0
      %2990 = vmatprep.subr.bf16.mxu0 0
      %2991 = vmatpush1.bf16.msra.mxu0 0
      %2992 = vmatprep.mubr.bf16.mxu0 0
      %2993 = vmatmul.mubr.bf16.gmra.mrb[0].mxu0 %v2694
      %v2994 = vpop.f32.mrb[0].mxu0
      %v2995 = vadd.f32 0.0, %v2994
      %v2996 = vpop.f32.mrb[0].mxu0
      %v2997 = vpop.f32.mrb[0].mxu0
      %v2998 = vadd.f32 0.0, %v2997
      %v2999 = vpop.f32.mrb[0].mxu0
      %3000 = vdwg.mxu0
      %v3003 = vrot.slane %v2995, 1
      %v3004 = vrot.slane %v2998, 1
      %v3005 = vsel %vm581, %v3003, %v3004
      %v3007 = vadd.f32 %v2895, %v3005
      %s3008 = scalar_lea.vmem %s234, 48
      %v3009 = vld [vmem:[%s3008] sm:$0xf]
      %v3010 = vld [vmem:[%s3008 + $0x4] sm:$0x1]
      %s3011 = scalar_lea.vmem %s239, 48
      %v3012 = vld [vmem:[%s3011] sm:$0xf]
      %v3013 = vld [vmem:[%s3011 + $0x4] sm:$0x1]
      %v3014 = vld [vmem:[%s936] sm:$0xf]
      %v3015 = vld [vmem:[%s936 + $0x4] sm:$0xf]
      %v3016 = vld [vmem:[%s936 + $0x8] sm:$0xf]
      %v3017 = vld [vmem:[%s936 + $0xc] sm:$0xf]
      %v3018 = vld [vmem:[%s936 + $0x10] sm:$0xf]
      %v3019 = vld [vmem:[%s936 + $0x14] sm:$0xf]
      %v3020 = vld [vmem:[%s936 + $0x18] sm:$0xf]
      %v3021 = vld [vmem:[%s936 + $0x1c] sm:$0xf]
      %v3022 = vld [vmem:[%s936 + $0x20] sm:$0xf]
      %v3023 = vld [vmem:[%s936 + $0x24] sm:$0xf]
      %v3024 = vld [vmem:[%s936 + $0x28] sm:$0xf]
      %v3025 = vld [vmem:[%s936 + $0x2c] sm:$0xf]
      %v3026 = vld [vmem:[%s936 + $0x30] sm:$0xf]
      %v3027 = vld [vmem:[%s936 + $0x34] sm:$0xf]
      %v3028 = vld [vmem:[%s936 + $0x38] sm:$0xf]
      %v3029 = vld [vmem:[%s936 + $0x3c] sm:$0xf]
      %v3032 = vunpack.c.l.b16 %v3009
      %v3033 = vunpack.c.l.b16 %v3010
      %v3034 = vpack.c.b16 %v3033, %v3032
      %v3052 = vunpack.c.l.b16 %v3014
      %v3053 = vunpack.c.l.b16 %v3015
      %v3054 = vunpack.c.l.b16 %v3016
      %v3055 = vunpack.c.l.b16 %v3017
      %v3056 = vunpack.c.l.b16 %v3018
      %v3057 = vunpack.c.l.b16 %v3019
      %v3058 = vunpack.c.l.b16 %v3020
      %v3059 = vunpack.c.l.b16 %v3021
      %v3060 = vunpack.c.l.b16 %v3022
      %v3061 = vunpack.c.l.b16 %v3023
      %v3062 = vunpack.c.l.b16 %v3024
      %v3063 = vunpack.c.l.b16 %v3025
      %v3064 = vunpack.c.l.b16 %v3026
      %v3065 = vunpack.c.l.b16 %v3027
      %v3066 = vunpack.c.l.b16 %v3028
      %v3067 = vunpack.c.l.b16 %v3029
      %v3068 = vpack.c.b16 %v3053, %v3052
      %v3069 = vpack.c.b16 %v3055, %v3054
      %v3070 = vpack.c.b16 %v3057, %v3056
      %v3071 = vpack.c.b16 %v3059, %v3058
      %v3072 = vpack.c.b16 %v3061, %v3060
      %v3073 = vpack.c.b16 %v3063, %v3062
      %v3074 = vpack.c.b16 %v3065, %v3064
      %v3075 = vpack.c.b16 %v3067, %v3066
      %3084 = vmatprep.subr.bf16.mxu0 0
      %3085 = vmatpush1.bf16.msra.mxu0 %v3068
      %3086 = vmatprep.subr.bf16.mxu0 0
      %3087 = vmatpush1.bf16.msra.mxu0 %v3069
      %3088 = vmatprep.subr.bf16.mxu0 0
      %3089 = vmatpush1.bf16.msra.mxu0 %v3070
      %3090 = vmatprep.subr.bf16.mxu0 0
      %3091 = vmatpush1.bf16.msra.mxu0 %v3071
      %3092 = vmatprep.subr.bf16.mxu0 0
      %3093 = vmatpush1.bf16.msra.mxu0 %v3072
      %3094 = vmatprep.subr.bf16.mxu0 0
      %3095 = vmatpush1.bf16.msra.mxu0 %v3073
      %3096 = vmatprep.subr.bf16.mxu0 0
      %3097 = vmatpush1.bf16.msra.mxu0 %v3074
      %3098 = vmatprep.subr.bf16.mxu0 0
      %3099 = vmatpush1.bf16.msra.mxu0 %v3075
      %3100 = vmatprep.subr.bf16.mxu0 0
      %3101 = vmatpush1.bf16.msra.mxu0 0
      %3102 = vmatprep.subr.bf16.mxu0 0
      %3103 = vmatpush1.bf16.msra.mxu0 0
      %3104 = vmatprep.subr.bf16.mxu0 0
      %3105 = vmatpush1.bf16.msra.mxu0 0
      %3106 = vmatprep.subr.bf16.mxu0 0
      %3107 = vmatpush1.bf16.msra.mxu0 0
      %3108 = vmatprep.subr.bf16.mxu0 0
      %3109 = vmatpush1.bf16.msra.mxu0 0
      %3110 = vmatprep.subr.bf16.mxu0 0
      %3111 = vmatpush1.bf16.msra.mxu0 0
      %3112 = vmatprep.subr.bf16.mxu0 0
      %3113 = vmatpush1.bf16.msra.mxu0 0
      %3114 = vmatprep.subr.bf16.mxu0 0
      %3115 = vmatpush1.bf16.msra.mxu0 0
      %3116 = vmatprep.mubr.bf16.mxu0 0
      %3117 = vmatmul.mubr.bf16.gmra.mrb[0].mxu0 %v3034
      %v3118 = vpop.f32.mrb[0].mxu0
      %v3119 = vadd.f32 0.0, %v3118
      %v3120 = vpop.f32.mrb[0].mxu0
      %v3121 = vpop.f32.mrb[0].mxu0
      %v3122 = vpop.f32.mrb[0].mxu0
      %3123 = vdwg.mxu0
      %v3124 = vadd.f32 %v3007, %v3119
      %v3125 = vld [vmem:[%s1048] sm:$0xf]
      %v3126 = vld [vmem:[%s1048 + $0x4] sm:$0xf]
      %v3127 = vld [vmem:[%s1048 + $0x8] sm:$0xf]
      %v3128 = vld [vmem:[%s1048 + $0xc] sm:$0xf]
      %v3129 = vld [vmem:[%s1048 + $0x10] sm:$0xf]
      %v3130 = vld [vmem:[%s1048 + $0x14] sm:$0xf]
      %v3131 = vld [vmem:[%s1048 + $0x18] sm:$0xf]
      %v3132 = vld [vmem:[%s1048 + $0x1c] sm:$0xf]
      %v3133 = vld [vmem:[%s1048 + $0x20] sm:$0xf]
      %v3134 = vld [vmem:[%s1048 + $0x24] sm:$0xf]
      %v3135 = vld [vmem:[%s1048 + $0x28] sm:$0xf]
      %v3136 = vld [vmem:[%s1048 + $0x2c] sm:$0xf]
      %v3137 = vld [vmem:[%s1048 + $0x30] sm:$0xf]
      %v3138 = vld [vmem:[%s1048 + $0x34] sm:$0xf]
      %v3139 = vld [vmem:[%s1048 + $0x38] sm:$0xf]
      %v3140 = vld [vmem:[%s1048 + $0x3c] sm:$0xf]
      %v3143 = vunpack.c.l.b16 %v3012
      %v3144 = vunpack.c.l.b16 %v3013
      %v3145 = vpack.c.b16 %v3144, %v3143
      %v3163 = vunpack.c.l.b16 %v3125
      %v3164 = vunpack.c.l.b16 %v3126
      %v3165 = vunpack.c.l.b16 %v3127
      %v3166 = vunpack.c.l.b16 %v3128
      %v3167 = vunpack.c.l.b16 %v3129
      %v3168 = vunpack.c.l.b16 %v3130
      %v3169 = vunpack.c.l.b16 %v3131
      %v3170 = vunpack.c.l.b16 %v3132
      %v3171 = vunpack.c.l.b16 %v3133
      %v3172 = vunpack.c.l.b16 %v3134
      %v3173 = vunpack.c.l.b16 %v3135
      %v3174 = vunpack.c.l.b16 %v3136
      %v3175 = vunpack.c.l.b16 %v3137
      %v3176 = vunpack.c.l.b16 %v3138
      %v3177 = vunpack.c.l.b16 %v3139
      %v3178 = vunpack.c.l.b16 %v3140
      %v3179 = vpack.c.b16 %v3164, %v3163
      %v3180 = vpack.c.b16 %v3166, %v3165
      %v3181 = vpack.c.b16 %v3168, %v3167
      %v3182 = vpack.c.b16 %v3170, %v3169
      %v3183 = vpack.c.b16 %v3172, %v3171
      %v3184 = vpack.c.b16 %v3174, %v3173
      %v3185 = vpack.c.b16 %v3176, %v3175
      %v3186 = vpack.c.b16 %v3178, %v3177
      %3195 = vmatprep.subr.bf16.mxu0 0
      %3196 = vmatpush1.bf16.msra.mxu0 %v3179
      %3197 = vmatprep.subr.bf16.mxu0 0
      %3198 = vmatpush1.bf16.msra.mxu0 %v3180
      %3199 = vmatprep.subr.bf16.mxu0 0
      %3200 = vmatpush1.bf16.msra.mxu0 %v3181
      %3201 = vmatprep.subr.bf16.mxu0 0
      %3202 = vmatpush1.bf16.msra.mxu0 %v3182
      %3203 = vmatprep.subr.bf16.mxu0 0
      %3204 = vmatpush1.bf16.msra.mxu0 %v3183
      %3205 = vmatprep.subr.bf16.mxu0 0
      %3206 = vmatpush1.bf16.msra.mxu0 %v3184
      %3207 = vmatprep.subr.bf16.mxu0 0
      %3208 = vmatpush1.bf16.msra.mxu0 %v3185
      %3209 = vmatprep.subr.bf16.mxu0 0
      %3210 = vmatpush1.bf16.msra.mxu0 %v3186
      %3211 = vmatprep.subr.bf16.mxu0 0
      %3212 = vmatpush1.bf16.msra.mxu0 0
      %3213 = vmatprep.subr.bf16.mxu0 0
      %3214 = vmatpush1.bf16.msra.mxu0 0
      %3215 = vmatprep.subr.bf16.mxu0 0
      %3216 = vmatpush1.bf16.msra.mxu0 0
      %3217 = vmatprep.subr.bf16.mxu0 0
      %3218 = vmatpush1.bf16.msra.mxu0 0
      %3219 = vmatprep.subr.bf16.mxu0 0
      %3220 = vmatpush1.bf16.msra.mxu0 0
      %3221 = vmatprep.subr.bf16.mxu0 0
      %3222 = vmatpush1.bf16.msra.mxu0 0
      %3223 = vmatprep.subr.bf16.mxu0 0
      %3224 = vmatpush1.bf16.msra.mxu0 0
      %3225 = vmatprep.subr.bf16.mxu0 0
      %3226 = vmatpush1.bf16.msra.mxu0 0
      %3227 = vmatprep.mubr.bf16.mxu0 0
      %3228 = vmatmul.mubr.bf16.gmra.mrb[0].mxu0 %v3145
      %v3229 = vpop.f32.mrb[0].mxu0
      %v3230 = vadd.f32 0.0, %v3229
      %v3231 = vpop.f32.mrb[0].mxu0
      %v3232 = vpop.f32.mrb[0].mxu0
      %v3233 = vpop.f32.mrb[0].mxu0
      %3234 = vdwg.mxu0
      %v3235 = vadd.f32 %v3124, %v3230
      %v3236 = vld [vmem:[%s1160] sm:$0xf]
      %v3237 = vld [vmem:[%s1160 + $0x4] sm:$0xf]
      %v3238 = vld [vmem:[%s1160 + $0x8] sm:$0xf]
      %v3239 = vld [vmem:[%s1160 + $0xc] sm:$0xf]
      %v3240 = vld [vmem:[%s1160 + $0x10] sm:$0xf]
      %v3241 = vld [vmem:[%s1160 + $0x14] sm:$0xf]
      %v3242 = vld [vmem:[%s1160 + $0x18] sm:$0xf]
      %v3243 = vld [vmem:[%s1160 + $0x1c] sm:$0xf]
      %v3244 = vld [vmem:[%s1160 + $0x20] sm:$0xf]
      %v3245 = vld [vmem:[%s1160 + $0x24] sm:$0xf]
      %v3246 = vld [vmem:[%s1160 + $0x28] sm:$0xf]
      %v3247 = vld [vmem:[%s1160 + $0x2c] sm:$0xf]
      %v3248 = vld [vmem:[%s1160 + $0x30] sm:$0xf]
      %v3249 = vld [vmem:[%s1160 + $0x34] sm:$0xf]
      %v3250 = vld [vmem:[%s1160 + $0x38] sm:$0xf]
      %v3251 = vld [vmem:[%s1160 + $0x3c] sm:$0xf]
      %v3268 = vunpack.c.l.b16 %v3236
      %v3269 = vunpack.c.l.b16 %v3237
      %v3270 = vunpack.c.l.b16 %v3238
      %v3271 = vunpack.c.l.b16 %v3239
      %v3272 = vunpack.c.l.b16 %v3240
      %v3273 = vunpack.c.l.b16 %v3241
      %v3274 = vunpack.c.l.b16 %v3242
      %v3275 = vunpack.c.l.b16 %v3243
      %v3276 = vunpack.c.l.b16 %v3244
      %v3277 = vunpack.c.l.b16 %v3245
      %v3278 = vunpack.c.l.b16 %v3246
      %v3279 = vunpack.c.l.b16 %v3247
      %v3280 = vunpack.c.l.b16 %v3248
      %v3281 = vunpack.c.l.b16 %v3249
      %v3282 = vunpack.c.l.b16 %v3250
      %v3283 = vunpack.c.l.b16 %v3251
      %v3284 = vpack.c.b16 %v3269, %v3268
      %v3285 = vpack.c.b16 %v3271, %v3270
      %v3286 = vpack.c.b16 %v3273, %v3272
      %v3287 = vpack.c.b16 %v3275, %v3274
      %v3288 = vpack.c.b16 %v3277, %v3276
      %v3289 = vpack.c.b16 %v3279, %v3278
      %v3290 = vpack.c.b16 %v3281, %v3280
      %v3291 = vpack.c.b16 %v3283, %v3282
      %3300 = vmatprep.subr.bf16.mxu0 0
      %3301 = vmatpush1.bf16.msra.mxu0 %v3284
      %3302 = vmatprep.subr.bf16.mxu0 0
      %3303 = vmatpush1.bf16.msra.mxu0 %v3285
      %3304 = vmatprep.subr.bf16.mxu0 0
      %3305 = vmatpush1.bf16.msra.mxu0 %v3286
      %3306 = vmatprep.subr.bf16.mxu0 0
      %3307 = vmatpush1.bf16.msra.mxu0 %v3287
      %3308 = vmatprep.subr.bf16.mxu0 0
      %3309 = vmatpush1.bf16.msra.mxu0 %v3288
      %3310 = vmatprep.subr.bf16.mxu0 0
      %3311 = vmatpush1.bf16.msra.mxu0 %v3289
      %3312 = vmatprep.subr.bf16.mxu0 0
      %3313 = vmatpush1.bf16.msra.mxu0 %v3290
      %3314 = vmatprep.subr.bf16.mxu0 0
      %3315 = vmatpush1.bf16.msra.mxu0 %v3291
      %3316 = vmatprep.subr.bf16.mxu0 0
      %3317 = vmatpush1.bf16.msra.mxu0 0
      %3318 = vmatprep.subr.bf16.mxu0 0
      %3319 = vmatpush1.bf16.msra.mxu0 0
      %3320 = vmatprep.subr.bf16.mxu0 0
      %3321 = vmatpush1.bf16.msra.mxu0 0
      %3322 = vmatprep.subr.bf16.mxu0 0
      %3323 = vmatpush1.bf16.msra.mxu0 0
      %3324 = vmatprep.subr.bf16.mxu0 0
      %3325 = vmatpush1.bf16.msra.mxu0 0
      %3326 = vmatprep.subr.bf16.mxu0 0
      %3327 = vmatpush1.bf16.msra.mxu0 0
      %3328 = vmatprep.subr.bf16.mxu0 0
      %3329 = vmatpush1.bf16.msra.mxu0 0
      %3330 = vmatprep.subr.bf16.mxu0 0
      %3331 = vmatpush1.bf16.msra.mxu0 0
      %3332 = vmatprep.mubr.bf16.mxu0 0
      %3333 = vmatmul.mubr.bf16.gmra.mrb[0].mxu0 %v3034
      %v3334 = vpop.f32.mrb[0].mxu0
      %v3335 = vadd.f32 0.0, %v3334
      %v3336 = vpop.f32.mrb[0].mxu0
      %v3337 = vpop.f32.mrb[0].mxu0
      %v3338 = vadd.f32 0.0, %v3337
      %v3339 = vpop.f32.mrb[0].mxu0
      %3340 = vdwg.mxu0
      %v3343 = vrot.slane %v3335, 1
      %v3344 = vrot.slane %v3338, 1
      %v3345 = vsel %vm581, %v3343, %v3344
      %v3347 = vadd.f32 %v3235, %v3345
      %v3348 = vld [vmem:[%s3] sm:$0x1]
      %v3350 = vlaneseq
      %v3351 = vshrl.u32 %v3350, 7
      %v3352 = vsub.s32 0, %v3351
      %v3353 = vrot.slane %v3348, %v3352
      %v3355 = vmul.f32 %v3347, %v3353
      %v3356 = vld [vmem:[%s4] sm:$0x1]
      %v3358 = vlaneseq
      %v3359 = vshrl.u32 %v3358, 7
      %v3360 = vsub.s32 0, %v3359
      %v3361 = vrot.slane %v3356, %v3360
      %v3363 = vadd.f32 %v3355, %v3361
      %v3364 = vmax.f32 %v3363, 0.0
      %v3365 = vpack.c.bf16 %v3364, %v3364
      %s3366 = scalar_lea.vmem %s244, 8
      %3367 = vst [vmem:[%s3366] sm:$0xf] %v3365
      %v3368 = vld [vmem:[%s3008] sm:$0xf]
      %v3369 = vld [vmem:[%s3008 + $0x4] sm:$0x1]
      %v3370 = vld [vmem:[%s3011] sm:$0xf]
      %v3371 = vld [vmem:[%s3011 + $0x4] sm:$0x1]
      %v3372 = vld [vmem:[%s2] sm:$0xf]
      %v3373 = vld [vmem:[%s2 + $0x4] sm:$0xf]
      %v3374 = vld [vmem:[%s2 + $0x8] sm:$0xf]
      %v3375 = vld [vmem:[%s2 + $0xc] sm:$0xf]
      %v3376 = vld [vmem:[%s2 + $0x10] sm:$0xf]
      %v3377 = vld [vmem:[%s2 + $0x14] sm:$0xf]
      %v3378 = vld [vmem:[%s2 + $0x18] sm:$0xf]
      %v3379 = vld [vmem:[%s2 + $0x1c] sm:$0xf]
      %v3380 = vld [vmem:[%s2 + $0x20] sm:$0xf]
      %v3381 = vld [vmem:[%s2 + $0x24] sm:$0xf]
      %v3382 = vld [vmem:[%s2 + $0x28] sm:$0xf]
      %v3383 = vld [vmem:[%s2 + $0x2c] sm:$0xf]
      %v3384 = vld [vmem:[%s2 + $0x30] sm:$0xf]
      %v3385 = vld [vmem:[%s2 + $0x34] sm:$0xf]
      %v3386 = vld [vmem:[%s2 + $0x38] sm:$0xf]
      %v3387 = vld [vmem:[%s2 + $0x3c] sm:$0xf]
      %v3390 = vunpack.c.l.b16 %v3368
      %v3391 = vunpack.c.l.b16 %v3369
      %v3392 = vpack.c.b16 %v3391, %v3390
      %v3410 = vunpack.c.l.b16 %v3372
      %v3411 = vunpack.c.l.b16 %v3373
      %v3412 = vunpack.c.l.b16 %v3374
      %v3413 = vunpack.c.l.b16 %v3375
      %v3414 = vunpack.c.l.b16 %v3376
      %v3415 = vunpack.c.l.b16 %v3377
      %v3416 = vunpack.c.l.b16 %v3378
      %v3417 = vunpack.c.l.b16 %v3379
      %v3418 = vunpack.c.l.b16 %v3380
      %v3419 = vunpack.c.l.b16 %v3381
      %v3420 = vunpack.c.l.b16 %v3382
      %v3421 = vunpack.c.l.b16 %v3383
      %v3422 = vunpack.c.l.b16 %v3384
      %v3423 = vunpack.c.l.b16 %v3385
      %v3424 = vunpack.c.l.b16 %v3386
      %v3425 = vunpack.c.l.b16 %v3387
      %v3426 = vpack.c.b16 %v3411, %v3410
      %v3427 = vpack.c.b16 %v3413, %v3412
      %v3428 = vpack.c.b16 %v3415, %v3414
      %v3429 = vpack.c.b16 %v3417, %v3416
      %v3430 = vpack.c.b16 %v3419, %v3418
      %v3431 = vpack.c.b16 %v3421, %v3420
      %v3432 = vpack.c.b16 %v3423, %v3422
      %v3433 = vpack.c.b16 %v3425, %v3424
      %3442 = vmatprep.subr.bf16.mxu0 0
      %3443 = vmatpush1.bf16.msra.mxu0 %v3426
      %3444 = vmatprep.subr.bf16.mxu0 0
      %3445 = vmatpush1.bf16.msra.mxu0 %v3427
      %3446 = vmatprep.subr.bf16.mxu0 0
      %3447 = vmatpush1.bf16.msra.mxu0 %v3428
      %3448 = vmatprep.subr.bf16.mxu0 0
      %3449 = vmatpush1.bf16.msra.mxu0 %v3429
      %3450 = vmatprep.subr.bf16.mxu0 0
      %3451 = vmatpush1.bf16.msra.mxu0 %v3430
      %3452 = vmatprep.subr.bf16.mxu0 0
      %3453 = vmatpush1.bf16.msra.mxu0 %v3431
      %3454 = vmatprep.subr.bf16.mxu0 0
      %3455 = vmatpush1.bf16.msra.mxu0 %v3432
      %3456 = vmatprep.subr.bf16.mxu0 0
      %3457 = vmatpush1.bf16.msra.mxu0 %v3433
      %3458 = vmatprep.subr.bf16.mxu0 0
      %3459 = vmatpush1.bf16.msra.mxu0 0
      %3460 = vmatprep.subr.bf16.mxu0 0
      %3461 = vmatpush1.bf16.msra.mxu0 0
      %3462 = vmatprep.subr.bf16.mxu0 0
      %3463 = vmatpush1.bf16.msra.mxu0 0
      %3464 = vmatprep.subr.bf16.mxu0 0
      %3465 = vmatpush1.bf16.msra.mxu0 0
      %3466 = vmatprep.subr.bf16.mxu0 0
      %3467 = vmatpush1.bf16.msra.mxu0 0
      %3468 = vmatprep.subr.bf16.mxu0 0
      %3469 = vmatpush1.bf16.msra.mxu0 0
      %3470 = vmatprep.subr.bf16.mxu0 0
      %3471 = vmatpush1.bf16.msra.mxu0 0
      %3472 = vmatprep.subr.bf16.mxu0 0
      %3473 = vmatpush1.bf16.msra.mxu0 0
      %3474 = vmatprep.mubr.bf16.mxu0 0
      %3475 = vmatmul.mubr.bf16.gmra.mrb[0].mxu0 %v3392
      %v3476 = vpop.f32.mrb[0].mxu0
      %v3477 = vadd.f32 0.0, %v3476
      %v3478 = vpop.f32.mrb[0].mxu0
      %v3479 = vpop.f32.mrb[0].mxu0
      %v3480 = vpop.f32.mrb[0].mxu0
      %3481 = vdwg.mxu0
      %v3482 = vadd.f32 %v3477, 0.0
      %v3483 = vld [vmem:[%s361] sm:$0xf]
      %v3484 = vld [vmem:[%s361 + $0x4] sm:$0xf]
      %v3485 = vld [vmem:[%s361 + $0x8] sm:$0xf]
      %v3486 = vld [vmem:[%s361 + $0xc] sm:$0xf]
      %v3487 = vld [vmem:[%s361 + $0x10] sm:$0xf]
      %v3488 = vld [vmem:[%s361 + $0x14] sm:$0xf]
      %v3489 = vld [vmem:[%s361 + $0x18] sm:$0xf]
      %v3490 = vld [vmem:[%s361 + $0x1c] sm:$0xf]
      %v3491 = vld [vmem:[%s361 + $0x20] sm:$0xf]
      %v3492 = vld [vmem:[%s361 + $0x24] sm:$0xf]
      %v3493 = vld [vmem:[%s361 + $0x28] sm:$0xf]
      %v3494 = vld [vmem:[%s361 + $0x2c] sm:$0xf]
      %v3495 = vld [vmem:[%s361 + $0x30] sm:$0xf]
      %v3496 = vld [vmem:[%s361 + $0x34] sm:$0xf]
      %v3497 = vld [vmem:[%s361 + $0x38] sm:$0xf]
      %v3498 = vld [vmem:[%s361 + $0x3c] sm:$0xf]
      %v3501 = vunpack.c.l.b16 %v3370
      %v3502 = vunpack.c.l.b16 %v3371
      %v3503 = vpack.c.b16 %v3502, %v3501
      %v3521 = vunpack.c.l.b16 %v3483
      %v3522 = vunpack.c.l.b16 %v3484
      %v3523 = vunpack.c.l.b16 %v3485
      %v3524 = vunpack.c.l.b16 %v3486
      %v3525 = vunpack.c.l.b16 %v3487
      %v3526 = vunpack.c.l.b16 %v3488
      %v3527 = vunpack.c.l.b16 %v3489
      %v3528 = vunpack.c.l.b16 %v3490
      %v3529 = vunpack.c.l.b16 %v3491
      %v3530 = vunpack.c.l.b16 %v3492
      %v3531 = vunpack.c.l.b16 %v3493
      %v3532 = vunpack.c.l.b16 %v3494
      %v3533 = vunpack.c.l.b16 %v3495
      %v3534 = vunpack.c.l.b16 %v3496
      %v3535 = vunpack.c.l.b16 %v3497
      %v3536 = vunpack.c.l.b16 %v3498
      %v3537 = vpack.c.b16 %v3522, %v3521
      %v3538 = vpack.c.b16 %v3524, %v3523
      %v3539 = vpack.c.b16 %v3526, %v3525
      %v3540 = vpack.c.b16 %v3528, %v3527
      %v3541 = vpack.c.b16 %v3530, %v3529
      %v3542 = vpack.c.b16 %v3532, %v3531
      %v3543 = vpack.c.b16 %v3534, %v3533
      %v3544 = vpack.c.b16 %v3536, %v3535
      %3553 = vmatprep.subr.bf16.mxu0 0
      %3554 = vmatpush1.bf16.msra.mxu0 %v3537
      %3555 = vmatprep.subr.bf16.mxu0 0
      %3556 = vmatpush1.bf16.msra.mxu0 %v3538
      %3557 = vmatprep.subr.bf16.mxu0 0
      %3558 = vmatpush1.bf16.msra.mxu0 %v3539
      %3559 = vmatprep.subr.bf16.mxu0 0
      %3560 = vmatpush1.bf16.msra.mxu0 %v3540
      %3561 = vmatprep.subr.bf16.mxu0 0
      %3562 = vmatpush1.bf16.msra.mxu0 %v3541
      %3563 = vmatprep.subr.bf16.mxu0 0
      %3564 = vmatpush1.bf16.msra.mxu0 %v3542
      %3565 = vmatprep.subr.bf16.mxu0 0
      %3566 = vmatpush1.bf16.msra.mxu0 %v3543
      %3567 = vmatprep.subr.bf16.mxu0 0
      %3568 = vmatpush1.bf16.msra.mxu0 %v3544
      %3569 = vmatprep.subr.bf16.mxu0 0
      %3570 = vmatpush1.bf16.msra.mxu0 0
      %3571 = vmatprep.subr.bf16.mxu0 0
      %3572 = vmatpush1.bf16.msra.mxu0 0
      %3573 = vmatprep.subr.bf16.mxu0 0
      %3574 = vmatpush1.bf16.msra.mxu0 0
      %3575 = vmatprep.subr.bf16.mxu0 0
      %3576 = vmatpush1.bf16.msra.mxu0 0
      %3577 = vmatprep.subr.bf16.mxu0 0
      %3578 = vmatpush1.bf16.msra.mxu0 0
      %3579 = vmatprep.subr.bf16.mxu0 0
      %3580 = vmatpush1.bf16.msra.mxu0 0
      %3581 = vmatprep.subr.bf16.mxu0 0
      %3582 = vmatpush1.bf16.msra.mxu0 0
      %3583 = vmatprep.subr.bf16.mxu0 0
      %3584 = vmatpush1.bf16.msra.mxu0 0
      %3585 = vmatprep.mubr.bf16.mxu0 0
      %3586 = vmatmul.mubr.bf16.gmra.mrb[0].mxu0 %v3503
      %v3587 = vpop.f32.mrb[0].mxu0
      %v3588 = vadd.f32 0.0, %v3587
      %v3589 = vpop.f32.mrb[0].mxu0
      %v3590 = vpop.f32.mrb[0].mxu0
      %v3591 = vpop.f32.mrb[0].mxu0
      %3592 = vdwg.mxu0
      %v3593 = vadd.f32 %v3482, %v3588
      %v3594 = vld [vmem:[%s473] sm:$0xf]
      %v3595 = vld [vmem:[%s473 + $0x4] sm:$0xf]
      %v3596 = vld [vmem:[%s473 + $0x8] sm:$0xf]
      %v3597 = vld [vmem:[%s473 + $0xc] sm:$0xf]
      %v3598 = vld [vmem:[%s473 + $0x10] sm:$0xf]
      %v3599 = vld [vmem:[%s473 + $0x14] sm:$0xf]
      %v3600 = vld [vmem:[%s473 + $0x18] sm:$0xf]
      %v3601 = vld [vmem:[%s473 + $0x1c] sm:$0xf]
      %v3602 = vld [vmem:[%s473 + $0x20] sm:$0xf]
      %v3603 = vld [vmem:[%s473 + $0x24] sm:$0xf]
      %v3604 = vld [vmem:[%s473 + $0x28] sm:$0xf]
      %v3605 = vld [vmem:[%s473 + $0x2c] sm:$0xf]
      %v3606 = vld [vmem:[%s473 + $0x30] sm:$0xf]
      %v3607 = vld [vmem:[%s473 + $0x34] sm:$0xf]
      %v3608 = vld [vmem:[%s473 + $0x38] sm:$0xf]
      %v3609 = vld [vmem:[%s473 + $0x3c] sm:$0xf]
      %v3626 = vunpack.c.l.b16 %v3594
      %v3627 = vunpack.c.l.b16 %v3595
      %v3628 = vunpack.c.l.b16 %v3596
      %v3629 = vunpack.c.l.b16 %v3597
      %v3630 = vunpack.c.l.b16 %v3598
      %v3631 = vunpack.c.l.b16 %v3599
      %v3632 = vunpack.c.l.b16 %v3600
      %v3633 = vunpack.c.l.b16 %v3601
      %v3634 = vunpack.c.l.b16 %v3602
      %v3635 = vunpack.c.l.b16 %v3603
      %v3636 = vunpack.c.l.b16 %v3604
      %v3637 = vunpack.c.l.b16 %v3605
      %v3638 = vunpack.c.l.b16 %v3606
      %v3639 = vunpack.c.l.b16 %v3607
      %v3640 = vunpack.c.l.b16 %v3608
      %v3641 = vunpack.c.l.b16 %v3609
      %v3642 = vpack.c.b16 %v3627, %v3626
      %v3643 = vpack.c.b16 %v3629, %v3628
      %v3644 = vpack.c.b16 %v3631, %v3630
      %v3645 = vpack.c.b16 %v3633, %v3632
      %v3646 = vpack.c.b16 %v3635, %v3634
      %v3647 = vpack.c.b16 %v3637, %v3636
      %v3648 = vpack.c.b16 %v3639, %v3638
      %v3649 = vpack.c.b16 %v3641, %v3640
      %3658 = vmatprep.subr.bf16.mxu0 0
      %3659 = vmatpush1.bf16.msra.mxu0 %v3642
      %3660 = vmatprep.subr.bf16.mxu0 0
      %3661 = vmatpush1.bf16.msra.mxu0 %v3643
      %3662 = vmatprep.subr.bf16.mxu0 0
      %3663 = vmatpush1.bf16.msra.mxu0 %v3644
      %3664 = vmatprep.subr.bf16.mxu0 0
      %3665 = vmatpush1.bf16.msra.mxu0 %v3645
      %3666 = vmatprep.subr.bf16.mxu0 0
      %3667 = vmatpush1.bf16.msra.mxu0 %v3646
      %3668 = vmatprep.subr.bf16.mxu0 0
      %3669 = vmatpush1.bf16.msra.mxu0 %v3647
      %3670 = vmatprep.subr.bf16.mxu0 0
      %3671 = vmatpush1.bf16.msra.mxu0 %v3648
      %3672 = vmatprep.subr.bf16.mxu0 0
      %3673 = vmatpush1.bf16.msra.mxu0 %v3649
      %3674 = vmatprep.subr.bf16.mxu0 0
      %3675 = vmatpush1.bf16.msra.mxu0 0
      %3676 = vmatprep.subr.bf16.mxu0 0
      %3677 = vmatpush1.bf16.msra.mxu0 0
      %3678 = vmatprep.subr.bf16.mxu0 0
      %3679 = vmatpush1.bf16.msra.mxu0 0
      %3680 = vmatprep.subr.bf16.mxu0 0
      %3681 = vmatpush1.bf16.msra.mxu0 0
      %3682 = vmatprep.subr.bf16.mxu0 0
      %3683 = vmatpush1.bf16.msra.mxu0 0
      %3684 = vmatprep.subr.bf16.mxu0 0
      %3685 = vmatpush1.bf16.msra.mxu0 0
      %3686 = vmatprep.subr.bf16.mxu0 0
      %3687 = vmatpush1.bf16.msra.mxu0 0
      %3688 = vmatprep.subr.bf16.mxu0 0
      %3689 = vmatpush1.bf16.msra.mxu0 0
      %3690 = vmatprep.mubr.bf16.mxu0 0
      %3691 = vmatmul.mubr.bf16.gmra.mrb[0].mxu0 %v3392
      %v3692 = vpop.f32.mrb[0].mxu0
      %v3693 = vadd.f32 0.0, %v3692
      %v3694 = vpop.f32.mrb[0].mxu0
      %v3695 = vpop.f32.mrb[0].mxu0
      %v3696 = vadd.f32 0.0, %v3695
      %v3697 = vpop.f32.mrb[0].mxu0
      %3698 = vdwg.mxu0
      %v3701 = vrot.slane %v3693, 1
      %v3702 = vrot.slane %v3696, 1
      %v3703 = vsel %vm581, %v3701, %v3702
      %v3705 = vadd.f32 %v3593, %v3703
      %s3706 = scalar_lea.vmem %s234, 56
      %v3707 = vld [vmem:[%s3706] sm:$0xf]
      %v3708 = vld [vmem:[%s3706 + $0x4] sm:$0x1]
      %s3709 = scalar_lea.vmem %s239, 56
      %v3710 = vld [vmem:[%s3709] sm:$0xf]
      %v3711 = vld [vmem:[%s3709 + $0x4] sm:$0x1]
      %v3712 = vld [vmem:[%s593] sm:$0xf]
      %v3713 = vld [vmem:[%s593 + $0x4] sm:$0xf]
      %v3714 = vld [vmem:[%s593 + $0x8] sm:$0xf]
      %v3715 = vld [vmem:[%s593 + $0xc] sm:$0xf]
      %v3716 = vld [vmem:[%s593 + $0x10] sm:$0xf]
      %v3717 = vld [vmem:[%s593 + $0x14] sm:$0xf]
      %v3718 = vld [vmem:[%s593 + $0x18] sm:$0xf]
      %v3719 = vld [vmem:[%s593 + $0x1c] sm:$0xf]
      %v3720 = vld [vmem:[%s593 + $0x20] sm:$0xf]
      %v3721 = vld [vmem:[%s593 + $0x24] sm:$0xf]
      %v3722 = vld [vmem:[%s593 + $0x28] sm:$0xf]
      %v3723 = vld [vmem:[%s593 + $0x2c] sm:$0xf]
      %v3724 = vld [vmem:[%s593 + $0x30] sm:$0xf]
      %v3725 = vld [vmem:[%s593 + $0x34] sm:$0xf]
      %v3726 = vld [vmem:[%s593 + $0x38] sm:$0xf]
      %v3727 = vld [vmem:[%s593 + $0x3c] sm:$0xf]
      %v3730 = vunpack.c.l.b16 %v3707
      %v3731 = vunpack.c.l.b16 %v3708
      %v3732 = vpack.c.b16 %v3731, %v3730
      %v3750 = vunpack.c.l.b16 %v3712
      %v3751 = vunpack.c.l.b16 %v3713
      %v3752 = vunpack.c.l.b16 %v3714
      %v3753 = vunpack.c.l.b16 %v3715
      %v3754 = vunpack.c.l.b16 %v3716
      %v3755 = vunpack.c.l.b16 %v3717
      %v3756 = vunpack.c.l.b16 %v3718
      %v3757 = vunpack.c.l.b16 %v3719
      %v3758 = vunpack.c.l.b16 %v3720
      %v3759 = vunpack.c.l.b16 %v3721
      %v3760 = vunpack.c.l.b16 %v3722
      %v3761 = vunpack.c.l.b16 %v3723
      %v3762 = vunpack.c.l.b16 %v3724
      %v3763 = vunpack.c.l.b16 %v3725
      %v3764 = vunpack.c.l.b16 %v3726
      %v3765 = vunpack.c.l.b16 %v3727
      %v3766 = vpack.c.b16 %v3751, %v3750
      %v3767 = vpack.c.b16 %v3753, %v3752
      %v3768 = vpack.c.b16 %v3755, %v3754
      %v3769 = vpack.c.b16 %v3757, %v3756
      %v3770 = vpack.c.b16 %v3759, %v3758
      %v3771 = vpack.c.b16 %v3761, %v3760
      %v3772 = vpack.c.b16 %v3763, %v3762
      %v3773 = vpack.c.b16 %v3765, %v3764
      %3782 = vmatprep.subr.bf16.mxu0 0
      %3783 = vmatpush1.bf16.msra.mxu0 %v3766
      %3784 = vmatprep.subr.bf16.mxu0 0
      %3785 = vmatpush1.bf16.msra.mxu0 %v3767
      %3786 = vmatprep.subr.bf16.mxu0 0
      %3787 = vmatpush1.bf16.msra.mxu0 %v3768
      %3788 = vmatprep.subr.bf16.mxu0 0
      %3789 = vmatpush1.bf16.msra.mxu0 %v3769
      %3790 = vmatprep.subr.bf16.mxu0 0
      %3791 = vmatpush1.bf16.msra.mxu0 %v3770
      %3792 = vmatprep.subr.bf16.mxu0 0
      %3793 = vmatpush1.bf16.msra.mxu0 %v3771
      %3794 = vmatprep.subr.bf16.mxu0 0
      %3795 = vmatpush1.bf16.msra.mxu0 %v3772
      %3796 = vmatprep.subr.bf16.mxu0 0
      %3797 = vmatpush1.bf16.msra.mxu0 %v3773
      %3798 = vmatprep.subr.bf16.mxu0 0
      %3799 = vmatpush1.bf16.msra.mxu0 0
      %3800 = vmatprep.subr.bf16.mxu0 0
      %3801 = vmatpush1.bf16.msra.mxu0 0
      %3802 = vmatprep.subr.bf16.mxu0 0
      %3803 = vmatpush1.bf16.msra.mxu0 0
      %3804 = vmatprep.subr.bf16.mxu0 0
      %3805 = vmatpush1.bf16.msra.mxu0 0
      %3806 = vmatprep.subr.bf16.mxu0 0
      %3807 = vmatpush1.bf16.msra.mxu0 0
      %3808 = vmatprep.subr.bf16.mxu0 0
      %3809 = vmatpush1.bf16.msra.mxu0 0
      %3810 = vmatprep.subr.bf16.mxu0 0
      %3811 = vmatpush1.bf16.msra.mxu0 0
      %3812 = vmatprep.subr.bf16.mxu0 0
      %3813 = vmatpush1.bf16.msra.mxu0 0
      %3814 = vmatprep.mubr.bf16.mxu0 0
      %3815 = vmatmul.mubr.bf16.gmra.mrb[0].mxu0 %v3732
      %v3816 = vpop.f32.mrb[0].mxu0
      %v3817 = vadd.f32 0.0, %v3816
      %v3818 = vpop.f32.mrb[0].mxu0
      %v3819 = vpop.f32.mrb[0].mxu0
      %v3820 = vpop.f32.mrb[0].mxu0
      %3821 = vdwg.mxu0
      %v3822 = vadd.f32 %v3705, %v3817
      %v3823 = vld [vmem:[%s705] sm:$0xf]
      %v3824 = vld [vmem:[%s705 + $0x4] sm:$0xf]
      %v3825 = vld [vmem:[%s705 + $0x8] sm:$0xf]
      %v3826 = vld [vmem:[%s705 + $0xc] sm:$0xf]
      %v3827 = vld [vmem:[%s705 + $0x10] sm:$0xf]
      %v3828 = vld [vmem:[%s705 + $0x14] sm:$0xf]
      %v3829 = vld [vmem:[%s705 + $0x18] sm:$0xf]
      %v3830 = vld [vmem:[%s705 + $0x1c] sm:$0xf]
      %v3831 = vld [vmem:[%s705 + $0x20] sm:$0xf]
      %v3832 = vld [vmem:[%s705 + $0x24] sm:$0xf]
      %v3833 = vld [vmem:[%s705 + $0x28] sm:$0xf]
      %v3834 = vld [vmem:[%s705 + $0x2c] sm:$0xf]
      %v3835 = vld [vmem:[%s705 + $0x30] sm:$0xf]
      %v3836 = vld [vmem:[%s705 + $0x34] sm:$0xf]
      %v3837 = vld [vmem:[%s705 + $0x38] sm:$0xf]
      %v3838 = vld [vmem:[%s705 + $0x3c] sm:$0xf]
      %v3841 = vunpack.c.l.b16 %v3710
      %v3842 = vunpack.c.l.b16 %v3711
      %v3843 = vpack.c.b16 %v3842, %v3841
      %v3861 = vunpack.c.l.b16 %v3823
      %v3862 = vunpack.c.l.b16 %v3824
      %v3863 = vunpack.c.l.b16 %v3825
      %v3864 = vunpack.c.l.b16 %v3826
      %v3865 = vunpack.c.l.b16 %v3827
      %v3866 = vunpack.c.l.b16 %v3828
      %v3867 = vunpack.c.l.b16 %v3829
      %v3868 = vunpack.c.l.b16 %v3830
      %v3869 = vunpack.c.l.b16 %v3831
      %v3870 = vunpack.c.l.b16 %v3832
      %v3871 = vunpack.c.l.b16 %v3833
      %v3872 = vunpack.c.l.b16 %v3834
      %v3873 = vunpack.c.l.b16 %v3835
      %v3874 = vunpack.c.l.b16 %v3836
      %v3875 = vunpack.c.l.b16 %v3837
      %v3876 = vunpack.c.l.b16 %v3838
      %v3877 = vpack.c.b16 %v3862, %v3861
      %v3878 = vpack.c.b16 %v3864, %v3863
      %v3879 = vpack.c.b16 %v3866, %v3865
      %v3880 = vpack.c.b16 %v3868, %v3867
      %v3881 = vpack.c.b16 %v3870, %v3869
      %v3882 = vpack.c.b16 %v3872, %v3871
      %v3883 = vpack.c.b16 %v3874, %v3873
      %v3884 = vpack.c.b16 %v3876, %v3875
      %3893 = vmatprep.subr.bf16.mxu0 0
      %3894 = vmatpush1.bf16.msra.mxu0 %v3877
      %3895 = vmatprep.subr.bf16.mxu0 0
      %3896 = vmatpush1.bf16.msra.mxu0 %v3878
      %3897 = vmatprep.subr.bf16.mxu0 0
      %3898 = vmatpush1.bf16.msra.mxu0 %v3879
      %3899 = vmatprep.subr.bf16.mxu0 0
      %3900 = vmatpush1.bf16.msra.mxu0 %v3880
      %3901 = vmatprep.subr.bf16.mxu0 0
      %3902 = vmatpush1.bf16.msra.mxu0 %v3881
      %3903 = vmatprep.subr.bf16.mxu0 0
      %3904 = vmatpush1.bf16.msra.mxu0 %v3882
      %3905 = vmatprep.subr.bf16.mxu0 0
      %3906 = vmatpush1.bf16.msra.mxu0 %v3883
      %3907 = vmatprep.subr.bf16.mxu0 0
      %3908 = vmatpush1.bf16.msra.mxu0 %v3884
      %3909 = vmatprep.subr.bf16.mxu0 0
      %3910 = vmatpush1.bf16.msra.mxu0 0
      %3911 = vmatprep.subr.bf16.mxu0 0
      %3912 = vmatpush1.bf16.msra.mxu0 0
      %3913 = vmatprep.subr.bf16.mxu0 0
      %3914 = vmatpush1.bf16.msra.mxu0 0
      %3915 = vmatprep.subr.bf16.mxu0 0
      %3916 = vmatpush1.bf16.msra.mxu0 0
      %3917 = vmatprep.subr.bf16.mxu0 0
      %3918 = vmatpush1.bf16.msra.mxu0 0
      %3919 = vmatprep.subr.bf16.mxu0 0
      %3920 = vmatpush1.bf16.msra.mxu0 0
      %3921 = vmatprep.subr.bf16.mxu0 0
      %3922 = vmatpush1.bf16.msra.mxu0 0
      %3923 = vmatprep.subr.bf16.mxu0 0
      %3924 = vmatpush1.bf16.msra.mxu0 0
      %3925 = vmatprep.mubr.bf16.mxu0 0
      %3926 = vmatmul.mubr.bf16.gmra.mrb[0].mxu0 %v3843
      %v3927 = vpop.f32.mrb[0].mxu0
      %v3928 = vadd.f32 0.0, %v3927
      %v3929 = vpop.f32.mrb[0].mxu0
      %v3930 = vpop.f32.mrb[0].mxu0
      %v3931 = vpop.f32.mrb[0].mxu0
      %3932 = vdwg.mxu0
      %v3933 = vadd.f32 %v3822, %v3928
      %v3934 = vld [vmem:[%s817] sm:$0xf]
      %v3935 = vld [vmem:[%s817 + $0x4] sm:$0xf]
      %v3936 = vld [vmem:[%s817 + $0x8] sm:$0xf]
      %v3937 = vld [vmem:[%s817 + $0xc] sm:$0xf]
      %v3938 = vld [vmem:[%s817 + $0x10] sm:$0xf]
      %v3939 = vld [vmem:[%s817 + $0x14] sm:$0xf]
      %v3940 = vld [vmem:[%s817 + $0x18] sm:$0xf]
      %v3941 = vld [vmem:[%s817 + $0x1c] sm:$0xf]
      %v3942 = vld [vmem:[%s817 + $0x20] sm:$0xf]
      %v3943 = vld [vmem:[%s817 + $0x24] sm:$0xf]
      %v3944 = vld [vmem:[%s817 + $0x28] sm:$0xf]
      %v3945 = vld [vmem:[%s817 + $0x2c] sm:$0xf]
      %v3946 = vld [vmem:[%s817 + $0x30] sm:$0xf]
      %v3947 = vld [vmem:[%s817 + $0x34] sm:$0xf]
      %v3948 = vld [vmem:[%s817 + $0x38] sm:$0xf]
      %v3949 = vld [vmem:[%s817 + $0x3c] sm:$0xf]
      %v3966 = vunpack.c.l.b16 %v3934
      %v3967 = vunpack.c.l.b16 %v3935
      %v3968 = vunpack.c.l.b16 %v3936
      %v3969 = vunpack.c.l.b16 %v3937
      %v3970 = vunpack.c.l.b16 %v3938
      %v3971 = vunpack.c.l.b16 %v3939
      %v3972 = vunpack.c.l.b16 %v3940
      %v3973 = vunpack.c.l.b16 %v3941
      %v3974 = vunpack.c.l.b16 %v3942
      %v3975 = vunpack.c.l.b16 %v3943
      %v3976 = vunpack.c.l.b16 %v3944
      %v3977 = vunpack.c.l.b16 %v3945
      %v3978 = vunpack.c.l.b16 %v3946
      %v3979 = vunpack.c.l.b16 %v3947
      %v3980 = vunpack.c.l.b16 %v3948
      %v3981 = vunpack.c.l.b16 %v3949
      %v3982 = vpack.c.b16 %v3967, %v3966
      %v3983 = vpack.c.b16 %v3969, %v3968
      %v3984 = vpack.c.b16 %v3971, %v3970
      %v3985 = vpack.c.b16 %v3973, %v3972
      %v3986 = vpack.c.b16 %v3975, %v3974
      %v3987 = vpack.c.b16 %v3977, %v3976
      %v3988 = vpack.c.b16 %v3979, %v3978
      %v3989 = vpack.c.b16 %v3981, %v3980
      %3998 = vmatprep.subr.bf16.mxu0 0
      %3999 = vmatpush1.bf16.msra.mxu0 %v3982
      %4000 = vmatprep.subr.bf16.mxu0 0
      %4001 = vmatpush1.bf16.msra.mxu0 %v3983
      %4002 = vmatprep.subr.bf16.mxu0 0
      %4003 = vmatpush1.bf16.msra.mxu0 %v3984
      %4004 = vmatprep.subr.bf16.mxu0 0
      %4005 = vmatpush1.bf16.msra.mxu0 %v3985
      %4006 = vmatprep.subr.bf16.mxu0 0
      %4007 = vmatpush1.bf16.msra.mxu0 %v3986
      %4008 = vmatprep.subr.bf16.mxu0 0
      %4009 = vmatpush1.bf16.msra.mxu0 %v3987
      %4010 = vmatprep.subr.bf16.mxu0 0
      %4011 = vmatpush1.bf16.msra.mxu0 %v3988
      %4012 = vmatprep.subr.bf16.mxu0 0
      %4013 = vmatpush1.bf16.msra.mxu0 %v3989
      %4014 = vmatprep.subr.bf16.mxu0 0
      %4015 = vmatpush1.bf16.msra.mxu0 0
      %4016 = vmatprep.subr.bf16.mxu0 0
      %4017 = vmatpush1.bf16.msra.mxu0 0
      %4018 = vmatprep.subr.bf16.mxu0 0
      %4019 = vmatpush1.bf16.msra.mxu0 0
      %4020 = vmatprep.subr.bf16.mxu0 0
      %4021 = vmatpush1.bf16.msra.mxu0 0
      %4022 = vmatprep.subr.bf16.mxu0 0
      %4023 = vmatpush1.bf16.msra.mxu0 0
      %4024 = vmatprep.subr.bf16.mxu0 0
      %4025 = vmatpush1.bf16.msra.mxu0 0
      %4026 = vmatprep.subr.bf16.mxu0 0
      %4027 = vmatpush1.bf16.msra.mxu0 0
      %4028 = vmatprep.subr.bf16.mxu0 0
      %4029 = vmatpush1.bf16.msra.mxu0 0
      %4030 = vmatprep.mubr.bf16.mxu0 0
      %4031 = vmatmul.mubr.bf16.gmra.mrb[0].mxu0 %v3732
      %v4032 = vpop.f32.mrb[0].mxu0
      %v4033 = vadd.f32 0.0, %v4032
      %v4034 = vpop.f32.mrb[0].mxu0
      %v4035 = vpop.f32.mrb[0].mxu0
      %v4036 = vadd.f32 0.0, %v4035
      %v4037 = vpop.f32.mrb[0].mxu0
      %4038 = vdwg.mxu0
      %v4041 = vrot.slane %v4033, 1
      %v4042 = vrot.slane %v4036, 1
      %v4043 = vsel %vm581, %v4041, %v4042
      %v4045 = vadd.f32 %v3933, %v4043
      %s4046 = scalar_lea.vmem %s234, 64
      %v4047 = vld [vmem:[%s4046] sm:$0xf]
      %v4048 = vld [vmem:[%s4046 + $0x4] sm:$0x1]
      %s4049 = scalar_lea.vmem %s239, 64
      %v4050 = vld [vmem:[%s4049] sm:$0xf]
      %v4051 = vld [vmem:[%s4049 + $0x4] sm:$0x1]
      %v4052 = vld [vmem:[%s936] sm:$0xf]
      %v4053 = vld [vmem:[%s936 + $0x4] sm:$0xf]
      %v4054 = vld [vmem:[%s936 + $0x8] sm:$0xf]
      %v4055 = vld [vmem:[%s936 + $0xc] sm:$0xf]
      %v4056 = vld [vmem:[%s936 + $0x10] sm:$0xf]
      %v4057 = vld [vmem:[%s936 + $0x14] sm:$0xf]
      %v4058 = vld [vmem:[%s936 + $0x18] sm:$0xf]
      %v4059 = vld [vmem:[%s936 + $0x1c] sm:$0xf]
      %v4060 = vld [vmem:[%s936 + $0x20] sm:$0xf]
      %v4061 = vld [vmem:[%s936 + $0x24] sm:$0xf]
      %v4062 = vld [vmem:[%s936 + $0x28] sm:$0xf]
      %v4063 = vld [vmem:[%s936 + $0x2c] sm:$0xf]
      %v4064 = vld [vmem:[%s936 + $0x30] sm:$0xf]
      %v4065 = vld [vmem:[%s936 + $0x34] sm:$0xf]
      %v4066 = vld [vmem:[%s936 + $0x38] sm:$0xf]
      %v4067 = vld [vmem:[%s936 + $0x3c] sm:$0xf]
      %v4070 = vunpack.c.l.b16 %v4047
      %v4071 = vunpack.c.l.b16 %v4048
      %v4072 = vpack.c.b16 %v4071, %v4070
      %v4090 = vunpack.c.l.b16 %v4052
      %v4091 = vunpack.c.l.b16 %v4053
      %v4092 = vunpack.c.l.b16 %v4054
      %v4093 = vunpack.c.l.b16 %v4055
      %v4094 = vunpack.c.l.b16 %v4056
      %v4095 = vunpack.c.l.b16 %v4057
      %v4096 = vunpack.c.l.b16 %v4058
      %v4097 = vunpack.c.l.b16 %v4059
      %v4098 = vunpack.c.l.b16 %v4060
      %v4099 = vunpack.c.l.b16 %v4061
      %v4100 = vunpack.c.l.b16 %v4062
      %v4101 = vunpack.c.l.b16 %v4063
      %v4102 = vunpack.c.l.b16 %v4064
      %v4103 = vunpack.c.l.b16 %v4065
      %v4104 = vunpack.c.l.b16 %v4066
      %v4105 = vunpack.c.l.b16 %v4067
      %v4106 = vpack.c.b16 %v4091, %v4090
      %v4107 = vpack.c.b16 %v4093, %v4092
      %v4108 = vpack.c.b16 %v4095, %v4094
      %v4109 = vpack.c.b16 %v4097, %v4096
      %v4110 = vpack.c.b16 %v4099, %v4098
      %v4111 = vpack.c.b16 %v4101, %v4100
      %v4112 = vpack.c.b16 %v4103, %v4102
      %v4113 = vpack.c.b16 %v4105, %v4104
      %4122 = vmatprep.subr.bf16.mxu0 0
      %4123 = vmatpush1.bf16.msra.mxu0 %v4106
      %4124 = vmatprep.subr.bf16.mxu0 0
      %4125 = vmatpush1.bf16.msra.mxu0 %v4107
      %4126 = vmatprep.subr.bf16.mxu0 0
      %4127 = vmatpush1.bf16.msra.mxu0 %v4108
      %4128 = vmatprep.subr.bf16.mxu0 0
      %4129 = vmatpush1.bf16.msra.mxu0 %v4109
      %4130 = vmatprep.subr.bf16.mxu0 0
      %4131 = vmatpush1.bf16.msra.mxu0 %v4110
      %4132 = vmatprep.subr.bf16.mxu0 0
      %4133 = vmatpush1.bf16.msra.mxu0 %v4111
      %4134 = vmatprep.subr.bf16.mxu0 0
      %4135 = vmatpush1.bf16.msra.mxu0 %v4112
      %4136 = vmatprep.subr.bf16.mxu0 0
      %4137 = vmatpush1.bf16.msra.mxu0 %v4113
      %4138 = vmatprep.subr.bf16.mxu0 0
      %4139 = vmatpush1.bf16.msra.mxu0 0
      %4140 = vmatprep.subr.bf16.mxu0 0
      %4141 = vmatpush1.bf16.msra.mxu0 0
      %4142 = vmatprep.subr.bf16.mxu0 0
      %4143 = vmatpush1.bf16.msra.mxu0 0
      %4144 = vmatprep.subr.bf16.mxu0 0
      %4145 = vmatpush1.bf16.msra.mxu0 0
      %4146 = vmatprep.subr.bf16.mxu0 0
      %4147 = vmatpush1.bf16.msra.mxu0 0
      %4148 = vmatprep.subr.bf16.mxu0 0
      %4149 = vmatpush1.bf16.msra.mxu0 0
      %4150 = vmatprep.subr.bf16.mxu0 0
      %4151 = vmatpush1.bf16.msra.mxu0 0
      %4152 = vmatprep.subr.bf16.mxu0 0
      %4153 = vmatpush1.bf16.msra.mxu0 0
      %4154 = vmatprep.mubr.bf16.mxu0 0
      %4155 = vmatmul.mubr.bf16.gmra.mrb[0].mxu0 %v4072
      %v4156 = vpop.f32.mrb[0].mxu0
      %v4157 = vadd.f32 0.0, %v4156
      %v4158 = vpop.f32.mrb[0].mxu0
      %v4159 = vpop.f32.mrb[0].mxu0
      %v4160 = vpop.f32.mrb[0].mxu0
      %4161 = vdwg.mxu0
      %v4162 = vadd.f32 %v4045, %v4157
      %v4163 = vld [vmem:[%s1048] sm:$0xf]
      %v4164 = vld [vmem:[%s1048 + $0x4] sm:$0xf]
      %v4165 = vld [vmem:[%s1048 + $0x8] sm:$0xf]
      %v4166 = vld [vmem:[%s1048 + $0xc] sm:$0xf]
      %v4167 = vld [vmem:[%s1048 + $0x10] sm:$0xf]
      %v4168 = vld [vmem:[%s1048 + $0x14] sm:$0xf]
      %v4169 = vld [vmem:[%s1048 + $0x18] sm:$0xf]
      %v4170 = vld [vmem:[%s1048 + $0x1c] sm:$0xf]
      %v4171 = vld [vmem:[%s1048 + $0x20] sm:$0xf]
      %v4172 = vld [vmem:[%s1048 + $0x24] sm:$0xf]
      %v4173 = vld [vmem:[%s1048 + $0x28] sm:$0xf]
      %v4174 = vld [vmem:[%s1048 + $0x2c] sm:$0xf]
      %v4175 = vld [vmem:[%s1048 + $0x30] sm:$0xf]
      %v4176 = vld [vmem:[%s1048 + $0x34] sm:$0xf]
      %v4177 = vld [vmem:[%s1048 + $0x38] sm:$0xf]
      %v4178 = vld [vmem:[%s1048 + $0x3c] sm:$0xf]
      %v4181 = vunpack.c.l.b16 %v4050
      %v4182 = vunpack.c.l.b16 %v4051
      %v4183 = vpack.c.b16 %v4182, %v4181
      %v4201 = vunpack.c.l.b16 %v4163
      %v4202 = vunpack.c.l.b16 %v4164
      %v4203 = vunpack.c.l.b16 %v4165
      %v4204 = vunpack.c.l.b16 %v4166
      %v4205 = vunpack.c.l.b16 %v4167
      %v4206 = vunpack.c.l.b16 %v4168
      %v4207 = vunpack.c.l.b16 %v4169
      %v4208 = vunpack.c.l.b16 %v4170
      %v4209 = vunpack.c.l.b16 %v4171
      %v4210 = vunpack.c.l.b16 %v4172
      %v4211 = vunpack.c.l.b16 %v4173
      %v4212 = vunpack.c.l.b16 %v4174
      %v4213 = vunpack.c.l.b16 %v4175
      %v4214 = vunpack.c.l.b16 %v4176
      %v4215 = vunpack.c.l.b16 %v4177
      %v4216 = vunpack.c.l.b16 %v4178
      %v4217 = vpack.c.b16 %v4202, %v4201
      %v4218 = vpack.c.b16 %v4204, %v4203
      %v4219 = vpack.c.b16 %v4206, %v4205
      %v4220 = vpack.c.b16 %v4208, %v4207
      %v4221 = vpack.c.b16 %v4210, %v4209
      %v4222 = vpack.c.b16 %v4212, %v4211
      %v4223 = vpack.c.b16 %v4214, %v4213
      %v4224 = vpack.c.b16 %v4216, %v4215
      %4233 = vmatprep.subr.bf16.mxu0 0
      %4234 = vmatpush1.bf16.msra.mxu0 %v4217
      %4235 = vmatprep.subr.bf16.mxu0 0
      %4236 = vmatpush1.bf16.msra.mxu0 %v4218
      %4237 = vmatprep.subr.bf16.mxu0 0
      %4238 = vmatpush1.bf16.msra.mxu0 %v4219
      %4239 = vmatprep.subr.bf16.mxu0 0
      %4240 = vmatpush1.bf16.msra.mxu0 %v4220
      %4241 = vmatprep.subr.bf16.mxu0 0
      %4242 = vmatpush1.bf16.msra.mxu0 %v4221
      %4243 = vmatprep.subr.bf16.mxu0 0
      %4244 = vmatpush1.bf16.msra.mxu0 %v4222
      %4245 = vmatprep.subr.bf16.mxu0 0
      %4246 = vmatpush1.bf16.msra.mxu0 %v4223
      %4247 = vmatprep.subr.bf16.mxu0 0
      %4248 = vmatpush1.bf16.msra.mxu0 %v4224
      %4249 = vmatprep.subr.bf16.mxu0 0
      %4250 = vmatpush1.bf16.msra.mxu0 0
      %4251 = vmatprep.subr.bf16.mxu0 0
      %4252 = vmatpush1.bf16.msra.mxu0 0
      %4253 = vmatprep.subr.bf16.mxu0 0
      %4254 = vmatpush1.bf16.msra.mxu0 0
      %4255 = vmatprep.subr.bf16.mxu0 0
      %4256 = vmatpush1.bf16.msra.mxu0 0
      %4257 = vmatprep.subr.bf16.mxu0 0
      %4258 = vmatpush1.bf16.msra.mxu0 0
      %4259 = vmatprep.subr.bf16.mxu0 0
      %4260 = vmatpush1.bf16.msra.mxu0 0
      %4261 = vmatprep.subr.bf16.mxu0 0
      %4262 = vmatpush1.bf16.msra.mxu0 0
      %4263 = vmatprep.subr.bf16.mxu0 0
      %4264 = vmatpush1.bf16.msra.mxu0 0
      %4265 = vmatprep.mubr.bf16.mxu0 0
      %4266 = vmatmul.mubr.bf16.gmra.mrb[0].mxu0 %v4183
      %v4267 = vpop.f32.mrb[0].mxu0
      %v4268 = vadd.f32 0.0, %v4267
      %v4269 = vpop.f32.mrb[0].mxu0
      %v4270 = vpop.f32.mrb[0].mxu0
      %v4271 = vpop.f32.mrb[0].mxu0
      %4272 = vdwg.mxu0
      %v4273 = vadd.f32 %v4162, %v4268
      %v4274 = vld [vmem:[%s1160] sm:$0xf]
      %v4275 = vld [vmem:[%s1160 + $0x4] sm:$0xf]
      %v4276 = vld [vmem:[%s1160 + $0x8] sm:$0xf]
      %v4277 = vld [vmem:[%s1160 + $0xc] sm:$0xf]
      %v4278 = vld [vmem:[%s1160 + $0x10] sm:$0xf]
      %v4279 = vld [vmem:[%s1160 + $0x14] sm:$0xf]
      %v4280 = vld [vmem:[%s1160 + $0x18] sm:$0xf]
      %v4281 = vld [vmem:[%s1160 + $0x1c] sm:$0xf]
      %v4282 = vld [vmem:[%s1160 + $0x20] sm:$0xf]
      %v4283 = vld [vmem:[%s1160 + $0x24] sm:$0xf]
      %v4284 = vld [vmem:[%s1160 + $0x28] sm:$0xf]
      %v4285 = vld [vmem:[%s1160 + $0x2c] sm:$0xf]
      %v4286 = vld [vmem:[%s1160 + $0x30] sm:$0xf]
      %v4287 = vld [vmem:[%s1160 + $0x34] sm:$0xf]
      %v4288 = vld [vmem:[%s1160 + $0x38] sm:$0xf]
      %v4289 = vld [vmem:[%s1160 + $0x3c] sm:$0xf]
      %v4306 = vunpack.c.l.b16 %v4274
      %v4307 = vunpack.c.l.b16 %v4275
      %v4308 = vunpack.c.l.b16 %v4276
      %v4309 = vunpack.c.l.b16 %v4277
      %v4310 = vunpack.c.l.b16 %v4278
      %v4311 = vunpack.c.l.b16 %v4279
      %v4312 = vunpack.c.l.b16 %v4280
      %v4313 = vunpack.c.l.b16 %v4281
      %v4314 = vunpack.c.l.b16 %v4282
      %v4315 = vunpack.c.l.b16 %v4283
      %v4316 = vunpack.c.l.b16 %v4284
      %v4317 = vunpack.c.l.b16 %v4285
      %v4318 = vunpack.c.l.b16 %v4286
      %v4319 = vunpack.c.l.b16 %v4287
      %v4320 = vunpack.c.l.b16 %v4288
      %v4321 = vunpack.c.l.b16 %v4289
      %v4322 = vpack.c.b16 %v4307, %v4306
      %v4323 = vpack.c.b16 %v4309, %v4308
      %v4324 = vpack.c.b16 %v4311, %v4310
      %v4325 = vpack.c.b16 %v4313, %v4312
      %v4326 = vpack.c.b16 %v4315, %v4314
      %v4327 = vpack.c.b16 %v4317, %v4316
      %v4328 = vpack.c.b16 %v4319, %v4318
      %v4329 = vpack.c.b16 %v4321, %v4320
      %4338 = vmatprep.subr.bf16.mxu0 0
      %4339 = vmatpush1.bf16.msra.mxu0 %v4322
      %4340 = vmatprep.subr.bf16.mxu0 0
      %4341 = vmatpush1.bf16.msra.mxu0 %v4323
      %4342 = vmatprep.subr.bf16.mxu0 0
      %4343 = vmatpush1.bf16.msra.mxu0 %v4324
      %4344 = vmatprep.subr.bf16.mxu0 0
      %4345 = vmatpush1.bf16.msra.mxu0 %v4325
      %4346 = vmatprep.subr.bf16.mxu0 0
      %4347 = vmatpush1.bf16.msra.mxu0 %v4326
      %4348 = vmatprep.subr.bf16.mxu0 0
      %4349 = vmatpush1.bf16.msra.mxu0 %v4327
      %4350 = vmatprep.subr.bf16.mxu0 0
      %4351 = vmatpush1.bf16.msra.mxu0 %v4328
      %4352 = vmatprep.subr.bf16.mxu0 0
      %4353 = vmatpush1.bf16.msra.mxu0 %v4329
      %4354 = vmatprep.subr.bf16.mxu0 0
      %4355 = vmatpush1.bf16.msra.mxu0 0
      %4356 = vmatprep.subr.bf16.mxu0 0
      %4357 = vmatpush1.bf16.msra.mxu0 0
      %4358 = vmatprep.subr.bf16.mxu0 0
      %4359 = vmatpush1.bf16.msra.mxu0 0
      %4360 = vmatprep.subr.bf16.mxu0 0
      %4361 = vmatpush1.bf16.msra.mxu0 0
      %4362 = vmatprep.subr.bf16.mxu0 0
      %4363 = vmatpush1.bf16.msra.mxu0 0
      %4364 = vmatprep.subr.bf16.mxu0 0
      %4365 = vmatpush1.bf16.msra.mxu0 0
      %4366 = vmatprep.subr.bf16.mxu0 0
      %4367 = vmatpush1.bf16.msra.mxu0 0
      %4368 = vmatprep.subr.bf16.mxu0 0
      %4369 = vmatpush1.bf16.msra.mxu0 0
      %4370 = vmatprep.mubr.bf16.mxu0 0
      %4371 = vmatmul.mubr.bf16.gmra.mrb[0].mxu0 %v4072
      %v4372 = vpop.f32.mrb[0].mxu0
      %v4373 = vadd.f32 0.0, %v4372
      %v4374 = vpop.f32.mrb[0].mxu0
      %v4375 = vpop.f32.mrb[0].mxu0
      %v4376 = vadd.f32 0.0, %v4375
      %v4377 = vpop.f32.mrb[0].mxu0
      %4378 = vdwg.mxu0
      %v4381 = vrot.slane %v4373, 1
      %v4382 = vrot.slane %v4376, 1
      %v4383 = vsel %vm581, %v4381, %v4382
      %v4385 = vadd.f32 %v4273, %v4383
      %v4386 = vld [vmem:[%s3] sm:$0x1]
      %v4388 = vlaneseq
      %v4389 = vshrl.u32 %v4388, 7
      %v4390 = vsub.s32 0, %v4389
      %v4391 = vrot.slane %v4386, %v4390
      %v4393 = vmul.f32 %v4385, %v4391
      %v4394 = vld [vmem:[%s4] sm:$0x1]
      %v4396 = vlaneseq
      %v4397 = vshrl.u32 %v4396, 7
      %v4398 = vsub.s32 0, %v4397
      %v4399 = vrot.slane %v4394, %v4398
      %v4401 = vadd.f32 %v4393, %v4399
      %v4402 = vmax.f32 %v4401, 0.0
      %v4403 = vpack.c.bf16 %v4402, %v4402
      %s4404 = scalar_lea.vmem %s244, 12
      %4405 = vst [vmem:[%s4404] sm:$0xf] %v4403
      %v4406 = vld [vmem:[%s4046] sm:$0xf]
      %v4407 = vld [vmem:[%s4046 + $0x4] sm:$0x1]
      %v4408 = vld [vmem:[%s4049] sm:$0xf]
      %v4409 = vld [vmem:[%s4049 + $0x4] sm:$0x1]
      %v4410 = vld [vmem:[%s2] sm:$0xf]
      %v4411 = vld [vmem:[%s2 + $0x4] sm:$0xf]
      %v4412 = vld [vmem:[%s2 + $0x8] sm:$0xf]
      %v4413 = vld [vmem:[%s2 + $0xc] sm:$0xf]
      %v4414 = vld [vmem:[%s2 + $0x10] sm:$0xf]
      %v4415 = vld [vmem:[%s2 + $0x14] sm:$0xf]
      %v4416 = vld [vmem:[%s2 + $0x18] sm:$0xf]
      %v4417 = vld [vmem:[%s2 + $0x1c] sm:$0xf]
      %v4418 = vld [vmem:[%s2 + $0x20] sm:$0xf]
      %v4419 = vld [vmem:[%s2 + $0x24] sm:$0xf]
      %v4420 = vld [vmem:[%s2 + $0x28] sm:$0xf]
      %v4421 = vld [vmem:[%s2 + $0x2c] sm:$0xf]
      %v4422 = vld [vmem:[%s2 + $0x30] sm:$0xf]
      %v4423 = vld [vmem:[%s2 + $0x34] sm:$0xf]
      %v4424 = vld [vmem:[%s2 + $0x38] sm:$0xf]
      %v4425 = vld [vmem:[%s2 + $0x3c] sm:$0xf]
      %v4428 = vunpack.c.l.b16 %v4406
      %v4429 = vunpack.c.l.b16 %v4407
      %v4430 = vpack.c.b16 %v4429, %v4428
      %v4448 = vunpack.c.l.b16 %v4410
      %v4449 = vunpack.c.l.b16 %v4411
      %v4450 = vunpack.c.l.b16 %v4412
      %v4451 = vunpack.c.l.b16 %v4413
      %v4452 = vunpack.c.l.b16 %v4414
      %v4453 = vunpack.c.l.b16 %v4415
      %v4454 = vunpack.c.l.b16 %v4416
      %v4455 = vunpack.c.l.b16 %v4417
      %v4456 = vunpack.c.l.b16 %v4418
      %v4457 = vunpack.c.l.b16 %v4419
      %v4458 = vunpack.c.l.b16 %v4420
      %v4459 = vunpack.c.l.b16 %v4421
      %v4460 = vunpack.c.l.b16 %v4422
      %v4461 = vunpack.c.l.b16 %v4423
      %v4462 = vunpack.c.l.b16 %v4424
      %v4463 = vunpack.c.l.b16 %v4425
      %v4464 = vpack.c.b16 %v4449, %v4448
      %v4465 = vpack.c.b16 %v4451, %v4450
      %v4466 = vpack.c.b16 %v4453, %v4452
      %v4467 = vpack.c.b16 %v4455, %v4454
      %v4468 = vpack.c.b16 %v4457, %v4456
      %v4469 = vpack.c.b16 %v4459, %v4458
      %v4470 = vpack.c.b16 %v4461, %v4460
      %v4471 = vpack.c.b16 %v4463, %v4462
      %4480 = vmatprep.subr.bf16.mxu0 0
      %4481 = vmatpush1.bf16.msra.mxu0 %v4464
      %4482 = vmatprep.subr.bf16.mxu0 0
      %4483 = vmatpush1.bf16.msra.mxu0 %v4465
      %4484 = vmatprep.subr.bf16.mxu0 0
      %4485 = vmatpush1.bf16.msra.mxu0 %v4466
      %4486 = vmatprep.subr.bf16.mxu0 0
      %4487 = vmatpush1.bf16.msra.mxu0 %v4467
      %4488 = vmatprep.subr.bf16.mxu0 0
      %4489 = vmatpush1.bf16.msra.mxu0 %v4468
      %4490 = vmatprep.subr.bf16.mxu0 0
      %4491 = vmatpush1.bf16.msra.mxu0 %v4469
      %4492 = vmatprep.subr.bf16.mxu0 0
      %4493 = vmatpush1.bf16.msra.mxu0 %v4470
      %4494 = vmatprep.subr.bf16.mxu0 0
      %4495 = vmatpush1.bf16.msra.mxu0 %v4471
      %4496 = vmatprep.subr.bf16.mxu0 0
      %4497 = vmatpush1.bf16.msra.mxu0 0
      %4498 = vmatprep.subr.bf16.mxu0 0
      %4499 = vmatpush1.bf16.msra.mxu0 0
      %4500 = vmatprep.subr.bf16.mxu0 0
      %4501 = vmatpush1.bf16.msra.mxu0 0
      %4502 = vmatprep.subr.bf16.mxu0 0
      %4503 = vmatpush1.bf16.msra.mxu0 0
      %4504 = vmatprep.subr.bf16.mxu0 0
      %4505 = vmatpush1.bf16.msra.mxu0 0
      %4506 = vmatprep.subr.bf16.mxu0 0
      %4507 = vmatpush1.bf16.msra.mxu0 0
      %4508 = vmatprep.subr.bf16.mxu0 0
      %4509 = vmatpush1.bf16.msra.mxu0 0
      %4510 = vmatprep.subr.bf16.mxu0 0
      %4511 = vmatpush1.bf16.msra.mxu0 0
      %4512 = vmatprep.mubr.bf16.mxu0 0
      %4513 = vmatmul.mubr.bf16.gmra.mrb[0].mxu0 %v4430
      %v4514 = vpop.f32.mrb[0].mxu0
      %v4515 = vadd.f32 0.0, %v4514
      %v4516 = vpop.f32.mrb[0].mxu0
      %v4517 = vpop.f32.mrb[0].mxu0
      %v4518 = vpop.f32.mrb[0].mxu0
      %4519 = vdwg.mxu0
      %v4520 = vadd.f32 %v4515, 0.0
      %v4521 = vld [vmem:[%s361] sm:$0xf]
      %v4522 = vld [vmem:[%s361 + $0x4] sm:$0xf]
      %v4523 = vld [vmem:[%s361 + $0x8] sm:$0xf]
      %v4524 = vld [vmem:[%s361 + $0xc] sm:$0xf]
      %v4525 = vld [vmem:[%s361 + $0x10] sm:$0xf]
      %v4526 = vld [vmem:[%s361 + $0x14] sm:$0xf]
      %v4527 = vld [vmem:[%s361 + $0x18] sm:$0xf]
      %v4528 = vld [vmem:[%s361 + $0x1c] sm:$0xf]
      %v4529 = vld [vmem:[%s361 + $0x20] sm:$0xf]
      %v4530 = vld [vmem:[%s361 + $0x24] sm:$0xf]
      %v4531 = vld [vmem:[%s361 + $0x28] sm:$0xf]
      %v4532 = vld [vmem:[%s361 + $0x2c] sm:$0xf]
      %v4533 = vld [vmem:[%s361 + $0x30] sm:$0xf]
      %v4534 = vld [vmem:[%s361 + $0x34] sm:$0xf]
      %v4535 = vld [vmem:[%s361 + $0x38] sm:$0xf]
      %v4536 = vld [vmem:[%s361 + $0x3c] sm:$0xf]
      %v4539 = vunpack.c.l.b16 %v4408
      %v4540 = vunpack.c.l.b16 %v4409
      %v4541 = vpack.c.b16 %v4540, %v4539
      %v4559 = vunpack.c.l.b16 %v4521
      %v4560 = vunpack.c.l.b16 %v4522
      %v4561 = vunpack.c.l.b16 %v4523
      %v4562 = vunpack.c.l.b16 %v4524
      %v4563 = vunpack.c.l.b16 %v4525
      %v4564 = vunpack.c.l.b16 %v4526
      %v4565 = vunpack.c.l.b16 %v4527
      %v4566 = vunpack.c.l.b16 %v4528
      %v4567 = vunpack.c.l.b16 %v4529
      %v4568 = vunpack.c.l.b16 %v4530
      %v4569 = vunpack.c.l.b16 %v4531
      %v4570 = vunpack.c.l.b16 %v4532
      %v4571 = vunpack.c.l.b16 %v4533
      %v4572 = vunpack.c.l.b16 %v4534
      %v4573 = vunpack.c.l.b16 %v4535
      %v4574 = vunpack.c.l.b16 %v4536
      %v4575 = vpack.c.b16 %v4560, %v4559
      %v4576 = vpack.c.b16 %v4562, %v4561
      %v4577 = vpack.c.b16 %v4564, %v4563
      %v4578 = vpack.c.b16 %v4566, %v4565
      %v4579 = vpack.c.b16 %v4568, %v4567
      %v4580 = vpack.c.b16 %v4570, %v4569
      %v4581 = vpack.c.b16 %v4572, %v4571
      %v4582 = vpack.c.b16 %v4574, %v4573
      %4591 = vmatprep.subr.bf16.mxu0 0
      %4592 = vmatpush1.bf16.msra.mxu0 %v4575
      %4593 = vmatprep.subr.bf16.mxu0 0
      %4594 = vmatpush1.bf16.msra.mxu0 %v4576
      %4595 = vmatprep.subr.bf16.mxu0 0
      %4596 = vmatpush1.bf16.msra.mxu0 %v4577
      %4597 = vmatprep.subr.bf16.mxu0 0
      %4598 = vmatpush1.bf16.msra.mxu0 %v4578
      %4599 = vmatprep.subr.bf16.mxu0 0
      %4600 = vmatpush1.bf16.msra.mxu0 %v4579
      %4601 = vmatprep.subr.bf16.mxu0 0
      %4602 = vmatpush1.bf16.msra.mxu0 %v4580
      %4603 = vmatprep.subr.bf16.mxu0 0
      %4604 = vmatpush1.bf16.msra.mxu0 %v4581
      %4605 = vmatprep.subr.bf16.mxu0 0
      %4606 = vmatpush1.bf16.msra.mxu0 %v4582
      %4607 = vmatprep.subr.bf16.mxu0 0
      %4608 = vmatpush1.bf16.msra.mxu0 0
      %4609 = vmatprep.subr.bf16.mxu0 0
      %4610 = vmatpush1.bf16.msra.mxu0 0
      %4611 = vmatprep.subr.bf16.mxu0 0
      %4612 = vmatpush1.bf16.msra.mxu0 0
      %4613 = vmatprep.subr.bf16.mxu0 0
      %4614 = vmatpush1.bf16.msra.mxu0 0
      %4615 = vmatprep.subr.bf16.mxu0 0
      %4616 = vmatpush1.bf16.msra.mxu0 0
      %4617 = vmatprep.subr.bf16.mxu0 0
      %4618 = vmatpush1.bf16.msra.mxu0 0
      %4619 = vmatprep.subr.bf16.mxu0 0
      %4620 = vmatpush1.bf16.msra.mxu0 0
      %4621 = vmatprep.subr.bf16.mxu0 0
      %4622 = vmatpush1.bf16.msra.mxu0 0
      %4623 = vmatprep.mubr.bf16.mxu0 0
      %4624 = vmatmul.mubr.bf16.gmra.mrb[0].mxu0 %v4541
      %v4625 = vpop.f32.mrb[0].mxu0
      %v4626 = vadd.f32 0.0, %v4625
      %v4627 = vpop.f32.mrb[0].mxu0
      %v4628 = vpop.f32.mrb[0].mxu0
      %v4629 = vpop.f32.mrb[0].mxu0
      %4630 = vdwg.mxu0
      %v4631 = vadd.f32 %v4520, %v4626
      %v4632 = vld [vmem:[%s473] sm:$0xf]
      %v4633 = vld [vmem:[%s473 + $0x4] sm:$0xf]
      %v4634 = vld [vmem:[%s473 + $0x8] sm:$0xf]
      %v4635 = vld [vmem:[%s473 + $0xc] sm:$0xf]
      %v4636 = vld [vmem:[%s473 + $0x10] sm:$0xf]
      %v4637 = vld [vmem:[%s473 + $0x14] sm:$0xf]
      %v4638 = vld [vmem:[%s473 + $0x18] sm:$0xf]
      %v4639 = vld [vmem:[%s473 + $0x1c] sm:$0xf]
      %v4640 = vld [vmem:[%s473 + $0x20] sm:$0xf]
      %v4641 = vld [vmem:[%s473 + $0x24] sm:$0xf]
      %v4642 = vld [vmem:[%s473 + $0x28] sm:$0xf]
      %v4643 = vld [vmem:[%s473 + $0x2c] sm:$0xf]
      %v4644 = vld [vmem:[%s473 + $0x30] sm:$0xf]
      %v4645 = vld [vmem:[%s473 + $0x34] sm:$0xf]
      %v4646 = vld [vmem:[%s473 + $0x38] sm:$0xf]
      %v4647 = vld [vmem:[%s473 + $0x3c] sm:$0xf]
      %v4664 = vunpack.c.l.b16 %v4632
      %v4665 = vunpack.c.l.b16 %v4633
      %v4666 = vunpack.c.l.b16 %v4634
      %v4667 = vunpack.c.l.b16 %v4635
      %v4668 = vunpack.c.l.b16 %v4636
      %v4669 = vunpack.c.l.b16 %v4637
      %v4670 = vunpack.c.l.b16 %v4638
      %v4671 = vunpack.c.l.b16 %v4639
      %v4672 = vunpack.c.l.b16 %v4640
      %v4673 = vunpack.c.l.b16 %v4641
      %v4674 = vunpack.c.l.b16 %v4642
      %v4675 = vunpack.c.l.b16 %v4643
      %v4676 = vunpack.c.l.b16 %v4644
      %v4677 = vunpack.c.l.b16 %v4645
      %v4678 = vunpack.c.l.b16 %v4646
      %v4679 = vunpack.c.l.b16 %v4647
      %v4680 = vpack.c.b16 %v4665, %v4664
      %v4681 = vpack.c.b16 %v4667, %v4666
      %v4682 = vpack.c.b16 %v4669, %v4668
      %v4683 = vpack.c.b16 %v4671, %v4670
      %v4684 = vpack.c.b16 %v4673, %v4672
      %v4685 = vpack.c.b16 %v4675, %v4674
      %v4686 = vpack.c.b16 %v4677, %v4676
      %v4687 = vpack.c.b16 %v4679, %v4678
      %4696 = vmatprep.subr.bf16.mxu0 0
      %4697 = vmatpush1.bf16.msra.mxu0 %v4680
      %4698 = vmatprep.subr.bf16.mxu0 0
      %4699 = vmatpush1.bf16.msra.mxu0 %v4681
      %4700 = vmatprep.subr.bf16.mxu0 0
      %4701 = vmatpush1.bf16.msra.mxu0 %v4682
      %4702 = vmatprep.subr.bf16.mxu0 0
      %4703 = vmatpush1.bf16.msra.mxu0 %v4683
      %4704 = vmatprep.subr.bf16.mxu0 0
      %4705 = vmatpush1.bf16.msra.mxu0 %v4684
      %4706 = vmatprep.subr.bf16.mxu0 0
      %4707 = vmatpush1.bf16.msra.mxu0 %v4685
      %4708 = vmatprep.subr.bf16.mxu0 0
      %4709 = vmatpush1.bf16.msra.mxu0 %v4686
      %4710 = vmatprep.subr.bf16.mxu0 0
      %4711 = vmatpush1.bf16.msra.mxu0 %v4687
      %4712 = vmatprep.subr.bf16.mxu0 0
      %4713 = vmatpush1.bf16.msra.mxu0 0
      %4714 = vmatprep.subr.bf16.mxu0 0
      %4715 = vmatpush1.bf16.msra.mxu0 0
      %4716 = vmatprep.subr.bf16.mxu0 0
      %4717 = vmatpush1.bf16.msra.mxu0 0
      %4718 = vmatprep.subr.bf16.mxu0 0
      %4719 = vmatpush1.bf16.msra.mxu0 0
      %4720 = vmatprep.subr.bf16.mxu0 0
      %4721 = vmatpush1.bf16.msra.mxu0 0
      %4722 = vmatprep.subr.bf16.mxu0 0
      %4723 = vmatpush1.bf16.msra.mxu0 0
      %4724 = vmatprep.subr.bf16.mxu0 0
      %4725 = vmatpush1.bf16.msra.mxu0 0
      %4726 = vmatprep.subr.bf16.mxu0 0
      %4727 = vmatpush1.bf16.msra.mxu0 0
      %4728 = vmatprep.mubr.bf16.mxu0 0
      %4729 = vmatmul.mubr.bf16.gmra.mrb[0].mxu0 %v4430
      %v4730 = vpop.f32.mrb[0].mxu0
      %v4731 = vadd.f32 0.0, %v4730
      %v4732 = vpop.f32.mrb[0].mxu0
      %v4733 = vpop.f32.mrb[0].mxu0
      %v4734 = vadd.f32 0.0, %v4733
      %v4735 = vpop.f32.mrb[0].mxu0
      %4736 = vdwg.mxu0
      %v4739 = vrot.slane %v4731, 1
      %v4740 = vrot.slane %v4734, 1
      %v4741 = vsel %vm581, %v4739, %v4740
      %v4743 = vadd.f32 %v4631, %v4741
      %s4744 = scalar_lea.vmem %s234, 72
      %v4745 = vld [vmem:[%s4744] sm:$0xf]
      %v4746 = vld [vmem:[%s4744 + $0x4] sm:$0x1]
      %s4747 = scalar_lea.vmem %s239, 72
      %v4748 = vld [vmem:[%s4747] sm:$0xf]
      %v4749 = vld [vmem:[%s4747 + $0x4] sm:$0x1]
      %v4750 = vld [vmem:[%s593] sm:$0xf]
      %v4751 = vld [vmem:[%s593 + $0x4] sm:$0xf]
      %v4752 = vld [vmem:[%s593 + $0x8] sm:$0xf]
      %v4753 = vld [vmem:[%s593 + $0xc] sm:$0xf]
      %v4754 = vld [vmem:[%s593 + $0x10] sm:$0xf]
      %v4755 = vld [vmem:[%s593 + $0x14] sm:$0xf]
      %v4756 = vld [vmem:[%s593 + $0x18] sm:$0xf]
      %v4757 = vld [vmem:[%s593 + $0x1c] sm:$0xf]
      %v4758 = vld [vmem:[%s593 + $0x20] sm:$0xf]
      %v4759 = vld [vmem:[%s593 + $0x24] sm:$0xf]
      %v4760 = vld [vmem:[%s593 + $0x28] sm:$0xf]
      %v4761 = vld [vmem:[%s593 + $0x2c] sm:$0xf]
      %v4762 = vld [vmem:[%s593 + $0x30] sm:$0xf]
      %v4763 = vld [vmem:[%s593 + $0x34] sm:$0xf]
      %v4764 = vld [vmem:[%s593 + $0x38] sm:$0xf]
      %v4765 = vld [vmem:[%s593 + $0x3c] sm:$0xf]
      %v4768 = vunpack.c.l.b16 %v4745
      %v4769 = vunpack.c.l.b16 %v4746
      %v4770 = vpack.c.b16 %v4769, %v4768
      %v4788 = vunpack.c.l.b16 %v4750
      %v4789 = vunpack.c.l.b16 %v4751
      %v4790 = vunpack.c.l.b16 %v4752
      %v4791 = vunpack.c.l.b16 %v4753
      %v4792 = vunpack.c.l.b16 %v4754
      %v4793 = vunpack.c.l.b16 %v4755
      %v4794 = vunpack.c.l.b16 %v4756
      %v4795 = vunpack.c.l.b16 %v4757
      %v4796 = vunpack.c.l.b16 %v4758
      %v4797 = vunpack.c.l.b16 %v4759
      %v4798 = vunpack.c.l.b16 %v4760
      %v4799 = vunpack.c.l.b16 %v4761
      %v4800 = vunpack.c.l.b16 %v4762
      %v4801 = vunpack.c.l.b16 %v4763
      %v4802 = vunpack.c.l.b16 %v4764
      %v4803 = vunpack.c.l.b16 %v4765
      %v4804 = vpack.c.b16 %v4789, %v4788
      %v4805 = vpack.c.b16 %v4791, %v4790
      %v4806 = vpack.c.b16 %v4793, %v4792
      %v4807 = vpack.c.b16 %v4795, %v4794
      %v4808 = vpack.c.b16 %v4797, %v4796
      %v4809 = vpack.c.b16 %v4799, %v4798
      %v4810 = vpack.c.b16 %v4801, %v4800
      %v4811 = vpack.c.b16 %v4803, %v4802
      %4820 = vmatprep.subr.bf16.mxu0 0
      %4821 = vmatpush1.bf16.msra.mxu0 %v4804
      %4822 = vmatprep.subr.bf16.mxu0 0
      %4823 = vmatpush1.bf16.msra.mxu0 %v4805
      %4824 = vmatprep.subr.bf16.mxu0 0
      %4825 = vmatpush1.bf16.msra.mxu0 %v4806
      %4826 = vmatprep.subr.bf16.mxu0 0
      %4827 = vmatpush1.bf16.msra.mxu0 %v4807
      %4828 = vmatprep.subr.bf16.mxu0 0
      %4829 = vmatpush1.bf16.msra.mxu0 %v4808
      %4830 = vmatprep.subr.bf16.mxu0 0
      %4831 = vmatpush1.bf16.msra.mxu0 %v4809
      %4832 = vmatprep.subr.bf16.mxu0 0
      %4833 = vmatpush1.bf16.msra.mxu0 %v4810
      %4834 = vmatprep.subr.bf16.mxu0 0
      %4835 = vmatpush1.bf16.msra.mxu0 %v4811
      %4836 = vmatprep.subr.bf16.mxu0 0
      %4837 = vmatpush1.bf16.msra.mxu0 0
      %4838 = vmatprep.subr.bf16.mxu0 0
      %4839 = vmatpush1.bf16.msra.mxu0 0
      %4840 = vmatprep.subr.bf16.mxu0 0
      %4841 = vmatpush1.bf16.msra.mxu0 0
      %4842 = vmatprep.subr.bf16.mxu0 0
      %4843 = vmatpush1.bf16.msra.mxu0 0
      %4844 = vmatprep.subr.bf16.mxu0 0
      %4845 = vmatpush1.bf16.msra.mxu0 0
      %4846 = vmatprep.subr.bf16.mxu0 0
      %4847 = vmatpush1.bf16.msra.mxu0 0
      %4848 = vmatprep.subr.bf16.mxu0 0
      %4849 = vmatpush1.bf16.msra.mxu0 0
      %4850 = vmatprep.subr.bf16.mxu0 0
      %4851 = vmatpush1.bf16.msra.mxu0 0
      %4852 = vmatprep.mubr.bf16.mxu0 0
      %4853 = vmatmul.mubr.bf16.gmra.mrb[0].mxu0 %v4770
      %v4854 = vpop.f32.mrb[0].mxu0
      %v4855 = vadd.f32 0.0, %v4854
      %v4856 = vpop.f32.mrb[0].mxu0
      %v4857 = vpop.f32.mrb[0].mxu0
      %v4858 = vpop.f32.mrb[0].mxu0
      %4859 = vdwg.mxu0
      %v4860 = vadd.f32 %v4743, %v4855
      %v4861 = vld [vmem:[%s705] sm:$0xf]
      %v4862 = vld [vmem:[%s705 + $0x4] sm:$0xf]
      %v4863 = vld [vmem:[%s705 + $0x8] sm:$0xf]
      %v4864 = vld [vmem:[%s705 + $0xc] sm:$0xf]
      %v4865 = vld [vmem:[%s705 + $0x10] sm:$0xf]
      %v4866 = vld [vmem:[%s705 + $0x14] sm:$0xf]
      %v4867 = vld [vmem:[%s705 + $0x18] sm:$0xf]
      %v4868 = vld [vmem:[%s705 + $0x1c] sm:$0xf]
      %v4869 = vld [vmem:[%s705 + $0x20] sm:$0xf]
      %v4870 = vld [vmem:[%s705 + $0x24] sm:$0xf]
      %v4871 = vld [vmem:[%s705 + $0x28] sm:$0xf]
      %v4872 = vld [vmem:[%s705 + $0x2c] sm:$0xf]
      %v4873 = vld [vmem:[%s705 + $0x30] sm:$0xf]
      %v4874 = vld [vmem:[%s705 + $0x34] sm:$0xf]
      %v4875 = vld [vmem:[%s705 + $0x38] sm:$0xf]
      %v4876 = vld [vmem:[%s705 + $0x3c] sm:$0xf]
      %v4879 = vunpack.c.l.b16 %v4748
      %v4880 = vunpack.c.l.b16 %v4749
      %v4881 = vpack.c.b16 %v4880, %v4879
      %v4899 = vunpack.c.l.b16 %v4861
      %v4900 = vunpack.c.l.b16 %v4862
      %v4901 = vunpack.c.l.b16 %v4863
      %v4902 = vunpack.c.l.b16 %v4864
      %v4903 = vunpack.c.l.b16 %v4865
      %v4904 = vunpack.c.l.b16 %v4866
      %v4905 = vunpack.c.l.b16 %v4867
      %v4906 = vunpack.c.l.b16 %v4868
      %v4907 = vunpack.c.l.b16 %v4869
      %v4908 = vunpack.c.l.b16 %v4870
      %v4909 = vunpack.c.l.b16 %v4871
      %v4910 = vunpack.c.l.b16 %v4872
      %v4911 = vunpack.c.l.b16 %v4873
      %v4912 = vunpack.c.l.b16 %v4874
      %v4913 = vunpack.c.l.b16 %v4875
      %v4914 = vunpack.c.l.b16 %v4876
      %v4915 = vpack.c.b16 %v4900, %v4899
      %v4916 = vpack.c.b16 %v4902, %v4901
      %v4917 = vpack.c.b16 %v4904, %v4903
      %v4918 = vpack.c.b16 %v4906, %v4905
      %v4919 = vpack.c.b16 %v4908, %v4907
      %v4920 = vpack.c.b16 %v4910, %v4909
      %v4921 = vpack.c.b16 %v4912, %v4911
      %v4922 = vpack.c.b16 %v4914, %v4913
      %4931 = vmatprep.subr.bf16.mxu0 0
      %4932 = vmatpush1.bf16.msra.mxu0 %v4915
      %4933 = vmatprep.subr.bf16.mxu0 0
      %4934 = vmatpush1.bf16.msra.mxu0 %v4916
      %4935 = vmatprep.subr.bf16.mxu0 0
      %4936 = vmatpush1.bf16.msra.mxu0 %v4917
      %4937 = vmatprep.subr.bf16.mxu0 0
      %4938 = vmatpush1.bf16.msra.mxu0 %v4918
      %4939 = vmatprep.subr.bf16.mxu0 0
      %4940 = vmatpush1.bf16.msra.mxu0 %v4919
      %4941 = vmatprep.subr.bf16.mxu0 0
      %4942 = vmatpush1.bf16.msra.mxu0 %v4920
      %4943 = vmatprep.subr.bf16.mxu0 0
      %4944 = vmatpush1.bf16.msra.mxu0 %v4921
      %4945 = vmatprep.subr.bf16.mxu0 0
      %4946 = vmatpush1.bf16.msra.mxu0 %v4922
      %4947 = vmatprep.subr.bf16.mxu0 0
      %4948 = vmatpush1.bf16.msra.mxu0 0
      %4949 = vmatprep.subr.bf16.mxu0 0
      %4950 = vmatpush1.bf16.msra.mxu0 0
      %4951 = vmatprep.subr.bf16.mxu0 0
      %4952 = vmatpush1.bf16.msra.mxu0 0
      %4953 = vmatprep.subr.bf16.mxu0 0
      %4954 = vmatpush1.bf16.msra.mxu0 0
      %4955 = vmatprep.subr.bf16.mxu0 0
      %4956 = vmatpush1.bf16.msra.mxu0 0
      %4957 = vmatprep.subr.bf16.mxu0 0
      %4958 = vmatpush1.bf16.msra.mxu0 0
      %4959 = vmatprep.subr.bf16.mxu0 0
      %4960 = vmatpush1.bf16.msra.mxu0 0
      %4961 = vmatprep.subr.bf16.mxu0 0
      %4962 = vmatpush1.bf16.msra.mxu0 0
      %4963 = vmatprep.mubr.bf16.mxu0 0
      %4964 = vmatmul.mubr.bf16.gmra.mrb[0].mxu0 %v4881
      %v4965 = vpop.f32.mrb[0].mxu0
      %v4966 = vadd.f32 0.0, %v4965
      %v4967 = vpop.f32.mrb[0].mxu0
      %v4968 = vpop.f32.mrb[0].mxu0
      %v4969 = vpop.f32.mrb[0].mxu0
      %4970 = vdwg.mxu0
      %v4971 = vadd.f32 %v4860, %v4966
      %v4972 = vld [vmem:[%s817] sm:$0xf]
      %v4973 = vld [vmem:[%s817 + $0x4] sm:$0xf]
      %v4974 = vld [vmem:[%s817 + $0x8] sm:$0xf]
      %v4975 = vld [vmem:[%s817 + $0xc] sm:$0xf]
      %v4976 = vld [vmem:[%s817 + $0x10] sm:$0xf]
      %v4977 = vld [vmem:[%s817 + $0x14] sm:$0xf]
      %v4978 = vld [vmem:[%s817 + $0x18] sm:$0xf]
      %v4979 = vld [vmem:[%s817 + $0x1c] sm:$0xf]
      %v4980 = vld [vmem:[%s817 + $0x20] sm:$0xf]
      %v4981 = vld [vmem:[%s817 + $0x24] sm:$0xf]
      %v4982 = vld [vmem:[%s817 + $0x28] sm:$0xf]
      %v4983 = vld [vmem:[%s817 + $0x2c] sm:$0xf]
      %v4984 = vld [vmem:[%s817 + $0x30] sm:$0xf]
      %v4985 = vld [vmem:[%s817 + $0x34] sm:$0xf]
      %v4986 = vld [vmem:[%s817 + $0x38] sm:$0xf]
      %v4987 = vld [vmem:[%s817 + $0x3c] sm:$0xf]
      %v5004 = vunpack.c.l.b16 %v4972
      %v5005 = vunpack.c.l.b16 %v4973
      %v5006 = vunpack.c.l.b16 %v4974
      %v5007 = vunpack.c.l.b16 %v4975
      %v5008 = vunpack.c.l.b16 %v4976
      %v5009 = vunpack.c.l.b16 %v4977
      %v5010 = vunpack.c.l.b16 %v4978
      %v5011 = vunpack.c.l.b16 %v4979
      %v5012 = vunpack.c.l.b16 %v4980
      %v5013 = vunpack.c.l.b16 %v4981
      %v5014 = vunpack.c.l.b16 %v4982
      %v5015 = vunpack.c.l.b16 %v4983
      %v5016 = vunpack.c.l.b16 %v4984
      %v5017 = vunpack.c.l.b16 %v4985
      %v5018 = vunpack.c.l.b16 %v4986
      %v5019 = vunpack.c.l.b16 %v4987
      %v5020 = vpack.c.b16 %v5005, %v5004
      %v5021 = vpack.c.b16 %v5007, %v5006
      %v5022 = vpack.c.b16 %v5009, %v5008
      %v5023 = vpack.c.b16 %v5011, %v5010
      %v5024 = vpack.c.b16 %v5013, %v5012
      %v5025 = vpack.c.b16 %v5015, %v5014
      %v5026 = vpack.c.b16 %v5017, %v5016
      %v5027 = vpack.c.b16 %v5019, %v5018
      %5036 = vmatprep.subr.bf16.mxu0 0
      %5037 = vmatpush1.bf16.msra.mxu0 %v5020
      %5038 = vmatprep.subr.bf16.mxu0 0
      %5039 = vmatpush1.bf16.msra.mxu0 %v5021
      %5040 = vmatprep.subr.bf16.mxu0 0
      %5041 = vmatpush1.bf16.msra.mxu0 %v5022
      %5042 = vmatprep.subr.bf16.mxu0 0
      %5043 = vmatpush1.bf16.msra.mxu0 %v5023
      %5044 = vmatprep.subr.bf16.mxu0 0
      %5045 = vmatpush1.bf16.msra.mxu0 %v5024
      %5046 = vmatprep.subr.bf16.mxu0 0
      %5047 = vmatpush1.bf16.msra.mxu0 %v5025
      %5048 = vmatprep.subr.bf16.mxu0 0
      %5049 = vmatpush1.bf16.msra.mxu0 %v5026
      %5050 = vmatprep.subr.bf16.mxu0 0
      %5051 = vmatpush1.bf16.msra.mxu0 %v5027
      %5052 = vmatprep.subr.bf16.mxu0 0
      %5053 = vmatpush1.bf16.msra.mxu0 0
      %5054 = vmatprep.subr.bf16.mxu0 0
      %5055 = vmatpush1.bf16.msra.mxu0 0
      %5056 = vmatprep.subr.bf16.mxu0 0
      %5057 = vmatpush1.bf16.msra.mxu0 0
      %5058 = vmatprep.subr.bf16.mxu0 0
      %5059 = vmatpush1.bf16.msra.mxu0 0
      %5060 = vmatprep.subr.bf16.mxu0 0
      %5061 = vmatpush1.bf16.msra.mxu0 0
      %5062 = vmatprep.subr.bf16.mxu0 0
      %5063 = vmatpush1.bf16.msra.mxu0 0
      %5064 = vmatprep.subr.bf16.mxu0 0
      %5065 = vmatpush1.bf16.msra.mxu0 0
      %5066 = vmatprep.subr.bf16.mxu0 0
      %5067 = vmatpush1.bf16.msra.mxu0 0
      %5068 = vmatprep.mubr.bf16.mxu0 0
      %5069 = vmatmul.mubr.bf16.gmra.mrb[0].mxu0 %v4770
      %v5070 = vpop.f32.mrb[0].mxu0
      %v5071 = vadd.f32 0.0, %v5070
      %v5072 = vpop.f32.mrb[0].mxu0
      %v5073 = vpop.f32.mrb[0].mxu0
      %v5074 = vadd.f32 0.0, %v5073
      %v5075 = vpop.f32.mrb[0].mxu0
      %5076 = vdwg.mxu0
      %v5079 = vrot.slane %v5071, 1
      %v5080 = vrot.slane %v5074, 1
      %v5081 = vsel %vm581, %v5079, %v5080
      %v5083 = vadd.f32 %v4971, %v5081
      %s5084 = scalar_lea.vmem %s234, 80
      %v5085 = vld [vmem:[%s5084] sm:$0xf]
      %v5086 = vld [vmem:[%s5084 + $0x4] sm:$0x1]
      %s5087 = scalar_lea.vmem %s239, 80
      %v5088 = vld [vmem:[%s5087] sm:$0xf]
      %v5089 = vld [vmem:[%s5087 + $0x4] sm:$0x1]
      %v5090 = vld [vmem:[%s936] sm:$0xf]
      %v5091 = vld [vmem:[%s936 + $0x4] sm:$0xf]
      %v5092 = vld [vmem:[%s936 + $0x8] sm:$0xf]
      %v5093 = vld [vmem:[%s936 + $0xc] sm:$0xf]
      %v5094 = vld [vmem:[%s936 + $0x10] sm:$0xf]
      %v5095 = vld [vmem:[%s936 + $0x14] sm:$0xf]
      %v5096 = vld [vmem:[%s936 + $0x18] sm:$0xf]
      %v5097 = vld [vmem:[%s936 + $0x1c] sm:$0xf]
      %v5098 = vld [vmem:[%s936 + $0x20] sm:$0xf]
      %v5099 = vld [vmem:[%s936 + $0x24] sm:$0xf]
      %v5100 = vld [vmem:[%s936 + $0x28] sm:$0xf]
      %v5101 = vld [vmem:[%s936 + $0x2c] sm:$0xf]
      %v5102 = vld [vmem:[%s936 + $0x30] sm:$0xf]
      %v5103 = vld [vmem:[%s936 + $0x34] sm:$0xf]
      %v5104 = vld [vmem:[%s936 + $0x38] sm:$0xf]
      %v5105 = vld [vmem:[%s936 + $0x3c] sm:$0xf]
      %v5108 = vunpack.c.l.b16 %v5085
      %v5109 = vunpack.c.l.b16 %v5086
      %v5110 = vpack.c.b16 %v5109, %v5108
      %v5128 = vunpack.c.l.b16 %v5090
      %v5129 = vunpack.c.l.b16 %v5091
      %v5130 = vunpack.c.l.b16 %v5092
      %v5131 = vunpack.c.l.b16 %v5093
      %v5132 = vunpack.c.l.b16 %v5094
      %v5133 = vunpack.c.l.b16 %v5095
      %v5134 = vunpack.c.l.b16 %v5096
      %v5135 = vunpack.c.l.b16 %v5097
      %v5136 = vunpack.c.l.b16 %v5098
      %v5137 = vunpack.c.l.b16 %v5099
      %v5138 = vunpack.c.l.b16 %v5100
      %v5139 = vunpack.c.l.b16 %v5101
      %v5140 = vunpack.c.l.b16 %v5102
      %v5141 = vunpack.c.l.b16 %v5103
      %v5142 = vunpack.c.l.b16 %v5104
      %v5143 = vunpack.c.l.b16 %v5105
      %v5144 = vpack.c.b16 %v5129, %v5128
      %v5145 = vpack.c.b16 %v5131, %v5130
      %v5146 = vpack.c.b16 %v5133, %v5132
      %v5147 = vpack.c.b16 %v5135, %v5134
      %v5148 = vpack.c.b16 %v5137, %v5136
      %v5149 = vpack.c.b16 %v5139, %v5138
      %v5150 = vpack.c.b16 %v5141, %v5140
      %v5151 = vpack.c.b16 %v5143, %v5142
      %5160 = vmatprep.subr.bf16.mxu0 0
      %5161 = vmatpush1.bf16.msra.mxu0 %v5144
      %5162 = vmatprep.subr.bf16.mxu0 0
      %5163 = vmatpush1.bf16.msra.mxu0 %v5145
      %5164 = vmatprep.subr.bf16.mxu0 0
      %5165 = vmatpush1.bf16.msra.mxu0 %v5146
      %5166 = vmatprep.subr.bf16.mxu0 0
      %5167 = vmatpush1.bf16.msra.mxu0 %v5147
      %5168 = vmatprep.subr.bf16.mxu0 0
      %5169 = vmatpush1.bf16.msra.mxu0 %v5148
      %5170 = vmatprep.subr.bf16.mxu0 0
      %5171 = vmatpush1.bf16.msra.mxu0 %v5149
      %5172 = vmatprep.subr.bf16.mxu0 0
      %5173 = vmatpush1.bf16.msra.mxu0 %v5150
      %5174 = vmatprep.subr.bf16.mxu0 0
      %5175 = vmatpush1.bf16.msra.mxu0 %v5151
      %5176 = vmatprep.subr.bf16.mxu0 0
      %5177 = vmatpush1.bf16.msra.mxu0 0
      %5178 = vmatprep.subr.bf16.mxu0 0
      %5179 = vmatpush1.bf16.msra.mxu0 0
      %5180 = vmatprep.subr.bf16.mxu0 0
      %5181 = vmatpush1.bf16.msra.mxu0 0
      %5182 = vmatprep.subr.bf16.mxu0 0
      %5183 = vmatpush1.bf16.msra.mxu0 0
      %5184 = vmatprep.subr.bf16.mxu0 0
      %5185 = vmatpush1.bf16.msra.mxu0 0
      %5186 = vmatprep.subr.bf16.mxu0 0
      %5187 = vmatpush1.bf16.msra.mxu0 0
      %5188 = vmatprep.subr.bf16.mxu0 0
      %5189 = vmatpush1.bf16.msra.mxu0 0
      %5190 = vmatprep.subr.bf16.mxu0 0
      %5191 = vmatpush1.bf16.msra.mxu0 0
      %5192 = vmatprep.mubr.bf16.mxu0 0
      %5193 = vmatmul.mubr.bf16.gmra.mrb[0].mxu0 %v5110
      %v5194 = vpop.f32.mrb[0].mxu0
      %v5195 = vadd.f32 0.0, %v5194
      %v5196 = vpop.f32.mrb[0].mxu0
      %v5197 = vpop.f32.mrb[0].mxu0
      %v5198 = vpop.f32.mrb[0].mxu0
      %5199 = vdwg.mxu0
      %v5200 = vadd.f32 %v5083, %v5195
      %v5201 = vld [vmem:[%s1048] sm:$0xf]
      %v5202 = vld [vmem:[%s1048 + $0x4] sm:$0xf]
      %v5203 = vld [vmem:[%s1048 + $0x8] sm:$0xf]
      %v5204 = vld [vmem:[%s1048 + $0xc] sm:$0xf]
      %v5205 = vld [vmem:[%s1048 + $0x10] sm:$0xf]
      %v5206 = vld [vmem:[%s1048 + $0x14] sm:$0xf]
      %v5207 = vld [vmem:[%s1048 + $0x18] sm:$0xf]
      %v5208 = vld [vmem:[%s1048 + $0x1c] sm:$0xf]
      %v5209 = vld [vmem:[%s1048 + $0x20] sm:$0xf]
      %v5210 = vld [vmem:[%s1048 + $0x24] sm:$0xf]
      %v5211 = vld [vmem:[%s1048 + $0x28] sm:$0xf]
      %v5212 = vld [vmem:[%s1048 + $0x2c] sm:$0xf]
      %v5213 = vld [vmem:[%s1048 + $0x30] sm:$0xf]
      %v5214 = vld [vmem:[%s1048 + $0x34] sm:$0xf]
      %v5215 = vld [vmem:[%s1048 + $0x38] sm:$0xf]
      %v5216 = vld [vmem:[%s1048 + $0x3c] sm:$0xf]
      %v5219 = vunpack.c.l.b16 %v5088
      %v5220 = vunpack.c.l.b16 %v5089
      %v5221 = vpack.c.b16 %v5220, %v5219
      %v5239 = vunpack.c.l.b16 %v5201
      %v5240 = vunpack.c.l.b16 %v5202
      %v5241 = vunpack.c.l.b16 %v5203
      %v5242 = vunpack.c.l.b16 %v5204
      %v5243 = vunpack.c.l.b16 %v5205
      %v5244 = vunpack.c.l.b16 %v5206
      %v5245 = vunpack.c.l.b16 %v5207
      %v5246 = vunpack.c.l.b16 %v5208
      %v5247 = vunpack.c.l.b16 %v5209
      %v5248 = vunpack.c.l.b16 %v5210
      %v5249 = vunpack.c.l.b16 %v5211
      %v5250 = vunpack.c.l.b16 %v5212
      %v5251 = vunpack.c.l.b16 %v5213
      %v5252 = vunpack.c.l.b16 %v5214
      %v5253 = vunpack.c.l.b16 %v5215
      %v5254 = vunpack.c.l.b16 %v5216
      %v5255 = vpack.c.b16 %v5240, %v5239
      %v5256 = vpack.c.b16 %v5242, %v5241
      %v5257 = vpack.c.b16 %v5244, %v5243
      %v5258 = vpack.c.b16 %v5246, %v5245
      %v5259 = vpack.c.b16 %v5248, %v5247
      %v5260 = vpack.c.b16 %v5250, %v5249
      %v5261 = vpack.c.b16 %v5252, %v5251
      %v5262 = vpack.c.b16 %v5254, %v5253
      %5271 = vmatprep.subr.bf16.mxu0 0
      %5272 = vmatpush1.bf16.msra.mxu0 %v5255
      %5273 = vmatprep.subr.bf16.mxu0 0
      %5274 = vmatpush1.bf16.msra.mxu0 %v5256
      %5275 = vmatprep.subr.bf16.mxu0 0
      %5276 = vmatpush1.bf16.msra.mxu0 %v5257
      %5277 = vmatprep.subr.bf16.mxu0 0
      %5278 = vmatpush1.bf16.msra.mxu0 %v5258
      %5279 = vmatprep.subr.bf16.mxu0 0
      %5280 = vmatpush1.bf16.msra.mxu0 %v5259
      %5281 = vmatprep.subr.bf16.mxu0 0
      %5282 = vmatpush1.bf16.msra.mxu0 %v5260
      %5283 = vmatprep.subr.bf16.mxu0 0
      %5284 = vmatpush1.bf16.msra.mxu0 %v5261
      %5285 = vmatprep.subr.bf16.mxu0 0
      %5286 = vmatpush1.bf16.msra.mxu0 %v5262
      %5287 = vmatprep.subr.bf16.mxu0 0
      %5288 = vmatpush1.bf16.msra.mxu0 0
      %5289 = vmatprep.subr.bf16.mxu0 0
      %5290 = vmatpush1.bf16.msra.mxu0 0
      %5291 = vmatprep.subr.bf16.mxu0 0
      %5292 = vmatpush1.bf16.msra.mxu0 0
      %5293 = vmatprep.subr.bf16.mxu0 0
      %5294 = vmatpush1.bf16.msra.mxu0 0
      %5295 = vmatprep.subr.bf16.mxu0 0
      %5296 = vmatpush1.bf16.msra.mxu0 0
      %5297 = vmatprep.subr.bf16.mxu0 0
      %5298 = vmatpush1.bf16.msra.mxu0 0
      %5299 = vmatprep.subr.bf16.mxu0 0
      %5300 = vmatpush1.bf16.msra.mxu0 0
      %5301 = vmatprep.subr.bf16.mxu0 0
      %5302 = vmatpush1.bf16.msra.mxu0 0
      %5303 = vmatprep.mubr.bf16.mxu0 0
      %5304 = vmatmul.mubr.bf16.gmra.mrb[0].mxu0 %v5221
      %v5305 = vpop.f32.mrb[0].mxu0
      %v5306 = vadd.f32 0.0, %v5305
      %v5307 = vpop.f32.mrb[0].mxu0
      %v5308 = vpop.f32.mrb[0].mxu0
      %v5309 = vpop.f32.mrb[0].mxu0
      %5310 = vdwg.mxu0
      %v5311 = vadd.f32 %v5200, %v5306
      %v5312 = vld [vmem:[%s1160] sm:$0xf]
      %v5313 = vld [vmem:[%s1160 + $0x4] sm:$0xf]
      %v5314 = vld [vmem:[%s1160 + $0x8] sm:$0xf]
      %v5315 = vld [vmem:[%s1160 + $0xc] sm:$0xf]
      %v5316 = vld [vmem:[%s1160 + $0x10] sm:$0xf]
      %v5317 = vld [vmem:[%s1160 + $0x14] sm:$0xf]
      %v5318 = vld [vmem:[%s1160 + $0x18] sm:$0xf]
      %v5319 = vld [vmem:[%s1160 + $0x1c] sm:$0xf]
      %v5320 = vld [vmem:[%s1160 + $0x20] sm:$0xf]
      %v5321 = vld [vmem:[%s1160 + $0x24] sm:$0xf]
      %v5322 = vld [vmem:[%s1160 + $0x28] sm:$0xf]
      %v5323 = vld [vmem:[%s1160 + $0x2c] sm:$0xf]
      %v5324 = vld [vmem:[%s1160 + $0x30] sm:$0xf]
      %v5325 = vld [vmem:[%s1160 + $0x34] sm:$0xf]
      %v5326 = vld [vmem:[%s1160 + $0x38] sm:$0xf]
      %v5327 = vld [vmem:[%s1160 + $0x3c] sm:$0xf]
      %v5344 = vunpack.c.l.b16 %v5312
      %v5345 = vunpack.c.l.b16 %v5313
      %v5346 = vunpack.c.l.b16 %v5314
      %v5347 = vunpack.c.l.b16 %v5315
      %v5348 = vunpack.c.l.b16 %v5316
      %v5349 = vunpack.c.l.b16 %v5317
      %v5350 = vunpack.c.l.b16 %v5318
      %v5351 = vunpack.c.l.b16 %v5319
      %v5352 = vunpack.c.l.b16 %v5320
      %v5353 = vunpack.c.l.b16 %v5321
      %v5354 = vunpack.c.l.b16 %v5322
      %v5355 = vunpack.c.l.b16 %v5323
      %v5356 = vunpack.c.l.b16 %v5324
      %v5357 = vunpack.c.l.b16 %v5325
      %v5358 = vunpack.c.l.b16 %v5326
      %v5359 = vunpack.c.l.b16 %v5327
      %v5360 = vpack.c.b16 %v5345, %v5344
      %v5361 = vpack.c.b16 %v5347, %v5346
      %v5362 = vpack.c.b16 %v5349, %v5348
      %v5363 = vpack.c.b16 %v5351, %v5350
      %v5364 = vpack.c.b16 %v5353, %v5352
      %v5365 = vpack.c.b16 %v5355, %v5354
      %v5366 = vpack.c.b16 %v5357, %v5356
      %v5367 = vpack.c.b16 %v5359, %v5358
      %5376 = vmatprep.subr.bf16.mxu0 0
      %5377 = vmatpush1.bf16.msra.mxu0 %v5360
      %5378 = vmatprep.subr.bf16.mxu0 0
      %5379 = vmatpush1.bf16.msra.mxu0 %v5361
      %5380 = vmatprep.subr.bf16.mxu0 0
      %5381 = vmatpush1.bf16.msra.mxu0 %v5362
      %5382 = vmatprep.subr.bf16.mxu0 0
      %5383 = vmatpush1.bf16.msra.mxu0 %v5363
      %5384 = vmatprep.subr.bf16.mxu0 0
      %5385 = vmatpush1.bf16.msra.mxu0 %v5364
      %5386 = vmatprep.subr.bf16.mxu0 0
      %5387 = vmatpush1.bf16.msra.mxu0 %v5365
      %5388 = vmatprep.subr.bf16.mxu0 0
      %5389 = vmatpush1.bf16.msra.mxu0 %v5366
      %5390 = vmatprep.subr.bf16.mxu0 0
      %5391 = vmatpush1.bf16.msra.mxu0 %v5367
      %5392 = vmatprep.subr.bf16.mxu0 0
      %5393 = vmatpush1.bf16.msra.mxu0 0
      %5394 = vmatprep.subr.bf16.mxu0 0
      %5395 = vmatpush1.bf16.msra.mxu0 0
      %5396 = vmatprep.subr.bf16.mxu0 0
      %5397 = vmatpush1.bf16.msra.mxu0 0
      %5398 = vmatprep.subr.bf16.mxu0 0
      %5399 = vmatpush1.bf16.msra.mxu0 0
      %5400 = vmatprep.subr.bf16.mxu0 0
      %5401 = vmatpush1.bf16.msra.mxu0 0
      %5402 = vmatprep.subr.bf16.mxu0 0
      %5403 = vmatpush1.bf16.msra.mxu0 0
      %5404 = vmatprep.subr.bf16.mxu0 0
      %5405 = vmatpush1.bf16.msra.mxu0 0
      %5406 = vmatprep.subr.bf16.mxu0 0
      %5407 = vmatpush1.bf16.msra.mxu0 0
      %5408 = vmatprep.mubr.bf16.mxu0 0
      %5409 = vmatmul.mubr.bf16.gmra.mrb[0].mxu0 %v5110
      %v5410 = vpop.f32.mrb[0].mxu0
      %v5411 = vadd.f32 0.0, %v5410
      %v5412 = vpop.f32.mrb[0].mxu0
      %v5413 = vpop.f32.mrb[0].mxu0
      %v5414 = vadd.f32 0.0, %v5413
      %v5415 = vpop.f32.mrb[0].mxu0
      %5416 = vdwg.mxu0
      %v5419 = vrot.slane %v5411, 1
      %v5420 = vrot.slane %v5414, 1
      %v5421 = vsel %vm581, %v5419, %v5420
      %v5423 = vadd.f32 %v5311, %v5421
      %v5424 = vld [vmem:[%s3] sm:$0x1]
      %v5426 = vlaneseq
      %v5427 = vshrl.u32 %v5426, 7
      %v5428 = vsub.s32 0, %v5427
      %v5429 = vrot.slane %v5424, %v5428
      %v5431 = vmul.f32 %v5423, %v5429
      %v5432 = vld [vmem:[%s4] sm:$0x1]
      %v5434 = vlaneseq
      %v5435 = vshrl.u32 %v5434, 7
      %v5436 = vsub.s32 0, %v5435
      %v5437 = vrot.slane %v5432, %v5436
      %v5439 = vadd.f32 %v5431, %v5437
      %v5440 = vmax.f32 %v5439, 0.0
      %v5441 = vpack.c.bf16 %v5440, %v5440
      %s5442 = scalar_lea.vmem %s244, 16
      %5443 = vst [vmem:[%s5442] sm:$0xf] %v5441
      %v5444 = vld [vmem:[%s5084] sm:$0xf]
      %v5445 = vld [vmem:[%s5084 + $0x4] sm:$0x1]
      %v5446 = vld [vmem:[%s5087] sm:$0xf]
      %v5447 = vld [vmem:[%s5087 + $0x4] sm:$0x1]
      %v5448 = vld [vmem:[%s2] sm:$0xf]
      %v5449 = vld [vmem:[%s2 + $0x4] sm:$0xf]
      %v5450 = vld [vmem:[%s2 + $0x8] sm:$0xf]
      %v5451 = vld [vmem:[%s2 + $0xc] sm:$0xf]
      %v5452 = vld [vmem:[%s2 + $0x10] sm:$0xf]
      %v5453 = vld [vmem:[%s2 + $0x14] sm:$0xf]
      %v5454 = vld [vmem:[%s2 + $0x18] sm:$0xf]
      %v5455 = vld [vmem:[%s2 + $0x1c] sm:$0xf]
      %v5456 = vld [vmem:[%s2 + $0x20] sm:$0xf]
      %v5457 = vld [vmem:[%s2 + $0x24] sm:$0xf]
      %v5458 = vld [vmem:[%s2 + $0x28] sm:$0xf]
      %v5459 = vld [vmem:[%s2 + $0x2c] sm:$0xf]
      %v5460 = vld [vmem:[%s2 + $0x30] sm:$0xf]
      %v5461 = vld [vmem:[%s2 + $0x34] sm:$0xf]
      %v5462 = vld [vmem:[%s2 + $0x38] sm:$0xf]
      %v5463 = vld [vmem:[%s2 + $0x3c] sm:$0xf]
      %v5466 = vunpack.c.l.b16 %v5444
      %v5467 = vunpack.c.l.b16 %v5445
      %v5468 = vpack.c.b16 %v5467, %v5466
      %v5486 = vunpack.c.l.b16 %v5448
      %v5487 = vunpack.c.l.b16 %v5449
      %v5488 = vunpack.c.l.b16 %v5450
      %v5489 = vunpack.c.l.b16 %v5451
      %v5490 = vunpack.c.l.b16 %v5452
      %v5491 = vunpack.c.l.b16 %v5453
      %v5492 = vunpack.c.l.b16 %v5454
      %v5493 = vunpack.c.l.b16 %v5455
      %v5494 = vunpack.c.l.b16 %v5456
      %v5495 = vunpack.c.l.b16 %v5457
      %v5496 = vunpack.c.l.b16 %v5458
      %v5497 = vunpack.c.l.b16 %v5459
      %v5498 = vunpack.c.l.b16 %v5460
      %v5499 = vunpack.c.l.b16 %v5461
      %v5500 = vunpack.c.l.b16 %v5462
      %v5501 = vunpack.c.l.b16 %v5463
      %v5502 = vpack.c.b16 %v5487, %v5486
      %v5503 = vpack.c.b16 %v5489, %v5488
      %v5504 = vpack.c.b16 %v5491, %v5490
      %v5505 = vpack.c.b16 %v5493, %v5492
      %v5506 = vpack.c.b16 %v5495, %v5494
      %v5507 = vpack.c.b16 %v5497, %v5496
      %v5508 = vpack.c.b16 %v5499, %v5498
      %v5509 = vpack.c.b16 %v5501, %v5500
      %5518 = vmatprep.subr.bf16.mxu0 0
      %5519 = vmatpush1.bf16.msra.mxu0 %v5502
      %5520 = vmatprep.subr.bf16.mxu0 0
      %5521 = vmatpush1.bf16.msra.mxu0 %v5503
      %5522 = vmatprep.subr.bf16.mxu0 0
      %5523 = vmatpush1.bf16.msra.mxu0 %v5504
      %5524 = vmatprep.subr.bf16.mxu0 0
      %5525 = vmatpush1.bf16.msra.mxu0 %v5505
      %5526 = vmatprep.subr.bf16.mxu0 0
      %5527 = vmatpush1.bf16.msra.mxu0 %v5506
      %5528 = vmatprep.subr.bf16.mxu0 0
      %5529 = vmatpush1.bf16.msra.mxu0 %v5507
      %5530 = vmatprep.subr.bf16.mxu0 0
      %5531 = vmatpush1.bf16.msra.mxu0 %v5508
      %5532 = vmatprep.subr.bf16.mxu0 0
      %5533 = vmatpush1.bf16.msra.mxu0 %v5509
      %5534 = vmatprep.subr.bf16.mxu0 0
      %5535 = vmatpush1.bf16.msra.mxu0 0
      %5536 = vmatprep.subr.bf16.mxu0 0
      %5537 = vmatpush1.bf16.msra.mxu0 0
      %5538 = vmatprep.subr.bf16.mxu0 0
      %5539 = vmatpush1.bf16.msra.mxu0 0
      %5540 = vmatprep.subr.bf16.mxu0 0
      %5541 = vmatpush1.bf16.msra.mxu0 0
      %5542 = vmatprep.subr.bf16.mxu0 0
      %5543 = vmatpush1.bf16.msra.mxu0 0
      %5544 = vmatprep.subr.bf16.mxu0 0
      %5545 = vmatpush1.bf16.msra.mxu0 0
      %5546 = vmatprep.subr.bf16.mxu0 0
      %5547 = vmatpush1.bf16.msra.mxu0 0
      %5548 = vmatprep.subr.bf16.mxu0 0
      %5549 = vmatpush1.bf16.msra.mxu0 0
      %5550 = vmatprep.mubr.bf16.mxu0 0
      %5551 = vmatmul.mubr.bf16.gmra.mrb[0].mxu0 %v5468
      %v5552 = vpop.f32.mrb[0].mxu0
      %v5553 = vadd.f32 0.0, %v5552
      %v5554 = vpop.f32.mrb[0].mxu0
      %v5555 = vpop.f32.mrb[0].mxu0
      %v5556 = vpop.f32.mrb[0].mxu0
      %5557 = vdwg.mxu0
      %v5558 = vadd.f32 %v5553, 0.0
      %v5559 = vld [vmem:[%s361] sm:$0xf]
      %v5560 = vld [vmem:[%s361 + $0x4] sm:$0xf]
      %v5561 = vld [vmem:[%s361 + $0x8] sm:$0xf]
      %v5562 = vld [vmem:[%s361 + $0xc] sm:$0xf]
      %v5563 = vld [vmem:[%s361 + $0x10] sm:$0xf]
      %v5564 = vld [vmem:[%s361 + $0x14] sm:$0xf]
      %v5565 = vld [vmem:[%s361 + $0x18] sm:$0xf]
      %v5566 = vld [vmem:[%s361 + $0x1c] sm:$0xf]
      %v5567 = vld [vmem:[%s361 + $0x20] sm:$0xf]
      %v5568 = vld [vmem:[%s361 + $0x24] sm:$0xf]
      %v5569 = vld [vmem:[%s361 + $0x28] sm:$0xf]
      %v5570 = vld [vmem:[%s361 + $0x2c] sm:$0xf]
      %v5571 = vld [vmem:[%s361 + $0x30] sm:$0xf]
      %v5572 = vld [vmem:[%s361 + $0x34] sm:$0xf]
      %v5573 = vld [vmem:[%s361 + $0x38] sm:$0xf]
      %v5574 = vld [vmem:[%s361 + $0x3c] sm:$0xf]
      %v5577 = vunpack.c.l.b16 %v5446
      %v5578 = vunpack.c.l.b16 %v5447
      %v5579 = vpack.c.b16 %v5578, %v5577
      %v5597 = vunpack.c.l.b16 %v5559
      %v5598 = vunpack.c.l.b16 %v5560
      %v5599 = vunpack.c.l.b16 %v5561
      %v5600 = vunpack.c.l.b16 %v5562
      %v5601 = vunpack.c.l.b16 %v5563
      %v5602 = vunpack.c.l.b16 %v5564
      %v5603 = vunpack.c.l.b16 %v5565
      %v5604 = vunpack.c.l.b16 %v5566
      %v5605 = vunpack.c.l.b16 %v5567
      %v5606 = vunpack.c.l.b16 %v5568
      %v5607 = vunpack.c.l.b16 %v5569
      %v5608 = vunpack.c.l.b16 %v5570
      %v5609 = vunpack.c.l.b16 %v5571
      %v5610 = vunpack.c.l.b16 %v5572
      %v5611 = vunpack.c.l.b16 %v5573
      %v5612 = vunpack.c.l.b16 %v5574
      %v5613 = vpack.c.b16 %v5598, %v5597
      %v5614 = vpack.c.b16 %v5600, %v5599
      %v5615 = vpack.c.b16 %v5602, %v5601
      %v5616 = vpack.c.b16 %v5604, %v5603
      %v5617 = vpack.c.b16 %v5606, %v5605
      %v5618 = vpack.c.b16 %v5608, %v5607
      %v5619 = vpack.c.b16 %v5610, %v5609
      %v5620 = vpack.c.b16 %v5612, %v5611
      %5629 = vmatprep.subr.bf16.mxu0 0
      %5630 = vmatpush1.bf16.msra.mxu0 %v5613
      %5631 = vmatprep.subr.bf16.mxu0 0
      %5632 = vmatpush1.bf16.msra.mxu0 %v5614
      %5633 = vmatprep.subr.bf16.mxu0 0
      %5634 = vmatpush1.bf16.msra.mxu0 %v5615
      %5635 = vmatprep.subr.bf16.mxu0 0
      %5636 = vmatpush1.bf16.msra.mxu0 %v5616
      %5637 = vmatprep.subr.bf16.mxu0 0
      %5638 = vmatpush1.bf16.msra.mxu0 %v5617
      %5639 = vmatprep.subr.bf16.mxu0 0
      %5640 = vmatpush1.bf16.msra.mxu0 %v5618
      %5641 = vmatprep.subr.bf16.mxu0 0
      %5642 = vmatpush1.bf16.msra.mxu0 %v5619
      %5643 = vmatprep.subr.bf16.mxu0 0
      %5644 = vmatpush1.bf16.msra.mxu0 %v5620
      %5645 = vmatprep.subr.bf16.mxu0 0
      %5646 = vmatpush1.bf16.msra.mxu0 0
      %5647 = vmatprep.subr.bf16.mxu0 0
      %5648 = vmatpush1.bf16.msra.mxu0 0
      %5649 = vmatprep.subr.bf16.mxu0 0
      %5650 = vmatpush1.bf16.msra.mxu0 0
      %5651 = vmatprep.subr.bf16.mxu0 0
      %5652 = vmatpush1.bf16.msra.mxu0 0
      %5653 = vmatprep.subr.bf16.mxu0 0
      %5654 = vmatpush1.bf16.msra.mxu0 0
      %5655 = vmatprep.subr.bf16.mxu0 0
      %5656 = vmatpush1.bf16.msra.mxu0 0
      %5657 = vmatprep.subr.bf16.mxu0 0
      %5658 = vmatpush1.bf16.msra.mxu0 0
      %5659 = vmatprep.subr.bf16.mxu0 0
      %5660 = vmatpush1.bf16.msra.mxu0 0
      %5661 = vmatprep.mubr.bf16.mxu0 0
      %5662 = vmatmul.mubr.bf16.gmra.mrb[0].mxu0 %v5579
      %v5663 = vpop.f32.mrb[0].mxu0
      %v5664 = vadd.f32 0.0, %v5663
      %v5665 = vpop.f32.mrb[0].mxu0
      %v5666 = vpop.f32.mrb[0].mxu0
      %v5667 = vpop.f32.mrb[0].mxu0
      %5668 = vdwg.mxu0
      %v5669 = vadd.f32 %v5558, %v5664
      %v5670 = vld [vmem:[%s473] sm:$0xf]
      %v5671 = vld [vmem:[%s473 + $0x4] sm:$0xf]
      %v5672 = vld [vmem:[%s473 + $0x8] sm:$0xf]
      %v5673 = vld [vmem:[%s473 + $0xc] sm:$0xf]
      %v5674 = vld [vmem:[%s473 + $0x10] sm:$0xf]
      %v5675 = vld [vmem:[%s473 + $0x14] sm:$0xf]
      %v5676 = vld [vmem:[%s473 + $0x18] sm:$0xf]
      %v5677 = vld [vmem:[%s473 + $0x1c] sm:$0xf]
      %v5678 = vld [vmem:[%s473 + $0x20] sm:$0xf]
      %v5679 = vld [vmem:[%s473 + $0x24] sm:$0xf]
      %v5680 = vld [vmem:[%s473 + $0x28] sm:$0xf]
      %v5681 = vld [vmem:[%s473 + $0x2c] sm:$0xf]
      %v5682 = vld [vmem:[%s473 + $0x30] sm:$0xf]
      %v5683 = vld [vmem:[%s473 + $0x34] sm:$0xf]
      %v5684 = vld [vmem:[%s473 + $0x38] sm:$0xf]
      %v5685 = vld [vmem:[%s473 + $0x3c] sm:$0xf]
      %v5702 = vunpack.c.l.b16 %v5670
      %v5703 = vunpack.c.l.b16 %v5671
      %v5704 = vunpack.c.l.b16 %v5672
      %v5705 = vunpack.c.l.b16 %v5673
      %v5706 = vunpack.c.l.b16 %v5674
      %v5707 = vunpack.c.l.b16 %v5675
      %v5708 = vunpack.c.l.b16 %v5676
      %v5709 = vunpack.c.l.b16 %v5677
      %v5710 = vunpack.c.l.b16 %v5678
      %v5711 = vunpack.c.l.b16 %v5679
      %v5712 = vunpack.c.l.b16 %v5680
      %v5713 = vunpack.c.l.b16 %v5681
      %v5714 = vunpack.c.l.b16 %v5682
      %v5715 = vunpack.c.l.b16 %v5683
      %v5716 = vunpack.c.l.b16 %v5684
      %v5717 = vunpack.c.l.b16 %v5685
      %v5718 = vpack.c.b16 %v5703, %v5702
      %v5719 = vpack.c.b16 %v5705, %v5704
      %v5720 = vpack.c.b16 %v5707, %v5706
      %v5721 = vpack.c.b16 %v5709, %v5708
      %v5722 = vpack.c.b16 %v5711, %v5710
      %v5723 = vpack.c.b16 %v5713, %v5712
      %v5724 = vpack.c.b16 %v5715, %v5714
      %v5725 = vpack.c.b16 %v5717, %v5716
      %5734 = vmatprep.subr.bf16.mxu0 0
      %5735 = vmatpush1.bf16.msra.mxu0 %v5718
      %5736 = vmatprep.subr.bf16.mxu0 0
      %5737 = vmatpush1.bf16.msra.mxu0 %v5719
      %5738 = vmatprep.subr.bf16.mxu0 0
      %5739 = vmatpush1.bf16.msra.mxu0 %v5720
      %5740 = vmatprep.subr.bf16.mxu0 0
      %5741 = vmatpush1.bf16.msra.mxu0 %v5721
      %5742 = vmatprep.subr.bf16.mxu0 0
      %5743 = vmatpush1.bf16.msra.mxu0 %v5722
      %5744 = vmatprep.subr.bf16.mxu0 0
      %5745 = vmatpush1.bf16.msra.mxu0 %v5723
      %5746 = vmatprep.subr.bf16.mxu0 0
      %5747 = vmatpush1.bf16.msra.mxu0 %v5724
      %5748 = vmatprep.subr.bf16.mxu0 0
      %5749 = vmatpush1.bf16.msra.mxu0 %v5725
      %5750 = vmatprep.subr.bf16.mxu0 0
      %5751 = vmatpush1.bf16.msra.mxu0 0
      %5752 = vmatprep.subr.bf16.mxu0 0
      %5753 = vmatpush1.bf16.msra.mxu0 0
      %5754 = vmatprep.subr.bf16.mxu0 0
      %5755 = vmatpush1.bf16.msra.mxu0 0
      %5756 = vmatprep.subr.bf16.mxu0 0
      %5757 = vmatpush1.bf16.msra.mxu0 0
      %5758 = vmatprep.subr.bf16.mxu0 0
      %5759 = vmatpush1.bf16.msra.mxu0 0
      %5760 = vmatprep.subr.bf16.mxu0 0
      %5761 = vmatpush1.bf16.msra.mxu0 0
      %5762 = vmatprep.subr.bf16.mxu0 0
      %5763 = vmatpush1.bf16.msra.mxu0 0
      %5764 = vmatprep.subr.bf16.mxu0 0
      %5765 = vmatpush1.bf16.msra.mxu0 0
      %5766 = vmatprep.mubr.bf16.mxu0 0
      %5767 = vmatmul.mubr.bf16.gmra.mrb[0].mxu0 %v5468
      %v5768 = vpop.f32.mrb[0].mxu0
      %v5769 = vadd.f32 0.0, %v5768
      %v5770 = vpop.f32.mrb[0].mxu0
      %v5771 = vpop.f32.mrb[0].mxu0
      %v5772 = vadd.f32 0.0, %v5771
      %v5773 = vpop.f32.mrb[0].mxu0
      %5774 = vdwg.mxu0
      %v5777 = vrot.slane %v5769, 1
      %v5778 = vrot.slane %v5772, 1
      %v5779 = vsel %vm581, %v5777, %v5778
      %v5781 = vadd.f32 %v5669, %v5779
      %s5782 = scalar_lea.vmem %s234, 88
      %v5783 = vld [vmem:[%s5782] sm:$0xf]
      %v5784 = vld [vmem:[%s5782 + $0x4] sm:$0x1]
      %s5785 = scalar_lea.vmem %s239, 88
      %v5786 = vld [vmem:[%s5785] sm:$0xf]
      %v5787 = vld [vmem:[%s5785 + $0x4] sm:$0x1]
      %v5788 = vld [vmem:[%s593] sm:$0xf]
      %v5789 = vld [vmem:[%s593 + $0x4] sm:$0xf]
      %v5790 = vld [vmem:[%s593 + $0x8] sm:$0xf]
      %v5791 = vld [vmem:[%s593 + $0xc] sm:$0xf]
      %v5792 = vld [vmem:[%s593 + $0x10] sm:$0xf]
      %v5793 = vld [vmem:[%s593 + $0x14] sm:$0xf]
      %v5794 = vld [vmem:[%s593 + $0x18] sm:$0xf]
      %v5795 = vld [vmem:[%s593 + $0x1c] sm:$0xf]
      %v5796 = vld [vmem:[%s593 + $0x20] sm:$0xf]
      %v5797 = vld [vmem:[%s593 + $0x24] sm:$0xf]
      %v5798 = vld [vmem:[%s593 + $0x28] sm:$0xf]
      %v5799 = vld [vmem:[%s593 + $0x2c] sm:$0xf]
      %v5800 = vld [vmem:[%s593 + $0x30] sm:$0xf]
      %v5801 = vld [vmem:[%s593 + $0x34] sm:$0xf]
      %v5802 = vld [vmem:[%s593 + $0x38] sm:$0xf]
      %v5803 = vld [vmem:[%s593 + $0x3c] sm:$0xf]
      %v5806 = vunpack.c.l.b16 %v5783
      %v5807 = vunpack.c.l.b16 %v5784
      %v5808 = vpack.c.b16 %v5807, %v5806
      %v5826 = vunpack.c.l.b16 %v5788
      %v5827 = vunpack.c.l.b16 %v5789
      %v5828 = vunpack.c.l.b16 %v5790
      %v5829 = vunpack.c.l.b16 %v5791
      %v5830 = vunpack.c.l.b16 %v5792
      %v5831 = vunpack.c.l.b16 %v5793
      %v5832 = vunpack.c.l.b16 %v5794
      %v5833 = vunpack.c.l.b16 %v5795
      %v5834 = vunpack.c.l.b16 %v5796
      %v5835 = vunpack.c.l.b16 %v5797
      %v5836 = vunpack.c.l.b16 %v5798
      %v5837 = vunpack.c.l.b16 %v5799
      %v5838 = vunpack.c.l.b16 %v5800
      %v5839 = vunpack.c.l.b16 %v5801
      %v5840 = vunpack.c.l.b16 %v5802
      %v5841 = vunpack.c.l.b16 %v5803
      %v5842 = vpack.c.b16 %v5827, %v5826
      %v5843 = vpack.c.b16 %v5829, %v5828
      %v5844 = vpack.c.b16 %v5831, %v5830
      %v5845 = vpack.c.b16 %v5833, %v5832
      %v5846 = vpack.c.b16 %v5835, %v5834
      %v5847 = vpack.c.b16 %v5837, %v5836
      %v5848 = vpack.c.b16 %v5839, %v5838
      %v5849 = vpack.c.b16 %v5841, %v5840
      %5858 = vmatprep.subr.bf16.mxu0 0
      %5859 = vmatpush1.bf16.msra.mxu0 %v5842
      %5860 = vmatprep.subr.bf16.mxu0 0
      %5861 = vmatpush1.bf16.msra.mxu0 %v5843
      %5862 = vmatprep.subr.bf16.mxu0 0
      %5863 = vmatpush1.bf16.msra.mxu0 %v5844
      %5864 = vmatprep.subr.bf16.mxu0 0
      %5865 = vmatpush1.bf16.msra.mxu0 %v5845
      %5866 = vmatprep.subr.bf16.mxu0 0
      %5867 = vmatpush1.bf16.msra.mxu0 %v5846
      %5868 = vmatprep.subr.bf16.mxu0 0
      %5869 = vmatpush1.bf16.msra.mxu0 %v5847
      %5870 = vmatprep.subr.bf16.mxu0 0
      %5871 = vmatpush1.bf16.msra.mxu0 %v5848
      %5872 = vmatprep.subr.bf16.mxu0 0
      %5873 = vmatpush1.bf16.msra.mxu0 %v5849
      %5874 = vmatprep.subr.bf16.mxu0 0
      %5875 = vmatpush1.bf16.msra.mxu0 0
      %5876 = vmatprep.subr.bf16.mxu0 0
      %5877 = vmatpush1.bf16.msra.mxu0 0
      %5878 = vmatprep.subr.bf16.mxu0 0
      %5879 = vmatpush1.bf16.msra.mxu0 0
      %5880 = vmatprep.subr.bf16.mxu0 0
      %5881 = vmatpush1.bf16.msra.mxu0 0
      %5882 = vmatprep.subr.bf16.mxu0 0
      %5883 = vmatpush1.bf16.msra.mxu0 0
      %5884 = vmatprep.subr.bf16.mxu0 0
      %5885 = vmatpush1.bf16.msra.mxu0 0
      %5886 = vmatprep.subr.bf16.mxu0 0
      %5887 = vmatpush1.bf16.msra.mxu0 0
      %5888 = vmatprep.subr.bf16.mxu0 0
      %5889 = vmatpush1.bf16.msra.mxu0 0
      %5890 = vmatprep.mubr.bf16.mxu0 0
      %5891 = vmatmul.mubr.bf16.gmra.mrb[0].mxu0 %v5808
      %v5892 = vpop.f32.mrb[0].mxu0
      %v5893 = vadd.f32 0.0, %v5892
      %v5894 = vpop.f32.mrb[0].mxu0
      %v5895 = vpop.f32.mrb[0].mxu0
      %v5896 = vpop.f32.mrb[0].mxu0
      %5897 = vdwg.mxu0
      %v5898 = vadd.f32 %v5781, %v5893
      %v5899 = vld [vmem:[%s705] sm:$0xf]
      %v5900 = vld [vmem:[%s705 + $0x4] sm:$0xf]
      %v5901 = vld [vmem:[%s705 + $0x8] sm:$0xf]
      %v5902 = vld [vmem:[%s705 + $0xc] sm:$0xf]
      %v5903 = vld [vmem:[%s705 + $0x10] sm:$0xf]
      %v5904 = vld [vmem:[%s705 + $0x14] sm:$0xf]
      %v5905 = vld [vmem:[%s705 + $0x18] sm:$0xf]
      %v5906 = vld [vmem:[%s705 + $0x1c] sm:$0xf]
      %v5907 = vld [vmem:[%s705 + $0x20] sm:$0xf]
      %v5908 = vld [vmem:[%s705 + $0x24] sm:$0xf]
      %v5909 = vld [vmem:[%s705 + $0x28] sm:$0xf]
      %v5910 = vld [vmem:[%s705 + $0x2c] sm:$0xf]
      %v5911 = vld [vmem:[%s705 + $0x30] sm:$0xf]
      %v5912 = vld [vmem:[%s705 + $0x34] sm:$0xf]
      %v5913 = vld [vmem:[%s705 + $0x38] sm:$0xf]
      %v5914 = vld [vmem:[%s705 + $0x3c] sm:$0xf]
      %v5917 = vunpack.c.l.b16 %v5786
      %v5918 = vunpack.c.l.b16 %v5787
      %v5919 = vpack.c.b16 %v5918, %v5917
      %v5937 = vunpack.c.l.b16 %v5899
      %v5938 = vunpack.c.l.b16 %v5900
      %v5939 = vunpack.c.l.b16 %v5901
      %v5940 = vunpack.c.l.b16 %v5902
      %v5941 = vunpack.c.l.b16 %v5903
      %v5942 = vunpack.c.l.b16 %v5904
      %v5943 = vunpack.c.l.b16 %v5905
      %v5944 = vunpack.c.l.b16 %v5906
      %v5945 = vunpack.c.l.b16 %v5907
      %v5946 = vunpack.c.l.b16 %v5908
      %v5947 = vunpack.c.l.b16 %v5909
      %v5948 = vunpack.c.l.b16 %v5910
      %v5949 = vunpack.c.l.b16 %v5911
      %v5950 = vunpack.c.l.b16 %v5912
      %v5951 = vunpack.c.l.b16 %v5913
      %v5952 = vunpack.c.l.b16 %v5914
      %v5953 = vpack.c.b16 %v5938, %v5937
      %v5954 = vpack.c.b16 %v5940, %v5939
      %v5955 = vpack.c.b16 %v5942, %v5941
      %v5956 = vpack.c.b16 %v5944, %v5943
      %v5957 = vpack.c.b16 %v5946, %v5945
      %v5958 = vpack.c.b16 %v5948, %v5947
      %v5959 = vpack.c.b16 %v5950, %v5949
      %v5960 = vpack.c.b16 %v5952, %v5951
      %5969 = vmatprep.subr.bf16.mxu0 0
      %5970 = vmatpush1.bf16.msra.mxu0 %v5953
      %5971 = vmatprep.subr.bf16.mxu0 0
      %5972 = vmatpush1.bf16.msra.mxu0 %v5954
      %5973 = vmatprep.subr.bf16.mxu0 0
      %5974 = vmatpush1.bf16.msra.mxu0 %v5955
      %5975 = vmatprep.subr.bf16.mxu0 0
      %5976 = vmatpush1.bf16.msra.mxu0 %v5956
      %5977 = vmatprep.subr.bf16.mxu0 0
      %5978 = vmatpush1.bf16.msra.mxu0 %v5957
      %5979 = vmatprep.subr.bf16.mxu0 0
      %5980 = vmatpush1.bf16.msra.mxu0 %v5958
      %5981 = vmatprep.subr.bf16.mxu0 0
      %5982 = vmatpush1.bf16.msra.mxu0 %v5959
      %5983 = vmatprep.subr.bf16.mxu0 0
      %5984 = vmatpush1.bf16.msra.mxu0 %v5960
      %5985 = vmatprep.subr.bf16.mxu0 0
      %5986 = vmatpush1.bf16.msra.mxu0 0
      %5987 = vmatprep.subr.bf16.mxu0 0
      %5988 = vmatpush1.bf16.msra.mxu0 0
      %5989 = vmatprep.subr.bf16.mxu0 0
      %5990 = vmatpush1.bf16.msra.mxu0 0
      %5991 = vmatprep.subr.bf16.mxu0 0
      %5992 = vmatpush1.bf16.msra.mxu0 0
      %5993 = vmatprep.subr.bf16.mxu0 0
      %5994 = vmatpush1.bf16.msra.mxu0 0
      %5995 = vmatprep.subr.bf16.mxu0 0
      %5996 = vmatpush1.bf16.msra.mxu0 0
      %5997 = vmatprep.subr.bf16.mxu0 0
      %5998 = vmatpush1.bf16.msra.mxu0 0
      %5999 = vmatprep.subr.bf16.mxu0 0
      %6000 = vmatpush1.bf16.msra.mxu0 0
      %6001 = vmatprep.mubr.bf16.mxu0 0
      %6002 = vmatmul.mubr.bf16.gmra.mrb[0].mxu0 %v5919
      %v6003 = vpop.f32.mrb[0].mxu0
      %v6004 = vadd.f32 0.0, %v6003
      %v6005 = vpop.f32.mrb[0].mxu0
      %v6006 = vpop.f32.mrb[0].mxu0
      %v6007 = vpop.f32.mrb[0].mxu0
      %6008 = vdwg.mxu0
      %v6009 = vadd.f32 %v5898, %v6004
      %v6010 = vld [vmem:[%s817] sm:$0xf]
      %v6011 = vld [vmem:[%s817 + $0x4] sm:$0xf]
      %v6012 = vld [vmem:[%s817 + $0x8] sm:$0xf]
      %v6013 = vld [vmem:[%s817 + $0xc] sm:$0xf]
      %v6014 = vld [vmem:[%s817 + $0x10] sm:$0xf]
      %v6015 = vld [vmem:[%s817 + $0x14] sm:$0xf]
      %v6016 = vld [vmem:[%s817 + $0x18] sm:$0xf]
      %v6017 = vld [vmem:[%s817 + $0x1c] sm:$0xf]
      %v6018 = vld [vmem:[%s817 + $0x20] sm:$0xf]
      %v6019 = vld [vmem:[%s817 + $0x24] sm:$0xf]
      %v6020 = vld [vmem:[%s817 + $0x28] sm:$0xf]
      %v6021 = vld [vmem:[%s817 + $0x2c] sm:$0xf]
      %v6022 = vld [vmem:[%s817 + $0x30] sm:$0xf]
      %v6023 = vld [vmem:[%s817 + $0x34] sm:$0xf]
      %v6024 = vld [vmem:[%s817 + $0x38] sm:$0xf]
      %v6025 = vld [vmem:[%s817 + $0x3c] sm:$0xf]
      %v6042 = vunpack.c.l.b16 %v6010
      %v6043 = vunpack.c.l.b16 %v6011
      %v6044 = vunpack.c.l.b16 %v6012
      %v6045 = vunpack.c.l.b16 %v6013
      %v6046 = vunpack.c.l.b16 %v6014
      %v6047 = vunpack.c.l.b16 %v6015
      %v6048 = vunpack.c.l.b16 %v6016
      %v6049 = vunpack.c.l.b16 %v6017
      %v6050 = vunpack.c.l.b16 %v6018
      %v6051 = vunpack.c.l.b16 %v6019
      %v6052 = vunpack.c.l.b16 %v6020
      %v6053 = vunpack.c.l.b16 %v6021
      %v6054 = vunpack.c.l.b16 %v6022
      %v6055 = vunpack.c.l.b16 %v6023
      %v6056 = vunpack.c.l.b16 %v6024
      %v6057 = vunpack.c.l.b16 %v6025
      %v6058 = vpack.c.b16 %v6043, %v6042
      %v6059 = vpack.c.b16 %v6045, %v6044
      %v6060 = vpack.c.b16 %v6047, %v6046
      %v6061 = vpack.c.b16 %v6049, %v6048
      %v6062 = vpack.c.b16 %v6051, %v6050
      %v6063 = vpack.c.b16 %v6053, %v6052
      %v6064 = vpack.c.b16 %v6055, %v6054
      %v6065 = vpack.c.b16 %v6057, %v6056
      %6074 = vmatprep.subr.bf16.mxu0 0
      %6075 = vmatpush1.bf16.msra.mxu0 %v6058
      %6076 = vmatprep.subr.bf16.mxu0 0
      %6077 = vmatpush1.bf16.msra.mxu0 %v6059
      %6078 = vmatprep.subr.bf16.mxu0 0
      %6079 = vmatpush1.bf16.msra.mxu0 %v6060
      %6080 = vmatprep.subr.bf16.mxu0 0
      %6081 = vmatpush1.bf16.msra.mxu0 %v6061
      %6082 = vmatprep.subr.bf16.mxu0 0
      %6083 = vmatpush1.bf16.msra.mxu0 %v6062
      %6084 = vmatprep.subr.bf16.mxu0 0
      %6085 = vmatpush1.bf16.msra.mxu0 %v6063
      %6086 = vmatprep.subr.bf16.mxu0 0
      %6087 = vmatpush1.bf16.msra.mxu0 %v6064
      %6088 = vmatprep.subr.bf16.mxu0 0
      %6089 = vmatpush1.bf16.msra.mxu0 %v6065
      %6090 = vmatprep.subr.bf16.mxu0 0
      %6091 = vmatpush1.bf16.msra.mxu0 0
      %6092 = vmatprep.subr.bf16.mxu0 0
      %6093 = vmatpush1.bf16.msra.mxu0 0
      %6094 = vmatprep.subr.bf16.mxu0 0
      %6095 = vmatpush1.bf16.msra.mxu0 0
      %6096 = vmatprep.subr.bf16.mxu0 0
      %6097 = vmatpush1.bf16.msra.mxu0 0
      %6098 = vmatprep.subr.bf16.mxu0 0
      %6099 = vmatpush1.bf16.msra.mxu0 0
      %6100 = vmatprep.subr.bf16.mxu0 0
      %6101 = vmatpush1.bf16.msra.mxu0 0
      %6102 = vmatprep.subr.bf16.mxu0 0
      %6103 = vmatpush1.bf16.msra.mxu0 0
      %6104 = vmatprep.subr.bf16.mxu0 0
      %6105 = vmatpush1.bf16.msra.mxu0 0
      %6106 = vmatprep.mubr.bf16.mxu0 0
      %6107 = vmatmul.mubr.bf16.gmra.mrb[0].mxu0 %v5808
      %v6108 = vpop.f32.mrb[0].mxu0
      %v6109 = vadd.f32 0.0, %v6108
      %v6110 = vpop.f32.mrb[0].mxu0
      %v6111 = vpop.f32.mrb[0].mxu0
      %v6112 = vadd.f32 0.0, %v6111
      %v6113 = vpop.f32.mrb[0].mxu0
      %6114 = vdwg.mxu0
      %v6117 = vrot.slane %v6109, 1
      %v6118 = vrot.slane %v6112, 1
      %v6119 = vsel %vm581, %v6117, %v6118
      %v6121 = vadd.f32 %v6009, %v6119
      %s6122 = scalar_lea.vmem %s234, 96
      %v6123 = vld [vmem:[%s6122] sm:$0xf]
      %v6124 = vld [vmem:[%s6122 + $0x4] sm:$0x1]
      %s6125 = scalar_lea.vmem %s239, 96
      %v6126 = vld [vmem:[%s6125] sm:$0xf]
      %v6127 = vld [vmem:[%s6125 + $0x4] sm:$0x1]
      %v6128 = vld [vmem:[%s936] sm:$0xf]
      %v6129 = vld [vmem:[%s936 + $0x4] sm:$0xf]
      %v6130 = vld [vmem:[%s936 + $0x8] sm:$0xf]
      %v6131 = vld [vmem:[%s936 + $0xc] sm:$0xf]
      %v6132 = vld [vmem:[%s936 + $0x10] sm:$0xf]
      %v6133 = vld [vmem:[%s936 + $0x14] sm:$0xf]
      %v6134 = vld [vmem:[%s936 + $0x18] sm:$0xf]
      %v6135 = vld [vmem:[%s936 + $0x1c] sm:$0xf]
      %v6136 = vld [vmem:[%s936 + $0x20] sm:$0xf]
      %v6137 = vld [vmem:[%s936 + $0x24] sm:$0xf]
      %v6138 = vld [vmem:[%s936 + $0x28] sm:$0xf]
      %v6139 = vld [vmem:[%s936 + $0x2c] sm:$0xf]
      %v6140 = vld [vmem:[%s936 + $0x30] sm:$0xf]
      %v6141 = vld [vmem:[%s936 + $0x34] sm:$0xf]
      %v6142 = vld [vmem:[%s936 + $0x38] sm:$0xf]
      %v6143 = vld [vmem:[%s936 + $0x3c] sm:$0xf]
      %v6146 = vunpack.c.l.b16 %v6123
      %v6147 = vunpack.c.l.b16 %v6124
      %v6148 = vpack.c.b16 %v6147, %v6146
      %v6166 = vunpack.c.l.b16 %v6128
      %v6167 = vunpack.c.l.b16 %v6129
      %v6168 = vunpack.c.l.b16 %v6130
      %v6169 = vunpack.c.l.b16 %v6131
      %v6170 = vunpack.c.l.b16 %v6132
      %v6171 = vunpack.c.l.b16 %v6133
      %v6172 = vunpack.c.l.b16 %v6134
      %v6173 = vunpack.c.l.b16 %v6135
      %v6174 = vunpack.c.l.b16 %v6136
      %v6175 = vunpack.c.l.b16 %v6137
      %v6176 = vunpack.c.l.b16 %v6138
      %v6177 = vunpack.c.l.b16 %v6139
      %v6178 = vunpack.c.l.b16 %v6140
      %v6179 = vunpack.c.l.b16 %v6141
      %v6180 = vunpack.c.l.b16 %v6142
      %v6181 = vunpack.c.l.b16 %v6143
      %v6182 = vpack.c.b16 %v6167, %v6166
      %v6183 = vpack.c.b16 %v6169, %v6168
      %v6184 = vpack.c.b16 %v6171, %v6170
      %v6185 = vpack.c.b16 %v6173, %v6172
      %v6186 = vpack.c.b16 %v6175, %v6174
      %v6187 = vpack.c.b16 %v6177, %v6176
      %v6188 = vpack.c.b16 %v6179, %v6178
      %v6189 = vpack.c.b16 %v6181, %v6180
      %6198 = vmatprep.subr.bf16.mxu0 0
      %6199 = vmatpush1.bf16.msra.mxu0 %v6182
      %6200 = vmatprep.subr.bf16.mxu0 0
      %6201 = vmatpush1.bf16.msra.mxu0 %v6183
      %6202 = vmatprep.subr.bf16.mxu0 0
      %6203 = vmatpush1.bf16.msra.mxu0 %v6184
      %6204 = vmatprep.subr.bf16.mxu0 0
      %6205 = vmatpush1.bf16.msra.mxu0 %v6185
      %6206 = vmatprep.subr.bf16.mxu0 0
      %6207 = vmatpush1.bf16.msra.mxu0 %v6186
      %6208 = vmatprep.subr.bf16.mxu0 0
      %6209 = vmatpush1.bf16.msra.mxu0 %v6187
      %6210 = vmatprep.subr.bf16.mxu0 0
      %6211 = vmatpush1.bf16.msra.mxu0 %v6188
      %6212 = vmatprep.subr.bf16.mxu0 0
      %6213 = vmatpush1.bf16.msra.mxu0 %v6189
      %6214 = vmatprep.subr.bf16.mxu0 0
      %6215 = vmatpush1.bf16.msra.mxu0 0
      %6216 = vmatprep.subr.bf16.mxu0 0
      %6217 = vmatpush1.bf16.msra.mxu0 0
      %6218 = vmatprep.subr.bf16.mxu0 0
      %6219 = vmatpush1.bf16.msra.mxu0 0
      %6220 = vmatprep.subr.bf16.mxu0 0
      %6221 = vmatpush1.bf16.msra.mxu0 0
      %6222 = vmatprep.subr.bf16.mxu0 0
      %6223 = vmatpush1.bf16.msra.mxu0 0
      %6224 = vmatprep.subr.bf16.mxu0 0
      %6225 = vmatpush1.bf16.msra.mxu0 0
      %6226 = vmatprep.subr.bf16.mxu0 0
      %6227 = vmatpush1.bf16.msra.mxu0 0
      %6228 = vmatprep.subr.bf16.mxu0 0
      %6229 = vmatpush1.bf16.msra.mxu0 0
      %6230 = vmatprep.mubr.bf16.mxu0 0
      %6231 = vmatmul.mubr.bf16.gmra.mrb[0].mxu0 %v6148
      %v6232 = vpop.f32.mrb[0].mxu0
      %v6233 = vadd.f32 0.0, %v6232
      %v6234 = vpop.f32.mrb[0].mxu0
      %v6235 = vpop.f32.mrb[0].mxu0
      %v6236 = vpop.f32.mrb[0].mxu0
      %6237 = vdwg.mxu0
      %v6238 = vadd.f32 %v6121, %v6233
      %v6239 = vld [vmem:[%s1048] sm:$0xf]
      %v6240 = vld [vmem:[%s1048 + $0x4] sm:$0xf]
      %v6241 = vld [vmem:[%s1048 + $0x8] sm:$0xf]
      %v6242 = vld [vmem:[%s1048 + $0xc] sm:$0xf]
      %v6243 = vld [vmem:[%s1048 + $0x10] sm:$0xf]
      %v6244 = vld [vmem:[%s1048 + $0x14] sm:$0xf]
      %v6245 = vld [vmem:[%s1048 + $0x18] sm:$0xf]
      %v6246 = vld [vmem:[%s1048 + $0x1c] sm:$0xf]
      %v6247 = vld [vmem:[%s1048 + $0x20] sm:$0xf]
      %v6248 = vld [vmem:[%s1048 + $0x24] sm:$0xf]
      %v6249 = vld [vmem:[%s1048 + $0x28] sm:$0xf]
      %v6250 = vld [vmem:[%s1048 + $0x2c] sm:$0xf]
      %v6251 = vld [vmem:[%s1048 + $0x30] sm:$0xf]
      %v6252 = vld [vmem:[%s1048 + $0x34] sm:$0xf]
      %v6253 = vld [vmem:[%s1048 + $0x38] sm:$0xf]
      %v6254 = vld [vmem:[%s1048 + $0x3c] sm:$0xf]
      %v6257 = vunpack.c.l.b16 %v6126
      %v6258 = vunpack.c.l.b16 %v6127
      %v6259 = vpack.c.b16 %v6258, %v6257
      %v6277 = vunpack.c.l.b16 %v6239
      %v6278 = vunpack.c.l.b16 %v6240
      %v6279 = vunpack.c.l.b16 %v6241
      %v6280 = vunpack.c.l.b16 %v6242
      %v6281 = vunpack.c.l.b16 %v6243
      %v6282 = vunpack.c.l.b16 %v6244
      %v6283 = vunpack.c.l.b16 %v6245
      %v6284 = vunpack.c.l.b16 %v6246
      %v6285 = vunpack.c.l.b16 %v6247
      %v6286 = vunpack.c.l.b16 %v6248
      %v6287 = vunpack.c.l.b16 %v6249
      %v6288 = vunpack.c.l.b16 %v6250
      %v6289 = vunpack.c.l.b16 %v6251
      %v6290 = vunpack.c.l.b16 %v6252
      %v6291 = vunpack.c.l.b16 %v6253
      %v6292 = vunpack.c.l.b16 %v6254
      %v6293 = vpack.c.b16 %v6278, %v6277
      %v6294 = vpack.c.b16 %v6280, %v6279
      %v6295 = vpack.c.b16 %v6282, %v6281
      %v6296 = vpack.c.b16 %v6284, %v6283
      %v6297 = vpack.c.b16 %v6286, %v6285
      %v6298 = vpack.c.b16 %v6288, %v6287
      %v6299 = vpack.c.b16 %v6290, %v6289
      %v6300 = vpack.c.b16 %v6292, %v6291
      %6309 = vmatprep.subr.bf16.mxu0 0
      %6310 = vmatpush1.bf16.msra.mxu0 %v6293
      %6311 = vmatprep.subr.bf16.mxu0 0
      %6312 = vmatpush1.bf16.msra.mxu0 %v6294
      %6313 = vmatprep.subr.bf16.mxu0 0
      %6314 = vmatpush1.bf16.msra.mxu0 %v6295
      %6315 = vmatprep.subr.bf16.mxu0 0
      %6316 = vmatpush1.bf16.msra.mxu0 %v6296
      %6317 = vmatprep.subr.bf16.mxu0 0
      %6318 = vmatpush1.bf16.msra.mxu0 %v6297
      %6319 = vmatprep.subr.bf16.mxu0 0
      %6320 = vmatpush1.bf16.msra.mxu0 %v6298
      %6321 = vmatprep.subr.bf16.mxu0 0
      %6322 = vmatpush1.bf16.msra.mxu0 %v6299
      %6323 = vmatprep.subr.bf16.mxu0 0
      %6324 = vmatpush1.bf16.msra.mxu0 %v6300
      %6325 = vmatprep.subr.bf16.mxu0 0
      %6326 = vmatpush1.bf16.msra.mxu0 0
      %6327 = vmatprep.subr.bf16.mxu0 0
      %6328 = vmatpush1.bf16.msra.mxu0 0
      %6329 = vmatprep.subr.bf16.mxu0 0
      %6330 = vmatpush1.bf16.msra.mxu0 0
      %6331 = vmatprep.subr.bf16.mxu0 0
      %6332 = vmatpush1.bf16.msra.mxu0 0
      %6333 = vmatprep.subr.bf16.mxu0 0
      %6334 = vmatpush1.bf16.msra.mxu0 0
      %6335 = vmatprep.subr.bf16.mxu0 0
      %6336 = vmatpush1.bf16.msra.mxu0 0
      %6337 = vmatprep.subr.bf16.mxu0 0
      %6338 = vmatpush1.bf16.msra.mxu0 0
      %6339 = vmatprep.subr.bf16.mxu0 0
      %6340 = vmatpush1.bf16.msra.mxu0 0
      %6341 = vmatprep.mubr.bf16.mxu0 0
      %6342 = vmatmul.mubr.bf16.gmra.mrb[0].mxu0 %v6259
      %v6343 = vpop.f32.mrb[0].mxu0
      %v6344 = vadd.f32 0.0, %v6343
      %v6345 = vpop.f32.mrb[0].mxu0
      %v6346 = vpop.f32.mrb[0].mxu0
      %v6347 = vpop.f32.mrb[0].mxu0
      %6348 = vdwg.mxu0
      %v6349 = vadd.f32 %v6238, %v6344
      %v6350 = vld [vmem:[%s1160] sm:$0xf]
      %v6351 = vld [vmem:[%s1160 + $0x4] sm:$0xf]
      %v6352 = vld [vmem:[%s1160 + $0x8] sm:$0xf]
      %v6353 = vld [vmem:[%s1160 + $0xc] sm:$0xf]
      %v6354 = vld [vmem:[%s1160 + $0x10] sm:$0xf]
      %v6355 = vld [vmem:[%s1160 + $0x14] sm:$0xf]
      %v6356 = vld [vmem:[%s1160 + $0x18] sm:$0xf]
      %v6357 = vld [vmem:[%s1160 + $0x1c] sm:$0xf]
      %v6358 = vld [vmem:[%s1160 + $0x20] sm:$0xf]
      %v6359 = vld [vmem:[%s1160 + $0x24] sm:$0xf]
      %v6360 = vld [vmem:[%s1160 + $0x28] sm:$0xf]
      %v6361 = vld [vmem:[%s1160 + $0x2c] sm:$0xf]
      %v6362 = vld [vmem:[%s1160 + $0x30] sm:$0xf]
      %v6363 = vld [vmem:[%s1160 + $0x34] sm:$0xf]
      %v6364 = vld [vmem:[%s1160 + $0x38] sm:$0xf]
      %v6365 = vld [vmem:[%s1160 + $0x3c] sm:$0xf]
      %v6382 = vunpack.c.l.b16 %v6350
      %v6383 = vunpack.c.l.b16 %v6351
      %v6384 = vunpack.c.l.b16 %v6352
      %v6385 = vunpack.c.l.b16 %v6353
      %v6386 = vunpack.c.l.b16 %v6354
      %v6387 = vunpack.c.l.b16 %v6355
      %v6388 = vunpack.c.l.b16 %v6356
      %v6389 = vunpack.c.l.b16 %v6357
      %v6390 = vunpack.c.l.b16 %v6358
      %v6391 = vunpack.c.l.b16 %v6359
      %v6392 = vunpack.c.l.b16 %v6360
      %v6393 = vunpack.c.l.b16 %v6361
      %v6394 = vunpack.c.l.b16 %v6362
      %v6395 = vunpack.c.l.b16 %v6363
      %v6396 = vunpack.c.l.b16 %v6364
      %v6397 = vunpack.c.l.b16 %v6365
      %v6398 = vpack.c.b16 %v6383, %v6382
      %v6399 = vpack.c.b16 %v6385, %v6384
      %v6400 = vpack.c.b16 %v6387, %v6386
      %v6401 = vpack.c.b16 %v6389, %v6388
      %v6402 = vpack.c.b16 %v6391, %v6390
      %v6403 = vpack.c.b16 %v6393, %v6392
      %v6404 = vpack.c.b16 %v6395, %v6394
      %v6405 = vpack.c.b16 %v6397, %v6396
      %6414 = vmatprep.subr.bf16.mxu0 0
      %6415 = vmatpush1.bf16.msra.mxu0 %v6398
      %6416 = vmatprep.subr.bf16.mxu0 0
      %6417 = vmatpush1.bf16.msra.mxu0 %v6399
      %6418 = vmatprep.subr.bf16.mxu0 0
      %6419 = vmatpush1.bf16.msra.mxu0 %v6400
      %6420 = vmatprep.subr.bf16.mxu0 0
      %6421 = vmatpush1.bf16.msra.mxu0 %v6401
      %6422 = vmatprep.subr.bf16.mxu0 0
      %6423 = vmatpush1.bf16.msra.mxu0 %v6402
      %6424 = vmatprep.subr.bf16.mxu0 0
      %6425 = vmatpush1.bf16.msra.mxu0 %v6403
      %6426 = vmatprep.subr.bf16.mxu0 0
      %6427 = vmatpush1.bf16.msra.mxu0 %v6404
      %6428 = vmatprep.subr.bf16.mxu0 0
      %6429 = vmatpush1.bf16.msra.mxu0 %v6405
      %6430 = vmatprep.subr.bf16.mxu0 0
      %6431 = vmatpush1.bf16.msra.mxu0 0
      %6432 = vmatprep.subr.bf16.mxu0 0
      %6433 = vmatpush1.bf16.msra.mxu0 0
      %6434 = vmatprep.subr.bf16.mxu0 0
      %6435 = vmatpush1.bf16.msra.mxu0 0
      %6436 = vmatprep.subr.bf16.mxu0 0
      %6437 = vmatpush1.bf16.msra.mxu0 0
      %6438 = vmatprep.subr.bf16.mxu0 0
      %6439 = vmatpush1.bf16.msra.mxu0 0
      %6440 = vmatprep.subr.bf16.mxu0 0
      %6441 = vmatpush1.bf16.msra.mxu0 0
      %6442 = vmatprep.subr.bf16.mxu0 0
      %6443 = vmatpush1.bf16.msra.mxu0 0
      %6444 = vmatprep.subr.bf16.mxu0 0
      %6445 = vmatpush1.bf16.msra.mxu0 0
      %6446 = vmatprep.mubr.bf16.mxu0 0
      %6447 = vmatmul.mubr.bf16.gmra.mrb[0].mxu0 %v6148
      %v6448 = vpop.f32.mrb[0].mxu0
      %v6449 = vadd.f32 0.0, %v6448
      %v6450 = vpop.f32.mrb[0].mxu0
      %v6451 = vpop.f32.mrb[0].mxu0
      %v6452 = vadd.f32 0.0, %v6451
      %v6453 = vpop.f32.mrb[0].mxu0
      %6454 = vdwg.mxu0
      %v6457 = vrot.slane %v6449, 1
      %v6458 = vrot.slane %v6452, 1
      %v6459 = vsel %vm581, %v6457, %v6458
      %v6461 = vadd.f32 %v6349, %v6459
      %v6462 = vld [vmem:[%s3] sm:$0x1]
      %v6464 = vlaneseq
      %v6465 = vshrl.u32 %v6464, 7
      %v6466 = vsub.s32 0, %v6465
      %v6467 = vrot.slane %v6462, %v6466
      %v6469 = vmul.f32 %v6461, %v6467
      %v6470 = vld [vmem:[%s4] sm:$0x1]
      %v6472 = vlaneseq
      %v6473 = vshrl.u32 %v6472, 7
      %v6474 = vsub.s32 0, %v6473
      %v6475 = vrot.slane %v6470, %v6474
      %v6477 = vadd.f32 %v6469, %v6475
      %v6478 = vmax.f32 %v6477, 0.0
      %v6479 = vpack.c.bf16 %v6478, %v6478
      %s6480 = scalar_lea.vmem %s244, 20
      %6481 = vst [vmem:[%s6480] sm:$0xf] %v6479
      %v6482 = vld [vmem:[%s6122] sm:$0xf]
      %v6483 = vld [vmem:[%s6122 + $0x4] sm:$0x1]
      %v6484 = vld [vmem:[%s6125] sm:$0xf]
      %v6485 = vld [vmem:[%s6125 + $0x4] sm:$0x1]
      %v6486 = vld [vmem:[%s2] sm:$0xf]
      %v6487 = vld [vmem:[%s2 + $0x4] sm:$0xf]
      %v6488 = vld [vmem:[%s2 + $0x8] sm:$0xf]
      %v6489 = vld [vmem:[%s2 + $0xc] sm:$0xf]
      %v6490 = vld [vmem:[%s2 + $0x10] sm:$0xf]
      %v6491 = vld [vmem:[%s2 + $0x14] sm:$0xf]
      %v6492 = vld [vmem:[%s2 + $0x18] sm:$0xf]
      %v6493 = vld [vmem:[%s2 + $0x1c] sm:$0xf]
      %v6494 = vld [vmem:[%s2 + $0x20] sm:$0xf]
      %v6495 = vld [vmem:[%s2 + $0x24] sm:$0xf]
      %v6496 = vld [vmem:[%s2 + $0x28] sm:$0xf]
      %v6497 = vld [vmem:[%s2 + $0x2c] sm:$0xf]
      %v6498 = vld [vmem:[%s2 + $0x30] sm:$0xf]
      %v6499 = vld [vmem:[%s2 + $0x34] sm:$0xf]
      %v6500 = vld [vmem:[%s2 + $0x38] sm:$0xf]
      %v6501 = vld [vmem:[%s2 + $0x3c] sm:$0xf]
      %v6504 = vunpack.c.l.b16 %v6482
      %v6505 = vunpack.c.l.b16 %v6483
      %v6506 = vpack.c.b16 %v6505, %v6504
      %v6524 = vunpack.c.l.b16 %v6486
      %v6525 = vunpack.c.l.b16 %v6487
      %v6526 = vunpack.c.l.b16 %v6488
      %v6527 = vunpack.c.l.b16 %v6489
      %v6528 = vunpack.c.l.b16 %v6490
      %v6529 = vunpack.c.l.b16 %v6491
      %v6530 = vunpack.c.l.b16 %v6492
      %v6531 = vunpack.c.l.b16 %v6493
      %v6532 = vunpack.c.l.b16 %v6494
      %v6533 = vunpack.c.l.b16 %v6495
      %v6534 = vunpack.c.l.b16 %v6496
      %v6535 = vunpack.c.l.b16 %v6497
      %v6536 = vunpack.c.l.b16 %v6498
      %v6537 = vunpack.c.l.b16 %v6499
      %v6538 = vunpack.c.l.b16 %v6500
      %v6539 = vunpack.c.l.b16 %v6501
      %v6540 = vpack.c.b16 %v6525, %v6524
      %v6541 = vpack.c.b16 %v6527, %v6526
      %v6542 = vpack.c.b16 %v6529, %v6528
      %v6543 = vpack.c.b16 %v6531, %v6530
      %v6544 = vpack.c.b16 %v6533, %v6532
      %v6545 = vpack.c.b16 %v6535, %v6534
      %v6546 = vpack.c.b16 %v6537, %v6536
      %v6547 = vpack.c.b16 %v6539, %v6538
      %6556 = vmatprep.subr.bf16.mxu0 0
      %6557 = vmatpush1.bf16.msra.mxu0 %v6540
      %6558 = vmatprep.subr.bf16.mxu0 0
      %6559 = vmatpush1.bf16.msra.mxu0 %v6541
      %6560 = vmatprep.subr.bf16.mxu0 0
      %6561 = vmatpush1.bf16.msra.mxu0 %v6542
      %6562 = vmatprep.subr.bf16.mxu0 0
      %6563 = vmatpush1.bf16.msra.mxu0 %v6543
      %6564 = vmatprep.subr.bf16.mxu0 0
      %6565 = vmatpush1.bf16.msra.mxu0 %v6544
      %6566 = vmatprep.subr.bf16.mxu0 0
      %6567 = vmatpush1.bf16.msra.mxu0 %v6545
      %6568 = vmatprep.subr.bf16.mxu0 0
      %6569 = vmatpush1.bf16.msra.mxu0 %v6546
      %6570 = vmatprep.subr.bf16.mxu0 0
      %6571 = vmatpush1.bf16.msra.mxu0 %v6547
      %6572 = vmatprep.subr.bf16.mxu0 0
      %6573 = vmatpush1.bf16.msra.mxu0 0
      %6574 = vmatprep.subr.bf16.mxu0 0
      %6575 = vmatpush1.bf16.msra.mxu0 0
      %6576 = vmatprep.subr.bf16.mxu0 0
      %6577 = vmatpush1.bf16.msra.mxu0 0
      %6578 = vmatprep.subr.bf16.mxu0 0
      %6579 = vmatpush1.bf16.msra.mxu0 0
      %6580 = vmatprep.subr.bf16.mxu0 0
      %6581 = vmatpush1.bf16.msra.mxu0 0
      %6582 = vmatprep.subr.bf16.mxu0 0
      %6583 = vmatpush1.bf16.msra.mxu0 0
      %6584 = vmatprep.subr.bf16.mxu0 0
      %6585 = vmatpush1.bf16.msra.mxu0 0
      %6586 = vmatprep.subr.bf16.mxu0 0
      %6587 = vmatpush1.bf16.msra.mxu0 0
      %6588 = vmatprep.mubr.bf16.mxu0 0
      %6589 = vmatmul.mubr.bf16.gmra.mrb[0].mxu0 %v6506
      %v6590 = vpop.f32.mrb[0].mxu0
      %v6591 = vadd.f32 0.0, %v6590
      %v6592 = vpop.f32.mrb[0].mxu0
      %v6593 = vpop.f32.mrb[0].mxu0
      %v6594 = vpop.f32.mrb[0].mxu0
      %6595 = vdwg.mxu0
      %v6596 = vadd.f32 %v6591, 0.0
      %v6597 = vld [vmem:[%s361] sm:$0xf]
      %v6598 = vld [vmem:[%s361 + $0x4] sm:$0xf]
      %v6599 = vld [vmem:[%s361 + $0x8] sm:$0xf]
      %v6600 = vld [vmem:[%s361 + $0xc] sm:$0xf]
      %v6601 = vld [vmem:[%s361 + $0x10] sm:$0xf]
      %v6602 = vld [vmem:[%s361 + $0x14] sm:$0xf]
      %v6603 = vld [vmem:[%s361 + $0x18] sm:$0xf]
      %v6604 = vld [vmem:[%s361 + $0x1c] sm:$0xf]
      %v6605 = vld [vmem:[%s361 + $0x20] sm:$0xf]
      %v6606 = vld [vmem:[%s361 + $0x24] sm:$0xf]
      %v6607 = vld [vmem:[%s361 + $0x28] sm:$0xf]
      %v6608 = vld [vmem:[%s361 + $0x2c] sm:$0xf]
      %v6609 = vld [vmem:[%s361 + $0x30] sm:$0xf]
      %v6610 = vld [vmem:[%s361 + $0x34] sm:$0xf]
      %v6611 = vld [vmem:[%s361 + $0x38] sm:$0xf]
      %v6612 = vld [vmem:[%s361 + $0x3c] sm:$0xf]
      %v6615 = vunpack.c.l.b16 %v6484
      %v6616 = vunpack.c.l.b16 %v6485
      %v6617 = vpack.c.b16 %v6616, %v6615
      %v6635 = vunpack.c.l.b16 %v6597
      %v6636 = vunpack.c.l.b16 %v6598
      %v6637 = vunpack.c.l.b16 %v6599
      %v6638 = vunpack.c.l.b16 %v6600
      %v6639 = vunpack.c.l.b16 %v6601
      %v6640 = vunpack.c.l.b16 %v6602
      %v6641 = vunpack.c.l.b16 %v6603
      %v6642 = vunpack.c.l.b16 %v6604
      %v6643 = vunpack.c.l.b16 %v6605
      %v6644 = vunpack.c.l.b16 %v6606
      %v6645 = vunpack.c.l.b16 %v6607
      %v6646 = vunpack.c.l.b16 %v6608
      %v6647 = vunpack.c.l.b16 %v6609
      %v6648 = vunpack.c.l.b16 %v6610
      %v6649 = vunpack.c.l.b16 %v6611
      %v6650 = vunpack.c.l.b16 %v6612
      %v6651 = vpack.c.b16 %v6636, %v6635
      %v6652 = vpack.c.b16 %v6638, %v6637
      %v6653 = vpack.c.b16 %v6640, %v6639
      %v6654 = vpack.c.b16 %v6642, %v6641
      %v6655 = vpack.c.b16 %v6644, %v6643
      %v6656 = vpack.c.b16 %v6646, %v6645
      %v6657 = vpack.c.b16 %v6648, %v6647
      %v6658 = vpack.c.b16 %v6650, %v6649
      %6667 = vmatprep.subr.bf16.mxu0 0
      %6668 = vmatpush1.bf16.msra.mxu0 %v6651
      %6669 = vmatprep.subr.bf16.mxu0 0
      %6670 = vmatpush1.bf16.msra.mxu0 %v6652
      %6671 = vmatprep.subr.bf16.mxu0 0
      %6672 = vmatpush1.bf16.msra.mxu0 %v6653
      %6673 = vmatprep.subr.bf16.mxu0 0
      %6674 = vmatpush1.bf16.msra.mxu0 %v6654
      %6675 = vmatprep.subr.bf16.mxu0 0
      %6676 = vmatpush1.bf16.msra.mxu0 %v6655
      %6677 = vmatprep.subr.bf16.mxu0 0
      %6678 = vmatpush1.bf16.msra.mxu0 %v6656
      %6679 = vmatprep.subr.bf16.mxu0 0
      %6680 = vmatpush1.bf16.msra.mxu0 %v6657
      %6681 = vmatprep.subr.bf16.mxu0 0
      %6682 = vmatpush1.bf16.msra.mxu0 %v6658
      %6683 = vmatprep.subr.bf16.mxu0 0
      %6684 = vmatpush1.bf16.msra.mxu0 0
      %6685 = vmatprep.subr.bf16.mxu0 0
      %6686 = vmatpush1.bf16.msra.mxu0 0
      %6687 = vmatprep.subr.bf16.mxu0 0
      %6688 = vmatpush1.bf16.msra.mxu0 0
      %6689 = vmatprep.subr.bf16.mxu0 0
      %6690 = vmatpush1.bf16.msra.mxu0 0
      %6691 = vmatprep.subr.bf16.mxu0 0
      %6692 = vmatpush1.bf16.msra.mxu0 0
      %6693 = vmatprep.subr.bf16.mxu0 0
      %6694 = vmatpush1.bf16.msra.mxu0 0
      %6695 = vmatprep.subr.bf16.mxu0 0
      %6696 = vmatpush1.bf16.msra.mxu0 0
      %6697 = vmatprep.subr.bf16.mxu0 0
      %6698 = vmatpush1.bf16.msra.mxu0 0
      %6699 = vmatprep.mubr.bf16.mxu0 0
      %6700 = vmatmul.mubr.bf16.gmra.mrb[0].mxu0 %v6617
      %v6701 = vpop.f32.mrb[0].mxu0
      %v6702 = vadd.f32 0.0, %v6701
      %v6703 = vpop.f32.mrb[0].mxu0
      %v6704 = vpop.f32.mrb[0].mxu0
      %v6705 = vpop.f32.mrb[0].mxu0
      %6706 = vdwg.mxu0
      %v6707 = vadd.f32 %v6596, %v6702
      %v6708 = vld [vmem:[%s473] sm:$0xf]
      %v6709 = vld [vmem:[%s473 + $0x4] sm:$0xf]
      %v6710 = vld [vmem:[%s473 + $0x8] sm:$0xf]
      %v6711 = vld [vmem:[%s473 + $0xc] sm:$0xf]
      %v6712 = vld [vmem:[%s473 + $0x10] sm:$0xf]
      %v6713 = vld [vmem:[%s473 + $0x14] sm:$0xf]
      %v6714 = vld [vmem:[%s473 + $0x18] sm:$0xf]
      %v6715 = vld [vmem:[%s473 + $0x1c] sm:$0xf]
      %v6716 = vld [vmem:[%s473 + $0x20] sm:$0xf]
      %v6717 = vld [vmem:[%s473 + $0x24] sm:$0xf]
      %v6718 = vld [vmem:[%s473 + $0x28] sm:$0xf]
      %v6719 = vld [vmem:[%s473 + $0x2c] sm:$0xf]
      %v6720 = vld [vmem:[%s473 + $0x30] sm:$0xf]
      %v6721 = vld [vmem:[%s473 + $0x34] sm:$0xf]
      %v6722 = vld [vmem:[%s473 + $0x38] sm:$0xf]
      %v6723 = vld [vmem:[%s473 + $0x3c] sm:$0xf]
      %v6740 = vunpack.c.l.b16 %v6708
      %v6741 = vunpack.c.l.b16 %v6709
      %v6742 = vunpack.c.l.b16 %v6710
      %v6743 = vunpack.c.l.b16 %v6711
      %v6744 = vunpack.c.l.b16 %v6712
      %v6745 = vunpack.c.l.b16 %v6713
      %v6746 = vunpack.c.l.b16 %v6714
      %v6747 = vunpack.c.l.b16 %v6715
      %v6748 = vunpack.c.l.b16 %v6716
      %v6749 = vunpack.c.l.b16 %v6717
      %v6750 = vunpack.c.l.b16 %v6718
      %v6751 = vunpack.c.l.b16 %v6719
      %v6752 = vunpack.c.l.b16 %v6720
      %v6753 = vunpack.c.l.b16 %v6721
      %v6754 = vunpack.c.l.b16 %v6722
      %v6755 = vunpack.c.l.b16 %v6723
      %v6756 = vpack.c.b16 %v6741, %v6740
      %v6757 = vpack.c.b16 %v6743, %v6742
      %v6758 = vpack.c.b16 %v6745, %v6744
      %v6759 = vpack.c.b16 %v6747, %v6746
      %v6760 = vpack.c.b16 %v6749, %v6748
      %v6761 = vpack.c.b16 %v6751, %v6750
      %v6762 = vpack.c.b16 %v6753, %v6752
      %v6763 = vpack.c.b16 %v6755, %v6754
      %6772 = vmatprep.subr.bf16.mxu0 0
      %6773 = vmatpush1.bf16.msra.mxu0 %v6756
      %6774 = vmatprep.subr.bf16.mxu0 0
      %6775 = vmatpush1.bf16.msra.mxu0 %v6757
      %6776 = vmatprep.subr.bf16.mxu0 0
      %6777 = vmatpush1.bf16.msra.mxu0 %v6758
      %6778 = vmatprep.subr.bf16.mxu0 0
      %6779 = vmatpush1.bf16.msra.mxu0 %v6759
      %6780 = vmatprep.subr.bf16.mxu0 0
      %6781 = vmatpush1.bf16.msra.mxu0 %v6760
      %6782 = vmatprep.subr.bf16.mxu0 0
      %6783 = vmatpush1.bf16.msra.mxu0 %v6761
      %6784 = vmatprep.subr.bf16.mxu0 0
      %6785 = vmatpush1.bf16.msra.mxu0 %v6762
      %6786 = vmatprep.subr.bf16.mxu0 0
      %6787 = vmatpush1.bf16.msra.mxu0 %v6763
      %6788 = vmatprep.subr.bf16.mxu0 0
      %6789 = vmatpush1.bf16.msra.mxu0 0
      %6790 = vmatprep.subr.bf16.mxu0 0
      %6791 = vmatpush1.bf16.msra.mxu0 0
      %6792 = vmatprep.subr.bf16.mxu0 0
      %6793 = vmatpush1.bf16.msra.mxu0 0
      %6794 = vmatprep.subr.bf16.mxu0 0
      %6795 = vmatpush1.bf16.msra.mxu0 0
      %6796 = vmatprep.subr.bf16.mxu0 0
      %6797 = vmatpush1.bf16.msra.mxu0 0
      %6798 = vmatprep.subr.bf16.mxu0 0
      %6799 = vmatpush1.bf16.msra.mxu0 0
      %6800 = vmatprep.subr.bf16.mxu0 0
      %6801 = vmatpush1.bf16.msra.mxu0 0
      %6802 = vmatprep.subr.bf16.mxu0 0
      %6803 = vmatpush1.bf16.msra.mxu0 0
      %6804 = vmatprep.mubr.bf16.mxu0 0
      %6805 = vmatmul.mubr.bf16.gmra.mrb[0].mxu0 %v6506
      %v6806 = vpop.f32.mrb[0].mxu0
      %v6807 = vadd.f32 0.0, %v6806
      %v6808 = vpop.f32.mrb[0].mxu0
      %v6809 = vpop.f32.mrb[0].mxu0
      %v6810 = vadd.f32 0.0, %v6809
      %v6811 = vpop.f32.mrb[0].mxu0
      %6812 = vdwg.mxu0
      %v6815 = vrot.slane %v6807, 1
      %v6816 = vrot.slane %v6810, 1
      %v6817 = vsel %vm581, %v6815, %v6816
      %v6819 = vadd.f32 %v6707, %v6817
      %s6820 = scalar_lea.vmem %s234, 104
      %v6821 = vld [vmem:[%s6820] sm:$0xf]
      %v6822 = vld [vmem:[%s6820 + $0x4] sm:$0x1]
      %s6823 = scalar_lea.vmem %s239, 104
      %v6824 = vld [vmem:[%s6823] sm:$0xf]
      %v6825 = vld [vmem:[%s6823 + $0x4] sm:$0x1]
      %v6826 = vld [vmem:[%s593] sm:$0xf]
      %v6827 = vld [vmem:[%s593 + $0x4] sm:$0xf]
      %v6828 = vld [vmem:[%s593 + $0x8] sm:$0xf]
      %v6829 = vld [vmem:[%s593 + $0xc] sm:$0xf]
      %v6830 = vld [vmem:[%s593 + $0x10] sm:$0xf]
      %v6831 = vld [vmem:[%s593 + $0x14] sm:$0xf]
      %v6832 = vld [vmem:[%s593 + $0x18] sm:$0xf]
      %v6833 = vld [vmem:[%s593 + $0x1c] sm:$0xf]
      %v6834 = vld [vmem:[%s593 + $0x20] sm:$0xf]
      %v6835 = vld [vmem:[%s593 + $0x24] sm:$0xf]
      %v6836 = vld [vmem:[%s593 + $0x28] sm:$0xf]
      %v6837 = vld [vmem:[%s593 + $0x2c] sm:$0xf]
      %v6838 = vld [vmem:[%s593 + $0x30] sm:$0xf]
      %v6839 = vld [vmem:[%s593 + $0x34] sm:$0xf]
      %v6840 = vld [vmem:[%s593 + $0x38] sm:$0xf]
      %v6841 = vld [vmem:[%s593 + $0x3c] sm:$0xf]
      %v6844 = vunpack.c.l.b16 %v6821
      %v6845 = vunpack.c.l.b16 %v6822
      %v6846 = vpack.c.b16 %v6845, %v6844
      %v6864 = vunpack.c.l.b16 %v6826
      %v6865 = vunpack.c.l.b16 %v6827
      %v6866 = vunpack.c.l.b16 %v6828
      %v6867 = vunpack.c.l.b16 %v6829
      %v6868 = vunpack.c.l.b16 %v6830
      %v6869 = vunpack.c.l.b16 %v6831
      %v6870 = vunpack.c.l.b16 %v6832
      %v6871 = vunpack.c.l.b16 %v6833
      %v6872 = vunpack.c.l.b16 %v6834
      %v6873 = vunpack.c.l.b16 %v6835
      %v6874 = vunpack.c.l.b16 %v6836
      %v6875 = vunpack.c.l.b16 %v6837
      %v6876 = vunpack.c.l.b16 %v6838
      %v6877 = vunpack.c.l.b16 %v6839
      %v6878 = vunpack.c.l.b16 %v6840
      %v6879 = vunpack.c.l.b16 %v6841
      %v6880 = vpack.c.b16 %v6865, %v6864
      %v6881 = vpack.c.b16 %v6867, %v6866
      %v6882 = vpack.c.b16 %v6869, %v6868
      %v6883 = vpack.c.b16 %v6871, %v6870
      %v6884 = vpack.c.b16 %v6873, %v6872
      %v6885 = vpack.c.b16 %v6875, %v6874
      %v6886 = vpack.c.b16 %v6877, %v6876
      %v6887 = vpack.c.b16 %v6879, %v6878
      %6896 = vmatprep.subr.bf16.mxu0 0
      %6897 = vmatpush1.bf16.msra.mxu0 %v6880
      %6898 = vmatprep.subr.bf16.mxu0 0
      %6899 = vmatpush1.bf16.msra.mxu0 %v6881
      %6900 = vmatprep.subr.bf16.mxu0 0
      %6901 = vmatpush1.bf16.msra.mxu0 %v6882
      %6902 = vmatprep.subr.bf16.mxu0 0
      %6903 = vmatpush1.bf16.msra.mxu0 %v6883
      %6904 = vmatprep.subr.bf16.mxu0 0
      %6905 = vmatpush1.bf16.msra.mxu0 %v6884
      %6906 = vmatprep.subr.bf16.mxu0 0
      %6907 = vmatpush1.bf16.msra.mxu0 %v6885
      %6908 = vmatprep.subr.bf16.mxu0 0
      %6909 = vmatpush1.bf16.msra.mxu0 %v6886
      %6910 = vmatprep.subr.bf16.mxu0 0
      %6911 = vmatpush1.bf16.msra.mxu0 %v6887
      %6912 = vmatprep.subr.bf16.mxu0 0
      %6913 = vmatpush1.bf16.msra.mxu0 0
      %6914 = vmatprep.subr.bf16.mxu0 0
      %6915 = vmatpush1.bf16.msra.mxu0 0
      %6916 = vmatprep.subr.bf16.mxu0 0
      %6917 = vmatpush1.bf16.msra.mxu0 0
      %6918 = vmatprep.subr.bf16.mxu0 0
      %6919 = vmatpush1.bf16.msra.mxu0 0
      %6920 = vmatprep.subr.bf16.mxu0 0
      %6921 = vmatpush1.bf16.msra.mxu0 0
      %6922 = vmatprep.subr.bf16.mxu0 0
      %6923 = vmatpush1.bf16.msra.mxu0 0
      %6924 = vmatprep.subr.bf16.mxu0 0
      %6925 = vmatpush1.bf16.msra.mxu0 0
      %6926 = vmatprep.subr.bf16.mxu0 0
      %6927 = vmatpush1.bf16.msra.mxu0 0
      %6928 = vmatprep.mubr.bf16.mxu0 0
      %6929 = vmatmul.mubr.bf16.gmra.mrb[0].mxu0 %v6846
      %v6930 = vpop.f32.mrb[0].mxu0
      %v6931 = vadd.f32 0.0, %v6930
      %v6932 = vpop.f32.mrb[0].mxu0
      %v6933 = vpop.f32.mrb[0].mxu0
      %v6934 = vpop.f32.mrb[0].mxu0
      %6935 = vdwg.mxu0
      %v6936 = vadd.f32 %v6819, %v6931
      %v6937 = vld [vmem:[%s705] sm:$0xf]
      %v6938 = vld [vmem:[%s705 + $0x4] sm:$0xf]
      %v6939 = vld [vmem:[%s705 + $0x8] sm:$0xf]
      %v6940 = vld [vmem:[%s705 + $0xc] sm:$0xf]
      %v6941 = vld [vmem:[%s705 + $0x10] sm:$0xf]
      %v6942 = vld [vmem:[%s705 + $0x14] sm:$0xf]
      %v6943 = vld [vmem:[%s705 + $0x18] sm:$0xf]
      %v6944 = vld [vmem:[%s705 + $0x1c] sm:$0xf]
      %v6945 = vld [vmem:[%s705 + $0x20] sm:$0xf]
      %v6946 = vld [vmem:[%s705 + $0x24] sm:$0xf]
      %v6947 = vld [vmem:[%s705 + $0x28] sm:$0xf]
      %v6948 = vld [vmem:[%s705 + $0x2c] sm:$0xf]
      %v6949 = vld [vmem:[%s705 + $0x30] sm:$0xf]
      %v6950 = vld [vmem:[%s705 + $0x34] sm:$0xf]
      %v6951 = vld [vmem:[%s705 + $0x38] sm:$0xf]
      %v6952 = vld [vmem:[%s705 + $0x3c] sm:$0xf]
      %v6955 = vunpack.c.l.b16 %v6824
      %v6956 = vunpack.c.l.b16 %v6825
      %v6957 = vpack.c.b16 %v6956, %v6955
      %v6975 = vunpack.c.l.b16 %v6937
      %v6976 = vunpack.c.l.b16 %v6938
      %v6977 = vunpack.c.l.b16 %v6939
      %v6978 = vunpack.c.l.b16 %v6940
      %v6979 = vunpack.c.l.b16 %v6941
      %v6980 = vunpack.c.l.b16 %v6942
      %v6981 = vunpack.c.l.b16 %v6943
      %v6982 = vunpack.c.l.b16 %v6944
      %v6983 = vunpack.c.l.b16 %v6945
      %v6984 = vunpack.c.l.b16 %v6946
      %v6985 = vunpack.c.l.b16 %v6947
      %v6986 = vunpack.c.l.b16 %v6948
      %v6987 = vunpack.c.l.b16 %v6949
      %v6988 = vunpack.c.l.b16 %v6950
      %v6989 = vunpack.c.l.b16 %v6951
      %v6990 = vunpack.c.l.b16 %v6952
      %v6991 = vpack.c.b16 %v6976, %v6975
      %v6992 = vpack.c.b16 %v6978, %v6977
      %v6993 = vpack.c.b16 %v6980, %v6979
      %v6994 = vpack.c.b16 %v6982, %v6981
      %v6995 = vpack.c.b16 %v6984, %v6983
      %v6996 = vpack.c.b16 %v6986, %v6985
      %v6997 = vpack.c.b16 %v6988, %v6987
      %v6998 = vpack.c.b16 %v6990, %v6989
      %7007 = vmatprep.subr.bf16.mxu0 0
      %7008 = vmatpush1.bf16.msra.mxu0 %v6991
      %7009 = vmatprep.subr.bf16.mxu0 0
      %7010 = vmatpush1.bf16.msra.mxu0 %v6992
      %7011 = vmatprep.subr.bf16.mxu0 0
      %7012 = vmatpush1.bf16.msra.mxu0 %v6993
      %7013 = vmatprep.subr.bf16.mxu0 0
      %7014 = vmatpush1.bf16.msra.mxu0 %v6994
      %7015 = vmatprep.subr.bf16.mxu0 0
      %7016 = vmatpush1.bf16.msra.mxu0 %v6995
      %7017 = vmatprep.subr.bf16.mxu0 0
      %7018 = vmatpush1.bf16.msra.mxu0 %v6996
      %7019 = vmatprep.subr.bf16.mxu0 0
      %7020 = vmatpush1.bf16.msra.mxu0 %v6997
      %7021 = vmatprep.subr.bf16.mxu0 0
      %7022 = vmatpush1.bf16.msra.mxu0 %v6998
      %7023 = vmatprep.subr.bf16.mxu0 0
      %7024 = vmatpush1.bf16.msra.mxu0 0
      %7025 = vmatprep.subr.bf16.mxu0 0
      %7026 = vmatpush1.bf16.msra.mxu0 0
      %7027 = vmatprep.subr.bf16.mxu0 0
      %7028 = vmatpush1.bf16.msra.mxu0 0
      %7029 = vmatprep.subr.bf16.mxu0 0
      %7030 = vmatpush1.bf16.msra.mxu0 0
      %7031 = vmatprep.subr.bf16.mxu0 0
      %7032 = vmatpush1.bf16.msra.mxu0 0
      %7033 = vmatprep.subr.bf16.mxu0 0
      %7034 = vmatpush1.bf16.msra.mxu0 0
      %7035 = vmatprep.subr.bf16.mxu0 0
      %7036 = vmatpush1.bf16.msra.mxu0 0
      %7037 = vmatprep.subr.bf16.mxu0 0
      %7038 = vmatpush1.bf16.msra.mxu0 0
      %7039 = vmatprep.mubr.bf16.mxu0 0
      %7040 = vmatmul.mubr.bf16.gmra.mrb[0].mxu0 %v6957
      %v7041 = vpop.f32.mrb[0].mxu0
      %v7042 = vadd.f32 0.0, %v7041
      %v7043 = vpop.f32.mrb[0].mxu0
      %v7044 = vpop.f32.mrb[0].mxu0
      %v7045 = vpop.f32.mrb[0].mxu0
      %7046 = vdwg.mxu0
      %v7047 = vadd.f32 %v6936, %v7042
      %v7048 = vld [vmem:[%s817] sm:$0xf]
      %v7049 = vld [vmem:[%s817 + $0x4] sm:$0xf]
      %v7050 = vld [vmem:[%s817 + $0x8] sm:$0xf]
      %v7051 = vld [vmem:[%s817 + $0xc] sm:$0xf]
      %v7052 = vld [vmem:[%s817 + $0x10] sm:$0xf]
      %v7053 = vld [vmem:[%s817 + $0x14] sm:$0xf]
      %v7054 = vld [vmem:[%s817 + $0x18] sm:$0xf]
      %v7055 = vld [vmem:[%s817 + $0x1c] sm:$0xf]
      %v7056 = vld [vmem:[%s817 + $0x20] sm:$0xf]
      %v7057 = vld [vmem:[%s817 + $0x24] sm:$0xf]
      %v7058 = vld [vmem:[%s817 + $0x28] sm:$0xf]
      %v7059 = vld [vmem:[%s817 + $0x2c] sm:$0xf]
      %v7060 = vld [vmem:[%s817 + $0x30] sm:$0xf]
      %v7061 = vld [vmem:[%s817 + $0x34] sm:$0xf]
      %v7062 = vld [vmem:[%s817 + $0x38] sm:$0xf]
      %v7063 = vld [vmem:[%s817 + $0x3c] sm:$0xf]
      %v7080 = vunpack.c.l.b16 %v7048
      %v7081 = vunpack.c.l.b16 %v7049
      %v7082 = vunpack.c.l.b16 %v7050
      %v7083 = vunpack.c.l.b16 %v7051
      %v7084 = vunpack.c.l.b16 %v7052
      %v7085 = vunpack.c.l.b16 %v7053
      %v7086 = vunpack.c.l.b16 %v7054
      %v7087 = vunpack.c.l.b16 %v7055
      %v7088 = vunpack.c.l.b16 %v7056
      %v7089 = vunpack.c.l.b16 %v7057
      %v7090 = vunpack.c.l.b16 %v7058
      %v7091 = vunpack.c.l.b16 %v7059
      %v7092 = vunpack.c.l.b16 %v7060
      %v7093 = vunpack.c.l.b16 %v7061
      %v7094 = vunpack.c.l.b16 %v7062
      %v7095 = vunpack.c.l.b16 %v7063
      %v7096 = vpack.c.b16 %v7081, %v7080
      %v7097 = vpack.c.b16 %v7083, %v7082
      %v7098 = vpack.c.b16 %v7085, %v7084
      %v7099 = vpack.c.b16 %v7087, %v7086
      %v7100 = vpack.c.b16 %v7089, %v7088
      %v7101 = vpack.c.b16 %v7091, %v7090
      %v7102 = vpack.c.b16 %v7093, %v7092
      %v7103 = vpack.c.b16 %v7095, %v7094
      %7112 = vmatprep.subr.bf16.mxu0 0
      %7113 = vmatpush1.bf16.msra.mxu0 %v7096
      %7114 = vmatprep.subr.bf16.mxu0 0
      %7115 = vmatpush1.bf16.msra.mxu0 %v7097
      %7116 = vmatprep.subr.bf16.mxu0 0
      %7117 = vmatpush1.bf16.msra.mxu0 %v7098
      %7118 = vmatprep.subr.bf16.mxu0 0
      %7119 = vmatpush1.bf16.msra.mxu0 %v7099
      %7120 = vmatprep.subr.bf16.mxu0 0
      %7121 = vmatpush1.bf16.msra.mxu0 %v7100
      %7122 = vmatprep.subr.bf16.mxu0 0
      %7123 = vmatpush1.bf16.msra.mxu0 %v7101
      %7124 = vmatprep.subr.bf16.mxu0 0
      %7125 = vmatpush1.bf16.msra.mxu0 %v7102
      %7126 = vmatprep.subr.bf16.mxu0 0
      %7127 = vmatpush1.bf16.msra.mxu0 %v7103
      %7128 = vmatprep.subr.bf16.mxu0 0
      %7129 = vmatpush1.bf16.msra.mxu0 0
      %7130 = vmatprep.subr.bf16.mxu0 0
      %7131 = vmatpush1.bf16.msra.mxu0 0
      %7132 = vmatprep.subr.bf16.mxu0 0
      %7133 = vmatpush1.bf16.msra.mxu0 0
      %7134 = vmatprep.subr.bf16.mxu0 0
      %7135 = vmatpush1.bf16.msra.mxu0 0
      %7136 = vmatprep.subr.bf16.mxu0 0
      %7137 = vmatpush1.bf16.msra.mxu0 0
      %7138 = vmatprep.subr.bf16.mxu0 0
      %7139 = vmatpush1.bf16.msra.mxu0 0
      %7140 = vmatprep.subr.bf16.mxu0 0
      %7141 = vmatpush1.bf16.msra.mxu0 0
      %7142 = vmatprep.subr.bf16.mxu0 0
      %7143 = vmatpush1.bf16.msra.mxu0 0
      %7144 = vmatprep.mubr.bf16.mxu0 0
      %7145 = vmatmul.mubr.bf16.gmra.mrb[0].mxu0 %v6846
      %v7146 = vpop.f32.mrb[0].mxu0
      %v7147 = vadd.f32 0.0, %v7146
      %v7148 = vpop.f32.mrb[0].mxu0
      %v7149 = vpop.f32.mrb[0].mxu0
      %v7150 = vadd.f32 0.0, %v7149
      %v7151 = vpop.f32.mrb[0].mxu0
      %7152 = vdwg.mxu0
      %v7155 = vrot.slane %v7147, 1
      %v7156 = vrot.slane %v7150, 1
      %v7157 = vsel %vm581, %v7155, %v7156
      %v7159 = vadd.f32 %v7047, %v7157
      %s7160 = scalar_lea.vmem %s234, 112
      %v7161 = vld [vmem:[%s7160] sm:$0xf]
      %v7162 = vld [vmem:[%s7160 + $0x4] sm:$0x1]
      %s7163 = scalar_lea.vmem %s239, 112
      %v7164 = vld [vmem:[%s7163] sm:$0xf]
      %v7165 = vld [vmem:[%s7163 + $0x4] sm:$0x1]
      %v7166 = vld [vmem:[%s936] sm:$0xf]
      %v7167 = vld [vmem:[%s936 + $0x4] sm:$0xf]
      %v7168 = vld [vmem:[%s936 + $0x8] sm:$0xf]
      %v7169 = vld [vmem:[%s936 + $0xc] sm:$0xf]
      %v7170 = vld [vmem:[%s936 + $0x10] sm:$0xf]
      %v7171 = vld [vmem:[%s936 + $0x14] sm:$0xf]
      %v7172 = vld [vmem:[%s936 + $0x18] sm:$0xf]
      %v7173 = vld [vmem:[%s936 + $0x1c] sm:$0xf]
      %v7174 = vld [vmem:[%s936 + $0x20] sm:$0xf]
      %v7175 = vld [vmem:[%s936 + $0x24] sm:$0xf]
      %v7176 = vld [vmem:[%s936 + $0x28] sm:$0xf]
      %v7177 = vld [vmem:[%s936 + $0x2c] sm:$0xf]
      %v7178 = vld [vmem:[%s936 + $0x30] sm:$0xf]
      %v7179 = vld [vmem:[%s936 + $0x34] sm:$0xf]
      %v7180 = vld [vmem:[%s936 + $0x38] sm:$0xf]
      %v7181 = vld [vmem:[%s936 + $0x3c] sm:$0xf]
      %v7184 = vunpack.c.l.b16 %v7161
      %v7185 = vunpack.c.l.b16 %v7162
      %v7186 = vpack.c.b16 %v7185, %v7184
      %v7204 = vunpack.c.l.b16 %v7166
      %v7205 = vunpack.c.l.b16 %v7167
      %v7206 = vunpack.c.l.b16 %v7168
      %v7207 = vunpack.c.l.b16 %v7169
      %v7208 = vunpack.c.l.b16 %v7170
      %v7209 = vunpack.c.l.b16 %v7171
      %v7210 = vunpack.c.l.b16 %v7172
      %v7211 = vunpack.c.l.b16 %v7173
      %v7212 = vunpack.c.l.b16 %v7174
      %v7213 = vunpack.c.l.b16 %v7175
      %v7214 = vunpack.c.l.b16 %v7176
      %v7215 = vunpack.c.l.b16 %v7177
      %v7216 = vunpack.c.l.b16 %v7178
      %v7217 = vunpack.c.l.b16 %v7179
      %v7218 = vunpack.c.l.b16 %v7180
      %v7219 = vunpack.c.l.b16 %v7181
      %v7220 = vpack.c.b16 %v7205, %v7204
      %v7221 = vpack.c.b16 %v7207, %v7206
      %v7222 = vpack.c.b16 %v7209, %v7208
      %v7223 = vpack.c.b16 %v7211, %v7210
      %v7224 = vpack.c.b16 %v7213, %v7212
      %v7225 = vpack.c.b16 %v7215, %v7214
      %v7226 = vpack.c.b16 %v7217, %v7216
      %v7227 = vpack.c.b16 %v7219, %v7218
      %7236 = vmatprep.subr.bf16.mxu0 0
      %7237 = vmatpush1.bf16.msra.mxu0 %v7220
      %7238 = vmatprep.subr.bf16.mxu0 0
      %7239 = vmatpush1.bf16.msra.mxu0 %v7221
      %7240 = vmatprep.subr.bf16.mxu0 0
      %7241 = vmatpush1.bf16.msra.mxu0 %v7222
      %7242 = vmatprep.subr.bf16.mxu0 0
      %7243 = vmatpush1.bf16.msra.mxu0 %v7223
      %7244 = vmatprep.subr.bf16.mxu0 0
      %7245 = vmatpush1.bf16.msra.mxu0 %v7224
      %7246 = vmatprep.subr.bf16.mxu0 0
      %7247 = vmatpush1.bf16.msra.mxu0 %v7225
      %7248 = vmatprep.subr.bf16.mxu0 0
      %7249 = vmatpush1.bf16.msra.mxu0 %v7226
      %7250 = vmatprep.subr.bf16.mxu0 0
      %7251 = vmatpush1.bf16.msra.mxu0 %v7227
      %7252 = vmatprep.subr.bf16.mxu0 0
      %7253 = vmatpush1.bf16.msra.mxu0 0
      %7254 = vmatprep.subr.bf16.mxu0 0
      %7255 = vmatpush1.bf16.msra.mxu0 0
      %7256 = vmatprep.subr.bf16.mxu0 0
      %7257 = vmatpush1.bf16.msra.mxu0 0
      %7258 = vmatprep.subr.bf16.mxu0 0
      %7259 = vmatpush1.bf16.msra.mxu0 0
      %7260 = vmatprep.subr.bf16.mxu0 0
      %7261 = vmatpush1.bf16.msra.mxu0 0
      %7262 = vmatprep.subr.bf16.mxu0 0
      %7263 = vmatpush1.bf16.msra.mxu0 0
      %7264 = vmatprep.subr.bf16.mxu0 0
      %7265 = vmatpush1.bf16.msra.mxu0 0
      %7266 = vmatprep.subr.bf16.mxu0 0
      %7267 = vmatpush1.bf16.msra.mxu0 0
      %7268 = vmatprep.mubr.bf16.mxu0 0
      %7269 = vmatmul.mubr.bf16.gmra.mrb[0].mxu0 %v7186
      %v7270 = vpop.f32.mrb[0].mxu0
      %v7271 = vadd.f32 0.0, %v7270
      %v7272 = vpop.f32.mrb[0].mxu0
      %v7273 = vpop.f32.mrb[0].mxu0
      %v7274 = vpop.f32.mrb[0].mxu0
      %7275 = vdwg.mxu0
      %v7276 = vadd.f32 %v7159, %v7271
      %v7277 = vld [vmem:[%s1048] sm:$0xf]
      %v7278 = vld [vmem:[%s1048 + $0x4] sm:$0xf]
      %v7279 = vld [vmem:[%s1048 + $0x8] sm:$0xf]
      %v7280 = vld [vmem:[%s1048 + $0xc] sm:$0xf]
      %v7281 = vld [vmem:[%s1048 + $0x10] sm:$0xf]
      %v7282 = vld [vmem:[%s1048 + $0x14] sm:$0xf]
      %v7283 = vld [vmem:[%s1048 + $0x18] sm:$0xf]
      %v7284 = vld [vmem:[%s1048 + $0x1c] sm:$0xf]
      %v7285 = vld [vmem:[%s1048 + $0x20] sm:$0xf]
      %v7286 = vld [vmem:[%s1048 + $0x24] sm:$0xf]
      %v7287 = vld [vmem:[%s1048 + $0x28] sm:$0xf]
      %v7288 = vld [vmem:[%s1048 + $0x2c] sm:$0xf]
      %v7289 = vld [vmem:[%s1048 + $0x30] sm:$0xf]
      %v7290 = vld [vmem:[%s1048 + $0x34] sm:$0xf]
      %v7291 = vld [vmem:[%s1048 + $0x38] sm:$0xf]
      %v7292 = vld [vmem:[%s1048 + $0x3c] sm:$0xf]
      %v7295 = vunpack.c.l.b16 %v7164
      %v7296 = vunpack.c.l.b16 %v7165
      %v7297 = vpack.c.b16 %v7296, %v7295
      %v7315 = vunpack.c.l.b16 %v7277
      %v7316 = vunpack.c.l.b16 %v7278
      %v7317 = vunpack.c.l.b16 %v7279
      %v7318 = vunpack.c.l.b16 %v7280
      %v7319 = vunpack.c.l.b16 %v7281
      %v7320 = vunpack.c.l.b16 %v7282
      %v7321 = vunpack.c.l.b16 %v7283
      %v7322 = vunpack.c.l.b16 %v7284
      %v7323 = vunpack.c.l.b16 %v7285
      %v7324 = vunpack.c.l.b16 %v7286
      %v7325 = vunpack.c.l.b16 %v7287
      %v7326 = vunpack.c.l.b16 %v7288
      %v7327 = vunpack.c.l.b16 %v7289
      %v7328 = vunpack.c.l.b16 %v7290
      %v7329 = vunpack.c.l.b16 %v7291
      %v7330 = vunpack.c.l.b16 %v7292
      %v7331 = vpack.c.b16 %v7316, %v7315
      %v7332 = vpack.c.b16 %v7318, %v7317
      %v7333 = vpack.c.b16 %v7320, %v7319
      %v7334 = vpack.c.b16 %v7322, %v7321
      %v7335 = vpack.c.b16 %v7324, %v7323
      %v7336 = vpack.c.b16 %v7326, %v7325
      %v7337 = vpack.c.b16 %v7328, %v7327
      %v7338 = vpack.c.b16 %v7330, %v7329
      %7347 = vmatprep.subr.bf16.mxu0 0
      %7348 = vmatpush1.bf16.msra.mxu0 %v7331
      %7349 = vmatprep.subr.bf16.mxu0 0
      %7350 = vmatpush1.bf16.msra.mxu0 %v7332
      %7351 = vmatprep.subr.bf16.mxu0 0
      %7352 = vmatpush1.bf16.msra.mxu0 %v7333
      %7353 = vmatprep.subr.bf16.mxu0 0
      %7354 = vmatpush1.bf16.msra.mxu0 %v7334
      %7355 = vmatprep.subr.bf16.mxu0 0
      %7356 = vmatpush1.bf16.msra.mxu0 %v7335
      %7357 = vmatprep.subr.bf16.mxu0 0
      %7358 = vmatpush1.bf16.msra.mxu0 %v7336
      %7359 = vmatprep.subr.bf16.mxu0 0
      %7360 = vmatpush1.bf16.msra.mxu0 %v7337
      %7361 = vmatprep.subr.bf16.mxu0 0
      %7362 = vmatpush1.bf16.msra.mxu0 %v7338
      %7363 = vmatprep.subr.bf16.mxu0 0
      %7364 = vmatpush1.bf16.msra.mxu0 0
      %7365 = vmatprep.subr.bf16.mxu0 0
      %7366 = vmatpush1.bf16.msra.mxu0 0
      %7367 = vmatprep.subr.bf16.mxu0 0
      %7368 = vmatpush1.bf16.msra.mxu0 0
      %7369 = vmatprep.subr.bf16.mxu0 0
      %7370 = vmatpush1.bf16.msra.mxu0 0
      %7371 = vmatprep.subr.bf16.mxu0 0
      %7372 = vmatpush1.bf16.msra.mxu0 0
      %7373 = vmatprep.subr.bf16.mxu0 0
      %7374 = vmatpush1.bf16.msra.mxu0 0
      %7375 = vmatprep.subr.bf16.mxu0 0
      %7376 = vmatpush1.bf16.msra.mxu0 0
      %7377 = vmatprep.subr.bf16.mxu0 0
      %7378 = vmatpush1.bf16.msra.mxu0 0
      %7379 = vmatprep.mubr.bf16.mxu0 0
      %7380 = vmatmul.mubr.bf16.gmra.mrb[0].mxu0 %v7297
      %v7381 = vpop.f32.mrb[0].mxu0
      %v7382 = vadd.f32 0.0, %v7381
      %v7383 = vpop.f32.mrb[0].mxu0
      %v7384 = vpop.f32.mrb[0].mxu0
      %v7385 = vpop.f32.mrb[0].mxu0
      %7386 = vdwg.mxu0
      %v7387 = vadd.f32 %v7276, %v7382
      %v7388 = vld [vmem:[%s1160] sm:$0xf]
      %v7389 = vld [vmem:[%s1160 + $0x4] sm:$0xf]
      %v7390 = vld [vmem:[%s1160 + $0x8] sm:$0xf]
      %v7391 = vld [vmem:[%s1160 + $0xc] sm:$0xf]
      %v7392 = vld [vmem:[%s1160 + $0x10] sm:$0xf]
      %v7393 = vld [vmem:[%s1160 + $0x14] sm:$0xf]
      %v7394 = vld [vmem:[%s1160 + $0x18] sm:$0xf]
      %v7395 = vld [vmem:[%s1160 + $0x1c] sm:$0xf]
      %v7396 = vld [vmem:[%s1160 + $0x20] sm:$0xf]
      %v7397 = vld [vmem:[%s1160 + $0x24] sm:$0xf]
      %v7398 = vld [vmem:[%s1160 + $0x28] sm:$0xf]
      %v7399 = vld [vmem:[%s1160 + $0x2c] sm:$0xf]
      %v7400 = vld [vmem:[%s1160 + $0x30] sm:$0xf]
      %v7401 = vld [vmem:[%s1160 + $0x34] sm:$0xf]
      %v7402 = vld [vmem:[%s1160 + $0x38] sm:$0xf]
      %v7403 = vld [vmem:[%s1160 + $0x3c] sm:$0xf]
      %v7420 = vunpack.c.l.b16 %v7388
      %v7421 = vunpack.c.l.b16 %v7389
      %v7422 = vunpack.c.l.b16 %v7390
      %v7423 = vunpack.c.l.b16 %v7391
      %v7424 = vunpack.c.l.b16 %v7392
      %v7425 = vunpack.c.l.b16 %v7393
      %v7426 = vunpack.c.l.b16 %v7394
      %v7427 = vunpack.c.l.b16 %v7395
      %v7428 = vunpack.c.l.b16 %v7396
      %v7429 = vunpack.c.l.b16 %v7397
      %v7430 = vunpack.c.l.b16 %v7398
      %v7431 = vunpack.c.l.b16 %v7399
      %v7432 = vunpack.c.l.b16 %v7400
      %v7433 = vunpack.c.l.b16 %v7401
      %v7434 = vunpack.c.l.b16 %v7402
      %v7435 = vunpack.c.l.b16 %v7403
      %v7436 = vpack.c.b16 %v7421, %v7420
      %v7437 = vpack.c.b16 %v7423, %v7422
      %v7438 = vpack.c.b16 %v7425, %v7424
      %v7439 = vpack.c.b16 %v7427, %v7426
      %v7440 = vpack.c.b16 %v7429, %v7428
      %v7441 = vpack.c.b16 %v7431, %v7430
      %v7442 = vpack.c.b16 %v7433, %v7432
      %v7443 = vpack.c.b16 %v7435, %v7434
      %7452 = vmatprep.subr.bf16.mxu0 0
      %7453 = vmatpush1.bf16.msra.mxu0 %v7436
      %7454 = vmatprep.subr.bf16.mxu0 0
      %7455 = vmatpush1.bf16.msra.mxu0 %v7437
      %7456 = vmatprep.subr.bf16.mxu0 0
      %7457 = vmatpush1.bf16.msra.mxu0 %v7438
      %7458 = vmatprep.subr.bf16.mxu0 0
      %7459 = vmatpush1.bf16.msra.mxu0 %v7439
      %7460 = vmatprep.subr.bf16.mxu0 0
      %7461 = vmatpush1.bf16.msra.mxu0 %v7440
      %7462 = vmatprep.subr.bf16.mxu0 0
      %7463 = vmatpush1.bf16.msra.mxu0 %v7441
      %7464 = vmatprep.subr.bf16.mxu0 0
      %7465 = vmatpush1.bf16.msra.mxu0 %v7442
      %7466 = vmatprep.subr.bf16.mxu0 0
      %7467 = vmatpush1.bf16.msra.mxu0 %v7443
      %7468 = vmatprep.subr.bf16.mxu0 0
      %7469 = vmatpush1.bf16.msra.mxu0 0
      %7470 = vmatprep.subr.bf16.mxu0 0
      %7471 = vmatpush1.bf16.msra.mxu0 0
      %7472 = vmatprep.subr.bf16.mxu0 0
      %7473 = vmatpush1.bf16.msra.mxu0 0
      %7474 = vmatprep.subr.bf16.mxu0 0
      %7475 = vmatpush1.bf16.msra.mxu0 0
      %7476 = vmatprep.subr.bf16.mxu0 0
      %7477 = vmatpush1.bf16.msra.mxu0 0
      %7478 = vmatprep.subr.bf16.mxu0 0
      %7479 = vmatpush1.bf16.msra.mxu0 0
      %7480 = vmatprep.subr.bf16.mxu0 0
      %7481 = vmatpush1.bf16.msra.mxu0 0
      %7482 = vmatprep.subr.bf16.mxu0 0
      %7483 = vmatpush1.bf16.msra.mxu0 0
      %7484 = vmatprep.mubr.bf16.mxu0 0
      %7485 = vmatmul.mubr.bf16.gmra.mrb[0].mxu0 %v7186
      %v7486 = vpop.f32.mrb[0].mxu0
      %v7487 = vadd.f32 0.0, %v7486
      %v7488 = vpop.f32.mrb[0].mxu0
      %v7489 = vpop.f32.mrb[0].mxu0
      %v7490 = vadd.f32 0.0, %v7489
      %v7491 = vpop.f32.mrb[0].mxu0
      %7492 = vdwg.mxu0
      %v7495 = vrot.slane %v7487, 1
      %v7496 = vrot.slane %v7490, 1
      %v7497 = vsel %vm581, %v7495, %v7496
      %v7499 = vadd.f32 %v7387, %v7497
      %v7500 = vld [vmem:[%s3] sm:$0x1]
      %v7502 = vlaneseq
      %v7503 = vshrl.u32 %v7502, 7
      %v7504 = vsub.s32 0, %v7503
      %v7505 = vrot.slane %v7500, %v7504
      %v7507 = vmul.f32 %v7499, %v7505
      %v7508 = vld [vmem:[%s4] sm:$0x1]
      %v7510 = vlaneseq
      %v7511 = vshrl.u32 %v7510, 7
      %v7512 = vsub.s32 0, %v7511
      %v7513 = vrot.slane %v7508, %v7512
      %v7515 = vadd.f32 %v7507, %v7513
      %v7516 = vmax.f32 %v7515, 0.0
      %v7517 = vpack.c.bf16 %v7516, %v7516
      %s7518 = scalar_lea.vmem %s244, 24
      %7519 = vst [vmem:[%s7518] sm:$0xf] %v7517
      %v7520 = vld [vmem:[%s7160] sm:$0xf]
      %v7521 = vld [vmem:[%s7160 + $0x4] sm:$0x1]
      %v7522 = vld [vmem:[%s7163] sm:$0xf]
      %v7523 = vld [vmem:[%s7163 + $0x4] sm:$0x1]
      %v7524 = vld [vmem:[%s2] sm:$0xf]
      %v7525 = vld [vmem:[%s2 + $0x4] sm:$0xf]
      %v7526 = vld [vmem:[%s2 + $0x8] sm:$0xf]
      %v7527 = vld [vmem:[%s2 + $0xc] sm:$0xf]
      %v7528 = vld [vmem:[%s2 + $0x10] sm:$0xf]
      %v7529 = vld [vmem:[%s2 + $0x14] sm:$0xf]
      %v7530 = vld [vmem:[%s2 + $0x18] sm:$0xf]
      %v7531 = vld [vmem:[%s2 + $0x1c] sm:$0xf]
      %v7532 = vld [vmem:[%s2 + $0x20] sm:$0xf]
      %v7533 = vld [vmem:[%s2 + $0x24] sm:$0xf]
      %v7534 = vld [vmem:[%s2 + $0x28] sm:$0xf]
      %v7535 = vld [vmem:[%s2 + $0x2c] sm:$0xf]
      %v7536 = vld [vmem:[%s2 + $0x30] sm:$0xf]
      %v7537 = vld [vmem:[%s2 + $0x34] sm:$0xf]
      %v7538 = vld [vmem:[%s2 + $0x38] sm:$0xf]
      %v7539 = vld [vmem:[%s2 + $0x3c] sm:$0xf]
      %v7542 = vunpack.c.l.b16 %v7520
      %v7543 = vunpack.c.l.b16 %v7521
      %v7544 = vpack.c.b16 %v7543, %v7542
      %v7562 = vunpack.c.l.b16 %v7524
      %v7563 = vunpack.c.l.b16 %v7525
      %v7564 = vunpack.c.l.b16 %v7526
      %v7565 = vunpack.c.l.b16 %v7527
      %v7566 = vunpack.c.l.b16 %v7528
      %v7567 = vunpack.c.l.b16 %v7529
      %v7568 = vunpack.c.l.b16 %v7530
      %v7569 = vunpack.c.l.b16 %v7531
      %v7570 = vunpack.c.l.b16 %v7532
      %v7571 = vunpack.c.l.b16 %v7533
      %v7572 = vunpack.c.l.b16 %v7534
      %v7573 = vunpack.c.l.b16 %v7535
      %v7574 = vunpack.c.l.b16 %v7536
      %v7575 = vunpack.c.l.b16 %v7537
      %v7576 = vunpack.c.l.b16 %v7538
      %v7577 = vunpack.c.l.b16 %v7539
      %v7578 = vpack.c.b16 %v7563, %v7562
      %v7579 = vpack.c.b16 %v7565, %v7564
      %v7580 = vpack.c.b16 %v7567, %v7566
      %v7581 = vpack.c.b16 %v7569, %v7568
      %v7582 = vpack.c.b16 %v7571, %v7570
      %v7583 = vpack.c.b16 %v7573, %v7572
      %v7584 = vpack.c.b16 %v7575, %v7574
      %v7585 = vpack.c.b16 %v7577, %v7576
      %7594 = vmatprep.subr.bf16.mxu0 0
      %7595 = vmatpush1.bf16.msra.mxu0 %v7578
      %7596 = vmatprep.subr.bf16.mxu0 0
      %7597 = vmatpush1.bf16.msra.mxu0 %v7579
      %7598 = vmatprep.subr.bf16.mxu0 0
      %7599 = vmatpush1.bf16.msra.mxu0 %v7580
      %7600 = vmatprep.subr.bf16.mxu0 0
      %7601 = vmatpush1.bf16.msra.mxu0 %v7581
      %7602 = vmatprep.subr.bf16.mxu0 0
      %7603 = vmatpush1.bf16.msra.mxu0 %v7582
      %7604 = vmatprep.subr.bf16.mxu0 0
      %7605 = vmatpush1.bf16.msra.mxu0 %v7583
      %7606 = vmatprep.subr.bf16.mxu0 0
      %7607 = vmatpush1.bf16.msra.mxu0 %v7584
      %7608 = vmatprep.subr.bf16.mxu0 0
      %7609 = vmatpush1.bf16.msra.mxu0 %v7585
      %7610 = vmatprep.subr.bf16.mxu0 0
      %7611 = vmatpush1.bf16.msra.mxu0 0
      %7612 = vmatprep.subr.bf16.mxu0 0
      %7613 = vmatpush1.bf16.msra.mxu0 0
      %7614 = vmatprep.subr.bf16.mxu0 0
      %7615 = vmatpush1.bf16.msra.mxu0 0
      %7616 = vmatprep.subr.bf16.mxu0 0
      %7617 = vmatpush1.bf16.msra.mxu0 0
      %7618 = vmatprep.subr.bf16.mxu0 0
      %7619 = vmatpush1.bf16.msra.mxu0 0
      %7620 = vmatprep.subr.bf16.mxu0 0
      %7621 = vmatpush1.bf16.msra.mxu0 0
      %7622 = vmatprep.subr.bf16.mxu0 0
      %7623 = vmatpush1.bf16.msra.mxu0 0
      %7624 = vmatprep.subr.bf16.mxu0 0
      %7625 = vmatpush1.bf16.msra.mxu0 0
      %7626 = vmatprep.mubr.bf16.mxu0 0
      %7627 = vmatmul.mubr.bf16.gmra.mrb[0].mxu0 %v7544
      %v7628 = vpop.f32.mrb[0].mxu0
      %v7629 = vadd.f32 0.0, %v7628
      %v7630 = vpop.f32.mrb[0].mxu0
      %v7631 = vpop.f32.mrb[0].mxu0
      %v7632 = vpop.f32.mrb[0].mxu0
      %7633 = vdwg.mxu0
      %v7634 = vadd.f32 %v7629, 0.0
      %v7635 = vld [vmem:[%s361] sm:$0xf]
      %v7636 = vld [vmem:[%s361 + $0x4] sm:$0xf]
      %v7637 = vld [vmem:[%s361 + $0x8] sm:$0xf]
      %v7638 = vld [vmem:[%s361 + $0xc] sm:$0xf]
      %v7639 = vld [vmem:[%s361 + $0x10] sm:$0xf]
      %v7640 = vld [vmem:[%s361 + $0x14] sm:$0xf]
      %v7641 = vld [vmem:[%s361 + $0x18] sm:$0xf]
      %v7642 = vld [vmem:[%s361 + $0x1c] sm:$0xf]
      %v7643 = vld [vmem:[%s361 + $0x20] sm:$0xf]
      %v7644 = vld [vmem:[%s361 + $0x24] sm:$0xf]
      %v7645 = vld [vmem:[%s361 + $0x28] sm:$0xf]
      %v7646 = vld [vmem:[%s361 + $0x2c] sm:$0xf]
      %v7647 = vld [vmem:[%s361 + $0x30] sm:$0xf]
      %v7648 = vld [vmem:[%s361 + $0x34] sm:$0xf]
      %v7649 = vld [vmem:[%s361 + $0x38] sm:$0xf]
      %v7650 = vld [vmem:[%s361 + $0x3c] sm:$0xf]
      %v7653 = vunpack.c.l.b16 %v7522
      %v7654 = vunpack.c.l.b16 %v7523
      %v7655 = vpack.c.b16 %v7654, %v7653
      %v7673 = vunpack.c.l.b16 %v7635
      %v7674 = vunpack.c.l.b16 %v7636
      %v7675 = vunpack.c.l.b16 %v7637
      %v7676 = vunpack.c.l.b16 %v7638
      %v7677 = vunpack.c.l.b16 %v7639
      %v7678 = vunpack.c.l.b16 %v7640
      %v7679 = vunpack.c.l.b16 %v7641
      %v7680 = vunpack.c.l.b16 %v7642
      %v7681 = vunpack.c.l.b16 %v7643
      %v7682 = vunpack.c.l.b16 %v7644
      %v7683 = vunpack.c.l.b16 %v7645
      %v7684 = vunpack.c.l.b16 %v7646
      %v7685 = vunpack.c.l.b16 %v7647
      %v7686 = vunpack.c.l.b16 %v7648
      %v7687 = vunpack.c.l.b16 %v7649
      %v7688 = vunpack.c.l.b16 %v7650
      %v7689 = vpack.c.b16 %v7674, %v7673
      %v7690 = vpack.c.b16 %v7676, %v7675
      %v7691 = vpack.c.b16 %v7678, %v7677
      %v7692 = vpack.c.b16 %v7680, %v7679
      %v7693 = vpack.c.b16 %v7682, %v7681
      %v7694 = vpack.c.b16 %v7684, %v7683
      %v7695 = vpack.c.b16 %v7686, %v7685
      %v7696 = vpack.c.b16 %v7688, %v7687
      %7705 = vmatprep.subr.bf16.mxu0 0
      %7706 = vmatpush1.bf16.msra.mxu0 %v7689
      %7707 = vmatprep.subr.bf16.mxu0 0
      %7708 = vmatpush1.bf16.msra.mxu0 %v7690
      %7709 = vmatprep.subr.bf16.mxu0 0
      %7710 = vmatpush1.bf16.msra.mxu0 %v7691
      %7711 = vmatprep.subr.bf16.mxu0 0
      %7712 = vmatpush1.bf16.msra.mxu0 %v7692
      %7713 = vmatprep.subr.bf16.mxu0 0
      %7714 = vmatpush1.bf16.msra.mxu0 %v7693
      %7715 = vmatprep.subr.bf16.mxu0 0
      %7716 = vmatpush1.bf16.msra.mxu0 %v7694
      %7717 = vmatprep.subr.bf16.mxu0 0
      %7718 = vmatpush1.bf16.msra.mxu0 %v7695
      %7719 = vmatprep.subr.bf16.mxu0 0
      %7720 = vmatpush1.bf16.msra.mxu0 %v7696
      %7721 = vmatprep.subr.bf16.mxu0 0
      %7722 = vmatpush1.bf16.msra.mxu0 0
      %7723 = vmatprep.subr.bf16.mxu0 0
      %7724 = vmatpush1.bf16.msra.mxu0 0
      %7725 = vmatprep.subr.bf16.mxu0 0
      %7726 = vmatpush1.bf16.msra.mxu0 0
      %7727 = vmatprep.subr.bf16.mxu0 0
      %7728 = vmatpush1.bf16.msra.mxu0 0
      %7729 = vmatprep.subr.bf16.mxu0 0
      %7730 = vmatpush1.bf16.msra.mxu0 0
      %7731 = vmatprep.subr.bf16.mxu0 0
      %7732 = vmatpush1.bf16.msra.mxu0 0
      %7733 = vmatprep.subr.bf16.mxu0 0
      %7734 = vmatpush1.bf16.msra.mxu0 0
      %7735 = vmatprep.subr.bf16.mxu0 0
      %7736 = vmatpush1.bf16.msra.mxu0 0
      %7737 = vmatprep.mubr.bf16.mxu0 0
      %7738 = vmatmul.mubr.bf16.gmra.mrb[0].mxu0 %v7655
      %v7739 = vpop.f32.mrb[0].mxu0
      %v7740 = vadd.f32 0.0, %v7739
      %v7741 = vpop.f32.mrb[0].mxu0
      %v7742 = vpop.f32.mrb[0].mxu0
      %v7743 = vpop.f32.mrb[0].mxu0
      %7744 = vdwg.mxu0
      %v7745 = vadd.f32 %v7634, %v7740
      %v7746 = vld [vmem:[%s473] sm:$0xf]
      %v7747 = vld [vmem:[%s473 + $0x4] sm:$0xf]
      %v7748 = vld [vmem:[%s473 + $0x8] sm:$0xf]
      %v7749 = vld [vmem:[%s473 + $0xc] sm:$0xf]
      %v7750 = vld [vmem:[%s473 + $0x10] sm:$0xf]
      %v7751 = vld [vmem:[%s473 + $0x14] sm:$0xf]
      %v7752 = vld [vmem:[%s473 + $0x18] sm:$0xf]
      %v7753 = vld [vmem:[%s473 + $0x1c] sm:$0xf]
      %v7754 = vld [vmem:[%s473 + $0x20] sm:$0xf]
      %v7755 = vld [vmem:[%s473 + $0x24] sm:$0xf]
      %v7756 = vld [vmem:[%s473 + $0x28] sm:$0xf]
      %v7757 = vld [vmem:[%s473 + $0x2c] sm:$0xf]
      %v7758 = vld [vmem:[%s473 + $0x30] sm:$0xf]
      %v7759 = vld [vmem:[%s473 + $0x34] sm:$0xf]
      %v7760 = vld [vmem:[%s473 + $0x38] sm:$0xf]
      %v7761 = vld [vmem:[%s473 + $0x3c] sm:$0xf]
      %v7778 = vunpack.c.l.b16 %v7746
      %v7779 = vunpack.c.l.b16 %v7747
      %v7780 = vunpack.c.l.b16 %v7748
      %v7781 = vunpack.c.l.b16 %v7749
      %v7782 = vunpack.c.l.b16 %v7750
      %v7783 = vunpack.c.l.b16 %v7751
      %v7784 = vunpack.c.l.b16 %v7752
      %v7785 = vunpack.c.l.b16 %v7753
      %v7786 = vunpack.c.l.b16 %v7754
      %v7787 = vunpack.c.l.b16 %v7755
      %v7788 = vunpack.c.l.b16 %v7756
      %v7789 = vunpack.c.l.b16 %v7757
      %v7790 = vunpack.c.l.b16 %v7758
      %v7791 = vunpack.c.l.b16 %v7759
      %v7792 = vunpack.c.l.b16 %v7760
      %v7793 = vunpack.c.l.b16 %v7761
      %v7794 = vpack.c.b16 %v7779, %v7778
      %v7795 = vpack.c.b16 %v7781, %v7780
      %v7796 = vpack.c.b16 %v7783, %v7782
      %v7797 = vpack.c.b16 %v7785, %v7784
      %v7798 = vpack.c.b16 %v7787, %v7786
      %v7799 = vpack.c.b16 %v7789, %v7788
      %v7800 = vpack.c.b16 %v7791, %v7790
      %v7801 = vpack.c.b16 %v7793, %v7792
      %7810 = vmatprep.subr.bf16.mxu0 0
      %7811 = vmatpush1.bf16.msra.mxu0 %v7794
      %7812 = vmatprep.subr.bf16.mxu0 0
      %7813 = vmatpush1.bf16.msra.mxu0 %v7795
      %7814 = vmatprep.subr.bf16.mxu0 0
      %7815 = vmatpush1.bf16.msra.mxu0 %v7796
      %7816 = vmatprep.subr.bf16.mxu0 0
      %7817 = vmatpush1.bf16.msra.mxu0 %v7797
      %7818 = vmatprep.subr.bf16.mxu0 0
      %7819 = vmatpush1.bf16.msra.mxu0 %v7798
      %7820 = vmatprep.subr.bf16.mxu0 0
      %7821 = vmatpush1.bf16.msra.mxu0 %v7799
      %7822 = vmatprep.subr.bf16.mxu0 0
      %7823 = vmatpush1.bf16.msra.mxu0 %v7800
      %7824 = vmatprep.subr.bf16.mxu0 0
      %7825 = vmatpush1.bf16.msra.mxu0 %v7801
      %7826 = vmatprep.subr.bf16.mxu0 0
      %7827 = vmatpush1.bf16.msra.mxu0 0
      %7828 = vmatprep.subr.bf16.mxu0 0
      %7829 = vmatpush1.bf16.msra.mxu0 0
      %7830 = vmatprep.subr.bf16.mxu0 0
      %7831 = vmatpush1.bf16.msra.mxu0 0
      %7832 = vmatprep.subr.bf16.mxu0 0
      %7833 = vmatpush1.bf16.msra.mxu0 0
      %7834 = vmatprep.subr.bf16.mxu0 0
      %7835 = vmatpush1.bf16.msra.mxu0 0
      %7836 = vmatprep.subr.bf16.mxu0 0
      %7837 = vmatpush1.bf16.msra.mxu0 0
      %7838 = vmatprep.subr.bf16.mxu0 0
      %7839 = vmatpush1.bf16.msra.mxu0 0
      %7840 = vmatprep.subr.bf16.mxu0 0
      %7841 = vmatpush1.bf16.msra.mxu0 0
      %7842 = vmatprep.mubr.bf16.mxu0 0
      %7843 = vmatmul.mubr.bf16.gmra.mrb[0].mxu0 %v7544
      %v7844 = vpop.f32.mrb[0].mxu0
      %v7845 = vadd.f32 0.0, %v7844
      %v7846 = vpop.f32.mrb[0].mxu0
      %v7847 = vpop.f32.mrb[0].mxu0
      %v7848 = vadd.f32 0.0, %v7847
      %v7849 = vpop.f32.mrb[0].mxu0
      %7850 = vdwg.mxu0
      %v7853 = vrot.slane %v7845, 1
      %v7854 = vrot.slane %v7848, 1
      %v7855 = vsel %vm581, %v7853, %v7854
      %v7857 = vadd.f32 %v7745, %v7855
      %s7858 = scalar_lea.vmem %s234, 120
      %v7859 = vld [vmem:[%s7858] sm:$0xf]
      %v7860 = vld [vmem:[%s7858 + $0x4] sm:$0x1]
      %s7861 = scalar_lea.vmem %s239, 120
      %v7862 = vld [vmem:[%s7861] sm:$0xf]
      %v7863 = vld [vmem:[%s7861 + $0x4] sm:$0x1]
      %v7864 = vld [vmem:[%s593] sm:$0xf]
      %v7865 = vld [vmem:[%s593 + $0x4] sm:$0xf]
      %v7866 = vld [vmem:[%s593 + $0x8] sm:$0xf]
      %v7867 = vld [vmem:[%s593 + $0xc] sm:$0xf]
      %v7868 = vld [vmem:[%s593 + $0x10] sm:$0xf]
      %v7869 = vld [vmem:[%s593 + $0x14] sm:$0xf]
      %v7870 = vld [vmem:[%s593 + $0x18] sm:$0xf]
      %v7871 = vld [vmem:[%s593 + $0x1c] sm:$0xf]
      %v7872 = vld [vmem:[%s593 + $0x20] sm:$0xf]
      %v7873 = vld [vmem:[%s593 + $0x24] sm:$0xf]
      %v7874 = vld [vmem:[%s593 + $0x28] sm:$0xf]
      %v7875 = vld [vmem:[%s593 + $0x2c] sm:$0xf]
      %v7876 = vld [vmem:[%s593 + $0x30] sm:$0xf]
      %v7877 = vld [vmem:[%s593 + $0x34] sm:$0xf]
      %v7878 = vld [vmem:[%s593 + $0x38] sm:$0xf]
      %v7879 = vld [vmem:[%s593 + $0x3c] sm:$0xf]
      %v7882 = vunpack.c.l.b16 %v7859
      %v7883 = vunpack.c.l.b16 %v7860
      %v7884 = vpack.c.b16 %v7883, %v7882
      %v7902 = vunpack.c.l.b16 %v7864
      %v7903 = vunpack.c.l.b16 %v7865
      %v7904 = vunpack.c.l.b16 %v7866
      %v7905 = vunpack.c.l.b16 %v7867
      %v7906 = vunpack.c.l.b16 %v7868
      %v7907 = vunpack.c.l.b16 %v7869
      %v7908 = vunpack.c.l.b16 %v7870
      %v7909 = vunpack.c.l.b16 %v7871
      %v7910 = vunpack.c.l.b16 %v7872
      %v7911 = vunpack.c.l.b16 %v7873
      %v7912 = vunpack.c.l.b16 %v7874
      %v7913 = vunpack.c.l.b16 %v7875
      %v7914 = vunpack.c.l.b16 %v7876
      %v7915 = vunpack.c.l.b16 %v7877
      %v7916 = vunpack.c.l.b16 %v7878
      %v7917 = vunpack.c.l.b16 %v7879
      %v7918 = vpack.c.b16 %v7903, %v7902
      %v7919 = vpack.c.b16 %v7905, %v7904
      %v7920 = vpack.c.b16 %v7907, %v7906
      %v7921 = vpack.c.b16 %v7909, %v7908
      %v7922 = vpack.c.b16 %v7911, %v7910
      %v7923 = vpack.c.b16 %v7913, %v7912
      %v7924 = vpack.c.b16 %v7915, %v7914
      %v7925 = vpack.c.b16 %v7917, %v7916
      %7934 = vmatprep.subr.bf16.mxu0 0
      %7935 = vmatpush1.bf16.msra.mxu0 %v7918
      %7936 = vmatprep.subr.bf16.mxu0 0
      %7937 = vmatpush1.bf16.msra.mxu0 %v7919
      %7938 = vmatprep.subr.bf16.mxu0 0
      %7939 = vmatpush1.bf16.msra.mxu0 %v7920
      %7940 = vmatprep.subr.bf16.mxu0 0
      %7941 = vmatpush1.bf16.msra.mxu0 %v7921
      %7942 = vmatprep.subr.bf16.mxu0 0
      %7943 = vmatpush1.bf16.msra.mxu0 %v7922
      %7944 = vmatprep.subr.bf16.mxu0 0
      %7945 = vmatpush1.bf16.msra.mxu0 %v7923
      %7946 = vmatprep.subr.bf16.mxu0 0
      %7947 = vmatpush1.bf16.msra.mxu0 %v7924
      %7948 = vmatprep.subr.bf16.mxu0 0
      %7949 = vmatpush1.bf16.msra.mxu0 %v7925
      %7950 = vmatprep.subr.bf16.mxu0 0
      %7951 = vmatpush1.bf16.msra.mxu0 0
      %7952 = vmatprep.subr.bf16.mxu0 0
      %7953 = vmatpush1.bf16.msra.mxu0 0
      %7954 = vmatprep.subr.bf16.mxu0 0
      %7955 = vmatpush1.bf16.msra.mxu0 0
      %7956 = vmatprep.subr.bf16.mxu0 0
      %7957 = vmatpush1.bf16.msra.mxu0 0
      %7958 = vmatprep.subr.bf16.mxu0 0
      %7959 = vmatpush1.bf16.msra.mxu0 0
      %7960 = vmatprep.subr.bf16.mxu0 0
      %7961 = vmatpush1.bf16.msra.mxu0 0
      %7962 = vmatprep.subr.bf16.mxu0 0
      %7963 = vmatpush1.bf16.msra.mxu0 0
      %7964 = vmatprep.subr.bf16.mxu0 0
      %7965 = vmatpush1.bf16.msra.mxu0 0
      %7966 = vmatprep.mubr.bf16.mxu0 0
      %7967 = vmatmul.mubr.bf16.gmra.mrb[0].mxu0 %v7884
      %v7968 = vpop.f32.mrb[0].mxu0
      %v7969 = vadd.f32 0.0, %v7968
      %v7970 = vpop.f32.mrb[0].mxu0
      %v7971 = vpop.f32.mrb[0].mxu0
      %v7972 = vpop.f32.mrb[0].mxu0
      %7973 = vdwg.mxu0
      %v7974 = vadd.f32 %v7857, %v7969
      %v7975 = vld [vmem:[%s705] sm:$0xf]
      %v7976 = vld [vmem:[%s705 + $0x4] sm:$0xf]
      %v7977 = vld [vmem:[%s705 + $0x8] sm:$0xf]
      %v7978 = vld [vmem:[%s705 + $0xc] sm:$0xf]
      %v7979 = vld [vmem:[%s705 + $0x10] sm:$0xf]
      %v7980 = vld [vmem:[%s705 + $0x14] sm:$0xf]
      %v7981 = vld [vmem:[%s705 + $0x18] sm:$0xf]
      %v7982 = vld [vmem:[%s705 + $0x1c] sm:$0xf]
      %v7983 = vld [vmem:[%s705 + $0x20] sm:$0xf]
      %v7984 = vld [vmem:[%s705 + $0x24] sm:$0xf]
      %v7985 = vld [vmem:[%s705 + $0x28] sm:$0xf]
      %v7986 = vld [vmem:[%s705 + $0x2c] sm:$0xf]
      %v7987 = vld [vmem:[%s705 + $0x30] sm:$0xf]
      %v7988 = vld [vmem:[%s705 + $0x34] sm:$0xf]
      %v7989 = vld [vmem:[%s705 + $0x38] sm:$0xf]
      %v7990 = vld [vmem:[%s705 + $0x3c] sm:$0xf]
      %v7993 = vunpack.c.l.b16 %v7862
      %v7994 = vunpack.c.l.b16 %v7863
      %v7995 = vpack.c.b16 %v7994, %v7993
      %v8013 = vunpack.c.l.b16 %v7975
      %v8014 = vunpack.c.l.b16 %v7976
      %v8015 = vunpack.c.l.b16 %v7977
      %v8016 = vunpack.c.l.b16 %v7978
      %v8017 = vunpack.c.l.b16 %v7979
      %v8018 = vunpack.c.l.b16 %v7980
      %v8019 = vunpack.c.l.b16 %v7981
      %v8020 = vunpack.c.l.b16 %v7982
      %v8021 = vunpack.c.l.b16 %v7983
      %v8022 = vunpack.c.l.b16 %v7984
      %v8023 = vunpack.c.l.b16 %v7985
      %v8024 = vunpack.c.l.b16 %v7986
      %v8025 = vunpack.c.l.b16 %v7987
      %v8026 = vunpack.c.l.b16 %v7988
      %v8027 = vunpack.c.l.b16 %v7989
      %v8028 = vunpack.c.l.b16 %v7990
      %v8029 = vpack.c.b16 %v8014, %v8013
      %v8030 = vpack.c.b16 %v8016, %v8015
      %v8031 = vpack.c.b16 %v8018, %v8017
      %v8032 = vpack.c.b16 %v8020, %v8019
      %v8033 = vpack.c.b16 %v8022, %v8021
      %v8034 = vpack.c.b16 %v8024, %v8023
      %v8035 = vpack.c.b16 %v8026, %v8025
      %v8036 = vpack.c.b16 %v8028, %v8027
      %8045 = vmatprep.subr.bf16.mxu0 0
      %8046 = vmatpush1.bf16.msra.mxu0 %v8029
      %8047 = vmatprep.subr.bf16.mxu0 0
      %8048 = vmatpush1.bf16.msra.mxu0 %v8030
      %8049 = vmatprep.subr.bf16.mxu0 0
      %8050 = vmatpush1.bf16.msra.mxu0 %v8031
      %8051 = vmatprep.subr.bf16.mxu0 0
      %8052 = vmatpush1.bf16.msra.mxu0 %v8032
      %8053 = vmatprep.subr.bf16.mxu0 0
      %8054 = vmatpush1.bf16.msra.mxu0 %v8033
      %8055 = vmatprep.subr.bf16.mxu0 0
      %8056 = vmatpush1.bf16.msra.mxu0 %v8034
      %8057 = vmatprep.subr.bf16.mxu0 0
      %8058 = vmatpush1.bf16.msra.mxu0 %v8035
      %8059 = vmatprep.subr.bf16.mxu0 0
      %8060 = vmatpush1.bf16.msra.mxu0 %v8036
      %8061 = vmatprep.subr.bf16.mxu0 0
      %8062 = vmatpush1.bf16.msra.mxu0 0
      %8063 = vmatprep.subr.bf16.mxu0 0
      %8064 = vmatpush1.bf16.msra.mxu0 0
      %8065 = vmatprep.subr.bf16.mxu0 0
      %8066 = vmatpush1.bf16.msra.mxu0 0
      %8067 = vmatprep.subr.bf16.mxu0 0
      %8068 = vmatpush1.bf16.msra.mxu0 0
      %8069 = vmatprep.subr.bf16.mxu0 0
      %8070 = vmatpush1.bf16.msra.mxu0 0
      %8071 = vmatprep.subr.bf16.mxu0 0
      %8072 = vmatpush1.bf16.msra.mxu0 0
      %8073 = vmatprep.subr.bf16.mxu0 0
      %8074 = vmatpush1.bf16.msra.mxu0 0
      %8075 = vmatprep.subr.bf16.mxu0 0
      %8076 = vmatpush1.bf16.msra.mxu0 0
      %8077 = vmatprep.mubr.bf16.mxu0 0
      %8078 = vmatmul.mubr.bf16.gmra.mrb[0].mxu0 %v7995
      %v8079 = vpop.f32.mrb[0].mxu0
      %v8080 = vadd.f32 0.0, %v8079
      %v8081 = vpop.f32.mrb[0].mxu0
      %v8082 = vpop.f32.mrb[0].mxu0
      %v8083 = vpop.f32.mrb[0].mxu0
      %8084 = vdwg.mxu0
      %v8085 = vadd.f32 %v7974, %v8080
      %v8086 = vld [vmem:[%s817] sm:$0xf]
      %v8087 = vld [vmem:[%s817 + $0x4] sm:$0xf]
      %v8088 = vld [vmem:[%s817 + $0x8] sm:$0xf]
      %v8089 = vld [vmem:[%s817 + $0xc] sm:$0xf]
      %v8090 = vld [vmem:[%s817 + $0x10] sm:$0xf]
      %v8091 = vld [vmem:[%s817 + $0x14] sm:$0xf]
      %v8092 = vld [vmem:[%s817 + $0x18] sm:$0xf]
      %v8093 = vld [vmem:[%s817 + $0x1c] sm:$0xf]
      %v8094 = vld [vmem:[%s817 + $0x20] sm:$0xf]
      %v8095 = vld [vmem:[%s817 + $0x24] sm:$0xf]
      %v8096 = vld [vmem:[%s817 + $0x28] sm:$0xf]
      %v8097 = vld [vmem:[%s817 + $0x2c] sm:$0xf]
      %v8098 = vld [vmem:[%s817 + $0x30] sm:$0xf]
      %v8099 = vld [vmem:[%s817 + $0x34] sm:$0xf]
      %v8100 = vld [vmem:[%s817 + $0x38] sm:$0xf]
      %v8101 = vld [vmem:[%s817 + $0x3c] sm:$0xf]
      %v8118 = vunpack.c.l.b16 %v8086
      %v8119 = vunpack.c.l.b16 %v8087
      %v8120 = vunpack.c.l.b16 %v8088
      %v8121 = vunpack.c.l.b16 %v8089
      %v8122 = vunpack.c.l.b16 %v8090
      %v8123 = vunpack.c.l.b16 %v8091
      %v8124 = vunpack.c.l.b16 %v8092
      %v8125 = vunpack.c.l.b16 %v8093
      %v8126 = vunpack.c.l.b16 %v8094
      %v8127 = vunpack.c.l.b16 %v8095
      %v8128 = vunpack.c.l.b16 %v8096
      %v8129 = vunpack.c.l.b16 %v8097
      %v8130 = vunpack.c.l.b16 %v8098
      %v8131 = vunpack.c.l.b16 %v8099
      %v8132 = vunpack.c.l.b16 %v8100
      %v8133 = vunpack.c.l.b16 %v8101
      %v8134 = vpack.c.b16 %v8119, %v8118
      %v8135 = vpack.c.b16 %v8121, %v8120
      %v8136 = vpack.c.b16 %v8123, %v8122
      %v8137 = vpack.c.b16 %v8125, %v8124
      %v8138 = vpack.c.b16 %v8127, %v8126
      %v8139 = vpack.c.b16 %v8129, %v8128
      %v8140 = vpack.c.b16 %v8131, %v8130
      %v8141 = vpack.c.b16 %v8133, %v8132
      %8150 = vmatprep.subr.bf16.mxu0 0
      %8151 = vmatpush1.bf16.msra.mxu0 %v8134
      %8152 = vmatprep.subr.bf16.mxu0 0
      %8153 = vmatpush1.bf16.msra.mxu0 %v8135
      %8154 = vmatprep.subr.bf16.mxu0 0
      %8155 = vmatpush1.bf16.msra.mxu0 %v8136
      %8156 = vmatprep.subr.bf16.mxu0 0
      %8157 = vmatpush1.bf16.msra.mxu0 %v8137
      %8158 = vmatprep.subr.bf16.mxu0 0
      %8159 = vmatpush1.bf16.msra.mxu0 %v8138
      %8160 = vmatprep.subr.bf16.mxu0 0
      %8161 = vmatpush1.bf16.msra.mxu0 %v8139
      %8162 = vmatprep.subr.bf16.mxu0 0
      %8163 = vmatpush1.bf16.msra.mxu0 %v8140
      %8164 = vmatprep.subr.bf16.mxu0 0
      %8165 = vmatpush1.bf16.msra.mxu0 %v8141
      %8166 = vmatprep.subr.bf16.mxu0 0
      %8167 = vmatpush1.bf16.msra.mxu0 0
      %8168 = vmatprep.subr.bf16.mxu0 0
      %8169 = vmatpush1.bf16.msra.mxu0 0
      %8170 = vmatprep.subr.bf16.mxu0 0
      %8171 = vmatpush1.bf16.msra.mxu0 0
      %8172 = vmatprep.subr.bf16.mxu0 0
      %8173 = vmatpush1.bf16.msra.mxu0 0
      %8174 = vmatprep.subr.bf16.mxu0 0
      %8175 = vmatpush1.bf16.msra.mxu0 0
      %8176 = vmatprep.subr.bf16.mxu0 0
      %8177 = vmatpush1.bf16.msra.mxu0 0
      %8178 = vmatprep.subr.bf16.mxu0 0
      %8179 = vmatpush1.bf16.msra.mxu0 0
      %8180 = vmatprep.subr.bf16.mxu0 0
      %8181 = vmatpush1.bf16.msra.mxu0 0
      %8182 = vmatprep.mubr.bf16.mxu0 0
      %8183 = vmatmul.mubr.bf16.gmra.mrb[0].mxu0 %v7884
      %v8184 = vpop.f32.mrb[0].mxu0
      %v8185 = vadd.f32 0.0, %v8184
      %v8186 = vpop.f32.mrb[0].mxu0
      %v8187 = vpop.f32.mrb[0].mxu0
      %v8188 = vadd.f32 0.0, %v8187
      %v8189 = vpop.f32.mrb[0].mxu0
      %8190 = vdwg.mxu0
      %v8193 = vrot.slane %v8185, 1
      %v8194 = vrot.slane %v8188, 1
      %v8195 = vsel %vm581, %v8193, %v8194
      %v8197 = vadd.f32 %v8085, %v8195
      %s8198 = scalar_lea.vmem %s234, 128
      %v8199 = vld [vmem:[%s8198] sm:$0xf]
      %v8200 = vld [vmem:[%s8198 + $0x4] sm:$0x1]
      %s8201 = scalar_lea.vmem %s239, 128
      %v8202 = vld [vmem:[%s8201] sm:$0xf]
      %v8203 = vld [vmem:[%s8201 + $0x4] sm:$0x1]
      %v8204 = vld [vmem:[%s936] sm:$0xf]
      %v8205 = vld [vmem:[%s936 + $0x4] sm:$0xf]
      %v8206 = vld [vmem:[%s936 + $0x8] sm:$0xf]
      %v8207 = vld [vmem:[%s936 + $0xc] sm:$0xf]
      %v8208 = vld [vmem:[%s936 + $0x10] sm:$0xf]
      %v8209 = vld [vmem:[%s936 + $0x14] sm:$0xf]
      %v8210 = vld [vmem:[%s936 + $0x18] sm:$0xf]
      %v8211 = vld [vmem:[%s936 + $0x1c] sm:$0xf]
      %v8212 = vld [vmem:[%s936 + $0x20] sm:$0xf]
      %v8213 = vld [vmem:[%s936 + $0x24] sm:$0xf]
      %v8214 = vld [vmem:[%s936 + $0x28] sm:$0xf]
      %v8215 = vld [vmem:[%s936 + $0x2c] sm:$0xf]
      %v8216 = vld [vmem:[%s936 + $0x30] sm:$0xf]
      %v8217 = vld [vmem:[%s936 + $0x34] sm:$0xf]
      %v8218 = vld [vmem:[%s936 + $0x38] sm:$0xf]
      %v8219 = vld [vmem:[%s936 + $0x3c] sm:$0xf]
      %v8222 = vunpack.c.l.b16 %v8199
      %v8223 = vunpack.c.l.b16 %v8200
      %v8224 = vpack.c.b16 %v8223, %v8222
      %v8242 = vunpack.c.l.b16 %v8204
      %v8243 = vunpack.c.l.b16 %v8205
      %v8244 = vunpack.c.l.b16 %v8206
      %v8245 = vunpack.c.l.b16 %v8207
      %v8246 = vunpack.c.l.b16 %v8208
      %v8247 = vunpack.c.l.b16 %v8209
      %v8248 = vunpack.c.l.b16 %v8210
      %v8249 = vunpack.c.l.b16 %v8211
      %v8250 = vunpack.c.l.b16 %v8212
      %v8251 = vunpack.c.l.b16 %v8213
      %v8252 = vunpack.c.l.b16 %v8214
      %v8253 = vunpack.c.l.b16 %v8215
      %v8254 = vunpack.c.l.b16 %v8216
      %v8255 = vunpack.c.l.b16 %v8217
      %v8256 = vunpack.c.l.b16 %v8218
      %v8257 = vunpack.c.l.b16 %v8219
      %v8258 = vpack.c.b16 %v8243, %v8242
      %v8259 = vpack.c.b16 %v8245, %v8244
      %v8260 = vpack.c.b16 %v8247, %v8246
      %v8261 = vpack.c.b16 %v8249, %v8248
      %v8262 = vpack.c.b16 %v8251, %v8250
      %v8263 = vpack.c.b16 %v8253, %v8252
      %v8264 = vpack.c.b16 %v8255, %v8254
      %v8265 = vpack.c.b16 %v8257, %v8256
      %8274 = vmatprep.subr.bf16.mxu0 0
      %8275 = vmatpush1.bf16.msra.mxu0 %v8258
      %8276 = vmatprep.subr.bf16.mxu0 0
      %8277 = vmatpush1.bf16.msra.mxu0 %v8259
      %8278 = vmatprep.subr.bf16.mxu0 0
      %8279 = vmatpush1.bf16.msra.mxu0 %v8260
      %8280 = vmatprep.subr.bf16.mxu0 0
      %8281 = vmatpush1.bf16.msra.mxu0 %v8261
      %8282 = vmatprep.subr.bf16.mxu0 0
      %8283 = vmatpush1.bf16.msra.mxu0 %v8262
      %8284 = vmatprep.subr.bf16.mxu0 0
      %8285 = vmatpush1.bf16.msra.mxu0 %v8263
      %8286 = vmatprep.subr.bf16.mxu0 0
      %8287 = vmatpush1.bf16.msra.mxu0 %v8264
      %8288 = vmatprep.subr.bf16.mxu0 0
      %8289 = vmatpush1.bf16.msra.mxu0 %v8265
      %8290 = vmatprep.subr.bf16.mxu0 0
      %8291 = vmatpush1.bf16.msra.mxu0 0
      %8292 = vmatprep.subr.bf16.mxu0 0
      %8293 = vmatpush1.bf16.msra.mxu0 0
      %8294 = vmatprep.subr.bf16.mxu0 0
      %8295 = vmatpush1.bf16.msra.mxu0 0
      %8296 = vmatprep.subr.bf16.mxu0 0
      %8297 = vmatpush1.bf16.msra.mxu0 0
      %8298 = vmatprep.subr.bf16.mxu0 0
      %8299 = vmatpush1.bf16.msra.mxu0 0
      %8300 = vmatprep.subr.bf16.mxu0 0
      %8301 = vmatpush1.bf16.msra.mxu0 0
      %8302 = vmatprep.subr.bf16.mxu0 0
      %8303 = vmatpush1.bf16.msra.mxu0 0
      %8304 = vmatprep.subr.bf16.mxu0 0
      %8305 = vmatpush1.bf16.msra.mxu0 0
      %8306 = vmatprep.mubr.bf16.mxu0 0
      %8307 = vmatmul.mubr.bf16.gmra.mrb[0].mxu0 %v8224
      %v8308 = vpop.f32.mrb[0].mxu0
      %v8309 = vadd.f32 0.0, %v8308
      %v8310 = vpop.f32.mrb[0].mxu0
      %v8311 = vpop.f32.mrb[0].mxu0
      %v8312 = vpop.f32.mrb[0].mxu0
      %8313 = vdwg.mxu0
      %v8314 = vadd.f32 %v8197, %v8309
      %v8315 = vld [vmem:[%s1048] sm:$0xf]
      %v8316 = vld [vmem:[%s1048 + $0x4] sm:$0xf]
      %v8317 = vld [vmem:[%s1048 + $0x8] sm:$0xf]
      %v8318 = vld [vmem:[%s1048 + $0xc] sm:$0xf]
      %v8319 = vld [vmem:[%s1048 + $0x10] sm:$0xf]
      %v8320 = vld [vmem:[%s1048 + $0x14] sm:$0xf]
      %v8321 = vld [vmem:[%s1048 + $0x18] sm:$0xf]
      %v8322 = vld [vmem:[%s1048 + $0x1c] sm:$0xf]
      %v8323 = vld [vmem:[%s1048 + $0x20] sm:$0xf]
      %v8324 = vld [vmem:[%s1048 + $0x24] sm:$0xf]
      %v8325 = vld [vmem:[%s1048 + $0x28] sm:$0xf]
      %v8326 = vld [vmem:[%s1048 + $0x2c] sm:$0xf]
      %v8327 = vld [vmem:[%s1048 + $0x30] sm:$0xf]
      %v8328 = vld [vmem:[%s1048 + $0x34] sm:$0xf]
      %v8329 = vld [vmem:[%s1048 + $0x38] sm:$0xf]
      %v8330 = vld [vmem:[%s1048 + $0x3c] sm:$0xf]
      %v8333 = vunpack.c.l.b16 %v8202
      %v8334 = vunpack.c.l.b16 %v8203
      %v8335 = vpack.c.b16 %v8334, %v8333
      %v8353 = vunpack.c.l.b16 %v8315
      %v8354 = vunpack.c.l.b16 %v8316
      %v8355 = vunpack.c.l.b16 %v8317
      %v8356 = vunpack.c.l.b16 %v8318
      %v8357 = vunpack.c.l.b16 %v8319
      %v8358 = vunpack.c.l.b16 %v8320
      %v8359 = vunpack.c.l.b16 %v8321
      %v8360 = vunpack.c.l.b16 %v8322
      %v8361 = vunpack.c.l.b16 %v8323
      %v8362 = vunpack.c.l.b16 %v8324
      %v8363 = vunpack.c.l.b16 %v8325
      %v8364 = vunpack.c.l.b16 %v8326
      %v8365 = vunpack.c.l.b16 %v8327
      %v8366 = vunpack.c.l.b16 %v8328
      %v8367 = vunpack.c.l.b16 %v8329
      %v8368 = vunpack.c.l.b16 %v8330
      %v8369 = vpack.c.b16 %v8354, %v8353
      %v8370 = vpack.c.b16 %v8356, %v8355
      %v8371 = vpack.c.b16 %v8358, %v8357
      %v8372 = vpack.c.b16 %v8360, %v8359
      %v8373 = vpack.c.b16 %v8362, %v8361
      %v8374 = vpack.c.b16 %v8364, %v8363
      %v8375 = vpack.c.b16 %v8366, %v8365
      %v8376 = vpack.c.b16 %v8368, %v8367
      %8385 = vmatprep.subr.bf16.mxu0 0
      %8386 = vmatpush1.bf16.msra.mxu0 %v8369
      %8387 = vmatprep.subr.bf16.mxu0 0
      %8388 = vmatpush1.bf16.msra.mxu0 %v8370
      %8389 = vmatprep.subr.bf16.mxu0 0
      %8390 = vmatpush1.bf16.msra.mxu0 %v8371
      %8391 = vmatprep.subr.bf16.mxu0 0
      %8392 = vmatpush1.bf16.msra.mxu0 %v8372
      %8393 = vmatprep.subr.bf16.mxu0 0
      %8394 = vmatpush1.bf16.msra.mxu0 %v8373
      %8395 = vmatprep.subr.bf16.mxu0 0
      %8396 = vmatpush1.bf16.msra.mxu0 %v8374
      %8397 = vmatprep.subr.bf16.mxu0 0
      %8398 = vmatpush1.bf16.msra.mxu0 %v8375
      %8399 = vmatprep.subr.bf16.mxu0 0
      %8400 = vmatpush1.bf16.msra.mxu0 %v8376
      %8401 = vmatprep.subr.bf16.mxu0 0
      %8402 = vmatpush1.bf16.msra.mxu0 0
      %8403 = vmatprep.subr.bf16.mxu0 0
      %8404 = vmatpush1.bf16.msra.mxu0 0
      %8405 = vmatprep.subr.bf16.mxu0 0
      %8406 = vmatpush1.bf16.msra.mxu0 0
      %8407 = vmatprep.subr.bf16.mxu0 0
      %8408 = vmatpush1.bf16.msra.mxu0 0
      %8409 = vmatprep.subr.bf16.mxu0 0
      %8410 = vmatpush1.bf16.msra.mxu0 0
      %8411 = vmatprep.subr.bf16.mxu0 0
      %8412 = vmatpush1.bf16.msra.mxu0 0
      %8413 = vmatprep.subr.bf16.mxu0 0
      %8414 = vmatpush1.bf16.msra.mxu0 0
      %8415 = vmatprep.subr.bf16.mxu0 0
      %8416 = vmatpush1.bf16.msra.mxu0 0
      %8417 = vmatprep.mubr.bf16.mxu0 0
      %8418 = vmatmul.mubr.bf16.gmra.mrb[0].mxu0 %v8335
      %v8419 = vpop.f32.mrb[0].mxu0
      %v8420 = vadd.f32 0.0, %v8419
      %v8421 = vpop.f32.mrb[0].mxu0
      %v8422 = vpop.f32.mrb[0].mxu0
      %v8423 = vpop.f32.mrb[0].mxu0
      %8424 = vdwg.mxu0
      %v8425 = vadd.f32 %v8314, %v8420
      %v8426 = vld [vmem:[%s1160] sm:$0xf]
      %v8427 = vld [vmem:[%s1160 + $0x4] sm:$0xf]
      %v8428 = vld [vmem:[%s1160 + $0x8] sm:$0xf]
      %v8429 = vld [vmem:[%s1160 + $0xc] sm:$0xf]
      %v8430 = vld [vmem:[%s1160 + $0x10] sm:$0xf]
      %v8431 = vld [vmem:[%s1160 + $0x14] sm:$0xf]
      %v8432 = vld [vmem:[%s1160 + $0x18] sm:$0xf]
      %v8433 = vld [vmem:[%s1160 + $0x1c] sm:$0xf]
      %v8434 = vld [vmem:[%s1160 + $0x20] sm:$0xf]
      %v8435 = vld [vmem:[%s1160 + $0x24] sm:$0xf]
      %v8436 = vld [vmem:[%s1160 + $0x28] sm:$0xf]
      %v8437 = vld [vmem:[%s1160 + $0x2c] sm:$0xf]
      %v8438 = vld [vmem:[%s1160 + $0x30] sm:$0xf]
      %v8439 = vld [vmem:[%s1160 + $0x34] sm:$0xf]
      %v8440 = vld [vmem:[%s1160 + $0x38] sm:$0xf]
      %v8441 = vld [vmem:[%s1160 + $0x3c] sm:$0xf]
      %v8458 = vunpack.c.l.b16 %v8426
      %v8459 = vunpack.c.l.b16 %v8427
      %v8460 = vunpack.c.l.b16 %v8428
      %v8461 = vunpack.c.l.b16 %v8429
      %v8462 = vunpack.c.l.b16 %v8430
      %v8463 = vunpack.c.l.b16 %v8431
      %v8464 = vunpack.c.l.b16 %v8432
      %v8465 = vunpack.c.l.b16 %v8433
      %v8466 = vunpack.c.l.b16 %v8434
      %v8467 = vunpack.c.l.b16 %v8435
      %v8468 = vunpack.c.l.b16 %v8436
      %v8469 = vunpack.c.l.b16 %v8437
      %v8470 = vunpack.c.l.b16 %v8438
      %v8471 = vunpack.c.l.b16 %v8439
      %v8472 = vunpack.c.l.b16 %v8440
      %v8473 = vunpack.c.l.b16 %v8441
      %v8474 = vpack.c.b16 %v8459, %v8458
      %v8475 = vpack.c.b16 %v8461, %v8460
      %v8476 = vpack.c.b16 %v8463, %v8462
      %v8477 = vpack.c.b16 %v8465, %v8464
      %v8478 = vpack.c.b16 %v8467, %v8466
      %v8479 = vpack.c.b16 %v8469, %v8468
      %v8480 = vpack.c.b16 %v8471, %v8470
      %v8481 = vpack.c.b16 %v8473, %v8472
      %8490 = vmatprep.subr.bf16.mxu0 0
      %8491 = vmatpush1.bf16.msra.mxu0 %v8474
      %8492 = vmatprep.subr.bf16.mxu0 0
      %8493 = vmatpush1.bf16.msra.mxu0 %v8475
      %8494 = vmatprep.subr.bf16.mxu0 0
      %8495 = vmatpush1.bf16.msra.mxu0 %v8476
      %8496 = vmatprep.subr.bf16.mxu0 0
      %8497 = vmatpush1.bf16.msra.mxu0 %v8477
      %8498 = vmatprep.subr.bf16.mxu0 0
      %8499 = vmatpush1.bf16.msra.mxu0 %v8478
      %8500 = vmatprep.subr.bf16.mxu0 0
      %8501 = vmatpush1.bf16.msra.mxu0 %v8479
      %8502 = vmatprep.subr.bf16.mxu0 0
      %8503 = vmatpush1.bf16.msra.mxu0 %v8480
      %8504 = vmatprep.subr.bf16.mxu0 0
      %8505 = vmatpush1.bf16.msra.mxu0 %v8481
      %8506 = vmatprep.subr.bf16.mxu0 0
      %8507 = vmatpush1.bf16.msra.mxu0 0
      %8508 = vmatprep.subr.bf16.mxu0 0
      %8509 = vmatpush1.bf16.msra.mxu0 0
      %8510 = vmatprep.subr.bf16.mxu0 0
      %8511 = vmatpush1.bf16.msra.mxu0 0
      %8512 = vmatprep.subr.bf16.mxu0 0
      %8513 = vmatpush1.bf16.msra.mxu0 0
      %8514 = vmatprep.subr.bf16.mxu0 0
      %8515 = vmatpush1.bf16.msra.mxu0 0
      %8516 = vmatprep.subr.bf16.mxu0 0
      %8517 = vmatpush1.bf16.msra.mxu0 0
      %8518 = vmatprep.subr.bf16.mxu0 0
      %8519 = vmatpush1.bf16.msra.mxu0 0
      %8520 = vmatprep.subr.bf16.mxu0 0
      %8521 = vmatpush1.bf16.msra.mxu0 0
      %8522 = vmatprep.mubr.bf16.mxu0 0
      %8523 = vmatmul.mubr.bf16.gmra.mrb[0].mxu0 %v8224
      %v8524 = vpop.f32.mrb[0].mxu0
      %v8525 = vadd.f32 0.0, %v8524
      %v8526 = vpop.f32.mrb[0].mxu0
      %v8527 = vpop.f32.mrb[0].mxu0
      %v8528 = vadd.f32 0.0, %v8527
      %v8529 = vpop.f32.mrb[0].mxu0
      %8530 = vdwg.mxu0
      %v8533 = vrot.slane %v8525, 1
      %v8534 = vrot.slane %v8528, 1
      %v8535 = vsel %vm581, %v8533, %v8534
      %v8537 = vadd.f32 %v8425, %v8535
      %v8538 = vld [vmem:[%s3] sm:$0x1]
      %v8540 = vlaneseq
      %v8541 = vshrl.u32 %v8540, 7
      %v8542 = vsub.s32 0, %v8541
      %v8543 = vrot.slane %v8538, %v8542
      %v8545 = vmul.f32 %v8537, %v8543
      %v8546 = vld [vmem:[%s4] sm:$0x1]
      %v8548 = vlaneseq
      %v8549 = vshrl.u32 %v8548, 7
      %v8550 = vsub.s32 0, %v8549
      %v8551 = vrot.slane %v8546, %v8550
      %v8553 = vadd.f32 %v8545, %v8551
      %v8554 = vmax.f32 %v8553, 0.0
      %v8555 = vpack.c.bf16 %v8554, %v8554
      %s8556 = scalar_lea.vmem %s244, 28
      %8557 = vst [vmem:[%s8556] sm:$0xf] %v8555
      %p8558 = scmp.lt.s32.totalorder %s16, 1
      %s8559 = scalar_select %p8558, %s16, 1
      %s8560 = smul.addr %s8559, 8
      %s8561 = smul.addr %s8560, 4
      %s8562 = scalar_lea.vmem %s5, %s8561
      // Predicated region
      $region41: #{_lambda_.5} parent=39 // pred_check
        %p8563 = pneg %p149
      $region42: #{_lambda_.5} parent=39 // pred_check_branch
        %8565 = sbr.rel (%p8563) target = $region44
      $region43: #{_lambda_.5} parent=39 // pred_region
        _
      $region44: #{_lambda_.5} parent=39 // pred_fallthru
        _
    $region40: #{_lambda_.5} parent=5 // pred_fallthru
      _
    %p8566 = scmp.le.s32.totalorder 2, %s11
    // Predicated region
    $region45: #{_lambda_.5} parent=5 // pred_check
      %p8567 = pneg %p8566
    $region46: #{_lambda_.5} parent=5 // pred_check_branch
      %8569 = sbr.rel (%p8567) target = $region48
    $region47: #{_lambda_.5} parent=5 // pred_region
      %s8570 = ssub.s32 %s11, 2
      // Predicated region
      $region49: #{_lambda_.5} parent=47 // pred_check
        %p8571 = pneg %p155
      $region50: #{_lambda_.5} parent=47 // pred_check_branch
        %8573 = sbr.rel (%p8571) target = $region52
      $region51: #{_lambda_.5} parent=47 // pred_region
        %p8574 = scmp.lt.s32.totalorder %s17, 1
        %s8575 = scalar_select %p8574, %s17, 1
        %s8576 = smul.addr %s8575, 8
        %s8577 = smul.addr %s8576, 4
        %s8578 = scalar_lea.vmem %s5, %s8577
      $region52: #{_lambda_.5} parent=47 // pred_fallthru
        _
    $region48: #{_lambda_.5} parent=5 // pred_fallthru
      _
  $region6: #{_lambda_.5} parent=0 // loop_footer
    %s15 = sadd.s32 1, %s11
  $region7: #{_lambda_.5} parent=0 // loop_footer_branch
    %10 = sbr.rel target = $region3
  $region8: #{_lambda_.5} parent=0 // loop_exit
    _

</llo_original>
